<compile_context>
chip_gen: v5e
topology: v5e:2x2
jax: 0.10.0
libtpu: 0.0.40
codegen_flags: <defaults>
</compile_context>

<pallas_src>
import functools

import jax
import jax.numpy as jnp
from jax.experimental import pallas as pl
from jax.experimental.pallas import tpu as pltpu

COUT_PAD = 128   # lane-dense padded channel count carried between layers


# --------------------------- Pallas kernels ---------------------------

def _conv_kernel(x_ref, w_ref, b_ref, o_ref, *, shifts, q, relu):
    """Fused stride-1 conv over flattened pixels (one image per grid step).

    x_ref: (P, Cin)      bf16 activation, pixels flattened row-major
    w_ref: (T, Cin, Cout) bf16 per-tap weights (folded BN scale already applied)
    b_ref: (1, Cout)      f32 folded BN shift
    o_ref: (q, Cout)      bf16 output rows (output pixel p corresponds to input pixel p)
    """
    cout = o_ref.shape[-1]
    acc = jnp.zeros((q, cout), jnp.float32)
    for t, sh in enumerate(shifts):                    # short static tap loop (9 or 4), unrolled
        acc = acc + jnp.dot(x_ref[pl.ds(sh, q), :], w_ref[t],
                            preferred_element_type=jnp.float32)
    y = acc + b_ref[...]                               # f32 epilogue
    if relu:
        y = jnp.maximum(y, 0.0)
    o_ref[...] = y.astype(o_ref.dtype)


def _conv_quant_kernel(x_ref, w_ref, med_ref, lat_ref, sym_ref, *, shifts, q):
    """Conv3 with fused EntropyBottleneck quantization: symbols = round(latent - medians)."""
    cout = lat_ref.shape[-1]
    acc = jnp.zeros((q, cout), jnp.float32)
    for t, sh in enumerate(shifts):
        acc = acc + jnp.dot(x_ref[pl.ds(sh, q), :], w_ref[t],
                            preferred_element_type=jnp.float32)
    lat_ref[...] = acc
    # TODO(synk): int16/int8 symbols would shrink the (tiny) writeback further; int32 kept for
    #             robust lowering.
    sym_ref[...] = jnp.round(acc - med_ref[...]).astype(jnp.int32)


# --------------------------- pallas_call wrappers ---------------------------

def _tap_shifts(kh, kw, win):
    return tuple(a * win + b for a in range(kh) for b in range(kw))


def conv_s1_pallas(x, w, b, *, win, kh, kw, relu):
    """y[n, p, :] = relu?( sum_t x[n, p + shift_t, :] @ w[t] + b ) on valid pixel rows."""
    n, p, cin = x.shape
    t, _, cout = w.shape
    shifts = _tap_shifts(kh, kw, win)
    q = p - shifts[-1]
    kernel = functools.partial(_conv_kernel, shifts=shifts, q=q, relu=relu)
    return pl.pallas_call(
        kernel,
        out_shape=jax.ShapeDtypeStruct((n, q, cout), jnp.bfloat16),
        grid_spec=pltpu.PrefetchScalarGridSpec(
            num_scalar_prefetch=0,
            grid=(n,),
            in_specs=[
                pl.BlockSpec((None, p, cin), lambda i: (i, 0, 0)),   # whole image in VMEM
                pl.BlockSpec((t, cin, cout), lambda i: (0, 0, 0)),   # weights resident across grid
                pl.BlockSpec((1, cout), lambda i: (0, 0)),
            ],
            out_specs=pl.BlockSpec((None, q, cout), lambda i: (i, 0, 0)),
        ),
        compiler_params=pltpu.CompilerParams(dimension_semantics=("parallel",)),
    )(x, w, b)


def conv_quant_pallas(x, w, med, *, win, kh, kw):
    n, p, cin = x.shape
    t, _, cout = w.shape
    shifts = _tap_shifts(kh, kw, win)
    q = p - shifts[-1]
    kernel = functools.partial(_conv_quant_kernel, shifts=shifts, q=q)
    return pl.pallas_call(
        kernel,
        out_shape=(jax.ShapeDtypeStruct((n, q, cout), jnp.float32),
                   jax.ShapeDtypeStruct((n, q, cout), jnp.int32)),
        grid_spec=pltpu.PrefetchScalarGridSpec(
            num_scalar_prefetch=0,
            grid=(n,),
            in_specs=[
                pl.BlockSpec((None, p, cin), lambda i: (i, 0, 0)),
                pl.BlockSpec((t, cin, cout), lambda i: (0, 0, 0)),
                pl.BlockSpec((1, cout), lambda i: (0, 0)),
            ],
            out_specs=(pl.BlockSpec((None, q, cout), lambda i: (i, 0, 0)),
                       pl.BlockSpec((None, q, cout), lambda i: (i, 0, 0))),
        ),
        compiler_params=pltpu.CompilerParams(dimension_semantics=("parallel",)),
    )(x, w, med)


# --------------------------- JAX glue (layout only, no compute blow-up) ---------------------------

def _prep_s2(x_nhwc, pad):
    """Spatial pad + space-to-depth(2) + flatten pixels.

    Turns a 5x5/stride-2 conv into a 3x3/stride-1 conv over (N, H2*W2, 4*C), so the Pallas kernel
    only needs shifted matmuls (no strided windows, no HBM im2col)."""
    n, h, w, c = x_nhwc.shape
    eh = (h + 2 * pad) % 2
    ew = (w + 2 * pad) % 2
    xp = jnp.pad(x_nhwc, ((0, 0), (pad, pad + eh), (pad, pad + ew), (0, 0)))
    h2 = (h + 2 * pad + eh) // 2
    w2 = (w + 2 * pad + ew) // 2
    xs = xp.reshape(n, h2, 2, w2, 2, c)
    xs = jnp.transpose(xs, (0, 1, 3, 2, 4, 5)).reshape(n, h2, w2, 4 * c)
    return xs.reshape(n, h2 * w2, 4 * c), h2, w2


def _unflatten_valid(y_full, h2, w2, oh, ow):
    """Recover the (N, OH, OW, C) valid region from the flattened full-width kernel output."""
    n, q, c = y_full.shape
    y = jnp.pad(y_full, ((0, 0), (0, h2 * w2 - q), (0, 0)))
    return y.reshape(n, h2, w2, c)[:, :oh, :ow, :]


# --------------------------- one-time parameter packing ---------------------------

def _fold_bn(gamma, beta, mean, var, eps=1e-5):
    scale = gamma / jnp.sqrt(var + eps)
    shift = beta - mean * scale
    return scale, shift


def _pack_w_s2d(w_oihw, scale, cin_pad, cout_pad):
    """(Cout,Cin,5,5) stride-2 conv weight -> (9, 4*cin_pad, cout_pad) space-to-depth'd stride-1
    3x3 tap weights; folded BN scale multiplied into the output columns; pads are zero."""
    cout, cin, kh, kw = w_oihw.shape
    w = jnp.transpose(w_oihw, (2, 3, 1, 0)) * scale[None, None, None, :]          # (5,5,Cin,Cout)
    w = jnp.pad(w, ((0, 1), (0, 1), (0, cin_pad - cin), (0, cout_pad - cout)))     # (6,6,cp,op)
    w = w.reshape(3, 2, 3, 2, cin_pad, cout_pad)       # (a,p,b,q,c,o): original tap (2a+p, 2b+q)
    w = jnp.transpose(w, (0, 2, 1, 3, 4, 5))           # (a,b,p,q,c,o)
    return w.reshape(9, 4 * cin_pad, cout_pad).astype(jnp.bfloat16)


def _pack_w_s1(w_oihw, cin_pad, cout_pad):
    """(Cout,Cin,kh,kw) stride-1 conv weight -> (kh*kw, cin_pad, cout_pad) tap weights."""
    cout, cin, kh, kw = w_oihw.shape
    w = jnp.transpose(w_oihw, (2, 3, 1, 0))
    w = jnp.pad(w, ((0, 0), (0, 0), (0, cin_pad - cin), (0, cout_pad - cout)))
    return w.reshape(kh * kw, cin_pad, cout_pad).astype(jnp.bfloat16)


def _pad_row(v, cout_pad):
    return jnp.zeros((1, cout_pad), jnp.float32).at[0, :v.shape[0]].set(v.astype(jnp.float32))


def pack_params(params):
    """Done once: fold BN scale into weights, pad channels to 128, cast weights to bf16."""
    s1, b1 = _fold_bn(*params["bn1"])
    s2, b2 = _fold_bn(*params["bn2"])
    cin1 = params["w1"].shape[1]
    cin1p = ((cin1 + 3) // 4) * 4          # pad conv1 input channels so 4*cin1p is sublane-aligned
    return {
        "cin1_pad": jnp.int32(cin1p),      # informational only
        "w1": _pack_w_s2d(params["w1"], s1, cin_pad=cin1p, cout_pad=COUT_PAD),
        "b1": _pad_row(b1, COUT_PAD),
        "w2": _pack_w_s2d(params["w2"], s2, cin_pad=COUT_PAD, cout_pad=COUT_PAD),
        "b2": _pad_row(b2, COUT_PAD),
        "w3": _pack_w_s1(params["w3"], cin_pad=COUT_PAD, cout_pad=COUT_PAD),
        "medians": _pad_row(params["medians"], COUT_PAD),
    }


# --------------------------- parameters (deterministic, synthetic) ---------------------------

def init_params(key, num_input_channels=3, num_bottleneck_channels=24):
    c0 = num_input_channels
    c1 = num_bottleneck_channels * 4   # 96
    c2 = num_bottleneck_channels * 2   # 48
    c3 = num_bottleneck_channels       # 24
    ks = jax.random.split(key, 8)

    def conv_w(k, cout, cin, kh, kw):
        fan_in = cin * kh * kw
        return jax.random.normal(k, (cout, cin, kh, kw), jnp.float32) / jnp.sqrt(fan_in)

    params = {
        "w1": conv_w(ks[0], c1, c0, 5, 5),
        "bn1": (1.0 + 0.05 * jax.random.normal(ks[1], (c1,)),   # gamma
                0.02 * jax.random.normal(ks[2], (c1,)),          # beta
                0.01 * jax.random.normal(ks[3], (c1,)),          # running_mean
                jnp.ones((c1,), jnp.float32)),                   # running_var
        "w2": conv_w(ks[4], c2, c1, 5, 5),
        "bn2": (1.0 + 0.05 * jax.random.normal(ks[5], (c2,)),
                0.02 * jax.random.normal(ks[6], (c2,)),
                0.01 * jax.random.normal(ks[7], (c2,)),
                jnp.ones((c2,), jnp.float32)),
        "w3": conv_w(jax.random.fold_in(key, 99), c3, c2, 2, 2),
        "medians": jnp.linspace(-0.5, 0.5, c3).astype(jnp.float32),
    }
    return params


# --------------------------- ClientModel forward ---------------------------

@functools.partial(jax.jit, static_argnames=("cout",))
def _encode(packed, x_nchw, *, cout):
    x = jnp.transpose(x_nchw, (0, 2, 3, 1)).astype(jnp.float32)          # NCHW -> NHWC
    # pad the 3 input channels to 4 so conv1's contracting dim (4*4 = 16) is sublane aligned
    x = jnp.pad(x, ((0, 0), (0, 0), (0, 0), (0, (-x.shape[-1]) % 4)))

    # conv1 (5x5, s2, p2) + BN + ReLU  -> bf16, 128 padded channels
    x1, hh1, ww1 = _prep_s2(x, pad=2)
    y1 = conv_s1_pallas(x1.astype(jnp.bfloat16), packed["w1"], packed["b1"],
                        win=ww1, kh=3, kw=3, relu=True)
    y1 = _unflatten_valid(y1, hh1, ww1, hh1 - 2, ww1 - 2)                # (N, OH1, OW1, 128)

    # conv2 (5x5, s2, p2) + BN + ReLU  (input channels stay padded to 128 - no slice/re-pad)
    x2, hh2, ww2 = _prep_s2(y1, pad=2)
    y2 = conv_s1_pallas(x2, packed["w2"], packed["b2"], win=ww2, kh=3, kw=3, relu=True)
    y2 = _unflatten_valid(y2, hh2, ww2, hh2 - 2, ww2 - 2)                # (N, OH2, OW2, 128)

    # conv3 (2x2, s1, p0) with quantization fused into the epilogue
    n, h3, w3, c = y2.shape
    x3 = y2.reshape(n, h3 * w3, c)
    lat_f, sym_f = conv_quant_pallas(x3, packed["w3"], packed["medians"], win=w3, kh=2, kw=2)
    latent = _unflatten_valid(lat_f, h3, w3, h3 - 1, w3 - 1)[..., :cout]
    symbols = _unflatten_valid(sym_f, h3, w3, h3 - 1, w3 - 1)[..., :cout]
    return latent, symbols


def client_model_forward(packed, x_nchw, num_latent_channels=24):
    """Mirrors ClientModel.forward: returns ((features,), (input_shape,))."""
    input_shape = tuple(int(s) for s in x_nchw.shape[-2:])
    latent, symbols = _encode(packed, x_nchw, cout=num_latent_channels)
    # TODO(synk): range/arithmetic coding of `symbols` into byte strings (compressai C++ rANS)
    #             is not expressible in Pallas; the quantized symbols stand in for the strings.
    features = {"strings": [symbols], "shape": tuple(int(s) for s in latent.shape[1:3])}
    return ((features,), (input_shape,))


# --------------------------- reference (pure JAX) for a sanity check ---------------------------

def _ref_forward(params, x_nchw):
    x = jnp.transpose(x_nchw, (0, 2, 3, 1)).astype(jnp.float32)

    def conv(z, w, stride, pad):
        w_hwio = jnp.transpose(w, (2, 3, 1, 0))
        return jax.lax.conv_general_dilated(
            z, w_hwio, (stride, stride), [(pad, pad), (pad, pad)],
            dimension_numbers=("NHWC", "HWIO", "NHWC"))

    s1, b1 = _fold_bn(*params["bn1"])
    s2, b2 = _fold_bn(*params["bn2"])
    h = jnp.maximum(conv(x, params["w1"], 2, 2) * s1 + b1, 0.0)
    h = jnp.maximum(conv(h, params["w2"], 2, 2) * s2 + b2, 0.0)
    latent = conv(h, params["w3"], 1, 0)
    symbols = jnp.round(latent - params["medians"]).astype(jnp.int32)
    return latent, symbols


if __name__ == "__main__":
    key = jax.random.PRNGKey(0)
    pkey, xkey = jax.random.split(key)
    params = init_params(pkey)
    packed = pack_params(params)

    # small input, NCHW like the PyTorch module expects (3-channel image)
    x = jax.random.normal(xkey, (2, 3, 32, 32), jnp.float32)

    (features,), (input_shape,) = client_model_forward(packed, x)
    symbols = jax.block_until_ready(features["strings"][0])
    latent, _ = _encode(packed, x, cout=24)
    latent = jax.block_until_ready(latent)

    # pure-JAX f32 reference
    latent_ref, symbols_ref = _ref_forward(params, x)

    assert input_shape == (32, 32)
    assert features["shape"] == tuple(latent_ref.shape[1:3]), "latent spatial shape mismatch"
    # conv chain matches the f32 reference up to bf16-operand tolerance
    assert jnp.allclose(latent, latent_ref, atol=8e-2, rtol=5e-2), "latent mismatch vs reference"
    # fused quantization is exactly round(latent - medians) for the latent the kernel produced
    assert jnp.array_equal(
        symbols, jnp.round(latent - params["medians"]).astype(jnp.int32)), "fused quantize mismatch"
    # symbols agree with the reference except where bf16 noise crosses a .5 rounding boundary
    assert int(jnp.max(jnp.abs(symbols - symbols_ref))) <= 1, "symbol error > 1"
    assert float(jnp.mean((symbols == symbols_ref).astype(jnp.float32))) >= 0.95, "too many symbol flips"

    print("KERNEL_OK")
</pallas_src>

<mosaic_0001>
module attributes {stable_mosaic.version = 11 : i64} {
  func.func @_conv_kernel(%arg0: i32, %arg1: memref<1x324x16xbf16, #tpu.memory_space<vmem>>, %arg2: memref<9x16x128xbf16, #tpu.memory_space<vmem>>, %arg3: memref<1x128xf32, #tpu.memory_space<vmem>>, %arg4: memref<1x286x128xbf16, #tpu.memory_space<vmem>>) attributes {dimension_semantics = [#tpu.dimension_semantics<parallel>], iteration_bounds = array<i64: 2>, scalar_prefetch = 0 : i64, scratch_operands = 0 : i64, tpu.core_type = #tpu.core_type<tc>, window_params = [{transform_indices = @transform_0, window_bounds = array<i64: 1, 324, 16>}, {pipeline_mode = #tpu.pipeline_mode<synchronous>, transform_indices = @transform_1, window_bounds = array<i64: 9, 16, 128>}, {pipeline_mode = #tpu.pipeline_mode<synchronous>, transform_indices = @transform_2, window_bounds = array<i64: 1, 128>}, {transform_indices = @transform_3, window_bounds = array<i64: 1, 286, 128>}]} {
    %cst = arith.constant 0.000000e+00 : f32
    %0 = vector.broadcast %cst : f32 to vector<286x128xf32>
    %c0 = arith.constant 0 : index
    %c0_0 = arith.constant 0 : index
    %c0_1 = arith.constant 0 : index
    %1 = vector.load %arg1[%c0, %c0_0, %c0_1] : memref<1x324x16xbf16, #tpu.memory_space<vmem>>, vector<1x286x16xbf16>
    %2 = vector.shape_cast %1 : vector<1x286x16xbf16> to vector<286x16xbf16>
    %c0_2 = arith.constant 0 : index
    %c0_3 = arith.constant 0 : index
    %c0_4 = arith.constant 0 : index
    %3 = vector.load %arg2[%c0_2, %c0_3, %c0_4] : memref<9x16x128xbf16, #tpu.memory_space<vmem>>, vector<1x16x128xbf16>
    %4 = vector.shape_cast %3 : vector<1x16x128xbf16> to vector<16x128xbf16>
    %cst_5 = arith.constant dense<0.000000e+00> : vector<286x128xf32>
    %5 = tpu.matmul %2, %4, %cst_5 {dimension_numbers = #tpu.dot_dimension_numbers<[1], [0], [0], [1], [0, 0, 1, 1], [], []>} : vector<286x16xbf16>, vector<16x128xbf16>, vector<286x128xf32> -> vector<286x128xf32>
    %6 = arith.addf %0, %5 : vector<286x128xf32>
    %c0_6 = arith.constant 0 : index
    %c1 = arith.constant 1 : index
    %c0_7 = arith.constant 0 : index
    %7 = vector.load %arg1[%c0_6, %c1, %c0_7] : memref<1x324x16xbf16, #tpu.memory_space<vmem>>, vector<1x286x16xbf16>
    %8 = vector.shape_cast %7 : vector<1x286x16xbf16> to vector<286x16xbf16>
    %c1_8 = arith.constant 1 : index
    %c0_9 = arith.constant 0 : index
    %c0_10 = arith.constant 0 : index
    %9 = vector.load %arg2[%c1_8, %c0_9, %c0_10] : memref<9x16x128xbf16, #tpu.memory_space<vmem>>, vector<1x16x128xbf16>
    %10 = vector.shape_cast %9 : vector<1x16x128xbf16> to vector<16x128xbf16>
    %cst_11 = arith.constant dense<0.000000e+00> : vector<286x128xf32>
    %11 = tpu.matmul %8, %10, %cst_11 {dimension_numbers = #tpu.dot_dimension_numbers<[1], [0], [0], [1], [0, 0, 1, 1], [], []>} : vector<286x16xbf16>, vector<16x128xbf16>, vector<286x128xf32> -> vector<286x128xf32>
    %12 = arith.addf %6, %11 : vector<286x128xf32>
    %c0_12 = arith.constant 0 : index
    %c2 = arith.constant 2 : index
    %c0_13 = arith.constant 0 : index
    %13 = vector.load %arg1[%c0_12, %c2, %c0_13] : memref<1x324x16xbf16, #tpu.memory_space<vmem>>, vector<1x286x16xbf16>
    %14 = vector.shape_cast %13 : vector<1x286x16xbf16> to vector<286x16xbf16>
    %c2_14 = arith.constant 2 : index
    %c0_15 = arith.constant 0 : index
    %c0_16 = arith.constant 0 : index
    %15 = vector.load %arg2[%c2_14, %c0_15, %c0_16] : memref<9x16x128xbf16, #tpu.memory_space<vmem>>, vector<1x16x128xbf16>
    %16 = vector.shape_cast %15 : vector<1x16x128xbf16> to vector<16x128xbf16>
    %cst_17 = arith.constant dense<0.000000e+00> : vector<286x128xf32>
    %17 = tpu.matmul %14, %16, %cst_17 {dimension_numbers = #tpu.dot_dimension_numbers<[1], [0], [0], [1], [0, 0, 1, 1], [], []>} : vector<286x16xbf16>, vector<16x128xbf16>, vector<286x128xf32> -> vector<286x128xf32>
    %18 = arith.addf %12, %17 : vector<286x128xf32>
    %c0_18 = arith.constant 0 : index
    %c18 = arith.constant 18 : index
    %c0_19 = arith.constant 0 : index
    %19 = vector.load %arg1[%c0_18, %c18, %c0_19] : memref<1x324x16xbf16, #tpu.memory_space<vmem>>, vector<1x286x16xbf16>
    %20 = vector.shape_cast %19 : vector<1x286x16xbf16> to vector<286x16xbf16>
    %c3 = arith.constant 3 : index
    %c0_20 = arith.constant 0 : index
    %c0_21 = arith.constant 0 : index
    %21 = vector.load %arg2[%c3, %c0_20, %c0_21] : memref<9x16x128xbf16, #tpu.memory_space<vmem>>, vector<1x16x128xbf16>
    %22 = vector.shape_cast %21 : vector<1x16x128xbf16> to vector<16x128xbf16>
    %cst_22 = arith.constant dense<0.000000e+00> : vector<286x128xf32>
    %23 = tpu.matmul %20, %22, %cst_22 {dimension_numbers = #tpu.dot_dimension_numbers<[1], [0], [0], [1], [0, 0, 1, 1], [], []>} : vector<286x16xbf16>, vector<16x128xbf16>, vector<286x128xf32> -> vector<286x128xf32>
    %24 = arith.addf %18, %23 : vector<286x128xf32>
    %c0_23 = arith.constant 0 : index
    %c19 = arith.constant 19 : index
    %c0_24 = arith.constant 0 : index
    %25 = vector.load %arg1[%c0_23, %c19, %c0_24] : memref<1x324x16xbf16, #tpu.memory_space<vmem>>, vector<1x286x16xbf16>
    %26 = vector.shape_cast %25 : vector<1x286x16xbf16> to vector<286x16xbf16>
    %c4 = arith.constant 4 : index
    %c0_25 = arith.constant 0 : index
    %c0_26 = arith.constant 0 : index
    %27 = vector.load %arg2[%c4, %c0_25, %c0_26] : memref<9x16x128xbf16, #tpu.memory_space<vmem>>, vector<1x16x128xbf16>
    %28 = vector.shape_cast %27 : vector<1x16x128xbf16> to vector<16x128xbf16>
    %cst_27 = arith.constant dense<0.000000e+00> : vector<286x128xf32>
    %29 = tpu.matmul %26, %28, %cst_27 {dimension_numbers = #tpu.dot_dimension_numbers<[1], [0], [0], [1], [0, 0, 1, 1], [], []>} : vector<286x16xbf16>, vector<16x128xbf16>, vector<286x128xf32> -> vector<286x128xf32>
    %30 = arith.addf %24, %29 : vector<286x128xf32>
    %c0_28 = arith.constant 0 : index
    %c20 = arith.constant 20 : index
    %c0_29 = arith.constant 0 : index
    %31 = vector.load %arg1[%c0_28, %c20, %c0_29] : memref<1x324x16xbf16, #tpu.memory_space<vmem>>, vector<1x286x16xbf16>
    %32 = vector.shape_cast %31 : vector<1x286x16xbf16> to vector<286x16xbf16>
    %c5 = arith.constant 5 : index
    %c0_30 = arith.constant 0 : index
    %c0_31 = arith.constant 0 : index
    %33 = vector.load %arg2[%c5, %c0_30, %c0_31] : memref<9x16x128xbf16, #tpu.memory_space<vmem>>, vector<1x16x128xbf16>
    %34 = vector.shape_cast %33 : vector<1x16x128xbf16> to vector<16x128xbf16>
    %cst_32 = arith.constant dense<0.000000e+00> : vector<286x128xf32>
    %35 = tpu.matmul %32, %34, %cst_32 {dimension_numbers = #tpu.dot_dimension_numbers<[1], [0], [0], [1], [0, 0, 1, 1], [], []>} : vector<286x16xbf16>, vector<16x128xbf16>, vector<286x128xf32> -> vector<286x128xf32>
    %36 = arith.addf %30, %35 : vector<286x128xf32>
    %c0_33 = arith.constant 0 : index
    %c36 = arith.constant 36 : index
    %c0_34 = arith.constant 0 : index
    %37 = vector.load %arg1[%c0_33, %c36, %c0_34] : memref<1x324x16xbf16, #tpu.memory_space<vmem>>, vector<1x286x16xbf16>
    %38 = vector.shape_cast %37 : vector<1x286x16xbf16> to vector<286x16xbf16>
    %c6 = arith.constant 6 : index
    %c0_35 = arith.constant 0 : index
    %c0_36 = arith.constant 0 : index
    %39 = vector.load %arg2[%c6, %c0_35, %c0_36] : memref<9x16x128xbf16, #tpu.memory_space<vmem>>, vector<1x16x128xbf16>
    %40 = vector.shape_cast %39 : vector<1x16x128xbf16> to vector<16x128xbf16>
    %cst_37 = arith.constant dense<0.000000e+00> : vector<286x128xf32>
    %41 = tpu.matmul %38, %40, %cst_37 {dimension_numbers = #tpu.dot_dimension_numbers<[1], [0], [0], [1], [0, 0, 1, 1], [], []>} : vector<286x16xbf16>, vector<16x128xbf16>, vector<286x128xf32> -> vector<286x128xf32>
    %42 = arith.addf %36, %41 : vector<286x128xf32>
    %c0_38 = arith.constant 0 : index
    %c37 = arith.constant 37 : index
    %c0_39 = arith.constant 0 : index
    %43 = vector.load %arg1[%c0_38, %c37, %c0_39] : memref<1x324x16xbf16, #tpu.memory_space<vmem>>, vector<1x286x16xbf16>
    %44 = vector.shape_cast %43 : vector<1x286x16xbf16> to vector<286x16xbf16>
    %c7 = arith.constant 7 : index
    %c0_40 = arith.constant 0 : index
    %c0_41 = arith.constant 0 : index
    %45 = vector.load %arg2[%c7, %c0_40, %c0_41] : memref<9x16x128xbf16, #tpu.memory_space<vmem>>, vector<1x16x128xbf16>
    %46 = vector.shape_cast %45 : vector<1x16x128xbf16> to vector<16x128xbf16>
    %cst_42 = arith.constant dense<0.000000e+00> : vector<286x128xf32>
    %47 = tpu.matmul %44, %46, %cst_42 {dimension_numbers = #tpu.dot_dimension_numbers<[1], [0], [0], [1], [0, 0, 1, 1], [], []>} : vector<286x16xbf16>, vector<16x128xbf16>, vector<286x128xf32> -> vector<286x128xf32>
    %48 = arith.addf %42, %47 : vector<286x128xf32>
    %c0_43 = arith.constant 0 : index
    %c38 = arith.constant 38 : index
    %c0_44 = arith.constant 0 : index
    %49 = vector.load %arg1[%c0_43, %c38, %c0_44] : memref<1x324x16xbf16, #tpu.memory_space<vmem>>, vector<1x286x16xbf16>
    %50 = vector.shape_cast %49 : vector<1x286x16xbf16> to vector<286x16xbf16>
    %c8 = arith.constant 8 : index
    %c0_45 = arith.constant 0 : index
    %c0_46 = arith.constant 0 : index
    %51 = vector.load %arg2[%c8, %c0_45, %c0_46] : memref<9x16x128xbf16, #tpu.memory_space<vmem>>, vector<1x16x128xbf16>
    %52 = vector.shape_cast %51 : vector<1x16x128xbf16> to vector<16x128xbf16>
    %cst_47 = arith.constant dense<0.000000e+00> : vector<286x128xf32>
    %53 = tpu.matmul %50, %52, %cst_47 {dimension_numbers = #tpu.dot_dimension_numbers<[1], [0], [0], [1], [0, 0, 1, 1], [], []>} : vector<286x16xbf16>, vector<16x128xbf16>, vector<286x128xf32> -> vector<286x128xf32>
    %54 = arith.addf %48, %53 : vector<286x128xf32>
    %c0_48 = arith.constant 0 : index
    %c0_49 = arith.constant 0 : index
    %55 = vector.load %arg3[%c0_48, %c0_49] : memref<1x128xf32, #tpu.memory_space<vmem>>, vector<1x128xf32>
    %56 = vector.broadcast %55 : vector<1x128xf32> to vector<286x128xf32>
    %57 = arith.addf %54, %56 : vector<286x128xf32>
    %cst_50 = arith.constant 0.000000e+00 : f32
    %58 = vector.broadcast %cst_50 : f32 to vector<286x128xf32>
    %59 = arith.maximumf %57, %58 : vector<286x128xf32>
    %60 = arith.truncf %59 : vector<286x128xf32> to vector<286x128xbf16>
    %c0_51 = arith.constant 0 : index
    %c0_52 = arith.constant 0 : index
    %c0_53 = arith.constant 0 : index
    %61 = vector.load %arg4[%c0_51, %c0_52, %c0_53] : memref<1x286x128xbf16, #tpu.memory_space<vmem>>, vector<1x286x128xbf16>
    %62 = vector.shape_cast %61 : vector<1x286x128xbf16> to vector<286x128xbf16>
    %63 = vector.shape_cast %60 : vector<286x128xbf16> to vector<1x286x128xbf16>
    tpu.vector_store %arg4[%c0_51, %c0_52, %c0_53], %63 {strides = array<i32>} : memref<1x286x128xbf16, #tpu.memory_space<vmem>>, vector<1x286x128xbf16>,
    return
  }
  func.func @transform_0(%arg0: i32) -> (i32, i32, i32) {
    %c0_i32 = arith.constant 0 : i32
    %c0_i32_0 = arith.constant 0 : i32
    %c0_i32_1 = arith.constant 0 : i32
    return %arg0, %c0_i32, %c0_i32_0 : i32, i32, i32
  }
  func.func @transform_1(%arg0: i32) -> (i32, i32, i32) {
    %c0_i32 = arith.constant 0 : i32
    %c0_i32_0 = arith.constant 0 : i32
    %c0_i32_1 = arith.constant 0 : i32
    %c0_i32_2 = arith.constant 0 : i32
    return %c0_i32, %c0_i32_0, %c0_i32_1 : i32, i32, i32
  }
  func.func @transform_2(%arg0: i32) -> (i32, i32) {
    %c0_i32 = arith.constant 0 : i32
    %c0_i32_0 = arith.constant 0 : i32
    %c0_i32_1 = arith.constant 0 : i32
    return %c0_i32, %c0_i32_0 : i32, i32
  }
  func.func @transform_3(%arg0: i32) -> (i32, i32, i32) {
    %c0_i32 = arith.constant 0 : i32
    %c0_i32_0 = arith.constant 0 : i32
    %c0_i32_1 = arith.constant 0 : i32
    return %arg0, %c0_i32, %c0_i32_0 : i32, i32, i32
  }
}

module attributes {stable_mosaic.version = 11 : i64} {
  func.func @_conv_kernel(%arg0: i32, %arg1: memref<1x100x512xbf16, #tpu.memory_space<vmem>>, %arg2: memref<9x512x128xbf16, #tpu.memory_space<vmem>>, %arg3: memref<1x128xf32, #tpu.memory_space<vmem>>, %arg4: memref<1x78x128xbf16, #tpu.memory_space<vmem>>) attributes {dimension_semantics = [#tpu.dimension_semantics<parallel>], iteration_bounds = array<i64: 2>, scalar_prefetch = 0 : i64, scratch_operands = 0 : i64, tpu.core_type = #tpu.core_type<tc>, window_params = [{transform_indices = @transform_0, window_bounds = array<i64: 1, 100, 512>}, {pipeline_mode = #tpu.pipeline_mode<synchronous>, transform_indices = @transform_1, window_bounds = array<i64: 9, 512, 128>}, {pipeline_mode = #tpu.pipeline_mode<synchronous>, transform_indices = @transform_2, window_bounds = array<i64: 1, 128>}, {transform_indices = @transform_3, window_bounds = array<i64: 1, 78, 128>}]} {
    %cst = arith.constant 0.000000e+00 : f32
    %0 = vector.broadcast %cst : f32 to vector<78x128xf32>
    %c0 = arith.constant 0 : index
    %c0_0 = arith.constant 0 : index
    %c0_1 = arith.constant 0 : index
    %1 = vector.load %arg1[%c0, %c0_0, %c0_1] : memref<1x100x512xbf16, #tpu.memory_space<vmem>>, vector<1x78x512xbf16>
    %2 = vector.shape_cast %1 : vector<1x78x512xbf16> to vector<78x512xbf16>
    %c0_2 = arith.constant 0 : index
    %c0_3 = arith.constant 0 : index
    %c0_4 = arith.constant 0 : index
    %3 = vector.load %arg2[%c0_2, %c0_3, %c0_4] : memref<9x512x128xbf16, #tpu.memory_space<vmem>>, vector<1x512x128xbf16>
    %4 = vector.shape_cast %3 : vector<1x512x128xbf16> to vector<512x128xbf16>
    %cst_5 = arith.constant dense<0.000000e+00> : vector<78x128xf32>
    %5 = tpu.matmul %2, %4, %cst_5 {dimension_numbers = #tpu.dot_dimension_numbers<[1], [0], [0], [1], [0, 0, 1, 1], [], []>} : vector<78x512xbf16>, vector<512x128xbf16>, vector<78x128xf32> -> vector<78x128xf32>
    %6 = arith.addf %0, %5 : vector<78x128xf32>
    %c0_6 = arith.constant 0 : index
    %c1 = arith.constant 1 : index
    %c0_7 = arith.constant 0 : index
    %7 = vector.load %arg1[%c0_6, %c1, %c0_7] : memref<1x100x512xbf16, #tpu.memory_space<vmem>>, vector<1x78x512xbf16>
    %8 = vector.shape_cast %7 : vector<1x78x512xbf16> to vector<78x512xbf16>
    %c1_8 = arith.constant 1 : index
    %c0_9 = arith.constant 0 : index
    %c0_10 = arith.constant 0 : index
    %9 = vector.load %arg2[%c1_8, %c0_9, %c0_10] : memref<9x512x128xbf16, #tpu.memory_space<vmem>>, vector<1x512x128xbf16>
    %10 = vector.shape_cast %9 : vector<1x512x128xbf16> to vector<512x128xbf16>
    %cst_11 = arith.constant dense<0.000000e+00> : vector<78x128xf32>
    %11 = tpu.matmul %8, %10, %cst_11 {dimension_numbers = #tpu.dot_dimension_numbers<[1], [0], [0], [1], [0, 0, 1, 1], [], []>} : vector<78x512xbf16>, vector<512x128xbf16>, vector<78x128xf32> -> vector<78x128xf32>
    %12 = arith.addf %6, %11 : vector<78x128xf32>
    %c0_12 = arith.constant 0 : index
    %c2 = arith.constant 2 : index
    %c0_13 = arith.constant 0 : index
    %13 = vector.load %arg1[%c0_12, %c2, %c0_13] : memref<1x100x512xbf16, #tpu.memory_space<vmem>>, vector<1x78x512xbf16>
    %14 = vector.shape_cast %13 : vector<1x78x512xbf16> to vector<78x512xbf16>
    %c2_14 = arith.constant 2 : index
    %c0_15 = arith.constant 0 : index
    %c0_16 = arith.constant 0 : index
    %15 = vector.load %arg2[%c2_14, %c0_15, %c0_16] : memref<9x512x128xbf16, #tpu.memory_space<vmem>>, vector<1x512x128xbf16>
    %16 = vector.shape_cast %15 : vector<1x512x128xbf16> to vector<512x128xbf16>
    %cst_17 = arith.constant dense<0.000000e+00> : vector<78x128xf32>
    %17 = tpu.matmul %14, %16, %cst_17 {dimension_numbers = #tpu.dot_dimension_numbers<[1], [0], [0], [1], [0, 0, 1, 1], [], []>} : vector<78x512xbf16>, vector<512x128xbf16>, vector<78x128xf32> -> vector<78x128xf32>
    %18 = arith.addf %12, %17 : vector<78x128xf32>
    %c0_18 = arith.constant 0 : index
    %c10 = arith.constant 10 : index
    %c0_19 = arith.constant 0 : index
    %19 = vector.load %arg1[%c0_18, %c10, %c0_19] : memref<1x100x512xbf16, #tpu.memory_space<vmem>>, vector<1x78x512xbf16>
    %20 = vector.shape_cast %19 : vector<1x78x512xbf16> to vector<78x512xbf16>
    %c3 = arith.constant 3 : index
    %c0_20 = arith.constant 0 : index
    %c0_21 = arith.constant 0 : index
    %21 = vector.load %arg2[%c3, %c0_20, %c0_21] : memref<9x512x128xbf16, #tpu.memory_space<vmem>>, vector<1x512x128xbf16>
    %22 = vector.shape_cast %21 : vector<1x512x128xbf16> to vector<512x128xbf16>
    %cst_22 = arith.constant dense<0.000000e+00> : vector<78x128xf32>
    %23 = tpu.matmul %20, %22, %cst_22 {dimension_numbers = #tpu.dot_dimension_numbers<[1], [0], [0], [1], [0, 0, 1, 1], [], []>} : vector<78x512xbf16>, vector<512x128xbf16>, vector<78x128xf32> -> vector<78x128xf32>
    %24 = arith.addf %18, %23 : vector<78x128xf32>
    %c0_23 = arith.constant 0 : index
    %c11 = arith.constant 11 : index
    %c0_24 = arith.constant 0 : index
    %25 = vector.load %arg1[%c0_23, %c11, %c0_24] : memref<1x100x512xbf16, #tpu.memory_space<vmem>>, vector<1x78x512xbf16>
    %26 = vector.shape_cast %25 : vector<1x78x512xbf16> to vector<78x512xbf16>
    %c4 = arith.constant 4 : index
    %c0_25 = arith.constant 0 : index
    %c0_26 = arith.constant 0 : index
    %27 = vector.load %arg2[%c4, %c0_25, %c0_26] : memref<9x512x128xbf16, #tpu.memory_space<vmem>>, vector<1x512x128xbf16>
    %28 = vector.shape_cast %27 : vector<1x512x128xbf16> to vector<512x128xbf16>
    %cst_27 = arith.constant dense<0.000000e+00> : vector<78x128xf32>
    %29 = tpu.matmul %26, %28, %cst_27 {dimension_numbers = #tpu.dot_dimension_numbers<[1], [0], [0], [1], [0, 0, 1, 1], [], []>} : vector<78x512xbf16>, vector<512x128xbf16>, vector<78x128xf32> -> vector<78x128xf32>
    %30 = arith.addf %24, %29 : vector<78x128xf32>
    %c0_28 = arith.constant 0 : index
    %c12 = arith.constant 12 : index
    %c0_29 = arith.constant 0 : index
    %31 = vector.load %arg1[%c0_28, %c12, %c0_29] : memref<1x100x512xbf16, #tpu.memory_space<vmem>>, vector<1x78x512xbf16>
    %32 = vector.shape_cast %31 : vector<1x78x512xbf16> to vector<78x512xbf16>
    %c5 = arith.constant 5 : index
    %c0_30 = arith.constant 0 : index
    %c0_31 = arith.constant 0 : index
    %33 = vector.load %arg2[%c5, %c0_30, %c0_31] : memref<9x512x128xbf16, #tpu.memory_space<vmem>>, vector<1x512x128xbf16>
    %34 = vector.shape_cast %33 : vector<1x512x128xbf16> to vector<512x128xbf16>
    %cst_32 = arith.constant dense<0.000000e+00> : vector<78x128xf32>
    %35 = tpu.matmul %32, %34, %cst_32 {dimension_numbers = #tpu.dot_dimension_numbers<[1], [0], [0], [1], [0, 0, 1, 1], [], []>} : vector<78x512xbf16>, vector<512x128xbf16>, vector<78x128xf32> -> vector<78x128xf32>
    %36 = arith.addf %30, %35 : vector<78x128xf32>
    %c0_33 = arith.constant 0 : index
    %c20 = arith.constant 20 : index
    %c0_34 = arith.constant 0 : index
    %37 = vector.load %arg1[%c0_33, %c20, %c0_34] : memref<1x100x512xbf16, #tpu.memory_space<vmem>>, vector<1x78x512xbf16>
    %38 = vector.shape_cast %37 : vector<1x78x512xbf16> to vector<78x512xbf16>
    %c6 = arith.constant 6 : index
    %c0_35 = arith.constant 0 : index
    %c0_36 = arith.constant 0 : index
    %39 = vector.load %arg2[%c6, %c0_35, %c0_36] : memref<9x512x128xbf16, #tpu.memory_space<vmem>>, vector<1x512x128xbf16>
    %40 = vector.shape_cast %39 : vector<1x512x128xbf16> to vector<512x128xbf16>
    %cst_37 = arith.constant dense<0.000000e+00> : vector<78x128xf32>
    %41 = tpu.matmul %38, %40, %cst_37 {dimension_numbers = #tpu.dot_dimension_numbers<[1], [0], [0], [1], [0, 0, 1, 1], [], []>} : vector<78x512xbf16>, vector<512x128xbf16>, vector<78x128xf32> -> vector<78x128xf32>
    %42 = arith.addf %36, %41 : vector<78x128xf32>
    %c0_38 = arith.constant 0 : index
    %c21 = arith.constant 21 : index
    %c0_39 = arith.constant 0 : index
    %43 = vector.load %arg1[%c0_38, %c21, %c0_39] : memref<1x100x512xbf16, #tpu.memory_space<vmem>>, vector<1x78x512xbf16>
    %44 = vector.shape_cast %43 : vector<1x78x512xbf16> to vector<78x512xbf16>
    %c7 = arith.constant 7 : index
    %c0_40 = arith.constant 0 : index
    %c0_41 = arith.constant 0 : index
    %45 = vector.load %arg2[%c7, %c0_40, %c0_41] : memref<9x512x128xbf16, #tpu.memory_space<vmem>>, vector<1x512x128xbf16>
    %46 = vector.shape_cast %45 : vector<1x512x128xbf16> to vector<512x128xbf16>
    %cst_42 = arith.constant dense<0.000000e+00> : vector<78x128xf32>
    %47 = tpu.matmul %44, %46, %cst_42 {dimension_numbers = #tpu.dot_dimension_numbers<[1], [0], [0], [1], [0, 0, 1, 1], [], []>} : vector<78x512xbf16>, vector<512x128xbf16>, vector<78x128xf32> -> vector<78x128xf32>
    %48 = arith.addf %42, %47 : vector<78x128xf32>
    %c0_43 = arith.constant 0 : index
    %c22 = arith.constant 22 : index
    %c0_44 = arith.constant 0 : index
    %49 = vector.load %arg1[%c0_43, %c22, %c0_44] : memref<1x100x512xbf16, #tpu.memory_space<vmem>>, vector<1x78x512xbf16>
    %50 = vector.shape_cast %49 : vector<1x78x512xbf16> to vector<78x512xbf16>
    %c8 = arith.constant 8 : index
    %c0_45 = arith.constant 0 : index
    %c0_46 = arith.constant 0 : index
    %51 = vector.load %arg2[%c8, %c0_45, %c0_46] : memref<9x512x128xbf16, #tpu.memory_space<vmem>>, vector<1x512x128xbf16>
    %52 = vector.shape_cast %51 : vector<1x512x128xbf16> to vector<512x128xbf16>
    %cst_47 = arith.constant dense<0.000000e+00> : vector<78x128xf32>
    %53 = tpu.matmul %50, %52, %cst_47 {dimension_numbers = #tpu.dot_dimension_numbers<[1], [0], [0], [1], [0, 0, 1, 1], [], []>} : vector<78x512xbf16>, vector<512x128xbf16>, vector<78x128xf32> -> vector<78x128xf32>
    %54 = arith.addf %48, %53 : vector<78x128xf32>
    %c0_48 = arith.constant 0 : index
    %c0_49 = arith.constant 0 : index
    %55 = vector.load %arg3[%c0_48, %c0_49] : memref<1x128xf32, #tpu.memory_space<vmem>>, vector<1x128xf32>
    %56 = vector.broadcast %55 : vector<1x128xf32> to vector<78x128xf32>
    %57 = arith.addf %54, %56 : vector<78x128xf32>
    %cst_50 = arith.constant 0.000000e+00 : f32
    %58 = vector.broadcast %cst_50 : f32 to vector<78x128xf32>
    %59 = arith.maximumf %57, %58 : vector<78x128xf32>
    %60 = arith.truncf %59 : vector<78x128xf32> to vector<78x128xbf16>
    %c0_51 = arith.constant 0 : index
    %c0_52 = arith.constant 0 : index
    %c0_53 = arith.constant 0 : index
    %61 = vector.load %arg4[%c0_51, %c0_52, %c0_53] : memref<1x78x128xbf16, #tpu.memory_space<vmem>>, vector<1x78x128xbf16>
    %62 = vector.shape_cast %61 : vector<1x78x128xbf16> to vector<78x128xbf16>
    %63 = vector.shape_cast %60 : vector<78x128xbf16> to vector<1x78x128xbf16>
    tpu.vector_store %arg4[%c0_51, %c0_52, %c0_53], %63 {strides = array<i32>} : memref<1x78x128xbf16, #tpu.memory_space<vmem>>, vector<1x78x128xbf16>,
    return
  }
  func.func @transform_0(%arg0: i32) -> (i32, i32, i32) {
    %c0_i32 = arith.constant 0 : i32
    %c0_i32_0 = arith.constant 0 : i32
    %c0_i32_1 = arith.constant 0 : i32
    return %arg0, %c0_i32, %c0_i32_0 : i32, i32, i32
  }
  func.func @transform_1(%arg0: i32) -> (i32, i32, i32) {
    %c0_i32 = arith.constant 0 : i32
    %c0_i32_0 = arith.constant 0 : i32
    %c0_i32_1 = arith.constant 0 : i32
    %c0_i32_2 = arith.constant 0 : i32
    return %c0_i32, %c0_i32_0, %c0_i32_1 : i32, i32, i32
  }
  func.func @transform_2(%arg0: i32) -> (i32, i32) {
    %c0_i32 = arith.constant 0 : i32
    %c0_i32_0 = arith.constant 0 : i32
    %c0_i32_1 = arith.constant 0 : i32
    return %c0_i32, %c0_i32_0 : i32, i32
  }
  func.func @transform_3(%arg0: i32) -> (i32, i32, i32) {
    %c0_i32 = arith.constant 0 : i32
    %c0_i32_0 = arith.constant 0 : i32
    %c0_i32_1 = arith.constant 0 : i32
    return %arg0, %c0_i32, %c0_i32_0 : i32, i32, i32
  }
}

module attributes {stable_mosaic.version = 11 : i64} {
  func.func @_conv_quant_kernel(%arg0: i32, %arg1: memref<1x64x128xbf16, #tpu.memory_space<vmem>>, %arg2: memref<4x128x128xbf16, #tpu.memory_space<vmem>>, %arg3: memref<1x128xf32, #tpu.memory_space<vmem>>, %arg4: memref<1x55x128xf32, #tpu.memory_space<vmem>>, %arg5: memref<1x55x128xi32, #tpu.memory_space<vmem>>) attributes {dimension_semantics = [#tpu.dimension_semantics<parallel>], iteration_bounds = array<i64: 2>, scalar_prefetch = 0 : i64, scratch_operands = 0 : i64, tpu.core_type = #tpu.core_type<tc>, window_params = [{transform_indices = @transform_0, window_bounds = array<i64: 1, 64, 128>}, {pipeline_mode = #tpu.pipeline_mode<synchronous>, transform_indices = @transform_1, window_bounds = array<i64: 4, 128, 128>}, {pipeline_mode = #tpu.pipeline_mode<synchronous>, transform_indices = @transform_2, window_bounds = array<i64: 1, 128>}, {transform_indices = @transform_3, window_bounds = array<i64: 1, 55, 128>}, {transform_indices = @transform_4, window_bounds = array<i64: 1, 55, 128>}]} {
    %cst = arith.constant 0.000000e+00 : f32
    %0 = vector.broadcast %cst : f32 to vector<55x128xf32>
    %c0 = arith.constant 0 : index
    %c0_0 = arith.constant 0 : index
    %c0_1 = arith.constant 0 : index
    %1 = vector.load %arg1[%c0, %c0_0, %c0_1] : memref<1x64x128xbf16, #tpu.memory_space<vmem>>, vector<1x55x128xbf16>
    %2 = vector.shape_cast %1 : vector<1x55x128xbf16> to vector<55x128xbf16>
    %c0_2 = arith.constant 0 : index
    %c0_3 = arith.constant 0 : index
    %c0_4 = arith.constant 0 : index
    %3 = vector.load %arg2[%c0_2, %c0_3, %c0_4] : memref<4x128x128xbf16, #tpu.memory_space<vmem>>, vector<1x128x128xbf16>
    %4 = vector.shape_cast %3 : vector<1x128x128xbf16> to vector<128x128xbf16>
    %cst_5 = arith.constant dense<0.000000e+00> : vector<55x128xf32>
    %5 = tpu.matmul %2, %4, %cst_5 {dimension_numbers = #tpu.dot_dimension_numbers<[1], [0], [0], [1], [0, 0, 1, 1], [], []>} : vector<55x128xbf16>, vector<128x128xbf16>, vector<55x128xf32> -> vector<55x128xf32>
    %6 = arith.addf %0, %5 : vector<55x128xf32>
    %c0_6 = arith.constant 0 : index
    %c1 = arith.constant 1 : index
    %c0_7 = arith.constant 0 : index
    %7 = vector.load %arg1[%c0_6, %c1, %c0_7] : memref<1x64x128xbf16, #tpu.memory_space<vmem>>, vector<1x55x128xbf16>
    %8 = vector.shape_cast %7 : vector<1x55x128xbf16> to vector<55x128xbf16>
    %c1_8 = arith.constant 1 : index
    %c0_9 = arith.constant 0 : index
    %c0_10 = arith.constant 0 : index
    %9 = vector.load %arg2[%c1_8, %c0_9, %c0_10] : memref<4x128x128xbf16, #tpu.memory_space<vmem>>, vector<1x128x128xbf16>
    %10 = vector.shape_cast %9 : vector<1x128x128xbf16> to vector<128x128xbf16>
    %cst_11 = arith.constant dense<0.000000e+00> : vector<55x128xf32>
    %11 = tpu.matmul %8, %10, %cst_11 {dimension_numbers = #tpu.dot_dimension_numbers<[1], [0], [0], [1], [0, 0, 1, 1], [], []>} : vector<55x128xbf16>, vector<128x128xbf16>, vector<55x128xf32> -> vector<55x128xf32>
    %12 = arith.addf %6, %11 : vector<55x128xf32>
    %c0_12 = arith.constant 0 : index
    %c8 = arith.constant 8 : index
    %c0_13 = arith.constant 0 : index
    %13 = vector.load %arg1[%c0_12, %c8, %c0_13] : memref<1x64x128xbf16, #tpu.memory_space<vmem>>, vector<1x55x128xbf16>
    %14 = vector.shape_cast %13 : vector<1x55x128xbf16> to vector<55x128xbf16>
    %c2 = arith.constant 2 : index
    %c0_14 = arith.constant 0 : index
    %c0_15 = arith.constant 0 : index
    %15 = vector.load %arg2[%c2, %c0_14, %c0_15] : memref<4x128x128xbf16, #tpu.memory_space<vmem>>, vector<1x128x128xbf16>
    %16 = vector.shape_cast %15 : vector<1x128x128xbf16> to vector<128x128xbf16>
    %cst_16 = arith.constant dense<0.000000e+00> : vector<55x128xf32>
    %17 = tpu.matmul %14, %16, %cst_16 {dimension_numbers = #tpu.dot_dimension_numbers<[1], [0], [0], [1], [0, 0, 1, 1], [], []>} : vector<55x128xbf16>, vector<128x128xbf16>, vector<55x128xf32> -> vector<55x128xf32>
    %18 = arith.addf %12, %17 : vector<55x128xf32>
    %c0_17 = arith.constant 0 : index
    %c9 = arith.constant 9 : index
    %c0_18 = arith.constant 0 : index
    %19 = vector.load %arg1[%c0_17, %c9, %c0_18] : memref<1x64x128xbf16, #tpu.memory_space<vmem>>, vector<1x55x128xbf16>
    %20 = vector.shape_cast %19 : vector<1x55x128xbf16> to vector<55x128xbf16>
    %c3 = arith.constant 3 : index
    %c0_19 = arith.constant 0 : index
    %c0_20 = arith.constant 0 : index
    %21 = vector.load %arg2[%c3, %c0_19, %c0_20] : memref<4x128x128xbf16, #tpu.memory_space<vmem>>, vector<1x128x128xbf16>
    %22 = vector.shape_cast %21 : vector<1x128x128xbf16> to vector<128x128xbf16>
    %cst_21 = arith.constant dense<0.000000e+00> : vector<55x128xf32>
    %23 = tpu.matmul %20, %22, %cst_21 {dimension_numbers = #tpu.dot_dimension_numbers<[1], [0], [0], [1], [0, 0, 1, 1], [], []>} : vector<55x128xbf16>, vector<128x128xbf16>, vector<55x128xf32> -> vector<55x128xf32>
    %24 = arith.addf %18, %23 : vector<55x128xf32>
    %c0_22 = arith.constant 0 : index
    %c0_23 = arith.constant 0 : index
    %c0_24 = arith.constant 0 : index
    %25 = vector.load %arg4[%c0_22, %c0_23, %c0_24] : memref<1x55x128xf32, #tpu.memory_space<vmem>>, vector<1x55x128xf32>
    %26 = vector.shape_cast %25 : vector<1x55x128xf32> to vector<55x128xf32>
    %27 = vector.shape_cast %24 : vector<55x128xf32> to vector<1x55x128xf32>
    tpu.vector_store %arg4[%c0_22, %c0_23, %c0_24], %27 {strides = array<i32>} : memref<1x55x128xf32, #tpu.memory_space<vmem>>, vector<1x55x128xf32>,
    %c0_25 = arith.constant 0 : index
    %c0_26 = arith.constant 0 : index
    %28 = vector.load %arg3[%c0_25, %c0_26] : memref<1x128xf32, #tpu.memory_space<vmem>>, vector<1x128xf32>
    %29 = vector.broadcast %28 : vector<1x128xf32> to vector<55x128xf32>
    %30 = arith.subf %24, %29 : vector<55x128xf32>
    %31 = math.roundeven %30 : vector<55x128xf32>
    %32 = arith.fptosi %31 : vector<55x128xf32> to vector<55x128xi32>
    %c0_27 = arith.constant 0 : index
    %c0_28 = arith.constant 0 : index
    %c0_29 = arith.constant 0 : index
    %33 = vector.load %arg5[%c0_27, %c0_28, %c0_29] : memref<1x55x128xi32, #tpu.memory_space<vmem>>, vector<1x55x128xi32>
    %34 = vector.shape_cast %33 : vector<1x55x128xi32> to vector<55x128xi32>
    %35 = vector.shape_cast %32 : vector<55x128xi32> to vector<1x55x128xi32>
    tpu.vector_store %arg5[%c0_27, %c0_28, %c0_29], %35 {strides = array<i32>} : memref<1x55x128xi32, #tpu.memory_space<vmem>>, vector<1x55x128xi32>,
    return
  }
  func.func @transform_0(%arg0: i32) -> (i32, i32, i32) {
    %c0_i32 = arith.constant 0 : i32
    %c0_i32_0 = arith.constant 0 : i32
    %c0_i32_1 = arith.constant 0 : i32
    return %arg0, %c0_i32, %c0_i32_0 : i32, i32, i32
  }
  func.func @transform_1(%arg0: i32) -> (i32, i32, i32) {
    %c0_i32 = arith.constant 0 : i32
    %c0_i32_0 = arith.constant 0 : i32
    %c0_i32_1 = arith.constant 0 : i32
    %c0_i32_2 = arith.constant 0 : i32
    return %c0_i32, %c0_i32_0, %c0_i32_1 : i32, i32, i32
  }
  func.func @transform_2(%arg0: i32) -> (i32, i32) {
    %c0_i32 = arith.constant 0 : i32
    %c0_i32_0 = arith.constant 0 : i32
    %c0_i32_1 = arith.constant 0 : i32
    return %c0_i32, %c0_i32_0 : i32, i32
  }
  func.func @transform_3(%arg0: i32) -> (i32, i32, i32) {
    %c0_i32 = arith.constant 0 : i32
    %c0_i32_0 = arith.constant 0 : i32
    %c0_i32_1 = arith.constant 0 : i32
    return %arg0, %c0_i32, %c0_i32_0 : i32, i32, i32
  }
  func.func @transform_4(%arg0: i32) -> (i32, i32, i32) {
    %c0_i32 = arith.constant 0 : i32
    %c0_i32_0 = arith.constant 0 : i32
    %c0_i32_1 = arith.constant 0 : i32
    return %arg0, %c0_i32, %c0_i32_0 : i32, i32, i32
  }
}

</mosaic_0001>

<llo_original>
// kernel: _encode.3
$region0: #{_encode.3}
  #allocation0 [shape = 'u32[]', space=smem, size = 0x4, offset = 0x4, fixed_abs, tag = 'smem constant byte address 0x4 - core index']
  #allocation1 [shape = 'u32[72,128]{1,0:T(1,128)}', space=vmem, size = 0x9000, scoped, tag = 'internal scratch']
  %s0 = inlined_call_operand.vmem [shape: bf16[2,324,16], index: 0, kind: input, shape index: {}]
  %s1 = inlined_call_operand.vmem [shape: bf16[9,16,128], index: 1, kind: input, shape index: {}]
  %s2 = inlined_call_operand.vmem [shape: f32[1,128], index: 2, kind: input, shape index: {}]
  %s3 = inlined_call_operand.vmem [shape: bf16[2,286,128], index: 3, kind: output, shape index: {}]
  %s4 = sld [smem:[#allocation0]]
  $region45: #{_encode.3} parent=0
    _
  %s6 = ssub.s32 1, %s4
  %s7 = scalar_select 0, %s6, %s4
  loop: start=0, step=1, limit=4
  $region2: #{_encode.3} parent=0 // loop_pre_header
    _
  $region3: #{_encode.3} parent=0 // loop_header
    %s9 = sphi 0, %s13
    %p10 = scmp.ge.s32.totalorder %s9, 4
    %s19 = sphi 0, %s21
    %s22 = sphi 0, %s19
    %s23 = sphi 0, %s22
    %s39 = sphi 0, %s23
    %s43 = sphi 0, %s43
    %s45 = sphi 0, %s43
    %s46 = sphi 0, %s45
    %s60 = sphi 0, %s46
    %s64 = sphi 0, %s64
    %s66 = sphi 0, %s64
    %s67 = sphi 0, %s66
    %s81 = sphi 0, %s67
    %s87 = sphi 0, %s89
    %s90 = sphi 0, %s87
    %s91 = sphi 0, %s90
    %s107 = sphi 0, %s91
  $region4: #{_encode.3} parent=0 // loop_header_branch
    %12 = sbr.rel (%p10) target = $region8
  $region5: #{_encode.3} parent=0 // loop_body
    %s14 = ssub.s32 %s9, 1
    %s15 = ssub.s32 %s9, 2
    %s16 = sadd.s32 %s9, 1
    %s17 = ssub.s32 %s9, %s16
    %p18 = scmp.eq.s32.totalorder %s17, 0
    %s20 = sadd.s32 %s19, 1
    %s21 = scalar_select %p18, %s19, %s20
    %p24 = pneg %p18
    %p25 = scmp.eq.s32.totalorder %s9, 1
    %p26 = por %p24, %p25
    %p27 = scmp.ne.s32.totalorder %s19, %s22
    %p28 = scmp.eq.s32.totalorder %s9, 0
    %p29 = por %p27, %p28
    %p30 = scmp.ne.s32.totalorder %s19, %s22
    %p31 = scmp.eq.s32.totalorder %s14, 1
    %p32 = por %p30, %p31
    %p33 = scmp.ne.s32.totalorder %s22, %s23
    %p34 = scmp.eq.s32.totalorder %s14, 0
    %p35 = por %p33, %p34
    %p36 = scmp.ne.s32.totalorder %s22, %s23
    %p37 = scmp.eq.s32.totalorder %s15, 1
    %p38 = por %p36, %p37
    %p40 = scmp.ne.s32.totalorder %s23, %s39
    %p41 = scmp.eq.s32.totalorder %s15, 0
    %p42 = por %p40, %p41
    %s44 = sadd.s32 %s43, 1
    %p47 = scmp.eq.s32.totalorder %s9, 1
    %p48 = scmp.ne.s32.totalorder %s43, %s45
    %p49 = scmp.eq.s32.totalorder %s9, 0
    %p50 = por %p48, %p49
    %p51 = scmp.ne.s32.totalorder %s43, %s45
    %p52 = scmp.eq.s32.totalorder %s14, 1
    %p53 = por %p51, %p52
    %p54 = scmp.ne.s32.totalorder %s45, %s46
    %p55 = scmp.eq.s32.totalorder %s14, 0
    %p56 = por %p54, %p55
    %p57 = scmp.ne.s32.totalorder %s45, %s46
    %p58 = scmp.eq.s32.totalorder %s15, 1
    %p59 = por %p57, %p58
    %p61 = scmp.ne.s32.totalorder %s46, %s60
    %p62 = scmp.eq.s32.totalorder %s15, 0
    %p63 = por %p61, %p62
    %s65 = sadd.s32 %s64, 1
    %p68 = scmp.eq.s32.totalorder %s9, 1
    %p69 = scmp.ne.s32.totalorder %s64, %s66
    %p70 = scmp.eq.s32.totalorder %s9, 0
    %p71 = por %p69, %p70
    %p72 = scmp.ne.s32.totalorder %s64, %s66
    %p73 = scmp.eq.s32.totalorder %s14, 1
    %p74 = por %p72, %p73
    %p75 = scmp.ne.s32.totalorder %s66, %s67
    %p76 = scmp.eq.s32.totalorder %s14, 0
    %p77 = por %p75, %p76
    %p78 = scmp.ne.s32.totalorder %s66, %s67
    %p79 = scmp.eq.s32.totalorder %s15, 1
    %p80 = por %p78, %p79
    %p82 = scmp.ne.s32.totalorder %s67, %s81
    %p83 = scmp.eq.s32.totalorder %s15, 0
    %p84 = por %p82, %p83
    %s85 = ssub.s32 %s9, %s16
    %p86 = scmp.eq.s32.totalorder %s85, 0
    %s88 = sadd.s32 %s87, 1
    %s89 = scalar_select %p86, %s87, %s88
    %p92 = pneg %p86
    %p93 = scmp.eq.s32.totalorder %s9, 1
    %p94 = por %p92, %p93
    %p95 = scmp.ne.s32.totalorder %s87, %s90
    %p96 = scmp.eq.s32.totalorder %s9, 0
    %p97 = por %p95, %p96
    %p98 = scmp.ne.s32.totalorder %s87, %s90
    %p99 = scmp.eq.s32.totalorder %s14, 1
    %p100 = por %p98, %p99
    %p101 = scmp.ne.s32.totalorder %s90, %s91
    %p102 = scmp.eq.s32.totalorder %s14, 0
    %p103 = por %p101, %p102
    %p104 = scmp.ne.s32.totalorder %s90, %s91
    %p105 = scmp.eq.s32.totalorder %s15, 1
    %p106 = por %p104, %p105
    %p108 = scmp.ne.s32.totalorder %s91, %s107
    %p109 = scmp.eq.s32.totalorder %s15, 0
    %p110 = por %p108, %p109
    %p111 = scmp.le.s32.totalorder 1, %s9
    %p112 = scmp.lt.s32.totalorder %s9, 3
    %p113 = pnand %p111, %p112
    %p114 = pneg %p113
    // Predicated region
    $region9: #{_encode.3} parent=5 // pred_check
      _
    $region10: #{_encode.3} parent=5 // pred_check_branch
      %116 = sbr.rel (%p113) target = $region12
    $region11: #{_encode.3} parent=5 // pred_region
      %s117 = ssub.s32 %s9, 1
      // Predicated region
      $region13: #{_encode.3} parent=11 // pred_check
        %p118 = pneg %p56
      $region14: #{_encode.3} parent=11 // pred_check_branch
        %120 = sbr.rel (%p118) target = $region16
      $region15: #{_encode.3} parent=11 // pred_region
        _
      $region16: #{_encode.3} parent=11 // pred_fallthru
        _
      // Predicated region
      $region17: #{_encode.3} parent=11 // pred_check
        %p121 = pneg %p77
      $region18: #{_encode.3} parent=11 // pred_check_branch
        %123 = sbr.rel (%p121) target = $region20
      $region19: #{_encode.3} parent=11 // pred_region
        _
      $region20: #{_encode.3} parent=11 // pred_fallthru
        _
    $region12: #{_encode.3} parent=5 // pred_fallthru
      _
    %p124 = scmp.lt.s32.totalorder %s9, 2
    // Predicated region
    $region21: #{_encode.3} parent=5 // pred_check
      %p125 = pneg %p124
    $region22: #{_encode.3} parent=5 // pred_check_branch
      %127 = sbr.rel (%p125) target = $region24
    $region23: #{_encode.3} parent=5 // pred_region
      // Predicated region
      $region25: #{_encode.3} parent=23 // pred_check
        %p128 = pneg %p29
      $region26: #{_encode.3} parent=23 // pred_check_branch
        %130 = sbr.rel (%p128) target = $region28
      $region27: #{_encode.3} parent=23 // pred_region
        %p131 = scmp.lt.s32.totalorder %s9, 1
        %s132 = scalar_select %p131, %s9, 1
        %s133 = smul.addr %s132, 41
        %s134 = smul.addr %s133, 4
        %s135 = scalar_lea.vmem %s0, %s134
      $region28: #{_encode.3} parent=23 // pred_fallthru
        _
    $region24: #{_encode.3} parent=5 // pred_fallthru
      _
    %p136 = scmp.le.s32.totalorder 1, %s9
    %p137 = scmp.lt.s32.totalorder %s9, 3
    %p138 = pnand %p136, %p137
    %p139 = pneg %p138
    // Predicated region
    $region29: #{_encode.3} parent=5 // pred_check
      _
    $region30: #{_encode.3} parent=5 // pred_check_branch
      %141 = sbr.rel (%p138) target = $region32
    $region31: #{_encode.3} parent=5 // pred_region
      %s142 = ssub.s32 %s9, 1
      %p143 = scmp.lt.s32.totalorder %s14, 1
      %s144 = scalar_select %p143, %s14, 1
      %s145 = smul.addr %s144, 41
      %s146 = smul.addr %s145, 4
      %s147 = scalar_lea.vmem %s0, %s146
      %p148 = pneg %p35
      %p149 = pneg %p32
      %p150 = pneg %p56
      %p151 = pneg %p53
      %p152 = pneg %p77
      %p153 = pneg %p74
      %p154 = pneg %p103
      %p155 = pneg %p100
      %p156 = scmp.lt.s32.totalorder %s14, 1
      %s157 = scalar_select %p156, %s14, 1
      %s158 = smul.addr %s157, 36
      %s159 = smul.addr %s158, 4
      %s160 = scalar_lea.vmem %s3, %s159
      %p161 = scmp.lt.s32.totalorder %s14, 1
      %s162 = scalar_select %p161, %s14, 1
      %s163 = smul.addr %s162, 41
      %s164 = smul.addr %s163, 4
      %s165 = scalar_lea.vmem %s0, %s164
      %p166 = scmp.lt.s32.totalorder %s14, 1
      %s167 = scalar_select %p166, %s14, 1
      %s168 = smul.addr %s167, 36
      %s169 = smul.addr %s168, 4
      %s170 = scalar_lea.vmem %s3, %s169
      %v172 = vld [vmem:[%s165] sm:$0xf]
      %v173 = vld [vmem:[%s165 + $0x4] sm:$0xf]
      %v174 = vld [vmem:[%s165 + $0x8] sm:$0xf]
      %v175 = vld [vmem:[%s165 + $0xc] sm:$0xf]
      %v176 = vld [vmem:[%s165 + $0x10] sm:$0xf]
      %v177 = vld [vmem:[%s165 + $0x14] sm:$0xf]
      %v178 = vld [vmem:[%s165 + $0x18] sm:$0xf]
      %v179 = vld [vmem:[%s165 + $0x1c] sm:$0xf]
      %v180 = vld [vmem:[%s165 + $0x20] sm:$0xf]
      %v181 = vld [vmem:[%s165 + $0x24] sm:$0xf]
      %v182 = vld [vmem:[%s165 + $0x28] sm:$0xf]
      %v183 = vld [vmem:[%s165 + $0x2c] sm:$0xf]
      %v184 = vld [vmem:[%s165 + $0x30] sm:$0xf]
      %v185 = vld [vmem:[%s165 + $0x34] sm:$0xf]
      %v186 = vld [vmem:[%s165 + $0x38] sm:$0xf]
      %v187 = vld [vmem:[%s165 + $0x3c] sm:$0xf]
      %v188 = vld [vmem:[%s165 + $0x40] sm:$0xf]
      %v189 = vld [vmem:[%s165 + $0x44] sm:$0xf]
      %v190 = vld [vmem:[%s165 + $0x48] sm:$0xf]
      %v191 = vld [vmem:[%s165 + $0x4c] sm:$0xf]
      %v192 = vld [vmem:[%s165 + $0x50] sm:$0xf]
      %v193 = vld [vmem:[%s165 + $0x54] sm:$0xf]
      %v194 = vld [vmem:[%s165 + $0x58] sm:$0xf]
      %v195 = vld [vmem:[%s165 + $0x5c] sm:$0xf]
      %v196 = vld [vmem:[%s165 + $0x60] sm:$0xf]
      %v197 = vld [vmem:[%s165 + $0x64] sm:$0xf]
      %v198 = vld [vmem:[%s165 + $0x68] sm:$0xf]
      %v199 = vld [vmem:[%s165 + $0x6c] sm:$0xf]
      %v200 = vld [vmem:[%s165 + $0x70] sm:$0xf]
      %v201 = vld [vmem:[%s165 + $0x74] sm:$0xf]
      %v202 = vld [vmem:[%s165 + $0x78] sm:$0xf]
      %v203 = vld [vmem:[%s165 + $0x7c] sm:$0xf]
      %v204 = vld [vmem:[%s165 + $0x80] sm:$0xf]
      %v205 = vld [vmem:[%s165 + $0x84] sm:$0xf]
      %v206 = vld [vmem:[%s165 + $0x88] sm:$0xf]
      %v207 = vld [vmem:[%s165 + $0x8c] sm:$0x7]
      %v208 = vld [vmem:[%s1] sm:$0xf]
      %v209 = vld [vmem:[%s1 + $0x4] sm:$0xf]
      %v210 = vld [vmem:[%s165 + $0x8c] sm:$0xf]
      %s211 = scalar_lea.vmem %s1, 8
      %v212 = vld [vmem:[%s211] sm:$0xf]
      %v213 = vld [vmem:[%s211 + $0x4] sm:$0xf]
      %v250 = vunpack.c.l.b16 %v172
      %v251 = vunpack.c.l.b16 %v173
      %v252 = vunpack.c.l.b16 %v174
      %v253 = vunpack.c.l.b16 %v175
      %v254 = vunpack.c.l.b16 %v176
      %v255 = vunpack.c.l.b16 %v177
      %v256 = vunpack.c.l.b16 %v178
      %v257 = vunpack.c.l.b16 %v179
      %v258 = vunpack.c.l.b16 %v180
      %v259 = vunpack.c.l.b16 %v181
      %v260 = vunpack.c.l.b16 %v182
      %v261 = vunpack.c.l.b16 %v183
      %v262 = vunpack.c.l.b16 %v184
      %v263 = vunpack.c.l.b16 %v185
      %v264 = vunpack.c.l.b16 %v186
      %v265 = vunpack.c.l.b16 %v187
      %v266 = vunpack.c.l.b16 %v188
      %v267 = vunpack.c.l.b16 %v189
      %v268 = vunpack.c.l.b16 %v190
      %v269 = vunpack.c.l.b16 %v191
      %v270 = vunpack.c.l.b16 %v192
      %v271 = vunpack.c.l.b16 %v193
      %v272 = vunpack.c.l.b16 %v194
      %v273 = vunpack.c.l.b16 %v195
      %v274 = vunpack.c.l.b16 %v196
      %v275 = vunpack.c.l.b16 %v197
      %v276 = vunpack.c.l.b16 %v198
      %v277 = vunpack.c.l.b16 %v199
      %v278 = vunpack.c.l.b16 %v200
      %v279 = vunpack.c.l.b16 %v201
      %v280 = vunpack.c.l.b16 %v202
      %v281 = vunpack.c.l.b16 %v203
      %v282 = vunpack.c.l.b16 %v204
      %v283 = vunpack.c.l.b16 %v205
      %v284 = vunpack.c.l.b16 %v206
      %v285 = vunpack.c.l.b16 %v210
      %v286 = vpack.c.b16 %v251, %v250
      %v287 = vpack.c.b16 %v253, %v252
      %v288 = vpack.c.b16 %v255, %v254
      %v289 = vpack.c.b16 %v257, %v256
      %v290 = vpack.c.b16 %v259, %v258
      %v291 = vpack.c.b16 %v261, %v260
      %v292 = vpack.c.b16 %v263, %v262
      %v293 = vpack.c.b16 %v265, %v264
      %v294 = vpack.c.b16 %v267, %v266
      %v295 = vpack.c.b16 %v269, %v268
      %v296 = vpack.c.b16 %v271, %v270
      %v297 = vpack.c.b16 %v273, %v272
      %v298 = vpack.c.b16 %v275, %v274
      %v299 = vpack.c.b16 %v277, %v276
      %v300 = vpack.c.b16 %v279, %v278
      %v301 = vpack.c.b16 %v281, %v280
      %v302 = vpack.c.b16 %v283, %v282
      %v303 = vpack.c.b16 %v285, %v284
      %vm304 = vsmask.f32 7424
      %v306 = vshrl.u32 %v286, 16
      %v308 = vshll.u32 %v286, 16
      %v310 = vrot.slane %v308, 1
      %v311 = vor.u32 %v306, %v310
      %v313 = vshll.u32 %v287, 16
      %v315 = vrot.slane %v313, 1
      %v316 = vsel %vm304, %v311, %v315
      %v317 = vshrl.u32 %v287, 16
      %v319 = vor.u32 %v317, %v315
      %v321 = vshll.u32 %v288, 16
      %v323 = vrot.slane %v321, 1
      %v324 = vsel %vm304, %v319, %v323
      %v325 = vshrl.u32 %v288, 16
      %v327 = vor.u32 %v325, %v323
      %v329 = vshll.u32 %v289, 16
      %v331 = vrot.slane %v329, 1
      %v332 = vsel %vm304, %v327, %v331
      %v333 = vshrl.u32 %v289, 16
      %v335 = vor.u32 %v333, %v331
      %v337 = vshll.u32 %v290, 16
      %v339 = vrot.slane %v337, 1
      %v340 = vsel %vm304, %v335, %v339
      %v341 = vshrl.u32 %v290, 16
      %v343 = vor.u32 %v341, %v339
      %v345 = vshll.u32 %v291, 16
      %v347 = vrot.slane %v345, 1
      %v348 = vsel %vm304, %v343, %v347
      %v349 = vshrl.u32 %v291, 16
      %v351 = vor.u32 %v349, %v347
      %v353 = vshll.u32 %v292, 16
      %v355 = vrot.slane %v353, 1
      %v356 = vsel %vm304, %v351, %v355
      %v357 = vshrl.u32 %v292, 16
      %v359 = vor.u32 %v357, %v355
      %v361 = vshll.u32 %v293, 16
      %v363 = vrot.slane %v361, 1
      %v364 = vsel %vm304, %v359, %v363
      %v365 = vshrl.u32 %v293, 16
      %v367 = vor.u32 %v365, %v363
      %v369 = vshll.u32 %v294, 16
      %v371 = vrot.slane %v369, 1
      %v372 = vsel %vm304, %v367, %v371
      %v373 = vshrl.u32 %v294, 16
      %v375 = vor.u32 %v373, %v371
      %v377 = vshll.u32 %v295, 16
      %v379 = vrot.slane %v377, 1
      %v380 = vsel %vm304, %v375, %v379
      %v381 = vshrl.u32 %v295, 16
      %v383 = vor.u32 %v381, %v379
      %v385 = vshll.u32 %v296, 16
      %v387 = vrot.slane %v385, 1
      %v388 = vsel %vm304, %v383, %v387
      %v389 = vshrl.u32 %v296, 16
      %v391 = vor.u32 %v389, %v387
      %v393 = vshll.u32 %v297, 16
      %v395 = vrot.slane %v393, 1
      %v396 = vsel %vm304, %v391, %v395
      %v397 = vshrl.u32 %v297, 16
      %v399 = vor.u32 %v397, %v395
      %v401 = vshll.u32 %v298, 16
      %v403 = vrot.slane %v401, 1
      %v404 = vsel %vm304, %v399, %v403
      %v405 = vshrl.u32 %v298, 16
      %v407 = vor.u32 %v405, %v403
      %v409 = vshll.u32 %v299, 16
      %v411 = vrot.slane %v409, 1
      %v412 = vsel %vm304, %v407, %v411
      %v413 = vshrl.u32 %v299, 16
      %v415 = vor.u32 %v413, %v411
      %v417 = vshll.u32 %v300, 16
      %v419 = vrot.slane %v417, 1
      %v420 = vsel %vm304, %v415, %v419
      %v421 = vshrl.u32 %v300, 16
      %v423 = vor.u32 %v421, %v419
      %v425 = vshll.u32 %v301, 16
      %v427 = vrot.slane %v425, 1
      %v428 = vsel %vm304, %v423, %v427
      %v429 = vshrl.u32 %v301, 16
      %v431 = vor.u32 %v429, %v427
      %v433 = vshll.u32 %v302, 16
      %v435 = vrot.slane %v433, 1
      %v436 = vsel %vm304, %v431, %v435
      %v437 = vshrl.u32 %v302, 16
      %v439 = vor.u32 %v437, %v435
      %v441 = vshll.u32 %v303, 16
      %v443 = vrot.slane %v441, 1
      %v444 = vsel %vm304, %v439, %v443
      %v445 = vshrl.u32 %v303, 16
      %v447 = vor.u32 %v445, %v443
      %v450 = vunpack.c.l.b16 %v212
      %v451 = vunpack.c.l.b16 %v213
      %v452 = vpack.c.b16 %v451, %v450
      %vm454 = vcmask 130048
      %v456 = vsel %vm454, %v316, 0
      %v459 = vsel %vm454, %v324, 0
      %v462 = vsel %vm454, %v332, 0
      %v465 = vsel %vm454, %v340, 0
      %v468 = vsel %vm454, %v348, 0
      %v471 = vsel %vm454, %v356, 0
      %v474 = vsel %vm454, %v364, 0
      %v477 = vsel %vm454, %v372, 0
      %v480 = vsel %vm454, %v380, 0
      %v483 = vsel %vm454, %v388, 0
      %v486 = vsel %vm454, %v396, 0
      %v489 = vsel %vm454, %v404, 0
      %v492 = vsel %vm454, %v412, 0
      %v495 = vsel %vm454, %v420, 0
      %v498 = vsel %vm454, %v428, 0
      %v501 = vsel %vm454, %v436, 0
      %v504 = vsel %vm454, %v444, 0
      %v507 = vsel %vm454, %v447, 0
      %509 = vmatpush.bf16.msra.mxu0 0
      %510 = vmatpush.bf16.msra.mxu0 0
      %511 = vmatpush.bf16.msra.mxu0 0
      %512 = vmatpush.bf16.msra.mxu0 0
      %513 = vmatpush.bf16.msra.mxu0 0
      %514 = vmatpush.bf16.msra.mxu0 0
      %515 = vmatpush.bf16.msra.mxu0 0
      %516 = vmatpush.bf16.msra.mxu0 %v452
      %517 = vmatmul.bf16.gmra.mxu0 %v456
      %v518 = vpop.f32.mrf.mxu0
      %v519 = vadd.f32 0.0, %v518
      %v520 = vpop.f32.mrf.mxu0
      %v521 = vadd.f32 0.0, %v520
      %522 = vmatmul.bf16.gmra.mxu0 %v459
      %v523 = vpop.f32.mrf.mxu0
      %v524 = vadd.f32 0.0, %v523
      %v525 = vpop.f32.mrf.mxu0
      %v526 = vadd.f32 0.0, %v525
      %527 = vmatmul.bf16.gmra.mxu0 %v462
      %v528 = vpop.f32.mrf.mxu0
      %v529 = vadd.f32 0.0, %v528
      %v530 = vpop.f32.mrf.mxu0
      %v531 = vadd.f32 0.0, %v530
      %532 = vmatmul.bf16.gmra.mxu0 %v465
      %v533 = vpop.f32.mrf.mxu0
      %v534 = vadd.f32 0.0, %v533
      %v535 = vpop.f32.mrf.mxu0
      %v536 = vadd.f32 0.0, %v535
      %537 = vmatmul.bf16.gmra.mxu0 %v468
      %v538 = vpop.f32.mrf.mxu0
      %v539 = vadd.f32 0.0, %v538
      %v540 = vpop.f32.mrf.mxu0
      %v541 = vadd.f32 0.0, %v540
      %542 = vmatmul.bf16.gmra.mxu0 %v471
      %v543 = vpop.f32.mrf.mxu0
      %v544 = vadd.f32 0.0, %v543
      %v545 = vpop.f32.mrf.mxu0
      %v546 = vadd.f32 0.0, %v545
      %547 = vmatmul.bf16.gmra.mxu0 %v474
      %v548 = vpop.f32.mrf.mxu0
      %v549 = vadd.f32 0.0, %v548
      %v550 = vpop.f32.mrf.mxu0
      %v551 = vadd.f32 0.0, %v550
      %552 = vmatmul.bf16.gmra.mxu0 %v477
      %v553 = vpop.f32.mrf.mxu0
      %v554 = vadd.f32 0.0, %v553
      %v555 = vpop.f32.mrf.mxu0
      %v556 = vadd.f32 0.0, %v555
      %557 = vmatmul.bf16.gmra.mxu0 %v480
      %v558 = vpop.f32.mrf.mxu0
      %v559 = vadd.f32 0.0, %v558
      %v560 = vpop.f32.mrf.mxu0
      %v561 = vadd.f32 0.0, %v560
      %562 = vmatmul.bf16.gmra.mxu0 %v483
      %v563 = vpop.f32.mrf.mxu0
      %v564 = vadd.f32 0.0, %v563
      %v565 = vpop.f32.mrf.mxu0
      %v566 = vadd.f32 0.0, %v565
      %567 = vmatmul.bf16.gmra.mxu0 %v486
      %v568 = vpop.f32.mrf.mxu0
      %v569 = vadd.f32 0.0, %v568
      %v570 = vpop.f32.mrf.mxu0
      %v571 = vadd.f32 0.0, %v570
      %572 = vmatmul.bf16.gmra.mxu0 %v489
      %v573 = vpop.f32.mrf.mxu0
      %v574 = vadd.f32 0.0, %v573
      %v575 = vpop.f32.mrf.mxu0
      %v576 = vadd.f32 0.0, %v575
      %577 = vmatmul.bf16.gmra.mxu0 %v492
      %v578 = vpop.f32.mrf.mxu0
      %v579 = vadd.f32 0.0, %v578
      %v580 = vpop.f32.mrf.mxu0
      %v581 = vadd.f32 0.0, %v580
      %582 = vmatmul.bf16.gmra.mxu0 %v495
      %v583 = vpop.f32.mrf.mxu0
      %v584 = vadd.f32 0.0, %v583
      %v585 = vpop.f32.mrf.mxu0
      %v586 = vadd.f32 0.0, %v585
      %587 = vmatmul.bf16.gmra.mxu0 %v498
      %v588 = vpop.f32.mrf.mxu0
      %v589 = vadd.f32 0.0, %v588
      %v590 = vpop.f32.mrf.mxu0
      %v591 = vadd.f32 0.0, %v590
      %592 = vmatmul.bf16.gmra.mxu0 %v501
      %v593 = vpop.f32.mrf.mxu0
      %v594 = vadd.f32 0.0, %v593
      %v595 = vpop.f32.mrf.mxu0
      %v596 = vadd.f32 0.0, %v595
      %597 = vmatmul.bf16.gmra.mxu0 %v504
      %v598 = vpop.f32.mrf.mxu0
      %v599 = vadd.f32 0.0, %v598
      %v600 = vpop.f32.mrf.mxu0
      %v601 = vadd.f32 0.0, %v600
      %602 = vmatmul.bf16.gmra.mxu0 %v507
      %v603 = vpop.f32.mrf.mxu0
      %v604 = vadd.f32 0.0, %v603
      %v605 = vpop.f32.mrf.mxu0
      %v606 = vadd.f32 0.0, %v605
      %607 = vdwg.mxu0
      %v609 = vunpack.c.l.b16 %v207
      %v610 = vpack.c.b16 %v609, %v284
      %v613 = vunpack.c.l.b16 %v208
      %v614 = vunpack.c.l.b16 %v209
      %v615 = vpack.c.b16 %v614, %v613
      %v617 = vsel %vm454, %v286, 0
      %v619 = vsel %vm454, %v287, 0
      %v621 = vsel %vm454, %v288, 0
      %v623 = vsel %vm454, %v289, 0
      %v625 = vsel %vm454, %v290, 0
      %v627 = vsel %vm454, %v291, 0
      %v629 = vsel %vm454, %v292, 0
      %v631 = vsel %vm454, %v293, 0
      %v633 = vsel %vm454, %v294, 0
      %v635 = vsel %vm454, %v295, 0
      %v637 = vsel %vm454, %v296, 0
      %v639 = vsel %vm454, %v297, 0
      %v641 = vsel %vm454, %v298, 0
      %v643 = vsel %vm454, %v299, 0
      %v645 = vsel %vm454, %v300, 0
      %v647 = vsel %vm454, %v301, 0
      %v649 = vsel %vm454, %v302, 0
      %v652 = vsel %vm454, %v610, 0
      %654 = vmatpush.bf16.msra.mxu0 0
      %655 = vmatpush.bf16.msra.mxu0 0
      %656 = vmatpush.bf16.msra.mxu0 0
      %657 = vmatpush.bf16.msra.mxu0 0
      %658 = vmatpush.bf16.msra.mxu0 0
      %659 = vmatpush.bf16.msra.mxu0 0
      %660 = vmatpush.bf16.msra.mxu0 0
      %661 = vmatpush.bf16.msra.mxu0 %v615
      %662 = vmatmul.bf16.gmra.mxu0 %v617
      %v663 = vpop.f32.mrf.mxu0
      %v664 = vadd.f32 %v519, %v663
      %v665 = vpop.f32.mrf.mxu0
      %v666 = vadd.f32 %v521, %v665
      %667 = vmatmul.bf16.gmra.mxu0 %v619
      %v668 = vpop.f32.mrf.mxu0
      %v669 = vadd.f32 %v524, %v668
      %v670 = vpop.f32.mrf.mxu0
      %v671 = vadd.f32 %v526, %v670
      %672 = vmatmul.bf16.gmra.mxu0 %v621
      %v673 = vpop.f32.mrf.mxu0
      %v674 = vadd.f32 %v529, %v673
      %v675 = vpop.f32.mrf.mxu0
      %v676 = vadd.f32 %v531, %v675
      %677 = vmatmul.bf16.gmra.mxu0 %v623
      %v678 = vpop.f32.mrf.mxu0
      %v679 = vadd.f32 %v534, %v678
      %v680 = vpop.f32.mrf.mxu0
      %v681 = vadd.f32 %v536, %v680
      %682 = vmatmul.bf16.gmra.mxu0 %v625
      %v683 = vpop.f32.mrf.mxu0
      %v684 = vadd.f32 %v539, %v683
      %v685 = vpop.f32.mrf.mxu0
      %v686 = vadd.f32 %v541, %v685
      %687 = vmatmul.bf16.gmra.mxu0 %v627
      %v688 = vpop.f32.mrf.mxu0
      %v689 = vadd.f32 %v544, %v688
      %v690 = vpop.f32.mrf.mxu0
      %v691 = vadd.f32 %v546, %v690
      %692 = vmatmul.bf16.gmra.mxu0 %v629
      %v693 = vpop.f32.mrf.mxu0
      %v694 = vadd.f32 %v549, %v693
      %v695 = vpop.f32.mrf.mxu0
      %v696 = vadd.f32 %v551, %v695
      %697 = vmatmul.bf16.gmra.mxu0 %v631
      %v698 = vpop.f32.mrf.mxu0
      %v699 = vadd.f32 %v554, %v698
      %v700 = vpop.f32.mrf.mxu0
      %v701 = vadd.f32 %v556, %v700
      %702 = vmatmul.bf16.gmra.mxu0 %v633
      %v703 = vpop.f32.mrf.mxu0
      %v704 = vadd.f32 %v559, %v703
      %v705 = vpop.f32.mrf.mxu0
      %v706 = vadd.f32 %v561, %v705
      %707 = vmatmul.bf16.gmra.mxu0 %v635
      %v708 = vpop.f32.mrf.mxu0
      %v709 = vadd.f32 %v564, %v708
      %v710 = vpop.f32.mrf.mxu0
      %v711 = vadd.f32 %v566, %v710
      %712 = vmatmul.bf16.gmra.mxu0 %v637
      %v713 = vpop.f32.mrf.mxu0
      %v714 = vadd.f32 %v569, %v713
      %v715 = vpop.f32.mrf.mxu0
      %v716 = vadd.f32 %v571, %v715
      %717 = vmatmul.bf16.gmra.mxu0 %v639
      %v718 = vpop.f32.mrf.mxu0
      %v719 = vadd.f32 %v574, %v718
      %v720 = vpop.f32.mrf.mxu0
      %v721 = vadd.f32 %v576, %v720
      %722 = vmatmul.bf16.gmra.mxu0 %v641
      %v723 = vpop.f32.mrf.mxu0
      %v724 = vadd.f32 %v579, %v723
      %v725 = vpop.f32.mrf.mxu0
      %v726 = vadd.f32 %v581, %v725
      %727 = vmatmul.bf16.gmra.mxu0 %v643
      %v728 = vpop.f32.mrf.mxu0
      %v729 = vadd.f32 %v584, %v728
      %v730 = vpop.f32.mrf.mxu0
      %v731 = vadd.f32 %v586, %v730
      %732 = vmatmul.bf16.gmra.mxu0 %v645
      %v733 = vpop.f32.mrf.mxu0
      %v734 = vadd.f32 %v589, %v733
      %v735 = vpop.f32.mrf.mxu0
      %v736 = vadd.f32 %v591, %v735
      %737 = vmatmul.bf16.gmra.mxu0 %v647
      %v738 = vpop.f32.mrf.mxu0
      %v739 = vadd.f32 %v594, %v738
      %v740 = vpop.f32.mrf.mxu0
      %v741 = vadd.f32 %v596, %v740
      %742 = vmatmul.bf16.gmra.mxu0 %v649
      %v743 = vpop.f32.mrf.mxu0
      %v744 = vadd.f32 %v599, %v743
      %v745 = vpop.f32.mrf.mxu0
      %v746 = vadd.f32 %v601, %v745
      %747 = vmatmul.bf16.gmra.mxu0 %v652
      %v748 = vpop.f32.mrf.mxu0
      %v749 = vadd.f32 %v604, %v748
      %v750 = vpop.f32.mrf.mxu0
      %v751 = vadd.f32 %v606, %v750
      %752 = vdwg.mxu0
      %v753 = vld [vmem:[%s165] sm:$0xe]
      %s754 = scalar_lea.vmem %s1, 16
      %v755 = vld [vmem:[%s754] sm:$0xf]
      %v756 = vld [vmem:[%s754 + $0x4] sm:$0xf]
      %v758 = vunpack.c.l.b16 %v753
      %v759 = vpack.c.b16 %v251, %v758
      %vm760 = vcmask 1046528
      %v761 = vrot.slane %v759, 1
      %v762 = vrot.slane %v287, 1
      %v763 = vsel %vm760, %v761, %v762
      %v764 = vrot.slane %v288, 1
      %v765 = vsel %vm760, %v762, %v764
      %v766 = vrot.slane %v289, 1
      %v767 = vsel %vm760, %v764, %v766
      %v768 = vrot.slane %v290, 1
      %v769 = vsel %vm760, %v766, %v768
      %v770 = vrot.slane %v291, 1
      %v771 = vsel %vm760, %v768, %v770
      %v772 = vrot.slane %v292, 1
      %v773 = vsel %vm760, %v770, %v772
      %v774 = vrot.slane %v293, 1
      %v775 = vsel %vm760, %v772, %v774
      %v776 = vrot.slane %v294, 1
      %v777 = vsel %vm760, %v774, %v776
      %v778 = vrot.slane %v295, 1
      %v779 = vsel %vm760, %v776, %v778
      %v780 = vrot.slane %v296, 1
      %v781 = vsel %vm760, %v778, %v780
      %v782 = vrot.slane %v297, 1
      %v783 = vsel %vm760, %v780, %v782
      %v784 = vrot.slane %v298, 1
      %v785 = vsel %vm760, %v782, %v784
      %v786 = vrot.slane %v299, 1
      %v787 = vsel %vm760, %v784, %v786
      %v788 = vrot.slane %v300, 1
      %v789 = vsel %vm760, %v786, %v788
      %v790 = vrot.slane %v301, 1
      %v791 = vsel %vm760, %v788, %v790
      %v792 = vrot.slane %v302, 1
      %v793 = vsel %vm760, %v790, %v792
      %v794 = vrot.slane %v303, 1
      %v795 = vsel %vm760, %v792, %v794
      %v798 = vunpack.c.l.b16 %v755
      %v799 = vunpack.c.l.b16 %v756
      %v800 = vpack.c.b16 %v799, %v798
      %v803 = vsel %vm454, %v763, 0
      %v806 = vsel %vm454, %v765, 0
      %v809 = vsel %vm454, %v767, 0
      %v812 = vsel %vm454, %v769, 0
      %v815 = vsel %vm454, %v771, 0
      %v818 = vsel %vm454, %v773, 0
      %v821 = vsel %vm454, %v775, 0
      %v824 = vsel %vm454, %v777, 0
      %v827 = vsel %vm454, %v779, 0
      %v830 = vsel %vm454, %v781, 0
      %v833 = vsel %vm454, %v783, 0
      %v836 = vsel %vm454, %v785, 0
      %v839 = vsel %vm454, %v787, 0
      %v842 = vsel %vm454, %v789, 0
      %v845 = vsel %vm454, %v791, 0
      %v848 = vsel %vm454, %v793, 0
      %v851 = vsel %vm454, %v795, 0
      %v854 = vsel %vm454, %v794, 0
      %856 = vmatpush.bf16.msra.mxu0 0
      %857 = vmatpush.bf16.msra.mxu0 0
      %858 = vmatpush.bf16.msra.mxu0 0
      %859 = vmatpush.bf16.msra.mxu0 0
      %860 = vmatpush.bf16.msra.mxu0 0
      %861 = vmatpush.bf16.msra.mxu0 0
      %862 = vmatpush.bf16.msra.mxu0 0
      %863 = vmatpush.bf16.msra.mxu0 %v800
      %864 = vmatmul.bf16.gmra.mxu0 %v803
      %v865 = vpop.f32.mrf.mxu0
      %v866 = vadd.f32 0.0, %v865
      %v867 = vpop.f32.mrf.mxu0
      %v868 = vadd.f32 0.0, %v867
      %869 = vmatmul.bf16.gmra.mxu0 %v806
      %v870 = vpop.f32.mrf.mxu0
      %v871 = vadd.f32 0.0, %v870
      %v872 = vpop.f32.mrf.mxu0
      %v873 = vadd.f32 0.0, %v872
      %874 = vmatmul.bf16.gmra.mxu0 %v809
      %v875 = vpop.f32.mrf.mxu0
      %v876 = vadd.f32 0.0, %v875
      %v877 = vpop.f32.mrf.mxu0
      %v878 = vadd.f32 0.0, %v877
      %879 = vmatmul.bf16.gmra.mxu0 %v812
      %v880 = vpop.f32.mrf.mxu0
      %v881 = vadd.f32 0.0, %v880
      %v882 = vpop.f32.mrf.mxu0
      %v883 = vadd.f32 0.0, %v882
      %884 = vmatmul.bf16.gmra.mxu0 %v815
      %v885 = vpop.f32.mrf.mxu0
      %v886 = vadd.f32 0.0, %v885
      %v887 = vpop.f32.mrf.mxu0
      %v888 = vadd.f32 0.0, %v887
      %889 = vmatmul.bf16.gmra.mxu0 %v818
      %v890 = vpop.f32.mrf.mxu0
      %v891 = vadd.f32 0.0, %v890
      %v892 = vpop.f32.mrf.mxu0
      %v893 = vadd.f32 0.0, %v892
      %894 = vmatmul.bf16.gmra.mxu0 %v821
      %v895 = vpop.f32.mrf.mxu0
      %v896 = vadd.f32 0.0, %v895
      %v897 = vpop.f32.mrf.mxu0
      %v898 = vadd.f32 0.0, %v897
      %899 = vmatmul.bf16.gmra.mxu0 %v824
      %v900 = vpop.f32.mrf.mxu0
      %v901 = vadd.f32 0.0, %v900
      %v902 = vpop.f32.mrf.mxu0
      %v903 = vadd.f32 0.0, %v902
      %904 = vmatmul.bf16.gmra.mxu0 %v827
      %v905 = vpop.f32.mrf.mxu0
      %v906 = vadd.f32 0.0, %v905
      %v907 = vpop.f32.mrf.mxu0
      %v908 = vadd.f32 0.0, %v907
      %909 = vmatmul.bf16.gmra.mxu0 %v830
      %v910 = vpop.f32.mrf.mxu0
      %v911 = vadd.f32 0.0, %v910
      %v912 = vpop.f32.mrf.mxu0
      %v913 = vadd.f32 0.0, %v912
      %914 = vmatmul.bf16.gmra.mxu0 %v833
      %v915 = vpop.f32.mrf.mxu0
      %v916 = vadd.f32 0.0, %v915
      %v917 = vpop.f32.mrf.mxu0
      %v918 = vadd.f32 0.0, %v917
      %919 = vmatmul.bf16.gmra.mxu0 %v836
      %v920 = vpop.f32.mrf.mxu0
      %v921 = vadd.f32 0.0, %v920
      %v922 = vpop.f32.mrf.mxu0
      %v923 = vadd.f32 0.0, %v922
      %924 = vmatmul.bf16.gmra.mxu0 %v839
      %v925 = vpop.f32.mrf.mxu0
      %v926 = vadd.f32 0.0, %v925
      %v927 = vpop.f32.mrf.mxu0
      %v928 = vadd.f32 0.0, %v927
      %929 = vmatmul.bf16.gmra.mxu0 %v842
      %v930 = vpop.f32.mrf.mxu0
      %v931 = vadd.f32 0.0, %v930
      %v932 = vpop.f32.mrf.mxu0
      %v933 = vadd.f32 0.0, %v932
      %934 = vmatmul.bf16.gmra.mxu0 %v845
      %v935 = vpop.f32.mrf.mxu0
      %v936 = vadd.f32 0.0, %v935
      %v937 = vpop.f32.mrf.mxu0
      %v938 = vadd.f32 0.0, %v937
      %939 = vmatmul.bf16.gmra.mxu0 %v848
      %v940 = vpop.f32.mrf.mxu0
      %v941 = vadd.f32 0.0, %v940
      %v942 = vpop.f32.mrf.mxu0
      %v943 = vadd.f32 0.0, %v942
      %944 = vmatmul.bf16.gmra.mxu0 %v851
      %v945 = vpop.f32.mrf.mxu0
      %v946 = vadd.f32 0.0, %v945
      %v947 = vpop.f32.mrf.mxu0
      %v948 = vadd.f32 0.0, %v947
      %949 = vmatmul.bf16.gmra.mxu0 %v854
      %v950 = vpop.f32.mrf.mxu0
      %v951 = vadd.f32 0.0, %v950
      %v952 = vpop.f32.mrf.mxu0
      %v953 = vadd.f32 0.0, %v952
      %954 = vdwg.mxu0
      %v955 = vadd.f32 %v664, %v866
      %v956 = vadd.f32 %v666, %v868
      %v957 = vadd.f32 %v669, %v871
      %v958 = vadd.f32 %v671, %v873
      %v959 = vadd.f32 %v674, %v876
      %v960 = vadd.f32 %v676, %v878
      %v961 = vadd.f32 %v679, %v881
      %v962 = vadd.f32 %v681, %v883
      %v963 = vadd.f32 %v684, %v886
      %v964 = vadd.f32 %v686, %v888
      %v965 = vadd.f32 %v689, %v891
      %v966 = vadd.f32 %v691, %v893
      %v967 = vadd.f32 %v694, %v896
      %v968 = vadd.f32 %v696, %v898
      %v969 = vadd.f32 %v699, %v901
      %v970 = vadd.f32 %v701, %v903
      %v971 = vadd.f32 %v704, %v906
      %v972 = vadd.f32 %v706, %v908
      %v973 = vadd.f32 %v709, %v911
      %v974 = vadd.f32 %v711, %v913
      %v975 = vadd.f32 %v714, %v916
      %v976 = vadd.f32 %v716, %v918
      %v977 = vadd.f32 %v719, %v921
      %v978 = vadd.f32 %v721, %v923
      %v979 = vadd.f32 %v724, %v926
      %v980 = vadd.f32 %v726, %v928
      %v981 = vadd.f32 %v729, %v931
      %v982 = vadd.f32 %v731, %v933
      %v983 = vadd.f32 %v734, %v936
      %v984 = vadd.f32 %v736, %v938
      %v985 = vadd.f32 %v739, %v941
      %v986 = vadd.f32 %v741, %v943
      %v987 = vadd.f32 %v744, %v946
      %v988 = vadd.f32 %v746, %v948
      %v989 = vadd.f32 %v749, %v951
      %v990 = vadd.f32 %v751, %v953
      %v991 = vld [vmem:[%s165 + $0x8] sm:$0xe]
      %v992 = vld [vmem:[%s165 + $0xc] sm:$0xf]
      %v993 = vld [vmem:[%s165 + $0x10] sm:$0xf]
      %v994 = vld [vmem:[%s165 + $0x14] sm:$0xf]
      %v995 = vld [vmem:[%s165 + $0x18] sm:$0xf]
      %v996 = vld [vmem:[%s165 + $0x1c] sm:$0xf]
      %v997 = vld [vmem:[%s165 + $0x20] sm:$0xf]
      %v998 = vld [vmem:[%s165 + $0x24] sm:$0xf]
      %v999 = vld [vmem:[%s165 + $0x28] sm:$0xf]
      %v1000 = vld [vmem:[%s165 + $0x2c] sm:$0xf]
      %v1001 = vld [vmem:[%s165 + $0x30] sm:$0xf]
      %v1002 = vld [vmem:[%s165 + $0x34] sm:$0xf]
      %v1003 = vld [vmem:[%s165 + $0x38] sm:$0xf]
      %v1004 = vld [vmem:[%s165 + $0x3c] sm:$0xf]
      %v1005 = vld [vmem:[%s165 + $0x40] sm:$0xf]
      %v1006 = vld [vmem:[%s165 + $0x44] sm:$0xf]
      %v1007 = vld [vmem:[%s165 + $0x48] sm:$0xf]
      %v1008 = vld [vmem:[%s165 + $0x4c] sm:$0xf]
      %v1009 = vld [vmem:[%s165 + $0x50] sm:$0xf]
      %v1010 = vld [vmem:[%s165 + $0x54] sm:$0xf]
      %v1011 = vld [vmem:[%s165 + $0x58] sm:$0xf]
      %v1012 = vld [vmem:[%s165 + $0x5c] sm:$0xf]
      %v1013 = vld [vmem:[%s165 + $0x60] sm:$0xf]
      %v1014 = vld [vmem:[%s165 + $0x64] sm:$0xf]
      %v1015 = vld [vmem:[%s165 + $0x68] sm:$0xf]
      %v1016 = vld [vmem:[%s165 + $0x6c] sm:$0xf]
      %v1017 = vld [vmem:[%s165 + $0x70] sm:$0xf]
      %v1018 = vld [vmem:[%s165 + $0x74] sm:$0xf]
      %v1019 = vld [vmem:[%s165 + $0x78] sm:$0xf]
      %v1020 = vld [vmem:[%s165 + $0x7c] sm:$0xf]
      %v1021 = vld [vmem:[%s165 + $0x80] sm:$0xf]
      %v1022 = vld [vmem:[%s165 + $0x84] sm:$0xf]
      %v1023 = vld [vmem:[%s165 + $0x88] sm:$0xf]
      %v1024 = vld [vmem:[%s165 + $0x8c] sm:$0xf]
      %v1025 = vld [vmem:[%s165 + $0x90] sm:$0xf]
      %v1026 = vld [vmem:[%s165 + $0x94] sm:$0xf]
      %s1027 = scalar_lea.vmem %s1, 24
      %v1028 = vld [vmem:[%s1027] sm:$0xf]
      %v1029 = vld [vmem:[%s1027 + $0x4] sm:$0xf]
      %v1066 = vunpack.c.l.b16 %v991
      %v1067 = vunpack.c.l.b16 %v992
      %v1068 = vunpack.c.l.b16 %v993
      %v1069 = vunpack.c.l.b16 %v994
      %v1070 = vunpack.c.l.b16 %v995
      %v1071 = vunpack.c.l.b16 %v996
      %v1072 = vunpack.c.l.b16 %v997
      %v1073 = vunpack.c.l.b16 %v998
      %v1074 = vunpack.c.l.b16 %v999
      %v1075 = vunpack.c.l.b16 %v1000
      %v1076 = vunpack.c.l.b16 %v1001
      %v1077 = vunpack.c.l.b16 %v1002
      %v1078 = vunpack.c.l.b16 %v1003
      %v1079 = vunpack.c.l.b16 %v1004
      %v1080 = vunpack.c.l.b16 %v1005
      %v1081 = vunpack.c.l.b16 %v1006
      %v1082 = vunpack.c.l.b16 %v1007
      %v1083 = vunpack.c.l.b16 %v1008
      %v1084 = vunpack.c.l.b16 %v1009
      %v1085 = vunpack.c.l.b16 %v1010
      %v1086 = vunpack.c.l.b16 %v1011
      %v1087 = vunpack.c.l.b16 %v1012
      %v1088 = vunpack.c.l.b16 %v1013
      %v1089 = vunpack.c.l.b16 %v1014
      %v1090 = vunpack.c.l.b16 %v1015
      %v1091 = vunpack.c.l.b16 %v1016
      %v1092 = vunpack.c.l.b16 %v1017
      %v1093 = vunpack.c.l.b16 %v1018
      %v1094 = vunpack.c.l.b16 %v1019
      %v1095 = vunpack.c.l.b16 %v1020
      %v1096 = vunpack.c.l.b16 %v1021
      %v1097 = vunpack.c.l.b16 %v1022
      %v1098 = vunpack.c.l.b16 %v1023
      %v1099 = vunpack.c.l.b16 %v1024
      %v1100 = vunpack.c.l.b16 %v1025
      %v1101 = vunpack.c.l.b16 %v1026
      %v1102 = vpack.c.b16 %v1067, %v1066
      %v1103 = vpack.c.b16 %v1069, %v1068
      %v1104 = vpack.c.b16 %v1071, %v1070
      %v1105 = vpack.c.b16 %v1073, %v1072
      %v1106 = vpack.c.b16 %v1075, %v1074
      %v1107 = vpack.c.b16 %v1077, %v1076
      %v1108 = vpack.c.b16 %v1079, %v1078
      %v1109 = vpack.c.b16 %v1081, %v1080
      %v1110 = vpack.c.b16 %v1083, %v1082
      %v1111 = vpack.c.b16 %v1085, %v1084
      %v1112 = vpack.c.b16 %v1087, %v1086
      %v1113 = vpack.c.b16 %v1089, %v1088
      %v1114 = vpack.c.b16 %v1091, %v1090
      %v1115 = vpack.c.b16 %v1093, %v1092
      %v1116 = vpack.c.b16 %v1095, %v1094
      %v1117 = vpack.c.b16 %v1097, %v1096
      %v1118 = vpack.c.b16 %v1099, %v1098
      %v1119 = vpack.c.b16 %v1101, %v1100
      %v1120 = vrot.slane %v1102, 1
      %v1121 = vrot.slane %v1103, 1
      %v1122 = vsel %vm760, %v1120, %v1121
      %v1123 = vrot.slane %v1104, 1
      %v1124 = vsel %vm760, %v1121, %v1123
      %v1125 = vrot.slane %v1105, 1
      %v1126 = vsel %vm760, %v1123, %v1125
      %v1127 = vrot.slane %v1106, 1
      %v1128 = vsel %vm760, %v1125, %v1127
      %v1129 = vrot.slane %v1107, 1
      %v1130 = vsel %vm760, %v1127, %v1129
      %v1131 = vrot.slane %v1108, 1
      %v1132 = vsel %vm760, %v1129, %v1131
      %v1133 = vrot.slane %v1109, 1
      %v1134 = vsel %vm760, %v1131, %v1133
      %v1135 = vrot.slane %v1110, 1
      %v1136 = vsel %vm760, %v1133, %v1135
      %v1137 = vrot.slane %v1111, 1
      %v1138 = vsel %vm760, %v1135, %v1137
      %v1139 = vrot.slane %v1112, 1
      %v1140 = vsel %vm760, %v1137, %v1139
      %v1141 = vrot.slane %v1113, 1
      %v1142 = vsel %vm760, %v1139, %v1141
      %v1143 = vrot.slane %v1114, 1
      %v1144 = vsel %vm760, %v1141, %v1143
      %v1145 = vrot.slane %v1115, 1
      %v1146 = vsel %vm760, %v1143, %v1145
      %v1147 = vrot.slane %v1116, 1
      %v1148 = vsel %vm760, %v1145, %v1147
      %v1149 = vrot.slane %v1117, 1
      %v1150 = vsel %vm760, %v1147, %v1149
      %v1151 = vrot.slane %v1118, 1
      %v1152 = vsel %vm760, %v1149, %v1151
      %v1153 = vrot.slane %v1119, 1
      %v1154 = vsel %vm760, %v1151, %v1153
      %v1157 = vunpack.c.l.b16 %v1028
      %v1158 = vunpack.c.l.b16 %v1029
      %v1159 = vpack.c.b16 %v1158, %v1157
      %v1162 = vsel %vm454, %v1122, 0
      %v1165 = vsel %vm454, %v1124, 0
      %v1168 = vsel %vm454, %v1126, 0
      %v1171 = vsel %vm454, %v1128, 0
      %v1174 = vsel %vm454, %v1130, 0
      %v1177 = vsel %vm454, %v1132, 0
      %v1180 = vsel %vm454, %v1134, 0
      %v1183 = vsel %vm454, %v1136, 0
      %v1186 = vsel %vm454, %v1138, 0
      %v1189 = vsel %vm454, %v1140, 0
      %v1192 = vsel %vm454, %v1142, 0
      %v1195 = vsel %vm454, %v1144, 0
      %v1198 = vsel %vm454, %v1146, 0
      %v1201 = vsel %vm454, %v1148, 0
      %v1204 = vsel %vm454, %v1150, 0
      %v1207 = vsel %vm454, %v1152, 0
      %v1210 = vsel %vm454, %v1154, 0
      %v1213 = vsel %vm454, %v1153, 0
      %1215 = vmatpush.bf16.msra.mxu0 0
      %1216 = vmatpush.bf16.msra.mxu0 0
      %1217 = vmatpush.bf16.msra.mxu0 0
      %1218 = vmatpush.bf16.msra.mxu0 0
      %1219 = vmatpush.bf16.msra.mxu0 0
      %1220 = vmatpush.bf16.msra.mxu0 0
      %1221 = vmatpush.bf16.msra.mxu0 0
      %1222 = vmatpush.bf16.msra.mxu0 %v1159
      %1223 = vmatmul.bf16.gmra.mxu0 %v1162
      %v1224 = vpop.f32.mrf.mxu0
      %v1225 = vadd.f32 0.0, %v1224
      %v1226 = vpop.f32.mrf.mxu0
      %v1227 = vadd.f32 0.0, %v1226
      %1228 = vmatmul.bf16.gmra.mxu0 %v1165
      %v1229 = vpop.f32.mrf.mxu0
      %v1230 = vadd.f32 0.0, %v1229
      %v1231 = vpop.f32.mrf.mxu0
      %v1232 = vadd.f32 0.0, %v1231
      %1233 = vmatmul.bf16.gmra.mxu0 %v1168
      %v1234 = vpop.f32.mrf.mxu0
      %v1235 = vadd.f32 0.0, %v1234
      %v1236 = vpop.f32.mrf.mxu0
      %v1237 = vadd.f32 0.0, %v1236
      %1238 = vmatmul.bf16.gmra.mxu0 %v1171
      %v1239 = vpop.f32.mrf.mxu0
      %v1240 = vadd.f32 0.0, %v1239
      %v1241 = vpop.f32.mrf.mxu0
      %v1242 = vadd.f32 0.0, %v1241
      %1243 = vmatmul.bf16.gmra.mxu0 %v1174
      %v1244 = vpop.f32.mrf.mxu0
      %v1245 = vadd.f32 0.0, %v1244
      %v1246 = vpop.f32.mrf.mxu0
      %v1247 = vadd.f32 0.0, %v1246
      %1248 = vmatmul.bf16.gmra.mxu0 %v1177
      %v1249 = vpop.f32.mrf.mxu0
      %v1250 = vadd.f32 0.0, %v1249
      %v1251 = vpop.f32.mrf.mxu0
      %v1252 = vadd.f32 0.0, %v1251
      %1253 = vmatmul.bf16.gmra.mxu0 %v1180
      %v1254 = vpop.f32.mrf.mxu0
      %v1255 = vadd.f32 0.0, %v1254
      %v1256 = vpop.f32.mrf.mxu0
      %v1257 = vadd.f32 0.0, %v1256
      %1258 = vmatmul.bf16.gmra.mxu0 %v1183
      %v1259 = vpop.f32.mrf.mxu0
      %v1260 = vadd.f32 0.0, %v1259
      %v1261 = vpop.f32.mrf.mxu0
      %v1262 = vadd.f32 0.0, %v1261
      %1263 = vmatmul.bf16.gmra.mxu0 %v1186
      %v1264 = vpop.f32.mrf.mxu0
      %v1265 = vadd.f32 0.0, %v1264
      %v1266 = vpop.f32.mrf.mxu0
      %v1267 = vadd.f32 0.0, %v1266
      %1268 = vmatmul.bf16.gmra.mxu0 %v1189
      %v1269 = vpop.f32.mrf.mxu0
      %v1270 = vadd.f32 0.0, %v1269
      %v1271 = vpop.f32.mrf.mxu0
      %v1272 = vadd.f32 0.0, %v1271
      %1273 = vmatmul.bf16.gmra.mxu0 %v1192
      %v1274 = vpop.f32.mrf.mxu0
      %v1275 = vadd.f32 0.0, %v1274
      %v1276 = vpop.f32.mrf.mxu0
      %v1277 = vadd.f32 0.0, %v1276
      %1278 = vmatmul.bf16.gmra.mxu0 %v1195
      %v1279 = vpop.f32.mrf.mxu0
      %v1280 = vadd.f32 0.0, %v1279
      %v1281 = vpop.f32.mrf.mxu0
      %v1282 = vadd.f32 0.0, %v1281
      %1283 = vmatmul.bf16.gmra.mxu0 %v1198
      %v1284 = vpop.f32.mrf.mxu0
      %v1285 = vadd.f32 0.0, %v1284
      %v1286 = vpop.f32.mrf.mxu0
      %v1287 = vadd.f32 0.0, %v1286
      %1288 = vmatmul.bf16.gmra.mxu0 %v1201
      %v1289 = vpop.f32.mrf.mxu0
      %v1290 = vadd.f32 0.0, %v1289
      %v1291 = vpop.f32.mrf.mxu0
      %v1292 = vadd.f32 0.0, %v1291
      %1293 = vmatmul.bf16.gmra.mxu0 %v1204
      %v1294 = vpop.f32.mrf.mxu0
      %v1295 = vadd.f32 0.0, %v1294
      %v1296 = vpop.f32.mrf.mxu0
      %v1297 = vadd.f32 0.0, %v1296
      %1298 = vmatmul.bf16.gmra.mxu0 %v1207
      %v1299 = vpop.f32.mrf.mxu0
      %v1300 = vadd.f32 0.0, %v1299
      %v1301 = vpop.f32.mrf.mxu0
      %v1302 = vadd.f32 0.0, %v1301
      %1303 = vmatmul.bf16.gmra.mxu0 %v1210
      %v1304 = vpop.f32.mrf.mxu0
      %v1305 = vadd.f32 0.0, %v1304
      %v1306 = vpop.f32.mrf.mxu0
      %v1307 = vadd.f32 0.0, %v1306
      %1308 = vmatmul.bf16.gmra.mxu0 %v1213
      %v1309 = vpop.f32.mrf.mxu0
      %v1310 = vadd.f32 0.0, %v1309
      %v1311 = vpop.f32.mrf.mxu0
      %v1312 = vadd.f32 0.0, %v1311
      %1313 = vdwg.mxu0
      %v1314 = vadd.f32 %v955, %v1225
      %v1315 = vadd.f32 %v956, %v1227
      %v1316 = vadd.f32 %v957, %v1230
      %v1317 = vadd.f32 %v958, %v1232
      %v1318 = vadd.f32 %v959, %v1235
      %v1319 = vadd.f32 %v960, %v1237
      %v1320 = vadd.f32 %v961, %v1240
      %v1321 = vadd.f32 %v962, %v1242
      %v1322 = vadd.f32 %v963, %v1245
      %v1323 = vadd.f32 %v964, %v1247
      %v1324 = vadd.f32 %v965, %v1250
      %v1325 = vadd.f32 %v966, %v1252
      %v1326 = vadd.f32 %v967, %v1255
      %v1327 = vadd.f32 %v968, %v1257
      %v1328 = vadd.f32 %v969, %v1260
      %v1329 = vadd.f32 %v970, %v1262
      %v1330 = vadd.f32 %v971, %v1265
      %v1331 = vadd.f32 %v972, %v1267
      %v1332 = vadd.f32 %v973, %v1270
      %v1333 = vadd.f32 %v974, %v1272
      %v1334 = vadd.f32 %v975, %v1275
      %v1335 = vadd.f32 %v976, %v1277
      %v1336 = vadd.f32 %v977, %v1280
      %v1337 = vadd.f32 %v978, %v1282
      %v1338 = vadd.f32 %v979, %v1285
      %v1339 = vadd.f32 %v980, %v1287
      %v1340 = vadd.f32 %v981, %v1290
      %v1341 = vadd.f32 %v982, %v1292
      %v1342 = vadd.f32 %v983, %v1295
      %v1343 = vadd.f32 %v984, %v1297
      %v1344 = vadd.f32 %v985, %v1300
      %v1345 = vadd.f32 %v986, %v1302
      %v1346 = vadd.f32 %v987, %v1305
      %v1347 = vadd.f32 %v988, %v1307
      %v1348 = vadd.f32 %v989, %v1310
      %v1349 = vadd.f32 %v990, %v1312
      %v1350 = vld [vmem:[%s165 + $0x8] sm:$0xe]
      %v1351 = vld [vmem:[%s165 + $0xc] sm:$0xf]
      %v1352 = vld [vmem:[%s165 + $0x10] sm:$0xf]
      %v1353 = vld [vmem:[%s165 + $0x14] sm:$0xf]
      %v1354 = vld [vmem:[%s165 + $0x18] sm:$0xf]
      %v1355 = vld [vmem:[%s165 + $0x1c] sm:$0xf]
      %v1356 = vld [vmem:[%s165 + $0x20] sm:$0xf]
      %v1357 = vld [vmem:[%s165 + $0x24] sm:$0xf]
      %v1358 = vld [vmem:[%s165 + $0x28] sm:$0xf]
      %v1359 = vld [vmem:[%s165 + $0x2c] sm:$0xf]
      %v1360 = vld [vmem:[%s165 + $0x30] sm:$0xf]
      %v1361 = vld [vmem:[%s165 + $0x34] sm:$0xf]
      %v1362 = vld [vmem:[%s165 + $0x38] sm:$0xf]
      %v1363 = vld [vmem:[%s165 + $0x3c] sm:$0xf]
      %v1364 = vld [vmem:[%s165 + $0x40] sm:$0xf]
      %v1365 = vld [vmem:[%s165 + $0x44] sm:$0xf]
      %v1366 = vld [vmem:[%s165 + $0x48] sm:$0xf]
      %v1367 = vld [vmem:[%s165 + $0x4c] sm:$0xf]
      %v1368 = vld [vmem:[%s165 + $0x50] sm:$0xf]
      %v1369 = vld [vmem:[%s165 + $0x54] sm:$0xf]
      %v1370 = vld [vmem:[%s165 + $0x58] sm:$0xf]
      %v1371 = vld [vmem:[%s165 + $0x5c] sm:$0xf]
      %v1372 = vld [vmem:[%s165 + $0x60] sm:$0xf]
      %v1373 = vld [vmem:[%s165 + $0x64] sm:$0xf]
      %v1374 = vld [vmem:[%s165 + $0x68] sm:$0xf]
      %v1375 = vld [vmem:[%s165 + $0x6c] sm:$0xf]
      %v1376 = vld [vmem:[%s165 + $0x70] sm:$0xf]
      %v1377 = vld [vmem:[%s165 + $0x74] sm:$0xf]
      %v1378 = vld [vmem:[%s165 + $0x78] sm:$0xf]
      %v1379 = vld [vmem:[%s165 + $0x7c] sm:$0xf]
      %v1380 = vld [vmem:[%s165 + $0x80] sm:$0xf]
      %v1381 = vld [vmem:[%s165 + $0x84] sm:$0xf]
      %v1382 = vld [vmem:[%s165 + $0x88] sm:$0xf]
      %v1383 = vld [vmem:[%s165 + $0x8c] sm:$0xf]
      %v1384 = vld [vmem:[%s165 + $0x90] sm:$0xf]
      %v1385 = vld [vmem:[%s165 + $0x94] sm:$0xf]
      %v1386 = vld [vmem:[%s165 + $0x98] sm:$0x1]
      %s1387 = scalar_lea.vmem %s1, 32
      %v1388 = vld [vmem:[%s1387] sm:$0xf]
      %v1389 = vld [vmem:[%s1387 + $0x4] sm:$0xf]
      %v1427 = vunpack.c.l.b16 %v1350
      %v1428 = vunpack.c.l.b16 %v1351
      %v1429 = vunpack.c.l.b16 %v1352
      %v1430 = vunpack.c.l.b16 %v1353
      %v1431 = vunpack.c.l.b16 %v1354
      %v1432 = vunpack.c.l.b16 %v1355
      %v1433 = vunpack.c.l.b16 %v1356
      %v1434 = vunpack.c.l.b16 %v1357
      %v1435 = vunpack.c.l.b16 %v1358
      %v1436 = vunpack.c.l.b16 %v1359
      %v1437 = vunpack.c.l.b16 %v1360
      %v1438 = vunpack.c.l.b16 %v1361
      %v1439 = vunpack.c.l.b16 %v1362
      %v1440 = vunpack.c.l.b16 %v1363
      %v1441 = vunpack.c.l.b16 %v1364
      %v1442 = vunpack.c.l.b16 %v1365
      %v1443 = vunpack.c.l.b16 %v1366
      %v1444 = vunpack.c.l.b16 %v1367
      %v1445 = vunpack.c.l.b16 %v1368
      %v1446 = vunpack.c.l.b16 %v1369
      %v1447 = vunpack.c.l.b16 %v1370
      %v1448 = vunpack.c.l.b16 %v1371
      %v1449 = vunpack.c.l.b16 %v1372
      %v1450 = vunpack.c.l.b16 %v1373
      %v1451 = vunpack.c.l.b16 %v1374
      %v1452 = vunpack.c.l.b16 %v1375
      %v1453 = vunpack.c.l.b16 %v1376
      %v1454 = vunpack.c.l.b16 %v1377
      %v1455 = vunpack.c.l.b16 %v1378
      %v1456 = vunpack.c.l.b16 %v1379
      %v1457 = vunpack.c.l.b16 %v1380
      %v1458 = vunpack.c.l.b16 %v1381
      %v1459 = vunpack.c.l.b16 %v1382
      %v1460 = vunpack.c.l.b16 %v1383
      %v1461 = vunpack.c.l.b16 %v1384
      %v1462 = vunpack.c.l.b16 %v1385
      %v1463 = vunpack.c.l.b16 %v1386
      %v1464 = vpack.c.b16 %v1428, %v1427
      %v1465 = vpack.c.b16 %v1430, %v1429
      %v1466 = vpack.c.b16 %v1432, %v1431
      %v1467 = vpack.c.b16 %v1434, %v1433
      %v1468 = vpack.c.b16 %v1436, %v1435
      %v1469 = vpack.c.b16 %v1438, %v1437
      %v1470 = vpack.c.b16 %v1440, %v1439
      %v1471 = vpack.c.b16 %v1442, %v1441
      %v1472 = vpack.c.b16 %v1444, %v1443
      %v1473 = vpack.c.b16 %v1446, %v1445
      %v1474 = vpack.c.b16 %v1448, %v1447
      %v1475 = vpack.c.b16 %v1450, %v1449
      %v1476 = vpack.c.b16 %v1452, %v1451
      %v1477 = vpack.c.b16 %v1454, %v1453
      %v1478 = vpack.c.b16 %v1456, %v1455
      %v1479 = vpack.c.b16 %v1458, %v1457
      %v1480 = vpack.c.b16 %v1460, %v1459
      %v1481 = vpack.c.b16 %v1462, %v1461
      %v1482 = vpack.c.b16 %v1463, %v1463
      %vm1483 = vsmask.f32 6400
      %v1485 = vshrl.u32 %v1464, 16
      %v1487 = vrot.slane %v1485, 1
      %v1488 = vshll.u32 %v1464, 16
      %v1490 = vrot.slane %v1488, 2
      %v1491 = vor.u32 %v1487, %v1490
      %v1493 = vshrl.u32 %v1465, 16
      %v1495 = vrot.slane %v1493, 1
      %v1496 = vshll.u32 %v1465, 16
      %v1498 = vrot.slane %v1496, 2
      %v1499 = vor.u32 %v1495, %v1498
      %v1500 = vsel %vm1483, %v1491, %v1499
      %v1502 = vshrl.u32 %v1466, 16
      %v1504 = vrot.slane %v1502, 1
      %v1505 = vshll.u32 %v1466, 16
      %v1507 = vrot.slane %v1505, 2
      %v1508 = vor.u32 %v1504, %v1507
      %v1509 = vsel %vm1483, %v1499, %v1508
      %v1511 = vshrl.u32 %v1467, 16
      %v1513 = vrot.slane %v1511, 1
      %v1514 = vshll.u32 %v1467, 16
      %v1516 = vrot.slane %v1514, 2
      %v1517 = vor.u32 %v1513, %v1516
      %v1518 = vsel %vm1483, %v1508, %v1517
      %v1520 = vshrl.u32 %v1468, 16
      %v1522 = vrot.slane %v1520, 1
      %v1523 = vshll.u32 %v1468, 16
      %v1525 = vrot.slane %v1523, 2
      %v1526 = vor.u32 %v1522, %v1525
      %v1527 = vsel %vm1483, %v1517, %v1526
      %v1529 = vshrl.u32 %v1469, 16
      %v1531 = vrot.slane %v1529, 1
      %v1532 = vshll.u32 %v1469, 16
      %v1534 = vrot.slane %v1532, 2
      %v1535 = vor.u32 %v1531, %v1534
      %v1536 = vsel %vm1483, %v1526, %v1535
      %v1538 = vshrl.u32 %v1470, 16
      %v1540 = vrot.slane %v1538, 1
      %v1541 = vshll.u32 %v1470, 16
      %v1543 = vrot.slane %v1541, 2
      %v1544 = vor.u32 %v1540, %v1543
      %v1545 = vsel %vm1483, %v1535, %v1544
      %v1547 = vshrl.u32 %v1471, 16
      %v1549 = vrot.slane %v1547, 1
      %v1550 = vshll.u32 %v1471, 16
      %v1552 = vrot.slane %v1550, 2
      %v1553 = vor.u32 %v1549, %v1552
      %v1554 = vsel %vm1483, %v1544, %v1553
      %v1556 = vshrl.u32 %v1472, 16
      %v1558 = vrot.slane %v1556, 1
      %v1559 = vshll.u32 %v1472, 16
      %v1561 = vrot.slane %v1559, 2
      %v1562 = vor.u32 %v1558, %v1561
      %v1563 = vsel %vm1483, %v1553, %v1562
      %v1565 = vshrl.u32 %v1473, 16
      %v1567 = vrot.slane %v1565, 1
      %v1568 = vshll.u32 %v1473, 16
      %v1570 = vrot.slane %v1568, 2
      %v1571 = vor.u32 %v1567, %v1570
      %v1572 = vsel %vm1483, %v1562, %v1571
      %v1574 = vshrl.u32 %v1474, 16
      %v1576 = vrot.slane %v1574, 1
      %v1577 = vshll.u32 %v1474, 16
      %v1579 = vrot.slane %v1577, 2
      %v1580 = vor.u32 %v1576, %v1579
      %v1581 = vsel %vm1483, %v1571, %v1580
      %v1583 = vshrl.u32 %v1475, 16
      %v1585 = vrot.slane %v1583, 1
      %v1586 = vshll.u32 %v1475, 16
      %v1588 = vrot.slane %v1586, 2
      %v1589 = vor.u32 %v1585, %v1588
      %v1590 = vsel %vm1483, %v1580, %v1589
      %v1592 = vshrl.u32 %v1476, 16
      %v1594 = vrot.slane %v1592, 1
      %v1595 = vshll.u32 %v1476, 16
      %v1597 = vrot.slane %v1595, 2
      %v1598 = vor.u32 %v1594, %v1597
      %v1599 = vsel %vm1483, %v1589, %v1598
      %v1601 = vshrl.u32 %v1477, 16
      %v1603 = vrot.slane %v1601, 1
      %v1604 = vshll.u32 %v1477, 16
      %v1606 = vrot.slane %v1604, 2
      %v1607 = vor.u32 %v1603, %v1606
      %v1608 = vsel %vm1483, %v1598, %v1607
      %v1610 = vshrl.u32 %v1478, 16
      %v1612 = vrot.slane %v1610, 1
      %v1613 = vshll.u32 %v1478, 16
      %v1615 = vrot.slane %v1613, 2
      %v1616 = vor.u32 %v1612, %v1615
      %v1617 = vsel %vm1483, %v1607, %v1616
      %v1619 = vshrl.u32 %v1479, 16
      %v1621 = vrot.slane %v1619, 1
      %v1622 = vshll.u32 %v1479, 16
      %v1624 = vrot.slane %v1622, 2
      %v1625 = vor.u32 %v1621, %v1624
      %v1626 = vsel %vm1483, %v1616, %v1625
      %v1628 = vshrl.u32 %v1480, 16
      %v1630 = vrot.slane %v1628, 1
      %v1631 = vshll.u32 %v1480, 16
      %v1633 = vrot.slane %v1631, 2
      %v1634 = vor.u32 %v1630, %v1633
      %v1635 = vsel %vm1483, %v1625, %v1634
      %v1637 = vshrl.u32 %v1481, 16
      %v1639 = vrot.slane %v1637, 1
      %v1640 = vshll.u32 %v1481, 16
      %v1642 = vrot.slane %v1640, 2
      %v1643 = vor.u32 %v1639, %v1642
      %v1644 = vsel %vm1483, %v1634, %v1643
      %v1646 = vshll.u32 %v1482, 16
      %v1648 = vrot.slane %v1646, 2
      %v1649 = vsel %vm1483, %v1643, %v1648
      %v1652 = vunpack.c.l.b16 %v1388
      %v1653 = vunpack.c.l.b16 %v1389
      %v1654 = vpack.c.b16 %v1653, %v1652
      %v1657 = vsel %vm454, %v1500, 0
      %v1660 = vsel %vm454, %v1509, 0
      %v1663 = vsel %vm454, %v1518, 0
      %v1666 = vsel %vm454, %v1527, 0
      %v1669 = vsel %vm454, %v1536, 0
      %v1672 = vsel %vm454, %v1545, 0
      %v1675 = vsel %vm454, %v1554, 0
      %v1678 = vsel %vm454, %v1563, 0
      %v1681 = vsel %vm454, %v1572, 0
      %v1684 = vsel %vm454, %v1581, 0
      %v1687 = vsel %vm454, %v1590, 0
      %v1690 = vsel %vm454, %v1599, 0
      %v1693 = vsel %vm454, %v1608, 0
      %v1696 = vsel %vm454, %v1617, 0
      %v1699 = vsel %vm454, %v1626, 0
      %v1702 = vsel %vm454, %v1635, 0
      %v1705 = vsel %vm454, %v1644, 0
      %v1708 = vsel %vm454, %v1649, 0
      %1710 = vmatpush.bf16.msra.mxu0 0
      %1711 = vmatpush.bf16.msra.mxu0 0
      %1712 = vmatpush.bf16.msra.mxu0 0
      %1713 = vmatpush.bf16.msra.mxu0 0
      %1714 = vmatpush.bf16.msra.mxu0 0
      %1715 = vmatpush.bf16.msra.mxu0 0
      %1716 = vmatpush.bf16.msra.mxu0 0
      %1717 = vmatpush.bf16.msra.mxu0 %v1654
      %1718 = vmatmul.bf16.gmra.mxu0 %v1657
      %v1719 = vpop.f32.mrf.mxu0
      %v1720 = vadd.f32 0.0, %v1719
      %v1721 = vpop.f32.mrf.mxu0
      %v1722 = vadd.f32 0.0, %v1721
      %1723 = vmatmul.bf16.gmra.mxu0 %v1660
      %v1724 = vpop.f32.mrf.mxu0
      %v1725 = vadd.f32 0.0, %v1724
      %v1726 = vpop.f32.mrf.mxu0
      %v1727 = vadd.f32 0.0, %v1726
      %1728 = vmatmul.bf16.gmra.mxu0 %v1663
      %v1729 = vpop.f32.mrf.mxu0
      %v1730 = vadd.f32 0.0, %v1729
      %v1731 = vpop.f32.mrf.mxu0
      %v1732 = vadd.f32 0.0, %v1731
      %1733 = vmatmul.bf16.gmra.mxu0 %v1666
      %v1734 = vpop.f32.mrf.mxu0
      %v1735 = vadd.f32 0.0, %v1734
      %v1736 = vpop.f32.mrf.mxu0
      %v1737 = vadd.f32 0.0, %v1736
      %1738 = vmatmul.bf16.gmra.mxu0 %v1669
      %v1739 = vpop.f32.mrf.mxu0
      %v1740 = vadd.f32 0.0, %v1739
      %v1741 = vpop.f32.mrf.mxu0
      %v1742 = vadd.f32 0.0, %v1741
      %1743 = vmatmul.bf16.gmra.mxu0 %v1672
      %v1744 = vpop.f32.mrf.mxu0
      %v1745 = vadd.f32 0.0, %v1744
      %v1746 = vpop.f32.mrf.mxu0
      %v1747 = vadd.f32 0.0, %v1746
      %1748 = vmatmul.bf16.gmra.mxu0 %v1675
      %v1749 = vpop.f32.mrf.mxu0
      %v1750 = vadd.f32 0.0, %v1749
      %v1751 = vpop.f32.mrf.mxu0
      %v1752 = vadd.f32 0.0, %v1751
      %1753 = vmatmul.bf16.gmra.mxu0 %v1678
      %v1754 = vpop.f32.mrf.mxu0
      %v1755 = vadd.f32 0.0, %v1754
      %v1756 = vpop.f32.mrf.mxu0
      %v1757 = vadd.f32 0.0, %v1756
      %1758 = vmatmul.bf16.gmra.mxu0 %v1681
      %v1759 = vpop.f32.mrf.mxu0
      %v1760 = vadd.f32 0.0, %v1759
      %v1761 = vpop.f32.mrf.mxu0
      %v1762 = vadd.f32 0.0, %v1761
      %1763 = vmatmul.bf16.gmra.mxu0 %v1684
      %v1764 = vpop.f32.mrf.mxu0
      %v1765 = vadd.f32 0.0, %v1764
      %v1766 = vpop.f32.mrf.mxu0
      %v1767 = vadd.f32 0.0, %v1766
      %1768 = vmatmul.bf16.gmra.mxu0 %v1687
      %v1769 = vpop.f32.mrf.mxu0
      %v1770 = vadd.f32 0.0, %v1769
      %v1771 = vpop.f32.mrf.mxu0
      %v1772 = vadd.f32 0.0, %v1771
      %1773 = vmatmul.bf16.gmra.mxu0 %v1690
      %v1774 = vpop.f32.mrf.mxu0
      %v1775 = vadd.f32 0.0, %v1774
      %v1776 = vpop.f32.mrf.mxu0
      %v1777 = vadd.f32 0.0, %v1776
      %1778 = vmatmul.bf16.gmra.mxu0 %v1693
      %v1779 = vpop.f32.mrf.mxu0
      %v1780 = vadd.f32 0.0, %v1779
      %v1781 = vpop.f32.mrf.mxu0
      %v1782 = vadd.f32 0.0, %v1781
      %1783 = vmatmul.bf16.gmra.mxu0 %v1696
      %v1784 = vpop.f32.mrf.mxu0
      %v1785 = vadd.f32 0.0, %v1784
      %v1786 = vpop.f32.mrf.mxu0
      %v1787 = vadd.f32 0.0, %v1786
      %1788 = vmatmul.bf16.gmra.mxu0 %v1699
      %v1789 = vpop.f32.mrf.mxu0
      %v1790 = vadd.f32 0.0, %v1789
      %v1791 = vpop.f32.mrf.mxu0
      %v1792 = vadd.f32 0.0, %v1791
      %1793 = vmatmul.bf16.gmra.mxu0 %v1702
      %v1794 = vpop.f32.mrf.mxu0
      %v1795 = vadd.f32 0.0, %v1794
      %v1796 = vpop.f32.mrf.mxu0
      %v1797 = vadd.f32 0.0, %v1796
      %1798 = vmatmul.bf16.gmra.mxu0 %v1705
      %v1799 = vpop.f32.mrf.mxu0
      %v1800 = vadd.f32 0.0, %v1799
      %v1801 = vpop.f32.mrf.mxu0
      %v1802 = vadd.f32 0.0, %v1801
      %1803 = vmatmul.bf16.gmra.mxu0 %v1708
      %v1804 = vpop.f32.mrf.mxu0
      %v1805 = vadd.f32 0.0, %v1804
      %v1806 = vpop.f32.mrf.mxu0
      %v1807 = vadd.f32 0.0, %v1806
      %1808 = vdwg.mxu0
      %v1809 = vadd.f32 %v1314, %v1720
      %v1810 = vadd.f32 %v1315, %v1722
      %v1811 = vadd.f32 %v1316, %v1725
      %v1812 = vadd.f32 %v1317, %v1727
      %v1813 = vadd.f32 %v1318, %v1730
      %v1814 = vadd.f32 %v1319, %v1732
      %v1815 = vadd.f32 %v1320, %v1735
      %v1816 = vadd.f32 %v1321, %v1737
      %v1817 = vadd.f32 %v1322, %v1740
      %v1818 = vadd.f32 %v1323, %v1742
      %v1819 = vadd.f32 %v1324, %v1745
      %v1820 = vadd.f32 %v1325, %v1747
      %v1821 = vadd.f32 %v1326, %v1750
      %v1822 = vadd.f32 %v1327, %v1752
      %v1823 = vadd.f32 %v1328, %v1755
      %v1824 = vadd.f32 %v1329, %v1757
      %v1825 = vadd.f32 %v1330, %v1760
      %v1826 = vadd.f32 %v1331, %v1762
      %v1827 = vadd.f32 %v1332, %v1765
      %v1828 = vadd.f32 %v1333, %v1767
      %v1829 = vadd.f32 %v1334, %v1770
      %v1830 = vadd.f32 %v1335, %v1772
      %v1831 = vadd.f32 %v1336, %v1775
      %v1832 = vadd.f32 %v1337, %v1777
      %v1833 = vadd.f32 %v1338, %v1780
      %v1834 = vadd.f32 %v1339, %v1782
      %v1835 = vadd.f32 %v1340, %v1785
      %v1836 = vadd.f32 %v1341, %v1787
      %v1837 = vadd.f32 %v1342, %v1790
      %v1838 = vadd.f32 %v1343, %v1792
      %v1839 = vadd.f32 %v1344, %v1795
      %v1840 = vadd.f32 %v1345, %v1797
      %v1841 = vadd.f32 %v1346, %v1800
      %v1842 = vadd.f32 %v1347, %v1802
      %v1843 = vadd.f32 %v1348, %v1805
      %v1844 = vadd.f32 %v1349, %v1807
      %v1845 = vld [vmem:[%s165 + $0x8] sm:$0xc]
      %s1846 = scalar_lea.vmem %s1, 40
      %v1847 = vld [vmem:[%s1846] sm:$0xf]
      %v1848 = vld [vmem:[%s1846 + $0x4] sm:$0xf]
      %v1850 = vunpack.c.l.b16 %v1845
      %v1851 = vpack.c.b16 %v1428, %v1850
      %vm1852 = vcmask 1045504
      %v1853 = vrot.slane %v1851, 2
      %v1854 = vrot.slane %v1465, 2
      %v1855 = vsel %vm1852, %v1853, %v1854
      %v1856 = vrot.slane %v1466, 2
      %v1857 = vsel %vm1852, %v1854, %v1856
      %v1858 = vrot.slane %v1467, 2
      %v1859 = vsel %vm1852, %v1856, %v1858
      %v1860 = vrot.slane %v1468, 2
      %v1861 = vsel %vm1852, %v1858, %v1860
      %v1862 = vrot.slane %v1469, 2
      %v1863 = vsel %vm1852, %v1860, %v1862
      %v1864 = vrot.slane %v1470, 2
      %v1865 = vsel %vm1852, %v1862, %v1864
      %v1866 = vrot.slane %v1471, 2
      %v1867 = vsel %vm1852, %v1864, %v1866
      %v1868 = vrot.slane %v1472, 2
      %v1869 = vsel %vm1852, %v1866, %v1868
      %v1870 = vrot.slane %v1473, 2
      %v1871 = vsel %vm1852, %v1868, %v1870
      %v1872 = vrot.slane %v1474, 2
      %v1873 = vsel %vm1852, %v1870, %v1872
      %v1874 = vrot.slane %v1475, 2
      %v1875 = vsel %vm1852, %v1872, %v1874
      %v1876 = vrot.slane %v1476, 2
      %v1877 = vsel %vm1852, %v1874, %v1876
      %v1878 = vrot.slane %v1477, 2
      %v1879 = vsel %vm1852, %v1876, %v1878
      %v1880 = vrot.slane %v1478, 2
      %v1881 = vsel %vm1852, %v1878, %v1880
      %v1882 = vrot.slane %v1479, 2
      %v1883 = vsel %vm1852, %v1880, %v1882
      %v1884 = vrot.slane %v1480, 2
      %v1885 = vsel %vm1852, %v1882, %v1884
      %v1886 = vrot.slane %v1481, 2
      %v1887 = vsel %vm1852, %v1884, %v1886
      %v1888 = vrot.slane %v1482, 2
      %v1889 = vsel %vm1852, %v1886, %v1888
      %v1892 = vunpack.c.l.b16 %v1847
      %v1893 = vunpack.c.l.b16 %v1848
      %v1894 = vpack.c.b16 %v1893, %v1892
      %v1897 = vsel %vm454, %v1855, 0
      %v1900 = vsel %vm454, %v1857, 0
      %v1903 = vsel %vm454, %v1859, 0
      %v1906 = vsel %vm454, %v1861, 0
      %v1909 = vsel %vm454, %v1863, 0
      %v1912 = vsel %vm454, %v1865, 0
      %v1915 = vsel %vm454, %v1867, 0
      %v1918 = vsel %vm454, %v1869, 0
      %v1921 = vsel %vm454, %v1871, 0
      %v1924 = vsel %vm454, %v1873, 0
      %v1927 = vsel %vm454, %v1875, 0
      %v1930 = vsel %vm454, %v1877, 0
      %v1933 = vsel %vm454, %v1879, 0
      %v1936 = vsel %vm454, %v1881, 0
      %v1939 = vsel %vm454, %v1883, 0
      %v1942 = vsel %vm454, %v1885, 0
      %v1945 = vsel %vm454, %v1887, 0
      %v1948 = vsel %vm454, %v1889, 0
      %1950 = vmatpush.bf16.msra.mxu0 0
      %1951 = vmatpush.bf16.msra.mxu0 0
      %1952 = vmatpush.bf16.msra.mxu0 0
      %1953 = vmatpush.bf16.msra.mxu0 0
      %1954 = vmatpush.bf16.msra.mxu0 0
      %1955 = vmatpush.bf16.msra.mxu0 0
      %1956 = vmatpush.bf16.msra.mxu0 0
      %1957 = vmatpush.bf16.msra.mxu0 %v1894
      %1958 = vmatmul.bf16.gmra.mxu0 %v1897
      %v1959 = vpop.f32.mrf.mxu0
      %v1960 = vadd.f32 0.0, %v1959
      %v1961 = vpop.f32.mrf.mxu0
      %v1962 = vadd.f32 0.0, %v1961
      %1963 = vmatmul.bf16.gmra.mxu0 %v1900
      %v1964 = vpop.f32.mrf.mxu0
      %v1965 = vadd.f32 0.0, %v1964
      %v1966 = vpop.f32.mrf.mxu0
      %v1967 = vadd.f32 0.0, %v1966
      %1968 = vmatmul.bf16.gmra.mxu0 %v1903
      %v1969 = vpop.f32.mrf.mxu0
      %v1970 = vadd.f32 0.0, %v1969
      %v1971 = vpop.f32.mrf.mxu0
      %v1972 = vadd.f32 0.0, %v1971
      %1973 = vmatmul.bf16.gmra.mxu0 %v1906
      %v1974 = vpop.f32.mrf.mxu0
      %v1975 = vadd.f32 0.0, %v1974
      %v1976 = vpop.f32.mrf.mxu0
      %v1977 = vadd.f32 0.0, %v1976
      %1978 = vmatmul.bf16.gmra.mxu0 %v1909
      %v1979 = vpop.f32.mrf.mxu0
      %v1980 = vadd.f32 0.0, %v1979
      %v1981 = vpop.f32.mrf.mxu0
      %v1982 = vadd.f32 0.0, %v1981
      %1983 = vmatmul.bf16.gmra.mxu0 %v1912
      %v1984 = vpop.f32.mrf.mxu0
      %v1985 = vadd.f32 0.0, %v1984
      %v1986 = vpop.f32.mrf.mxu0
      %v1987 = vadd.f32 0.0, %v1986
      %1988 = vmatmul.bf16.gmra.mxu0 %v1915
      %v1989 = vpop.f32.mrf.mxu0
      %v1990 = vadd.f32 0.0, %v1989
      %v1991 = vpop.f32.mrf.mxu0
      %v1992 = vadd.f32 0.0, %v1991
      %1993 = vmatmul.bf16.gmra.mxu0 %v1918
      %v1994 = vpop.f32.mrf.mxu0
      %v1995 = vadd.f32 0.0, %v1994
      %v1996 = vpop.f32.mrf.mxu0
      %v1997 = vadd.f32 0.0, %v1996
      %1998 = vmatmul.bf16.gmra.mxu0 %v1921
      %v1999 = vpop.f32.mrf.mxu0
      %v2000 = vadd.f32 0.0, %v1999
      %v2001 = vpop.f32.mrf.mxu0
      %v2002 = vadd.f32 0.0, %v2001
      %2003 = vmatmul.bf16.gmra.mxu0 %v1924
      %v2004 = vpop.f32.mrf.mxu0
      %v2005 = vadd.f32 0.0, %v2004
      %v2006 = vpop.f32.mrf.mxu0
      %v2007 = vadd.f32 0.0, %v2006
      %2008 = vmatmul.bf16.gmra.mxu0 %v1927
      %v2009 = vpop.f32.mrf.mxu0
      %v2010 = vadd.f32 0.0, %v2009
      %v2011 = vpop.f32.mrf.mxu0
      %v2012 = vadd.f32 0.0, %v2011
      %2013 = vmatmul.bf16.gmra.mxu0 %v1930
      %v2014 = vpop.f32.mrf.mxu0
      %v2015 = vadd.f32 0.0, %v2014
      %v2016 = vpop.f32.mrf.mxu0
      %v2017 = vadd.f32 0.0, %v2016
      %2018 = vmatmul.bf16.gmra.mxu0 %v1933
      %v2019 = vpop.f32.mrf.mxu0
      %v2020 = vadd.f32 0.0, %v2019
      %v2021 = vpop.f32.mrf.mxu0
      %v2022 = vadd.f32 0.0, %v2021
      %2023 = vmatmul.bf16.gmra.mxu0 %v1936
      %v2024 = vpop.f32.mrf.mxu0
      %v2025 = vadd.f32 0.0, %v2024
      %v2026 = vpop.f32.mrf.mxu0
      %v2027 = vadd.f32 0.0, %v2026
      %2028 = vmatmul.bf16.gmra.mxu0 %v1939
      %v2029 = vpop.f32.mrf.mxu0
      %v2030 = vadd.f32 0.0, %v2029
      %v2031 = vpop.f32.mrf.mxu0
      %v2032 = vadd.f32 0.0, %v2031
      %2033 = vmatmul.bf16.gmra.mxu0 %v1942
      %v2034 = vpop.f32.mrf.mxu0
      %v2035 = vadd.f32 0.0, %v2034
      %v2036 = vpop.f32.mrf.mxu0
      %v2037 = vadd.f32 0.0, %v2036
      %2038 = vmatmul.bf16.gmra.mxu0 %v1945
      %v2039 = vpop.f32.mrf.mxu0
      %v2040 = vadd.f32 0.0, %v2039
      %v2041 = vpop.f32.mrf.mxu0
      %v2042 = vadd.f32 0.0, %v2041
      %2043 = vmatmul.bf16.gmra.mxu0 %v1948
      %v2044 = vpop.f32.mrf.mxu0
      %v2045 = vadd.f32 0.0, %v2044
      %v2046 = vpop.f32.mrf.mxu0
      %v2047 = vadd.f32 0.0, %v2046
      %2048 = vdwg.mxu0
      %v2049 = vadd.f32 %v1809, %v1960
      %v2050 = vadd.f32 %v1810, %v1962
      %v2051 = vadd.f32 %v1811, %v1965
      %v2052 = vadd.f32 %v1812, %v1967
      %v2053 = vadd.f32 %v1813, %v1970
      %v2054 = vadd.f32 %v1814, %v1972
      %v2055 = vadd.f32 %v1815, %v1975
      %v2056 = vadd.f32 %v1816, %v1977
      %v2057 = vadd.f32 %v1817, %v1980
      %v2058 = vadd.f32 %v1818, %v1982
      %v2059 = vadd.f32 %v1819, %v1985
      %v2060 = vadd.f32 %v1820, %v1987
      %v2061 = vadd.f32 %v1821, %v1990
      %v2062 = vadd.f32 %v1822, %v1992
      %v2063 = vadd.f32 %v1823, %v1995
      %v2064 = vadd.f32 %v1824, %v1997
      %v2065 = vadd.f32 %v1825, %v2000
      %v2066 = vadd.f32 %v1826, %v2002
      %v2067 = vadd.f32 %v1827, %v2005
      %v2068 = vadd.f32 %v1828, %v2007
      %v2069 = vadd.f32 %v1829, %v2010
      %v2070 = vadd.f32 %v1830, %v2012
      %v2071 = vadd.f32 %v1831, %v2015
      %v2072 = vadd.f32 %v1832, %v2017
      %v2073 = vadd.f32 %v1833, %v2020
      %v2074 = vadd.f32 %v1834, %v2022
      %v2075 = vadd.f32 %v1835, %v2025
      %v2076 = vadd.f32 %v1836, %v2027
      %v2077 = vadd.f32 %v1837, %v2030
      %v2078 = vadd.f32 %v1838, %v2032
      %v2079 = vadd.f32 %v1839, %v2035
      %v2080 = vadd.f32 %v1840, %v2037
      %v2081 = vadd.f32 %v1841, %v2040
      %v2082 = vadd.f32 %v1842, %v2042
      %v2083 = vadd.f32 %v1843, %v2045
      %v2084 = vadd.f32 %v1844, %v2047
      %v2085 = vld [vmem:[%s165 + $0x10] sm:$0xc]
      %v2086 = vld [vmem:[%s165 + $0x14] sm:$0xf]
      %v2087 = vld [vmem:[%s165 + $0x18] sm:$0xf]
      %v2088 = vld [vmem:[%s165 + $0x1c] sm:$0xf]
      %v2089 = vld [vmem:[%s165 + $0x20] sm:$0xf]
      %v2090 = vld [vmem:[%s165 + $0x24] sm:$0xf]
      %v2091 = vld [vmem:[%s165 + $0x28] sm:$0xf]
      %v2092 = vld [vmem:[%s165 + $0x2c] sm:$0xf]
      %v2093 = vld [vmem:[%s165 + $0x30] sm:$0xf]
      %v2094 = vld [vmem:[%s165 + $0x34] sm:$0xf]
      %v2095 = vld [vmem:[%s165 + $0x38] sm:$0xf]
      %v2096 = vld [vmem:[%s165 + $0x3c] sm:$0xf]
      %v2097 = vld [vmem:[%s165 + $0x40] sm:$0xf]
      %v2098 = vld [vmem:[%s165 + $0x44] sm:$0xf]
      %v2099 = vld [vmem:[%s165 + $0x48] sm:$0xf]
      %v2100 = vld [vmem:[%s165 + $0x4c] sm:$0xf]
      %v2101 = vld [vmem:[%s165 + $0x50] sm:$0xf]
      %v2102 = vld [vmem:[%s165 + $0x54] sm:$0xf]
      %v2103 = vld [vmem:[%s165 + $0x58] sm:$0xf]
      %v2104 = vld [vmem:[%s165 + $0x5c] sm:$0xf]
      %v2105 = vld [vmem:[%s165 + $0x60] sm:$0xf]
      %v2106 = vld [vmem:[%s165 + $0x64] sm:$0xf]
      %v2107 = vld [vmem:[%s165 + $0x68] sm:$0xf]
      %v2108 = vld [vmem:[%s165 + $0x6c] sm:$0xf]
      %v2109 = vld [vmem:[%s165 + $0x70] sm:$0xf]
      %v2110 = vld [vmem:[%s165 + $0x74] sm:$0xf]
      %v2111 = vld [vmem:[%s165 + $0x78] sm:$0xf]
      %v2112 = vld [vmem:[%s165 + $0x7c] sm:$0xf]
      %v2113 = vld [vmem:[%s165 + $0x80] sm:$0xf]
      %v2114 = vld [vmem:[%s165 + $0x84] sm:$0xf]
      %v2115 = vld [vmem:[%s165 + $0x88] sm:$0xf]
      %v2116 = vld [vmem:[%s165 + $0x8c] sm:$0xf]
      %v2117 = vld [vmem:[%s165 + $0x90] sm:$0xf]
      %v2118 = vld [vmem:[%s165 + $0x94] sm:$0xf]
      %v2119 = vld [vmem:[%s165 + $0x98] sm:$0xf]
      %v2120 = vld [vmem:[%s165 + $0x9c] sm:$0xf]
      %v2121 = vld [vmem:[%s165 + $0xa0] sm:$0x1]
      %s2122 = scalar_lea.vmem %s1, 48
      %v2123 = vld [vmem:[%s2122] sm:$0xf]
      %v2124 = vld [vmem:[%s2122 + $0x4] sm:$0xf]
      %v2162 = vunpack.c.l.b16 %v2085
      %v2163 = vunpack.c.l.b16 %v2086
      %v2164 = vunpack.c.l.b16 %v2087
      %v2165 = vunpack.c.l.b16 %v2088
      %v2166 = vunpack.c.l.b16 %v2089
      %v2167 = vunpack.c.l.b16 %v2090
      %v2168 = vunpack.c.l.b16 %v2091
      %v2169 = vunpack.c.l.b16 %v2092
      %v2170 = vunpack.c.l.b16 %v2093
      %v2171 = vunpack.c.l.b16 %v2094
      %v2172 = vunpack.c.l.b16 %v2095
      %v2173 = vunpack.c.l.b16 %v2096
      %v2174 = vunpack.c.l.b16 %v2097
      %v2175 = vunpack.c.l.b16 %v2098
      %v2176 = vunpack.c.l.b16 %v2099
      %v2177 = vunpack.c.l.b16 %v2100
      %v2178 = vunpack.c.l.b16 %v2101
      %v2179 = vunpack.c.l.b16 %v2102
      %v2180 = vunpack.c.l.b16 %v2103
      %v2181 = vunpack.c.l.b16 %v2104
      %v2182 = vunpack.c.l.b16 %v2105
      %v2183 = vunpack.c.l.b16 %v2106
      %v2184 = vunpack.c.l.b16 %v2107
      %v2185 = vunpack.c.l.b16 %v2108
      %v2186 = vunpack.c.l.b16 %v2109
      %v2187 = vunpack.c.l.b16 %v2110
      %v2188 = vunpack.c.l.b16 %v2111
      %v2189 = vunpack.c.l.b16 %v2112
      %v2190 = vunpack.c.l.b16 %v2113
      %v2191 = vunpack.c.l.b16 %v2114
      %v2192 = vunpack.c.l.b16 %v2115
      %v2193 = vunpack.c.l.b16 %v2116
      %v2194 = vunpack.c.l.b16 %v2117
      %v2195 = vunpack.c.l.b16 %v2118
      %v2196 = vunpack.c.l.b16 %v2119
      %v2197 = vunpack.c.l.b16 %v2120
      %v2198 = vunpack.c.l.b16 %v2121
      %v2199 = vpack.c.b16 %v2163, %v2162
      %v2200 = vpack.c.b16 %v2165, %v2164
      %v2201 = vpack.c.b16 %v2167, %v2166
      %v2202 = vpack.c.b16 %v2169, %v2168
      %v2203 = vpack.c.b16 %v2171, %v2170
      %v2204 = vpack.c.b16 %v2173, %v2172
      %v2205 = vpack.c.b16 %v2175, %v2174
      %v2206 = vpack.c.b16 %v2177, %v2176
      %v2207 = vpack.c.b16 %v2179, %v2178
      %v2208 = vpack.c.b16 %v2181, %v2180
      %v2209 = vpack.c.b16 %v2183, %v2182
      %v2210 = vpack.c.b16 %v2185, %v2184
      %v2211 = vpack.c.b16 %v2187, %v2186
      %v2212 = vpack.c.b16 %v2189, %v2188
      %v2213 = vpack.c.b16 %v2191, %v2190
      %v2214 = vpack.c.b16 %v2193, %v2192
      %v2215 = vpack.c.b16 %v2195, %v2194
      %v2216 = vpack.c.b16 %v2197, %v2196
      %v2217 = vpack.c.b16 %v2198, %v2198
      %v2218 = vrot.slane %v2199, 2
      %v2219 = vrot.slane %v2200, 2
      %v2220 = vsel %vm1852, %v2218, %v2219
      %v2221 = vrot.slane %v2201, 2
      %v2222 = vsel %vm1852, %v2219, %v2221
      %v2223 = vrot.slane %v2202, 2
      %v2224 = vsel %vm1852, %v2221, %v2223
      %v2225 = vrot.slane %v2203, 2
      %v2226 = vsel %vm1852, %v2223, %v2225
      %v2227 = vrot.slane %v2204, 2
      %v2228 = vsel %vm1852, %v2225, %v2227
      %v2229 = vrot.slane %v2205, 2
      %v2230 = vsel %vm1852, %v2227, %v2229
      %v2231 = vrot.slane %v2206, 2
      %v2232 = vsel %vm1852, %v2229, %v2231
      %v2233 = vrot.slane %v2207, 2
      %v2234 = vsel %vm1852, %v2231, %v2233
      %v2235 = vrot.slane %v2208, 2
      %v2236 = vsel %vm1852, %v2233, %v2235
      %v2237 = vrot.slane %v2209, 2
      %v2238 = vsel %vm1852, %v2235, %v2237
      %v2239 = vrot.slane %v2210, 2
      %v2240 = vsel %vm1852, %v2237, %v2239
      %v2241 = vrot.slane %v2211, 2
      %v2242 = vsel %vm1852, %v2239, %v2241
      %v2243 = vrot.slane %v2212, 2
      %v2244 = vsel %vm1852, %v2241, %v2243
      %v2245 = vrot.slane %v2213, 2
      %v2246 = vsel %vm1852, %v2243, %v2245
      %v2247 = vrot.slane %v2214, 2
      %v2248 = vsel %vm1852, %v2245, %v2247
      %v2249 = vrot.slane %v2215, 2
      %v2250 = vsel %vm1852, %v2247, %v2249
      %v2251 = vrot.slane %v2216, 2
      %v2252 = vsel %vm1852, %v2249, %v2251
      %v2253 = vrot.slane %v2217, 2
      %v2254 = vsel %vm1852, %v2251, %v2253
      %v2257 = vunpack.c.l.b16 %v2123
      %v2258 = vunpack.c.l.b16 %v2124
      %v2259 = vpack.c.b16 %v2258, %v2257
      %v2262 = vsel %vm454, %v2220, 0
      %v2265 = vsel %vm454, %v2222, 0
      %v2268 = vsel %vm454, %v2224, 0
      %v2271 = vsel %vm454, %v2226, 0
      %v2274 = vsel %vm454, %v2228, 0
      %v2277 = vsel %vm454, %v2230, 0
      %v2280 = vsel %vm454, %v2232, 0
      %v2283 = vsel %vm454, %v2234, 0
      %v2286 = vsel %vm454, %v2236, 0
      %v2289 = vsel %vm454, %v2238, 0
      %v2292 = vsel %vm454, %v2240, 0
      %v2295 = vsel %vm454, %v2242, 0
      %v2298 = vsel %vm454, %v2244, 0
      %v2301 = vsel %vm454, %v2246, 0
      %v2304 = vsel %vm454, %v2248, 0
      %v2307 = vsel %vm454, %v2250, 0
      %v2310 = vsel %vm454, %v2252, 0
      %v2313 = vsel %vm454, %v2254, 0
      %2315 = vmatpush.bf16.msra.mxu0 0
      %2316 = vmatpush.bf16.msra.mxu0 0
      %2317 = vmatpush.bf16.msra.mxu0 0
      %2318 = vmatpush.bf16.msra.mxu0 0
      %2319 = vmatpush.bf16.msra.mxu0 0
      %2320 = vmatpush.bf16.msra.mxu0 0
      %2321 = vmatpush.bf16.msra.mxu0 0
      %2322 = vmatpush.bf16.msra.mxu0 %v2259
      %2323 = vmatmul.bf16.gmra.mxu0 %v2262
      %v2324 = vpop.f32.mrf.mxu0
      %v2325 = vadd.f32 0.0, %v2324
      %v2326 = vpop.f32.mrf.mxu0
      %v2327 = vadd.f32 0.0, %v2326
      %2328 = vmatmul.bf16.gmra.mxu0 %v2265
      %v2329 = vpop.f32.mrf.mxu0
      %v2330 = vadd.f32 0.0, %v2329
      %v2331 = vpop.f32.mrf.mxu0
      %v2332 = vadd.f32 0.0, %v2331
      %2333 = vmatmul.bf16.gmra.mxu0 %v2268
      %v2334 = vpop.f32.mrf.mxu0
      %v2335 = vadd.f32 0.0, %v2334
      %v2336 = vpop.f32.mrf.mxu0
      %v2337 = vadd.f32 0.0, %v2336
      %2338 = vmatmul.bf16.gmra.mxu0 %v2271
      %v2339 = vpop.f32.mrf.mxu0
      %v2340 = vadd.f32 0.0, %v2339
      %v2341 = vpop.f32.mrf.mxu0
      %v2342 = vadd.f32 0.0, %v2341
      %2343 = vmatmul.bf16.gmra.mxu0 %v2274
      %v2344 = vpop.f32.mrf.mxu0
      %v2345 = vadd.f32 0.0, %v2344
      %v2346 = vpop.f32.mrf.mxu0
      %v2347 = vadd.f32 0.0, %v2346
      %2348 = vmatmul.bf16.gmra.mxu0 %v2277
      %v2349 = vpop.f32.mrf.mxu0
      %v2350 = vadd.f32 0.0, %v2349
      %v2351 = vpop.f32.mrf.mxu0
      %v2352 = vadd.f32 0.0, %v2351
      %2353 = vmatmul.bf16.gmra.mxu0 %v2280
      %v2354 = vpop.f32.mrf.mxu0
      %v2355 = vadd.f32 0.0, %v2354
      %v2356 = vpop.f32.mrf.mxu0
      %v2357 = vadd.f32 0.0, %v2356
      %2358 = vmatmul.bf16.gmra.mxu0 %v2283
      %v2359 = vpop.f32.mrf.mxu0
      %v2360 = vadd.f32 0.0, %v2359
      %v2361 = vpop.f32.mrf.mxu0
      %v2362 = vadd.f32 0.0, %v2361
      %2363 = vmatmul.bf16.gmra.mxu0 %v2286
      %v2364 = vpop.f32.mrf.mxu0
      %v2365 = vadd.f32 0.0, %v2364
      %v2366 = vpop.f32.mrf.mxu0
      %v2367 = vadd.f32 0.0, %v2366
      %2368 = vmatmul.bf16.gmra.mxu0 %v2289
      %v2369 = vpop.f32.mrf.mxu0
      %v2370 = vadd.f32 0.0, %v2369
      %v2371 = vpop.f32.mrf.mxu0
      %v2372 = vadd.f32 0.0, %v2371
      %2373 = vmatmul.bf16.gmra.mxu0 %v2292
      %v2374 = vpop.f32.mrf.mxu0
      %v2375 = vadd.f32 0.0, %v2374
      %v2376 = vpop.f32.mrf.mxu0
      %v2377 = vadd.f32 0.0, %v2376
      %2378 = vmatmul.bf16.gmra.mxu0 %v2295
      %v2379 = vpop.f32.mrf.mxu0
      %v2380 = vadd.f32 0.0, %v2379
      %v2381 = vpop.f32.mrf.mxu0
      %v2382 = vadd.f32 0.0, %v2381
      %2383 = vmatmul.bf16.gmra.mxu0 %v2298
      %v2384 = vpop.f32.mrf.mxu0
      %v2385 = vadd.f32 0.0, %v2384
      %v2386 = vpop.f32.mrf.mxu0
      %v2387 = vadd.f32 0.0, %v2386
      %2388 = vmatmul.bf16.gmra.mxu0 %v2301
      %v2389 = vpop.f32.mrf.mxu0
      %v2390 = vadd.f32 0.0, %v2389
      %v2391 = vpop.f32.mrf.mxu0
      %v2392 = vadd.f32 0.0, %v2391
      %2393 = vmatmul.bf16.gmra.mxu0 %v2304
      %v2394 = vpop.f32.mrf.mxu0
      %v2395 = vadd.f32 0.0, %v2394
      %v2396 = vpop.f32.mrf.mxu0
      %v2397 = vadd.f32 0.0, %v2396
      %2398 = vmatmul.bf16.gmra.mxu0 %v2307
      %v2399 = vpop.f32.mrf.mxu0
      %v2400 = vadd.f32 0.0, %v2399
      %v2401 = vpop.f32.mrf.mxu0
      %v2402 = vadd.f32 0.0, %v2401
      %2403 = vmatmul.bf16.gmra.mxu0 %v2310
      %v2404 = vpop.f32.mrf.mxu0
      %v2405 = vadd.f32 0.0, %v2404
      %v2406 = vpop.f32.mrf.mxu0
      %v2407 = vadd.f32 0.0, %v2406
      %2408 = vmatmul.bf16.gmra.mxu0 %v2313
      %v2409 = vpop.f32.mrf.mxu0
      %v2410 = vadd.f32 0.0, %v2409
      %v2411 = vpop.f32.mrf.mxu0
      %v2412 = vadd.f32 0.0, %v2411
      %2413 = vdwg.mxu0
      %v2414 = vadd.f32 %v2049, %v2325
      %v2415 = vadd.f32 %v2050, %v2327
      %v2416 = vadd.f32 %v2051, %v2330
      %v2417 = vadd.f32 %v2052, %v2332
      %v2418 = vadd.f32 %v2053, %v2335
      %v2419 = vadd.f32 %v2054, %v2337
      %v2420 = vadd.f32 %v2055, %v2340
      %v2421 = vadd.f32 %v2056, %v2342
      %v2422 = vadd.f32 %v2057, %v2345
      %v2423 = vadd.f32 %v2058, %v2347
      %v2424 = vadd.f32 %v2059, %v2350
      %v2425 = vadd.f32 %v2060, %v2352
      %v2426 = vadd.f32 %v2061, %v2355
      %v2427 = vadd.f32 %v2062, %v2357
      %v2428 = vadd.f32 %v2063, %v2360
      %v2429 = vadd.f32 %v2064, %v2362
      %v2430 = vadd.f32 %v2065, %v2365
      %v2431 = vadd.f32 %v2066, %v2367
      %v2432 = vadd.f32 %v2067, %v2370
      %v2433 = vadd.f32 %v2068, %v2372
      %v2434 = vadd.f32 %v2069, %v2375
      %v2435 = vadd.f32 %v2070, %v2377
      %v2436 = vadd.f32 %v2071, %v2380
      %v2437 = vadd.f32 %v2072, %v2382
      %v2438 = vadd.f32 %v2073, %v2385
      %v2439 = vadd.f32 %v2074, %v2387
      %v2440 = vadd.f32 %v2075, %v2390
      %v2441 = vadd.f32 %v2076, %v2392
      %v2442 = vadd.f32 %v2077, %v2395
      %v2443 = vadd.f32 %v2078, %v2397
      %v2444 = vadd.f32 %v2079, %v2400
      %v2445 = vadd.f32 %v2080, %v2402
      %v2446 = vadd.f32 %v2081, %v2405
      %v2447 = vadd.f32 %v2082, %v2407
      %v2448 = vadd.f32 %v2083, %v2410
      %v2449 = vadd.f32 %v2084, %v2412
      %v2450 = vld [vmem:[%s165 + $0xa0] sm:$0x3]
      %s2451 = scalar_lea.vmem %s1, 56
      %v2452 = vld [vmem:[%s2451] sm:$0xf]
      %v2453 = vld [vmem:[%s2451 + $0x4] sm:$0xf]
      %v2455 = vunpack.c.l.b16 %v2450
      %v2456 = vpack.c.b16 %v2455, %v2455
      %vm2457 = vsmask.f32 5376
      %v2459 = vshrl.u32 %v2199, 16
      %v2461 = vrot.slane %v2459, 2
      %v2462 = vshll.u32 %v2199, 16
      %v2464 = vrot.slane %v2462, 3
      %v2465 = vor.u32 %v2461, %v2464
      %v2467 = vshrl.u32 %v2200, 16
      %v2469 = vrot.slane %v2467, 2
      %v2470 = vshll.u32 %v2200, 16
      %v2472 = vrot.slane %v2470, 3
      %v2473 = vor.u32 %v2469, %v2472
      %v2474 = vsel %vm2457, %v2465, %v2473
      %v2476 = vshrl.u32 %v2201, 16
      %v2478 = vrot.slane %v2476, 2
      %v2479 = vshll.u32 %v2201, 16
      %v2481 = vrot.slane %v2479, 3
      %v2482 = vor.u32 %v2478, %v2481
      %v2483 = vsel %vm2457, %v2473, %v2482
      %v2485 = vshrl.u32 %v2202, 16
      %v2487 = vrot.slane %v2485, 2
      %v2488 = vshll.u32 %v2202, 16
      %v2490 = vrot.slane %v2488, 3
      %v2491 = vor.u32 %v2487, %v2490
      %v2492 = vsel %vm2457, %v2482, %v2491
      %v2494 = vshrl.u32 %v2203, 16
      %v2496 = vrot.slane %v2494, 2
      %v2497 = vshll.u32 %v2203, 16
      %v2499 = vrot.slane %v2497, 3
      %v2500 = vor.u32 %v2496, %v2499
      %v2501 = vsel %vm2457, %v2491, %v2500
      %v2503 = vshrl.u32 %v2204, 16
      %v2505 = vrot.slane %v2503, 2
      %v2506 = vshll.u32 %v2204, 16
      %v2508 = vrot.slane %v2506, 3
      %v2509 = vor.u32 %v2505, %v2508
      %v2510 = vsel %vm2457, %v2500, %v2509
      %v2512 = vshrl.u32 %v2205, 16
      %v2514 = vrot.slane %v2512, 2
      %v2515 = vshll.u32 %v2205, 16
      %v2517 = vrot.slane %v2515, 3
      %v2518 = vor.u32 %v2514, %v2517
      %v2519 = vsel %vm2457, %v2509, %v2518
      %v2521 = vshrl.u32 %v2206, 16
      %v2523 = vrot.slane %v2521, 2
      %v2524 = vshll.u32 %v2206, 16
      %v2526 = vrot.slane %v2524, 3
      %v2527 = vor.u32 %v2523, %v2526
      %v2528 = vsel %vm2457, %v2518, %v2527
      %v2530 = vshrl.u32 %v2207, 16
      %v2532 = vrot.slane %v2530, 2
      %v2533 = vshll.u32 %v2207, 16
      %v2535 = vrot.slane %v2533, 3
      %v2536 = vor.u32 %v2532, %v2535
      %v2537 = vsel %vm2457, %v2527, %v2536
      %v2539 = vshrl.u32 %v2208, 16
      %v2541 = vrot.slane %v2539, 2
      %v2542 = vshll.u32 %v2208, 16
      %v2544 = vrot.slane %v2542, 3
      %v2545 = vor.u32 %v2541, %v2544
      %v2546 = vsel %vm2457, %v2536, %v2545
      %v2548 = vshrl.u32 %v2209, 16
      %v2550 = vrot.slane %v2548, 2
      %v2551 = vshll.u32 %v2209, 16
      %v2553 = vrot.slane %v2551, 3
      %v2554 = vor.u32 %v2550, %v2553
      %v2555 = vsel %vm2457, %v2545, %v2554
      %v2557 = vshrl.u32 %v2210, 16
      %v2559 = vrot.slane %v2557, 2
      %v2560 = vshll.u32 %v2210, 16
      %v2562 = vrot.slane %v2560, 3
      %v2563 = vor.u32 %v2559, %v2562
      %v2564 = vsel %vm2457, %v2554, %v2563
      %v2566 = vshrl.u32 %v2211, 16
      %v2568 = vrot.slane %v2566, 2
      %v2569 = vshll.u32 %v2211, 16
      %v2571 = vrot.slane %v2569, 3
      %v2572 = vor.u32 %v2568, %v2571
      %v2573 = vsel %vm2457, %v2563, %v2572
      %v2575 = vshrl.u32 %v2212, 16
      %v2577 = vrot.slane %v2575, 2
      %v2578 = vshll.u32 %v2212, 16
      %v2580 = vrot.slane %v2578, 3
      %v2581 = vor.u32 %v2577, %v2580
      %v2582 = vsel %vm2457, %v2572, %v2581
      %v2584 = vshrl.u32 %v2213, 16
      %v2586 = vrot.slane %v2584, 2
      %v2587 = vshll.u32 %v2213, 16
      %v2589 = vrot.slane %v2587, 3
      %v2590 = vor.u32 %v2586, %v2589
      %v2591 = vsel %vm2457, %v2581, %v2590
      %v2593 = vshrl.u32 %v2214, 16
      %v2595 = vrot.slane %v2593, 2
      %v2596 = vshll.u32 %v2214, 16
      %v2598 = vrot.slane %v2596, 3
      %v2599 = vor.u32 %v2595, %v2598
      %v2600 = vsel %vm2457, %v2590, %v2599
      %v2602 = vshrl.u32 %v2215, 16
      %v2604 = vrot.slane %v2602, 2
      %v2605 = vshll.u32 %v2215, 16
      %v2607 = vrot.slane %v2605, 3
      %v2608 = vor.u32 %v2604, %v2607
      %v2609 = vsel %vm2457, %v2599, %v2608
      %v2611 = vshrl.u32 %v2216, 16
      %v2613 = vrot.slane %v2611, 2
      %v2614 = vshll.u32 %v2216, 16
      %v2616 = vrot.slane %v2614, 3
      %v2617 = vor.u32 %v2613, %v2616
      %v2618 = vsel %vm2457, %v2608, %v2617
      %v2620 = vshrl.u32 %v2456, 16
      %v2622 = vrot.slane %v2620, 2
      %v2623 = vshll.u32 %v2456, 16
      %v2625 = vrot.slane %v2623, 3
      %v2626 = vor.u32 %v2622, %v2625
      %v2627 = vsel %vm2457, %v2617, %v2626
      %v2630 = vunpack.c.l.b16 %v2452
      %v2631 = vunpack.c.l.b16 %v2453
      %v2632 = vpack.c.b16 %v2631, %v2630
      %v2635 = vsel %vm454, %v2474, 0
      %v2638 = vsel %vm454, %v2483, 0
      %v2641 = vsel %vm454, %v2492, 0
      %v2644 = vsel %vm454, %v2501, 0
      %v2647 = vsel %vm454, %v2510, 0
      %v2650 = vsel %vm454, %v2519, 0
      %v2653 = vsel %vm454, %v2528, 0
      %v2656 = vsel %vm454, %v2537, 0
      %v2659 = vsel %vm454, %v2546, 0
      %v2662 = vsel %vm454, %v2555, 0
      %v2665 = vsel %vm454, %v2564, 0
      %v2668 = vsel %vm454, %v2573, 0
      %v2671 = vsel %vm454, %v2582, 0
      %v2674 = vsel %vm454, %v2591, 0
      %v2677 = vsel %vm454, %v2600, 0
      %v2680 = vsel %vm454, %v2609, 0
      %v2683 = vsel %vm454, %v2618, 0
      %v2686 = vsel %vm454, %v2627, 0
      %2688 = vmatpush.bf16.msra.mxu0 0
      %2689 = vmatpush.bf16.msra.mxu0 0
      %2690 = vmatpush.bf16.msra.mxu0 0
      %2691 = vmatpush.bf16.msra.mxu0 0
      %2692 = vmatpush.bf16.msra.mxu0 0
      %2693 = vmatpush.bf16.msra.mxu0 0
      %2694 = vmatpush.bf16.msra.mxu0 0
      %2695 = vmatpush.bf16.msra.mxu0 %v2632
      %2696 = vmatmul.bf16.gmra.mxu0 %v2635
      %v2697 = vpop.f32.mrf.mxu0
      %v2698 = vadd.f32 0.0, %v2697
      %v2699 = vpop.f32.mrf.mxu0
      %v2700 = vadd.f32 0.0, %v2699
      %2701 = vmatmul.bf16.gmra.mxu0 %v2638
      %v2702 = vpop.f32.mrf.mxu0
      %v2703 = vadd.f32 0.0, %v2702
      %v2704 = vpop.f32.mrf.mxu0
      %v2705 = vadd.f32 0.0, %v2704
      %2706 = vmatmul.bf16.gmra.mxu0 %v2641
      %v2707 = vpop.f32.mrf.mxu0
      %v2708 = vadd.f32 0.0, %v2707
      %v2709 = vpop.f32.mrf.mxu0
      %v2710 = vadd.f32 0.0, %v2709
      %2711 = vmatmul.bf16.gmra.mxu0 %v2644
      %v2712 = vpop.f32.mrf.mxu0
      %v2713 = vadd.f32 0.0, %v2712
      %v2714 = vpop.f32.mrf.mxu0
      %v2715 = vadd.f32 0.0, %v2714
      %2716 = vmatmul.bf16.gmra.mxu0 %v2647
      %v2717 = vpop.f32.mrf.mxu0
      %v2718 = vadd.f32 0.0, %v2717
      %v2719 = vpop.f32.mrf.mxu0
      %v2720 = vadd.f32 0.0, %v2719
      %2721 = vmatmul.bf16.gmra.mxu0 %v2650
      %v2722 = vpop.f32.mrf.mxu0
      %v2723 = vadd.f32 0.0, %v2722
      %v2724 = vpop.f32.mrf.mxu0
      %v2725 = vadd.f32 0.0, %v2724
      %2726 = vmatmul.bf16.gmra.mxu0 %v2653
      %v2727 = vpop.f32.mrf.mxu0
      %v2728 = vadd.f32 0.0, %v2727
      %v2729 = vpop.f32.mrf.mxu0
      %v2730 = vadd.f32 0.0, %v2729
      %2731 = vmatmul.bf16.gmra.mxu0 %v2656
      %v2732 = vpop.f32.mrf.mxu0
      %v2733 = vadd.f32 0.0, %v2732
      %v2734 = vpop.f32.mrf.mxu0
      %v2735 = vadd.f32 0.0, %v2734
      %2736 = vmatmul.bf16.gmra.mxu0 %v2659
      %v2737 = vpop.f32.mrf.mxu0
      %v2738 = vadd.f32 0.0, %v2737
      %v2739 = vpop.f32.mrf.mxu0
      %v2740 = vadd.f32 0.0, %v2739
      %2741 = vmatmul.bf16.gmra.mxu0 %v2662
      %v2742 = vpop.f32.mrf.mxu0
      %v2743 = vadd.f32 0.0, %v2742
      %v2744 = vpop.f32.mrf.mxu0
      %v2745 = vadd.f32 0.0, %v2744
      %2746 = vmatmul.bf16.gmra.mxu0 %v2665
      %v2747 = vpop.f32.mrf.mxu0
      %v2748 = vadd.f32 0.0, %v2747
      %v2749 = vpop.f32.mrf.mxu0
      %v2750 = vadd.f32 0.0, %v2749
      %2751 = vmatmul.bf16.gmra.mxu0 %v2668
      %v2752 = vpop.f32.mrf.mxu0
      %v2753 = vadd.f32 0.0, %v2752
      %v2754 = vpop.f32.mrf.mxu0
      %v2755 = vadd.f32 0.0, %v2754
      %2756 = vmatmul.bf16.gmra.mxu0 %v2671
      %v2757 = vpop.f32.mrf.mxu0
      %v2758 = vadd.f32 0.0, %v2757
      %v2759 = vpop.f32.mrf.mxu0
      %v2760 = vadd.f32 0.0, %v2759
      %2761 = vmatmul.bf16.gmra.mxu0 %v2674
      %v2762 = vpop.f32.mrf.mxu0
      %v2763 = vadd.f32 0.0, %v2762
      %v2764 = vpop.f32.mrf.mxu0
      %v2765 = vadd.f32 0.0, %v2764
      %2766 = vmatmul.bf16.gmra.mxu0 %v2677
      %v2767 = vpop.f32.mrf.mxu0
      %v2768 = vadd.f32 0.0, %v2767
      %v2769 = vpop.f32.mrf.mxu0
      %v2770 = vadd.f32 0.0, %v2769
      %2771 = vmatmul.bf16.gmra.mxu0 %v2680
      %v2772 = vpop.f32.mrf.mxu0
      %v2773 = vadd.f32 0.0, %v2772
      %v2774 = vpop.f32.mrf.mxu0
      %v2775 = vadd.f32 0.0, %v2774
      %2776 = vmatmul.bf16.gmra.mxu0 %v2683
      %v2777 = vpop.f32.mrf.mxu0
      %v2778 = vadd.f32 0.0, %v2777
      %v2779 = vpop.f32.mrf.mxu0
      %v2780 = vadd.f32 0.0, %v2779
      %2781 = vmatmul.bf16.gmra.mxu0 %v2686
      %v2782 = vpop.f32.mrf.mxu0
      %v2783 = vadd.f32 0.0, %v2782
      %v2784 = vpop.f32.mrf.mxu0
      %v2785 = vadd.f32 0.0, %v2784
      %2786 = vdwg.mxu0
      %v2787 = vadd.f32 %v2414, %v2698
      %v2788 = vadd.f32 %v2415, %v2700
      %v2789 = vadd.f32 %v2416, %v2703
      %v2790 = vadd.f32 %v2417, %v2705
      %v2791 = vadd.f32 %v2418, %v2708
      %v2792 = vadd.f32 %v2419, %v2710
      %v2793 = vadd.f32 %v2420, %v2713
      %v2794 = vadd.f32 %v2421, %v2715
      %v2795 = vadd.f32 %v2422, %v2718
      %v2796 = vadd.f32 %v2423, %v2720
      %v2797 = vadd.f32 %v2424, %v2723
      %v2798 = vadd.f32 %v2425, %v2725
      %v2799 = vadd.f32 %v2426, %v2728
      %v2800 = vadd.f32 %v2427, %v2730
      %v2801 = vadd.f32 %v2428, %v2733
      %v2802 = vadd.f32 %v2429, %v2735
      %v2803 = vadd.f32 %v2430, %v2738
      %v2804 = vadd.f32 %v2431, %v2740
      %v2805 = vadd.f32 %v2432, %v2743
      %v2806 = vadd.f32 %v2433, %v2745
      %v2807 = vadd.f32 %v2434, %v2748
      %v2808 = vadd.f32 %v2435, %v2750
      %v2809 = vadd.f32 %v2436, %v2753
      %v2810 = vadd.f32 %v2437, %v2755
      %v2811 = vadd.f32 %v2438, %v2758
      %v2812 = vadd.f32 %v2439, %v2760
      %v2813 = vadd.f32 %v2440, %v2763
      %v2814 = vadd.f32 %v2441, %v2765
      %v2815 = vadd.f32 %v2442, %v2768
      %v2816 = vadd.f32 %v2443, %v2770
      %v2817 = vadd.f32 %v2444, %v2773
      %v2818 = vadd.f32 %v2445, %v2775
      %v2819 = vadd.f32 %v2446, %v2778
      %v2820 = vadd.f32 %v2447, %v2780
      %v2821 = vadd.f32 %v2448, %v2783
      %v2822 = vadd.f32 %v2449, %v2785
      %v2823 = vld [vmem:[%s165 + $0x10] sm:$0x8]
      %s2824 = scalar_lea.vmem %s1, 64
      %v2825 = vld [vmem:[%s2824] sm:$0xf]
      %v2826 = vld [vmem:[%s2824 + $0x4] sm:$0xf]
      %v2828 = vunpack.c.l.b16 %v2823
      %v2829 = vpack.c.b16 %v2163, %v2828
      %vm2830 = vcmask 1044480
      %v2831 = vrot.slane %v2829, 3
      %v2832 = vrot.slane %v2200, 3
      %v2833 = vsel %vm2830, %v2831, %v2832
      %v2834 = vrot.slane %v2201, 3
      %v2835 = vsel %vm2830, %v2832, %v2834
      %v2836 = vrot.slane %v2202, 3
      %v2837 = vsel %vm2830, %v2834, %v2836
      %v2838 = vrot.slane %v2203, 3
      %v2839 = vsel %vm2830, %v2836, %v2838
      %v2840 = vrot.slane %v2204, 3
      %v2841 = vsel %vm2830, %v2838, %v2840
      %v2842 = vrot.slane %v2205, 3
      %v2843 = vsel %vm2830, %v2840, %v2842
      %v2844 = vrot.slane %v2206, 3
      %v2845 = vsel %vm2830, %v2842, %v2844
      %v2846 = vrot.slane %v2207, 3
      %v2847 = vsel %vm2830, %v2844, %v2846
      %v2848 = vrot.slane %v2208, 3
      %v2849 = vsel %vm2830, %v2846, %v2848
      %v2850 = vrot.slane %v2209, 3
      %v2851 = vsel %vm2830, %v2848, %v2850
      %v2852 = vrot.slane %v2210, 3
      %v2853 = vsel %vm2830, %v2850, %v2852
      %v2854 = vrot.slane %v2211, 3
      %v2855 = vsel %vm2830, %v2852, %v2854
      %v2856 = vrot.slane %v2212, 3
      %v2857 = vsel %vm2830, %v2854, %v2856
      %v2858 = vrot.slane %v2213, 3
      %v2859 = vsel %vm2830, %v2856, %v2858
      %v2860 = vrot.slane %v2214, 3
      %v2861 = vsel %vm2830, %v2858, %v2860
      %v2862 = vrot.slane %v2215, 3
      %v2863 = vsel %vm2830, %v2860, %v2862
      %v2864 = vrot.slane %v2216, 3
      %v2865 = vsel %vm2830, %v2862, %v2864
      %v2866 = vrot.slane %v2456, 3
      %v2867 = vsel %vm2830, %v2864, %v2866
      %v2870 = vunpack.c.l.b16 %v2825
      %v2871 = vunpack.c.l.b16 %v2826
      %v2872 = vpack.c.b16 %v2871, %v2870
      %v2875 = vsel %vm454, %v2833, 0
      %v2878 = vsel %vm454, %v2835, 0
      %v2881 = vsel %vm454, %v2837, 0
      %v2884 = vsel %vm454, %v2839, 0
      %v2887 = vsel %vm454, %v2841, 0
      %v2890 = vsel %vm454, %v2843, 0
      %v2893 = vsel %vm454, %v2845, 0
      %v2896 = vsel %vm454, %v2847, 0
      %v2899 = vsel %vm454, %v2849, 0
      %v2902 = vsel %vm454, %v2851, 0
      %v2905 = vsel %vm454, %v2853, 0
      %v2908 = vsel %vm454, %v2855, 0
      %v2911 = vsel %vm454, %v2857, 0
      %v2914 = vsel %vm454, %v2859, 0
      %v2917 = vsel %vm454, %v2861, 0
      %v2920 = vsel %vm454, %v2863, 0
      %v2923 = vsel %vm454, %v2865, 0
      %v2926 = vsel %vm454, %v2867, 0
      %2928 = vmatpush.bf16.msra.mxu0 0
      %2929 = vmatpush.bf16.msra.mxu0 0
      %2930 = vmatpush.bf16.msra.mxu0 0
      %2931 = vmatpush.bf16.msra.mxu0 0
      %2932 = vmatpush.bf16.msra.mxu0 0
      %2933 = vmatpush.bf16.msra.mxu0 0
      %2934 = vmatpush.bf16.msra.mxu0 0
      %2935 = vmatpush.bf16.msra.mxu0 %v2872
      %2936 = vmatmul.bf16.gmra.mxu0 %v2875
      %v2937 = vpop.f32.mrf.mxu0
      %v2938 = vadd.f32 0.0, %v2937
      %v2939 = vpop.f32.mrf.mxu0
      %v2940 = vadd.f32 0.0, %v2939
      %2941 = vmatmul.bf16.gmra.mxu0 %v2878
      %v2942 = vpop.f32.mrf.mxu0
      %v2943 = vadd.f32 0.0, %v2942
      %v2944 = vpop.f32.mrf.mxu0
      %v2945 = vadd.f32 0.0, %v2944
      %2946 = vmatmul.bf16.gmra.mxu0 %v2881
      %v2947 = vpop.f32.mrf.mxu0
      %v2948 = vadd.f32 0.0, %v2947
      %v2949 = vpop.f32.mrf.mxu0
      %v2950 = vadd.f32 0.0, %v2949
      %2951 = vmatmul.bf16.gmra.mxu0 %v2884
      %v2952 = vpop.f32.mrf.mxu0
      %v2953 = vadd.f32 0.0, %v2952
      %v2954 = vpop.f32.mrf.mxu0
      %v2955 = vadd.f32 0.0, %v2954
      %2956 = vmatmul.bf16.gmra.mxu0 %v2887
      %v2957 = vpop.f32.mrf.mxu0
      %v2958 = vadd.f32 0.0, %v2957
      %v2959 = vpop.f32.mrf.mxu0
      %v2960 = vadd.f32 0.0, %v2959
      %2961 = vmatmul.bf16.gmra.mxu0 %v2890
      %v2962 = vpop.f32.mrf.mxu0
      %v2963 = vadd.f32 0.0, %v2962
      %v2964 = vpop.f32.mrf.mxu0
      %v2965 = vadd.f32 0.0, %v2964
      %2966 = vmatmul.bf16.gmra.mxu0 %v2893
      %v2967 = vpop.f32.mrf.mxu0
      %v2968 = vadd.f32 0.0, %v2967
      %v2969 = vpop.f32.mrf.mxu0
      %v2970 = vadd.f32 0.0, %v2969
      %2971 = vmatmul.bf16.gmra.mxu0 %v2896
      %v2972 = vpop.f32.mrf.mxu0
      %v2973 = vadd.f32 0.0, %v2972
      %v2974 = vpop.f32.mrf.mxu0
      %v2975 = vadd.f32 0.0, %v2974
      %2976 = vmatmul.bf16.gmra.mxu0 %v2899
      %v2977 = vpop.f32.mrf.mxu0
      %v2978 = vadd.f32 0.0, %v2977
      %v2979 = vpop.f32.mrf.mxu0
      %v2980 = vadd.f32 0.0, %v2979
      %2981 = vmatmul.bf16.gmra.mxu0 %v2902
      %v2982 = vpop.f32.mrf.mxu0
      %v2983 = vadd.f32 0.0, %v2982
      %v2984 = vpop.f32.mrf.mxu0
      %v2985 = vadd.f32 0.0, %v2984
      %2986 = vmatmul.bf16.gmra.mxu0 %v2905
      %v2987 = vpop.f32.mrf.mxu0
      %v2988 = vadd.f32 0.0, %v2987
      %v2989 = vpop.f32.mrf.mxu0
      %v2990 = vadd.f32 0.0, %v2989
      %2991 = vmatmul.bf16.gmra.mxu0 %v2908
      %v2992 = vpop.f32.mrf.mxu0
      %v2993 = vadd.f32 0.0, %v2992
      %v2994 = vpop.f32.mrf.mxu0
      %v2995 = vadd.f32 0.0, %v2994
      %2996 = vmatmul.bf16.gmra.mxu0 %v2911
      %v2997 = vpop.f32.mrf.mxu0
      %v2998 = vadd.f32 0.0, %v2997
      %v2999 = vpop.f32.mrf.mxu0
      %v3000 = vadd.f32 0.0, %v2999
      %3001 = vmatmul.bf16.gmra.mxu0 %v2914
      %v3002 = vpop.f32.mrf.mxu0
      %v3003 = vadd.f32 0.0, %v3002
      %v3004 = vpop.f32.mrf.mxu0
      %v3005 = vadd.f32 0.0, %v3004
      %3006 = vmatmul.bf16.gmra.mxu0 %v2917
      %v3007 = vpop.f32.mrf.mxu0
      %v3008 = vadd.f32 0.0, %v3007
      %v3009 = vpop.f32.mrf.mxu0
      %v3010 = vadd.f32 0.0, %v3009
      %3011 = vmatmul.bf16.gmra.mxu0 %v2920
      %v3012 = vpop.f32.mrf.mxu0
      %v3013 = vadd.f32 0.0, %v3012
      %v3014 = vpop.f32.mrf.mxu0
      %v3015 = vadd.f32 0.0, %v3014
      %3016 = vmatmul.bf16.gmra.mxu0 %v2923
      %v3017 = vpop.f32.mrf.mxu0
      %v3018 = vadd.f32 0.0, %v3017
      %v3019 = vpop.f32.mrf.mxu0
      %v3020 = vadd.f32 0.0, %v3019
      %3021 = vmatmul.bf16.gmra.mxu0 %v2926
      %v3022 = vpop.f32.mrf.mxu0
      %v3023 = vadd.f32 0.0, %v3022
      %v3024 = vpop.f32.mrf.mxu0
      %v3025 = vadd.f32 0.0, %v3024
      %3026 = vdwg.mxu0
      %v3027 = vadd.f32 %v2787, %v2938
      %v3028 = vadd.f32 %v2788, %v2940
      %v3029 = vadd.f32 %v2789, %v2943
      %v3030 = vadd.f32 %v2790, %v2945
      %v3031 = vadd.f32 %v2791, %v2948
      %v3032 = vadd.f32 %v2792, %v2950
      %v3033 = vadd.f32 %v2793, %v2953
      %v3034 = vadd.f32 %v2794, %v2955
      %v3035 = vadd.f32 %v2795, %v2958
      %v3036 = vadd.f32 %v2796, %v2960
      %v3037 = vadd.f32 %v2797, %v2963
      %v3038 = vadd.f32 %v2798, %v2965
      %v3039 = vadd.f32 %v2799, %v2968
      %v3040 = vadd.f32 %v2800, %v2970
      %v3041 = vadd.f32 %v2801, %v2973
      %v3042 = vadd.f32 %v2802, %v2975
      %v3043 = vadd.f32 %v2803, %v2978
      %v3044 = vadd.f32 %v2804, %v2980
      %v3045 = vadd.f32 %v2805, %v2983
      %v3046 = vadd.f32 %v2806, %v2985
      %v3047 = vadd.f32 %v2807, %v2988
      %v3048 = vadd.f32 %v2808, %v2990
      %v3049 = vadd.f32 %v2809, %v2993
      %v3050 = vadd.f32 %v2810, %v2995
      %v3051 = vadd.f32 %v2811, %v2998
      %v3052 = vadd.f32 %v2812, %v3000
      %v3053 = vadd.f32 %v2813, %v3003
      %v3054 = vadd.f32 %v2814, %v3005
      %v3055 = vadd.f32 %v2815, %v3008
      %v3056 = vadd.f32 %v2816, %v3010
      %v3057 = vadd.f32 %v2817, %v3013
      %v3058 = vadd.f32 %v2818, %v3015
      %v3059 = vadd.f32 %v2819, %v3018
      %v3060 = vadd.f32 %v2820, %v3020
      %v3061 = vadd.f32 %v2821, %v3023
      %v3062 = vadd.f32 %v2822, %v3025
      %v3063 = vld [vmem:[%s2] sm:$0x1]
      %v3065 = vperm.slane %v3063, 0
      %v3067 = vadd.f32 %v3027, %v3065
      %v3068 = vadd.f32 %v3028, %v3065
      %v3069 = vadd.f32 %v3029, %v3065
      %v3070 = vadd.f32 %v3030, %v3065
      %v3071 = vadd.f32 %v3031, %v3065
      %v3072 = vadd.f32 %v3032, %v3065
      %v3073 = vadd.f32 %v3033, %v3065
      %v3074 = vadd.f32 %v3034, %v3065
      %v3075 = vadd.f32 %v3035, %v3065
      %v3076 = vadd.f32 %v3036, %v3065
      %v3077 = vadd.f32 %v3037, %v3065
      %v3078 = vadd.f32 %v3038, %v3065
      %v3079 = vadd.f32 %v3039, %v3065
      %v3080 = vadd.f32 %v3040, %v3065
      %v3081 = vadd.f32 %v3041, %v3065
      %v3082 = vadd.f32 %v3042, %v3065
      %v3083 = vadd.f32 %v3043, %v3065
      %v3084 = vadd.f32 %v3044, %v3065
      %v3085 = vadd.f32 %v3045, %v3065
      %v3086 = vadd.f32 %v3046, %v3065
      %v3087 = vadd.f32 %v3047, %v3065
      %v3088 = vadd.f32 %v3048, %v3065
      %v3089 = vadd.f32 %v3049, %v3065
      %v3090 = vadd.f32 %v3050, %v3065
      %v3091 = vadd.f32 %v3051, %v3065
      %v3092 = vadd.f32 %v3052, %v3065
      %v3093 = vadd.f32 %v3053, %v3065
      %v3094 = vadd.f32 %v3054, %v3065
      %v3095 = vadd.f32 %v3055, %v3065
      %v3096 = vadd.f32 %v3056, %v3065
      %v3097 = vadd.f32 %v3057, %v3065
      %v3098 = vadd.f32 %v3058, %v3065
      %v3099 = vadd.f32 %v3059, %v3065
      %v3100 = vadd.f32 %v3060, %v3065
      %v3101 = vadd.f32 %v3061, %v3065
      %v3102 = vadd.f32 %v3062, %v3065
      %v3103 = vmax.f32 %v3067, 0.0
      %v3104 = vmax.f32 %v3068, 0.0
      %v3105 = vmax.f32 %v3069, 0.0
      %v3106 = vmax.f32 %v3070, 0.0
      %v3107 = vmax.f32 %v3071, 0.0
      %v3108 = vmax.f32 %v3072, 0.0
      %v3109 = vmax.f32 %v3073, 0.0
      %v3110 = vmax.f32 %v3074, 0.0
      %v3111 = vmax.f32 %v3075, 0.0
      %v3112 = vmax.f32 %v3076, 0.0
      %v3113 = vmax.f32 %v3077, 0.0
      %v3114 = vmax.f32 %v3078, 0.0
      %v3115 = vmax.f32 %v3079, 0.0
      %v3116 = vmax.f32 %v3080, 0.0
      %v3117 = vmax.f32 %v3081, 0.0
      %v3118 = vmax.f32 %v3082, 0.0
      %v3119 = vmax.f32 %v3083, 0.0
      %v3120 = vmax.f32 %v3084, 0.0
      %v3121 = vmax.f32 %v3085, 0.0
      %v3122 = vmax.f32 %v3086, 0.0
      %v3123 = vmax.f32 %v3087, 0.0
      %v3124 = vmax.f32 %v3088, 0.0
      %v3125 = vmax.f32 %v3089, 0.0
      %v3126 = vmax.f32 %v3090, 0.0
      %v3127 = vmax.f32 %v3091, 0.0
      %v3128 = vmax.f32 %v3092, 0.0
      %v3129 = vmax.f32 %v3093, 0.0
      %v3130 = vmax.f32 %v3094, 0.0
      %v3131 = vmax.f32 %v3095, 0.0
      %v3132 = vmax.f32 %v3096, 0.0
      %v3133 = vmax.f32 %v3097, 0.0
      %v3134 = vmax.f32 %v3098, 0.0
      %v3135 = vmax.f32 %v3099, 0.0
      %v3136 = vmax.f32 %v3100, 0.0
      %v3137 = vmax.f32 %v3101, 0.0
      %v3138 = vmax.f32 %v3102, 0.0
      %v3139 = vpack.c.bf16 %v3103, %v3103
      %v3140 = vpack.c.bf16 %v3104, %v3104
      %v3141 = vpack.c.bf16 %v3105, %v3105
      %v3142 = vpack.c.bf16 %v3106, %v3106
      %v3143 = vpack.c.bf16 %v3107, %v3107
      %v3144 = vpack.c.bf16 %v3108, %v3108
      %v3145 = vpack.c.bf16 %v3109, %v3109
      %v3146 = vpack.c.bf16 %v3110, %v3110
      %v3147 = vpack.c.bf16 %v3111, %v3111
      %v3148 = vpack.c.bf16 %v3112, %v3112
      %v3149 = vpack.c.bf16 %v3113, %v3113
      %v3150 = vpack.c.bf16 %v3114, %v3114
      %v3151 = vpack.c.bf16 %v3115, %v3115
      %v3152 = vpack.c.bf16 %v3116, %v3116
      %v3153 = vpack.c.bf16 %v3117, %v3117
      %v3154 = vpack.c.bf16 %v3118, %v3118
      %v3155 = vpack.c.bf16 %v3119, %v3119
      %v3156 = vpack.c.bf16 %v3120, %v3120
      %v3157 = vpack.c.bf16 %v3121, %v3121
      %v3158 = vpack.c.bf16 %v3122, %v3122
      %v3159 = vpack.c.bf16 %v3123, %v3123
      %v3160 = vpack.c.bf16 %v3124, %v3124
      %v3161 = vpack.c.bf16 %v3125, %v3125
      %v3162 = vpack.c.bf16 %v3126, %v3126
      %v3163 = vpack.c.bf16 %v3127, %v3127
      %v3164 = vpack.c.bf16 %v3128, %v3128
      %v3165 = vpack.c.bf16 %v3129, %v3129
      %v3166 = vpack.c.bf16 %v3130, %v3130
      %v3167 = vpack.c.bf16 %v3131, %v3131
      %v3168 = vpack.c.bf16 %v3132, %v3132
      %v3169 = vpack.c.bf16 %v3133, %v3133
      %v3170 = vpack.c.bf16 %v3134, %v3134
      %v3171 = vpack.c.bf16 %v3135, %v3135
      %v3172 = vpack.c.bf16 %v3136, %v3136
      %v3173 = vpack.c.bf16 %v3137, %v3137
      %v3174 = vpack.c.bf16 %v3138, %v3138
      %3175 = vst [vmem:[%s170] sm:$0xf] %v3139
      %3176 = vst [vmem:[%s170 + $0x4] sm:$0xf] %v3140
      %3177 = vst [vmem:[%s170 + $0x8] sm:$0xf] %v3141
      %3178 = vst [vmem:[%s170 + $0xc] sm:$0xf] %v3142
      %3179 = vst [vmem:[%s170 + $0x10] sm:$0xf] %v3143
      %3180 = vst [vmem:[%s170 + $0x14] sm:$0xf] %v3144
      %3181 = vst [vmem:[%s170 + $0x18] sm:$0xf] %v3145
      %3182 = vst [vmem:[%s170 + $0x1c] sm:$0xf] %v3146
      %3183 = vst [vmem:[%s170 + $0x20] sm:$0xf] %v3147
      %3184 = vst [vmem:[%s170 + $0x24] sm:$0xf] %v3148
      %3185 = vst [vmem:[%s170 + $0x28] sm:$0xf] %v3149
      %3186 = vst [vmem:[%s170 + $0x2c] sm:$0xf] %v3150
      %3187 = vst [vmem:[%s170 + $0x30] sm:$0xf] %v3151
      %3188 = vst [vmem:[%s170 + $0x34] sm:$0xf] %v3152
      %3189 = vst [vmem:[%s170 + $0x38] sm:$0xf] %v3153
      %3190 = vst [vmem:[%s170 + $0x3c] sm:$0xf] %v3154
      %3191 = vst [vmem:[%s170 + $0x40] sm:$0xf] %v3155
      %3192 = vst [vmem:[%s170 + $0x44] sm:$0xf] %v3156
      %3193 = vst [vmem:[%s170 + $0x48] sm:$0xf] %v3157
      %3194 = vst [vmem:[%s170 + $0x4c] sm:$0xf] %v3158
      %3195 = vst [vmem:[%s170 + $0x50] sm:$0xf] %v3159
      %3196 = vst [vmem:[%s170 + $0x54] sm:$0xf] %v3160
      %3197 = vst [vmem:[%s170 + $0x58] sm:$0xf] %v3161
      %3198 = vst [vmem:[%s170 + $0x5c] sm:$0xf] %v3162
      %3199 = vst [vmem:[%s170 + $0x60] sm:$0xf] %v3163
      %3200 = vst [vmem:[%s170 + $0x64] sm:$0xf] %v3164
      %3201 = vst [vmem:[%s170 + $0x68] sm:$0xf] %v3165
      %3202 = vst [vmem:[%s170 + $0x6c] sm:$0xf] %v3166
      %3203 = vst [vmem:[%s170 + $0x70] sm:$0xf] %v3167
      %3204 = vst [vmem:[%s170 + $0x74] sm:$0xf] %v3168
      %3205 = vst [vmem:[%s170 + $0x78] sm:$0xf] %v3169
      %3206 = vst [vmem:[%s170 + $0x7c] sm:$0xf] %v3170
      %3207 = vst [vmem:[%s170 + $0x80] sm:$0xf] %v3171
      %3208 = vst [vmem:[%s170 + $0x84] sm:$0xf] %v3172
      %3209 = vst [vmem:[%s170 + $0x88] sm:$0xf] %v3173
      %3210 = vst [vmem:[%s170 + $0x8c] sm:$0x7] %v3174
      %p3211 = scmp.lt.s32.totalorder %s14, 1
      %s3212 = scalar_select %p3211, %s14, 1
      %s3213 = smul.addr %s3212, 36
      %s3214 = smul.addr %s3213, 4
      %s3215 = scalar_lea.vmem %s3, %s3214
      // Predicated region
      $region33: #{_encode.3} parent=31 // pred_check
        %p3216 = pneg %p100
      $region34: #{_encode.3} parent=31 // pred_check_branch
        %3218 = sbr.rel (%p3216) target = $region36
      $region35: #{_encode.3} parent=31 // pred_region
        _
      $region36: #{_encode.3} parent=31 // pred_fallthru
        _
    $region32: #{_encode.3} parent=5 // pred_fallthru
      _
    %p3219 = scmp.le.s32.totalorder 2, %s9
    // Predicated region
    $region37: #{_encode.3} parent=5 // pred_check
      %p3220 = pneg %p3219
    $region38: #{_encode.3} parent=5 // pred_check_branch
      %3222 = sbr.rel (%p3220) target = $region40
    $region39: #{_encode.3} parent=5 // pred_region
      %s3223 = ssub.s32 %s9, 2
      // Predicated region
      $region41: #{_encode.3} parent=39 // pred_check
        %p3224 = pneg %p106
      $region42: #{_encode.3} parent=39 // pred_check_branch
        %3226 = sbr.rel (%p3224) target = $region44
      $region43: #{_encode.3} parent=39 // pred_region
        %p3227 = scmp.lt.s32.totalorder %s15, 1
        %s3228 = scalar_select %p3227, %s15, 1
        %s3229 = smul.addr %s3228, 36
        %s3230 = smul.addr %s3229, 4
        %s3231 = scalar_lea.vmem %s3, %s3230
      $region44: #{_encode.3} parent=39 // pred_fallthru
        _
    $region40: #{_encode.3} parent=5 // pred_fallthru
      _
  $region6: #{_encode.3} parent=0 // loop_footer
    %s13 = sadd.s32 1, %s9
  $region7: #{_encode.3} parent=0 // loop_footer_branch
    %8 = sbr.rel target = $region3
  $region8: #{_encode.3} parent=0 // loop_exit
    _

// kernel: _encode.5
$region0: #{_encode.5}
  #allocation0 [shape = 'u32[]', space=smem, size = 0x4, offset = 0x4, fixed_abs, tag = 'smem constant byte address 0x4 - core index']
  #allocation1 [shape = 'u32[72,128]{1,0:T(1,128)}', space=vmem, size = 0x9000, scoped, tag = 'internal scratch']
  %s0 = inlined_call_operand.vmem [shape: bf16[2,64,128], index: 0, kind: input, shape index: {}]
  %s1 = inlined_call_operand.vmem [shape: bf16[4,128,128], index: 1, kind: input, shape index: {}]
  %s2 = inlined_call_operand.vmem [shape: f32[1,128], index: 2, kind: input, shape index: {}]
  %s3 = inlined_call_operand.vmem [shape: f32[2,55,128], index: 3, kind: output, shape index: {0}]
  %s4 = inlined_call_operand.vmem [shape: s32[2,55,128], index: 4, kind: output, shape index: {1}]
  %5 = xla_tuple %s3, %s4
  %s6 = sld [smem:[#allocation0]]
  $region53: #{_encode.5} parent=0
    _
  %s8 = ssub.s32 1, %s6
  %s9 = scalar_select 0, %s8, %s6
  loop: start=0, step=1, limit=4
  $region2: #{_encode.5} parent=0 // loop_pre_header
    _
  $region3: #{_encode.5} parent=0 // loop_header
    %s11 = sphi 0, %s15
    %p12 = scmp.ge.s32.totalorder %s11, 4
    %s21 = sphi 0, %s23
    %s24 = sphi 0, %s21
    %s25 = sphi 0, %s24
    %s41 = sphi 0, %s25
    %s45 = sphi 0, %s45
    %s47 = sphi 0, %s45
    %s48 = sphi 0, %s47
    %s62 = sphi 0, %s48
    %s66 = sphi 0, %s66
    %s68 = sphi 0, %s66
    %s69 = sphi 0, %s68
    %s83 = sphi 0, %s69
    %s89 = sphi 0, %s91
    %s92 = sphi 0, %s89
    %s93 = sphi 0, %s92
    %s109 = sphi 0, %s93
    %s115 = sphi 0, %s117
    %s118 = sphi 0, %s115
    %s119 = sphi 0, %s118
    %s135 = sphi 0, %s119
  $region4: #{_encode.5} parent=0 // loop_header_branch
    %14 = sbr.rel (%p12) target = $region8
  $region5: #{_encode.5} parent=0 // loop_body
    %s16 = ssub.s32 %s11, 1
    %s17 = ssub.s32 %s11, 2
    %s18 = sadd.s32 %s11, 1
    %s19 = ssub.s32 %s11, %s18
    %p20 = scmp.eq.s32.totalorder %s19, 0
    %s22 = sadd.s32 %s21, 1
    %s23 = scalar_select %p20, %s21, %s22
    %p26 = pneg %p20
    %p27 = scmp.eq.s32.totalorder %s11, 1
    %p28 = por %p26, %p27
    %p29 = scmp.ne.s32.totalorder %s21, %s24
    %p30 = scmp.eq.s32.totalorder %s11, 0
    %p31 = por %p29, %p30
    %p32 = scmp.ne.s32.totalorder %s21, %s24
    %p33 = scmp.eq.s32.totalorder %s16, 1
    %p34 = por %p32, %p33
    %p35 = scmp.ne.s32.totalorder %s24, %s25
    %p36 = scmp.eq.s32.totalorder %s16, 0
    %p37 = por %p35, %p36
    %p38 = scmp.ne.s32.totalorder %s24, %s25
    %p39 = scmp.eq.s32.totalorder %s17, 1
    %p40 = por %p38, %p39
    %p42 = scmp.ne.s32.totalorder %s25, %s41
    %p43 = scmp.eq.s32.totalorder %s17, 0
    %p44 = por %p42, %p43
    %s46 = sadd.s32 %s45, 1
    %p49 = scmp.eq.s32.totalorder %s11, 1
    %p50 = scmp.ne.s32.totalorder %s45, %s47
    %p51 = scmp.eq.s32.totalorder %s11, 0
    %p52 = por %p50, %p51
    %p53 = scmp.ne.s32.totalorder %s45, %s47
    %p54 = scmp.eq.s32.totalorder %s16, 1
    %p55 = por %p53, %p54
    %p56 = scmp.ne.s32.totalorder %s47, %s48
    %p57 = scmp.eq.s32.totalorder %s16, 0
    %p58 = por %p56, %p57
    %p59 = scmp.ne.s32.totalorder %s47, %s48
    %p60 = scmp.eq.s32.totalorder %s17, 1
    %p61 = por %p59, %p60
    %p63 = scmp.ne.s32.totalorder %s48, %s62
    %p64 = scmp.eq.s32.totalorder %s17, 0
    %p65 = por %p63, %p64
    %s67 = sadd.s32 %s66, 1
    %p70 = scmp.eq.s32.totalorder %s11, 1
    %p71 = scmp.ne.s32.totalorder %s66, %s68
    %p72 = scmp.eq.s32.totalorder %s11, 0
    %p73 = por %p71, %p72
    %p74 = scmp.ne.s32.totalorder %s66, %s68
    %p75 = scmp.eq.s32.totalorder %s16, 1
    %p76 = por %p74, %p75
    %p77 = scmp.ne.s32.totalorder %s68, %s69
    %p78 = scmp.eq.s32.totalorder %s16, 0
    %p79 = por %p77, %p78
    %p80 = scmp.ne.s32.totalorder %s68, %s69
    %p81 = scmp.eq.s32.totalorder %s17, 1
    %p82 = por %p80, %p81
    %p84 = scmp.ne.s32.totalorder %s69, %s83
    %p85 = scmp.eq.s32.totalorder %s17, 0
    %p86 = por %p84, %p85
    %s87 = ssub.s32 %s11, %s18
    %p88 = scmp.eq.s32.totalorder %s87, 0
    %s90 = sadd.s32 %s89, 1
    %s91 = scalar_select %p88, %s89, %s90
    %p94 = pneg %p88
    %p95 = scmp.eq.s32.totalorder %s11, 1
    %p96 = por %p94, %p95
    %p97 = scmp.ne.s32.totalorder %s89, %s92
    %p98 = scmp.eq.s32.totalorder %s11, 0
    %p99 = por %p97, %p98
    %p100 = scmp.ne.s32.totalorder %s89, %s92
    %p101 = scmp.eq.s32.totalorder %s16, 1
    %p102 = por %p100, %p101
    %p103 = scmp.ne.s32.totalorder %s92, %s93
    %p104 = scmp.eq.s32.totalorder %s16, 0
    %p105 = por %p103, %p104
    %p106 = scmp.ne.s32.totalorder %s92, %s93
    %p107 = scmp.eq.s32.totalorder %s17, 1
    %p108 = por %p106, %p107
    %p110 = scmp.ne.s32.totalorder %s93, %s109
    %p111 = scmp.eq.s32.totalorder %s17, 0
    %p112 = por %p110, %p111
    %s113 = ssub.s32 %s11, %s18
    %p114 = scmp.eq.s32.totalorder %s113, 0
    %s116 = sadd.s32 %s115, 1
    %s117 = scalar_select %p114, %s115, %s116
    %p120 = pneg %p114
    %p121 = scmp.eq.s32.totalorder %s11, 1
    %p122 = por %p120, %p121
    %p123 = scmp.ne.s32.totalorder %s115, %s118
    %p124 = scmp.eq.s32.totalorder %s11, 0
    %p125 = por %p123, %p124
    %p126 = scmp.ne.s32.totalorder %s115, %s118
    %p127 = scmp.eq.s32.totalorder %s16, 1
    %p128 = por %p126, %p127
    %p129 = scmp.ne.s32.totalorder %s118, %s119
    %p130 = scmp.eq.s32.totalorder %s16, 0
    %p131 = por %p129, %p130
    %p132 = scmp.ne.s32.totalorder %s118, %s119
    %p133 = scmp.eq.s32.totalorder %s17, 1
    %p134 = por %p132, %p133
    %p136 = scmp.ne.s32.totalorder %s119, %s135
    %p137 = scmp.eq.s32.totalorder %s17, 0
    %p138 = por %p136, %p137
    %p139 = scmp.le.s32.totalorder 1, %s11
    %p140 = scmp.lt.s32.totalorder %s11, 3
    %p141 = pnand %p139, %p140
    %p142 = pneg %p141
    // Predicated region
    $region9: #{_encode.5} parent=5 // pred_check
      _
    $region10: #{_encode.5} parent=5 // pred_check_branch
      %144 = sbr.rel (%p141) target = $region12
    $region11: #{_encode.5} parent=5 // pred_region
      %s145 = ssub.s32 %s11, 1
      // Predicated region
      $region13: #{_encode.5} parent=11 // pred_check
        %p146 = pneg %p58
      $region14: #{_encode.5} parent=11 // pred_check_branch
        %148 = sbr.rel (%p146) target = $region16
      $region15: #{_encode.5} parent=11 // pred_region
        _
      $region16: #{_encode.5} parent=11 // pred_fallthru
        _
      // Predicated region
      $region17: #{_encode.5} parent=11 // pred_check
        %p149 = pneg %p79
      $region18: #{_encode.5} parent=11 // pred_check_branch
        %151 = sbr.rel (%p149) target = $region20
      $region19: #{_encode.5} parent=11 // pred_region
        _
      $region20: #{_encode.5} parent=11 // pred_fallthru
        _
    $region12: #{_encode.5} parent=5 // pred_fallthru
      _
    %p152 = scmp.lt.s32.totalorder %s11, 2
    // Predicated region
    $region21: #{_encode.5} parent=5 // pred_check
      %p153 = pneg %p152
    $region22: #{_encode.5} parent=5 // pred_check_branch
      %155 = sbr.rel (%p153) target = $region24
    $region23: #{_encode.5} parent=5 // pred_region
      // Predicated region
      $region25: #{_encode.5} parent=23 // pred_check
        %p156 = pneg %p31
      $region26: #{_encode.5} parent=23 // pred_check_branch
        %158 = sbr.rel (%p156) target = $region28
      $region27: #{_encode.5} parent=23 // pred_region
        %p159 = scmp.lt.s32.totalorder %s11, 1
        %s160 = scalar_select %p159, %s11, 1
        %s161 = smul.addr %s160, 8
        %s162 = smul.addr %s161, 4
        %s163 = scalar_lea.vmem %s0, %s162
      $region28: #{_encode.5} parent=23 // pred_fallthru
        _
    $region24: #{_encode.5} parent=5 // pred_fallthru
      _
    %p164 = scmp.le.s32.totalorder 1, %s11
    %p165 = scmp.lt.s32.totalorder %s11, 3
    %p166 = pnand %p164, %p165
    %p167 = pneg %p166
    // Predicated region
    $region29: #{_encode.5} parent=5 // pred_check
      _
    $region30: #{_encode.5} parent=5 // pred_check_branch
      %169 = sbr.rel (%p166) target = $region32
    $region31: #{_encode.5} parent=5 // pred_region
      %s170 = ssub.s32 %s11, 1
      %p171 = scmp.lt.s32.totalorder %s16, 1
      %s172 = scalar_select %p171, %s16, 1
      %s173 = smul.addr %s172, 8
      %s174 = smul.addr %s173, 4
      %s175 = scalar_lea.vmem %s0, %s174
      %p176 = pneg %p37
      %p177 = pneg %p34
      %p178 = pneg %p58
      %p179 = pneg %p55
      %p180 = pneg %p79
      %p181 = pneg %p76
      %p182 = pneg %p105
      %p183 = pneg %p102
      %p184 = scmp.lt.s32.totalorder %s16, 1
      %s185 = scalar_select %p184, %s16, 1
      %s186 = smul.addr %s185, 7
      %s187 = smul.addr %s186, 8
      %s188 = scalar_lea.vmem %s3, %s187
      %p189 = pneg %p131
      %p190 = pneg %p128
      %p191 = scmp.lt.s32.totalorder %s16, 1
      %s192 = scalar_select %p191, %s16, 1
      %s193 = smul.addr %s192, 7
      %s194 = smul.addr %s193, 8
      %s195 = scalar_lea.vmem %s4, %s194
      %p196 = scmp.lt.s32.totalorder %s16, 1
      %s197 = scalar_select %p196, %s16, 1
      %s198 = smul.addr %s197, 8
      %s199 = smul.addr %s198, 4
      %s200 = scalar_lea.vmem %s0, %s199
      %p201 = scmp.lt.s32.totalorder %s16, 1
      %s202 = scalar_select %p201, %s16, 1
      %s203 = smul.addr %s202, 7
      %s204 = smul.addr %s203, 8
      %s205 = scalar_lea.vmem %s3, %s204
      %p206 = scmp.lt.s32.totalorder %s16, 1
      %s207 = scalar_select %p206, %s16, 1
      %s208 = smul.addr %s207, 7
      %s209 = smul.addr %s208, 8
      %s210 = scalar_lea.vmem %s4, %s209
      %v211 = vld [vmem:[%s200] sm:$0xf]
      %v212 = vld [vmem:[%s200 + $0x4] sm:$0xf]
      %v213 = vld [vmem:[%s200 + $0x8] sm:$0xf]
      %v214 = vld [vmem:[%s200 + $0xc] sm:$0xf]
      %v215 = vld [vmem:[%s200 + $0x10] sm:$0xf]
      %v216 = vld [vmem:[%s200 + $0x14] sm:$0xf]
      %v217 = vld [vmem:[%s200 + $0x18] sm:$0xf]
      %v218 = vld [vmem:[%s1] sm:$0xf]
      %v219 = vld [vmem:[%s1 + $0x4] sm:$0xf]
      %v220 = vld [vmem:[%s1 + $0x8] sm:$0xf]
      %v221 = vld [vmem:[%s1 + $0xc] sm:$0xf]
      %v222 = vld [vmem:[%s1 + $0x10] sm:$0xf]
      %v223 = vld [vmem:[%s1 + $0x14] sm:$0xf]
      %v224 = vld [vmem:[%s1 + $0x18] sm:$0xf]
      %v225 = vld [vmem:[%s1 + $0x1c] sm:$0xf]
      %v226 = vld [vmem:[%s1 + $0x20] sm:$0xf]
      %v227 = vld [vmem:[%s1 + $0x24] sm:$0xf]
      %v228 = vld [vmem:[%s1 + $0x28] sm:$0xf]
      %v229 = vld [vmem:[%s1 + $0x2c] sm:$0xf]
      %v230 = vld [vmem:[%s1 + $0x30] sm:$0xf]
      %v231 = vld [vmem:[%s1 + $0x34] sm:$0xf]
      %v232 = vld [vmem:[%s1 + $0x38] sm:$0xf]
      %v233 = vld [vmem:[%s1 + $0x3c] sm:$0xf]
      %s234 = scalar_lea.vmem %s1, 64
      %v235 = vld [vmem:[%s234] sm:$0xf]
      %v236 = vld [vmem:[%s234 + $0x4] sm:$0xf]
      %v237 = vld [vmem:[%s234 + $0x8] sm:$0xf]
      %v238 = vld [vmem:[%s234 + $0xc] sm:$0xf]
      %v239 = vld [vmem:[%s234 + $0x10] sm:$0xf]
      %v240 = vld [vmem:[%s234 + $0x14] sm:$0xf]
      %v241 = vld [vmem:[%s234 + $0x18] sm:$0xf]
      %v242 = vld [vmem:[%s234 + $0x1c] sm:$0xf]
      %v243 = vld [vmem:[%s234 + $0x20] sm:$0xf]
      %v244 = vld [vmem:[%s234 + $0x24] sm:$0xf]
      %v245 = vld [vmem:[%s234 + $0x28] sm:$0xf]
      %v246 = vld [vmem:[%s234 + $0x2c] sm:$0xf]
      %v247 = vld [vmem:[%s234 + $0x30] sm:$0xf]
      %v248 = vld [vmem:[%s234 + $0x34] sm:$0xf]
      %v249 = vld [vmem:[%s234 + $0x38] sm:$0xf]
      %v250 = vld [vmem:[%s234 + $0x3c] sm:$0xf]
      %v258 = vunpack.c.l.b16 %v211
      %v259 = vunpack.c.l.b16 %v212
      %v260 = vunpack.c.l.b16 %v213
      %v261 = vunpack.c.l.b16 %v214
      %v262 = vunpack.c.l.b16 %v215
      %v263 = vunpack.c.l.b16 %v216
      %v264 = vunpack.c.l.b16 %v217
      %v265 = vpack.c.b16 %v259, %v258
      %v266 = vpack.c.b16 %v261, %v260
      %v267 = vpack.c.b16 %v263, %v262
      %v268 = vpack.c.b16 %v264, %v264
      %vm269 = vsmask.f32 7424
      %v271 = vshrl.u32 %v265, 16
      %v273 = vshll.u32 %v265, 16
      %v275 = vrot.slane %v273, 1
      %v276 = vor.u32 %v271, %v275
      %v278 = vshll.u32 %v266, 16
      %v280 = vrot.slane %v278, 1
      %v281 = vsel %vm269, %v276, %v280
      %v282 = vshrl.u32 %v266, 16
      %v284 = vor.u32 %v282, %v280
      %v286 = vshll.u32 %v267, 16
      %v288 = vrot.slane %v286, 1
      %v289 = vsel %vm269, %v284, %v288
      %v290 = vshrl.u32 %v267, 16
      %v292 = vor.u32 %v290, %v288
      %v294 = vshll.u32 %v268, 16
      %v296 = vrot.slane %v294, 1
      %v297 = vsel %vm269, %v292, %v296
      %v298 = vshrl.u32 %v268, 16
      %v300 = vor.u32 %v298, %v296
      %v321 = vunpack.c.l.b16 %v235
      %v322 = vunpack.c.l.b16 %v236
      %v323 = vunpack.c.l.b16 %v237
      %v324 = vunpack.c.l.b16 %v238
      %v325 = vunpack.c.l.b16 %v239
      %v326 = vunpack.c.l.b16 %v240
      %v327 = vunpack.c.l.b16 %v241
      %v328 = vunpack.c.l.b16 %v242
      %v329 = vunpack.c.l.b16 %v243
      %v330 = vunpack.c.l.b16 %v244
      %v331 = vunpack.c.l.b16 %v245
      %v332 = vunpack.c.l.b16 %v246
      %v333 = vunpack.c.l.b16 %v247
      %v334 = vunpack.c.l.b16 %v248
      %v335 = vunpack.c.l.b16 %v249
      %v336 = vunpack.c.l.b16 %v250
      %v337 = vpack.c.b16 %v322, %v321
      %v338 = vpack.c.b16 %v324, %v323
      %v339 = vpack.c.b16 %v326, %v325
      %v340 = vpack.c.b16 %v328, %v327
      %v341 = vpack.c.b16 %v330, %v329
      %v342 = vpack.c.b16 %v332, %v331
      %v343 = vpack.c.b16 %v334, %v333
      %v344 = vpack.c.b16 %v336, %v335
      %353 = vmatpush.bf16.msra.mxu0 %v344
      %354 = vmatpush.bf16.msra.mxu0 %v343
      %355 = vmatpush.bf16.msra.mxu0 %v342
      %356 = vmatpush.bf16.msra.mxu0 %v341
      %357 = vmatpush.bf16.msra.mxu0 %v340
      %358 = vmatpush.bf16.msra.mxu0 %v339
      %359 = vmatpush.bf16.msra.mxu0 %v338
      %360 = vmatpush.bf16.msra.mxu0 %v337
      %361 = vmatmul.bf16.gmra.mxu0 %v281
      %v362 = vpop.f32.mrf.mxu0
      %v363 = vadd.f32 0.0, %v362
      %v364 = vpop.f32.mrf.mxu0
      %v365 = vadd.f32 0.0, %v364
      %366 = vmatmul.bf16.gmra.mxu0 %v289
      %v367 = vpop.f32.mrf.mxu0
      %v368 = vadd.f32 0.0, %v367
      %v369 = vpop.f32.mrf.mxu0
      %v370 = vadd.f32 0.0, %v369
      %371 = vmatmul.bf16.gmra.mxu0 %v297
      %v372 = vpop.f32.mrf.mxu0
      %v373 = vadd.f32 0.0, %v372
      %v374 = vpop.f32.mrf.mxu0
      %v375 = vadd.f32 0.0, %v374
      %376 = vmatmul.bf16.gmra.mxu0 %v300
      %v377 = vpop.f32.mrf.mxu0
      %v378 = vadd.f32 0.0, %v377
      %v379 = vpop.f32.mrf.mxu0
      %380 = vdwg.mxu0
      %v401 = vunpack.c.l.b16 %v218
      %v402 = vunpack.c.l.b16 %v219
      %v403 = vunpack.c.l.b16 %v220
      %v404 = vunpack.c.l.b16 %v221
      %v405 = vunpack.c.l.b16 %v222
      %v406 = vunpack.c.l.b16 %v223
      %v407 = vunpack.c.l.b16 %v224
      %v408 = vunpack.c.l.b16 %v225
      %v409 = vunpack.c.l.b16 %v226
      %v410 = vunpack.c.l.b16 %v227
      %v411 = vunpack.c.l.b16 %v228
      %v412 = vunpack.c.l.b16 %v229
      %v413 = vunpack.c.l.b16 %v230
      %v414 = vunpack.c.l.b16 %v231
      %v415 = vunpack.c.l.b16 %v232
      %v416 = vunpack.c.l.b16 %v233
      %v417 = vpack.c.b16 %v402, %v401
      %v418 = vpack.c.b16 %v404, %v403
      %v419 = vpack.c.b16 %v406, %v405
      %v420 = vpack.c.b16 %v408, %v407
      %v421 = vpack.c.b16 %v410, %v409
      %v422 = vpack.c.b16 %v412, %v411
      %v423 = vpack.c.b16 %v414, %v413
      %v424 = vpack.c.b16 %v416, %v415
      %433 = vmatpush.bf16.msra.mxu0 %v424
      %434 = vmatpush.bf16.msra.mxu0 %v423
      %435 = vmatpush.bf16.msra.mxu0 %v422
      %436 = vmatpush.bf16.msra.mxu0 %v421
      %437 = vmatpush.bf16.msra.mxu0 %v420
      %438 = vmatpush.bf16.msra.mxu0 %v419
      %439 = vmatpush.bf16.msra.mxu0 %v418
      %440 = vmatpush.bf16.msra.mxu0 %v417
      %441 = vmatmul.bf16.gmra.mxu0 %v265
      %v442 = vpop.f32.mrf.mxu0
      %v443 = vadd.f32 %v363, %v442
      %v444 = vpop.f32.mrf.mxu0
      %v445 = vadd.f32 %v365, %v444
      %446 = vmatmul.bf16.gmra.mxu0 %v266
      %v447 = vpop.f32.mrf.mxu0
      %v448 = vadd.f32 %v368, %v447
      %v449 = vpop.f32.mrf.mxu0
      %v450 = vadd.f32 %v370, %v449
      %451 = vmatmul.bf16.gmra.mxu0 %v267
      %v452 = vpop.f32.mrf.mxu0
      %v453 = vadd.f32 %v373, %v452
      %v454 = vpop.f32.mrf.mxu0
      %v455 = vadd.f32 %v375, %v454
      %456 = vmatmul.bf16.gmra.mxu0 %v268
      %v457 = vpop.f32.mrf.mxu0
      %v458 = vadd.f32 %v378, %v457
      %v459 = vpop.f32.mrf.mxu0
      %460 = vdwg.mxu0
      %v461 = vld [vmem:[%s200 + $0x4] sm:$0xf]
      %v462 = vld [vmem:[%s200 + $0x8] sm:$0xf]
      %v463 = vld [vmem:[%s200 + $0xc] sm:$0xf]
      %v464 = vld [vmem:[%s200 + $0x10] sm:$0xf]
      %v465 = vld [vmem:[%s200 + $0x14] sm:$0xf]
      %v466 = vld [vmem:[%s200 + $0x18] sm:$0xf]
      %v467 = vld [vmem:[%s200 + $0x1c] sm:$0xf]
      %s468 = scalar_lea.vmem %s1, 128
      %v469 = vld [vmem:[%s468] sm:$0xf]
      %v470 = vld [vmem:[%s468 + $0x4] sm:$0xf]
      %v471 = vld [vmem:[%s468 + $0x8] sm:$0xf]
      %v472 = vld [vmem:[%s468 + $0xc] sm:$0xf]
      %v473 = vld [vmem:[%s468 + $0x10] sm:$0xf]
      %v474 = vld [vmem:[%s468 + $0x14] sm:$0xf]
      %v475 = vld [vmem:[%s468 + $0x18] sm:$0xf]
      %v476 = vld [vmem:[%s468 + $0x1c] sm:$0xf]
      %v477 = vld [vmem:[%s468 + $0x20] sm:$0xf]
      %v478 = vld [vmem:[%s468 + $0x24] sm:$0xf]
      %v479 = vld [vmem:[%s468 + $0x28] sm:$0xf]
      %v480 = vld [vmem:[%s468 + $0x2c] sm:$0xf]
      %v481 = vld [vmem:[%s468 + $0x30] sm:$0xf]
      %v482 = vld [vmem:[%s468 + $0x34] sm:$0xf]
      %v483 = vld [vmem:[%s468 + $0x38] sm:$0xf]
      %v484 = vld [vmem:[%s468 + $0x3c] sm:$0xf]
      %v492 = vunpack.c.l.b16 %v461
      %v493 = vunpack.c.l.b16 %v462
      %v494 = vunpack.c.l.b16 %v463
      %v495 = vunpack.c.l.b16 %v464
      %v496 = vunpack.c.l.b16 %v465
      %v497 = vunpack.c.l.b16 %v466
      %v498 = vunpack.c.l.b16 %v467
      %v499 = vpack.c.b16 %v493, %v492
      %v500 = vpack.c.b16 %v495, %v494
      %v501 = vpack.c.b16 %v497, %v496
      %v502 = vpack.c.b16 %v498, %v498
      %v523 = vunpack.c.l.b16 %v469
      %v524 = vunpack.c.l.b16 %v470
      %v525 = vunpack.c.l.b16 %v471
      %v526 = vunpack.c.l.b16 %v472
      %v527 = vunpack.c.l.b16 %v473
      %v528 = vunpack.c.l.b16 %v474
      %v529 = vunpack.c.l.b16 %v475
      %v530 = vunpack.c.l.b16 %v476
      %v531 = vunpack.c.l.b16 %v477
      %v532 = vunpack.c.l.b16 %v478
      %v533 = vunpack.c.l.b16 %v479
      %v534 = vunpack.c.l.b16 %v480
      %v535 = vunpack.c.l.b16 %v481
      %v536 = vunpack.c.l.b16 %v482
      %v537 = vunpack.c.l.b16 %v483
      %v538 = vunpack.c.l.b16 %v484
      %v539 = vpack.c.b16 %v524, %v523
      %v540 = vpack.c.b16 %v526, %v525
      %v541 = vpack.c.b16 %v528, %v527
      %v542 = vpack.c.b16 %v530, %v529
      %v543 = vpack.c.b16 %v532, %v531
      %v544 = vpack.c.b16 %v534, %v533
      %v545 = vpack.c.b16 %v536, %v535
      %v546 = vpack.c.b16 %v538, %v537
      %555 = vmatpush.bf16.msra.mxu0 %v546
      %556 = vmatpush.bf16.msra.mxu0 %v545
      %557 = vmatpush.bf16.msra.mxu0 %v544
      %558 = vmatpush.bf16.msra.mxu0 %v543
      %559 = vmatpush.bf16.msra.mxu0 %v542
      %560 = vmatpush.bf16.msra.mxu0 %v541
      %561 = vmatpush.bf16.msra.mxu0 %v540
      %562 = vmatpush.bf16.msra.mxu0 %v539
      %563 = vmatmul.bf16.gmra.mxu0 %v499
      %v564 = vpop.f32.mrf.mxu0
      %v565 = vadd.f32 0.0, %v564
      %v566 = vpop.f32.mrf.mxu0
      %v567 = vadd.f32 0.0, %v566
      %568 = vmatmul.bf16.gmra.mxu0 %v500
      %v569 = vpop.f32.mrf.mxu0
      %v570 = vadd.f32 0.0, %v569
      %v571 = vpop.f32.mrf.mxu0
      %v572 = vadd.f32 0.0, %v571
      %573 = vmatmul.bf16.gmra.mxu0 %v501
      %v574 = vpop.f32.mrf.mxu0
      %v575 = vadd.f32 0.0, %v574
      %v576 = vpop.f32.mrf.mxu0
      %v577 = vadd.f32 0.0, %v576
      %578 = vmatmul.bf16.gmra.mxu0 %v502
      %v579 = vpop.f32.mrf.mxu0
      %v580 = vadd.f32 0.0, %v579
      %v581 = vpop.f32.mrf.mxu0
      %582 = vdwg.mxu0
      %v583 = vadd.f32 %v443, %v565
      %v584 = vadd.f32 %v445, %v567
      %v585 = vadd.f32 %v448, %v570
      %v586 = vadd.f32 %v450, %v572
      %v587 = vadd.f32 %v453, %v575
      %v588 = vadd.f32 %v455, %v577
      %v589 = vadd.f32 %v458, %v580
      %s590 = scalar_lea.vmem %s1, 192
      %v591 = vld [vmem:[%s590] sm:$0xf]
      %v592 = vld [vmem:[%s590 + $0x4] sm:$0xf]
      %v593 = vld [vmem:[%s590 + $0x8] sm:$0xf]
      %v594 = vld [vmem:[%s590 + $0xc] sm:$0xf]
      %v595 = vld [vmem:[%s590 + $0x10] sm:$0xf]
      %v596 = vld [vmem:[%s590 + $0x14] sm:$0xf]
      %v597 = vld [vmem:[%s590 + $0x18] sm:$0xf]
      %v598 = vld [vmem:[%s590 + $0x1c] sm:$0xf]
      %v599 = vld [vmem:[%s590 + $0x20] sm:$0xf]
      %v600 = vld [vmem:[%s590 + $0x24] sm:$0xf]
      %v601 = vld [vmem:[%s590 + $0x28] sm:$0xf]
      %v602 = vld [vmem:[%s590 + $0x2c] sm:$0xf]
      %v603 = vld [vmem:[%s590 + $0x30] sm:$0xf]
      %v604 = vld [vmem:[%s590 + $0x34] sm:$0xf]
      %v605 = vld [vmem:[%s590 + $0x38] sm:$0xf]
      %v606 = vld [vmem:[%s590 + $0x3c] sm:$0xf]
      %v608 = vshrl.u32 %v499, 16
      %v610 = vshll.u32 %v499, 16
      %v612 = vrot.slane %v610, 1
      %v613 = vor.u32 %v608, %v612
      %v615 = vshll.u32 %v500, 16
      %v617 = vrot.slane %v615, 1
      %v618 = vsel %vm269, %v613, %v617
      %v619 = vshrl.u32 %v500, 16
      %v621 = vor.u32 %v619, %v617
      %v623 = vshll.u32 %v501, 16
      %v625 = vrot.slane %v623, 1
      %v626 = vsel %vm269, %v621, %v625
      %v627 = vshrl.u32 %v501, 16
      %v629 = vor.u32 %v627, %v625
      %v631 = vshll.u32 %v502, 16
      %v633 = vrot.slane %v631, 1
      %v634 = vsel %vm269, %v629, %v633
      %v635 = vshrl.u32 %v502, 16
      %v637 = vor.u32 %v635, %v633
      %v658 = vunpack.c.l.b16 %v591
      %v659 = vunpack.c.l.b16 %v592
      %v660 = vunpack.c.l.b16 %v593
      %v661 = vunpack.c.l.b16 %v594
      %v662 = vunpack.c.l.b16 %v595
      %v663 = vunpack.c.l.b16 %v596
      %v664 = vunpack.c.l.b16 %v597
      %v665 = vunpack.c.l.b16 %v598
      %v666 = vunpack.c.l.b16 %v599
      %v667 = vunpack.c.l.b16 %v600
      %v668 = vunpack.c.l.b16 %v601
      %v669 = vunpack.c.l.b16 %v602
      %v670 = vunpack.c.l.b16 %v603
      %v671 = vunpack.c.l.b16 %v604
      %v672 = vunpack.c.l.b16 %v605
      %v673 = vunpack.c.l.b16 %v606
      %v674 = vpack.c.b16 %v659, %v658
      %v675 = vpack.c.b16 %v661, %v660
      %v676 = vpack.c.b16 %v663, %v662
      %v677 = vpack.c.b16 %v665, %v664
      %v678 = vpack.c.b16 %v667, %v666
      %v679 = vpack.c.b16 %v669, %v668
      %v680 = vpack.c.b16 %v671, %v670
      %v681 = vpack.c.b16 %v673, %v672
      %690 = vmatpush.bf16.msra.mxu0 %v681
      %691 = vmatpush.bf16.msra.mxu0 %v680
      %692 = vmatpush.bf16.msra.mxu0 %v679
      %693 = vmatpush.bf16.msra.mxu0 %v678
      %694 = vmatpush.bf16.msra.mxu0 %v677
      %695 = vmatpush.bf16.msra.mxu0 %v676
      %696 = vmatpush.bf16.msra.mxu0 %v675
      %697 = vmatpush.bf16.msra.mxu0 %v674
      %698 = vmatmul.bf16.gmra.mxu0 %v618
      %v699 = vpop.f32.mrf.mxu0
      %v700 = vadd.f32 0.0, %v699
      %v701 = vpop.f32.mrf.mxu0
      %v702 = vadd.f32 0.0, %v701
      %703 = vmatmul.bf16.gmra.mxu0 %v626
      %v704 = vpop.f32.mrf.mxu0
      %v705 = vadd.f32 0.0, %v704
      %v706 = vpop.f32.mrf.mxu0
      %v707 = vadd.f32 0.0, %v706
      %708 = vmatmul.bf16.gmra.mxu0 %v634
      %v709 = vpop.f32.mrf.mxu0
      %v710 = vadd.f32 0.0, %v709
      %v711 = vpop.f32.mrf.mxu0
      %v712 = vadd.f32 0.0, %v711
      %713 = vmatmul.bf16.gmra.mxu0 %v637
      %v714 = vpop.f32.mrf.mxu0
      %v715 = vadd.f32 0.0, %v714
      %v716 = vpop.f32.mrf.mxu0
      %717 = vdwg.mxu0
      %v718 = vadd.f32 %v583, %v700
      %v719 = vadd.f32 %v584, %v702
      %v720 = vadd.f32 %v585, %v705
      %v721 = vadd.f32 %v586, %v707
      %v722 = vadd.f32 %v587, %v710
      %v723 = vadd.f32 %v588, %v712
      %v724 = vadd.f32 %v589, %v715
      %725 = vst [vmem:[%s205] sm:$0xff] %v718
      %726 = vst [vmem:[%s205 + $0x8] sm:$0xff] %v719
      %727 = vst [vmem:[%s205 + $0x10] sm:$0xff] %v720
      %728 = vst [vmem:[%s205 + $0x18] sm:$0xff] %v721
      %729 = vst [vmem:[%s205 + $0x20] sm:$0xff] %v722
      %730 = vst [vmem:[%s205 + $0x28] sm:$0xff] %v723
      %731 = vst [vmem:[%s205 + $0x30] sm:$0x7f] %v724
      %v732 = vld [vmem:[%s2] sm:$0x1]
      %v734 = vperm.slane %v732, 0
      %v736 = vsub.f32 %v718, %v734
      %v737 = vsub.f32 %v719, %v734
      %v738 = vsub.f32 %v720, %v734
      %v739 = vsub.f32 %v721, %v734
      %v740 = vsub.f32 %v722, %v734
      %v741 = vsub.f32 %v723, %v734
      %v742 = vsub.f32 %v724, %v734
      %v743 = vcvt.f32.s32.ties.to.even %v736
      %v744 = vcvt.f32.s32.ties.to.even %v737
      %v745 = vcvt.f32.s32.ties.to.even %v738
      %v746 = vcvt.f32.s32.ties.to.even %v739
      %v747 = vcvt.f32.s32.ties.to.even %v740
      %v748 = vcvt.f32.s32.ties.to.even %v741
      %v749 = vcvt.f32.s32.ties.to.even %v742
      %750 = vst [vmem:[%s210] sm:$0xff] %v743
      %751 = vst [vmem:[%s210 + $0x8] sm:$0xff] %v744
      %752 = vst [vmem:[%s210 + $0x10] sm:$0xff] %v745
      %753 = vst [vmem:[%s210 + $0x18] sm:$0xff] %v746
      %754 = vst [vmem:[%s210 + $0x20] sm:$0xff] %v747
      %755 = vst [vmem:[%s210 + $0x28] sm:$0xff] %v748
      %756 = vst [vmem:[%s210 + $0x30] sm:$0x7f] %v749
      %p757 = scmp.lt.s32.totalorder %s16, 1
      %s758 = scalar_select %p757, %s16, 1
      %s759 = smul.addr %s758, 7
      %s760 = smul.addr %s759, 8
      %s761 = scalar_lea.vmem %s3, %s760
      %p762 = scmp.lt.s32.totalorder %s16, 1
      %s763 = scalar_select %p762, %s16, 1
      %s764 = smul.addr %s763, 7
      %s765 = smul.addr %s764, 8
      %s766 = scalar_lea.vmem %s4, %s765
      // Predicated region
      $region33: #{_encode.5} parent=31 // pred_check
        %p767 = pneg %p102
      $region34: #{_encode.5} parent=31 // pred_check_branch
        %769 = sbr.rel (%p767) target = $region36
      $region35: #{_encode.5} parent=31 // pred_region
        _
      $region36: #{_encode.5} parent=31 // pred_fallthru
        _
      // Predicated region
      $region37: #{_encode.5} parent=31 // pred_check
        %p770 = pneg %p128
      $region38: #{_encode.5} parent=31 // pred_check_branch
        %772 = sbr.rel (%p770) target = $region40
      $region39: #{_encode.5} parent=31 // pred_region
        _
      $region40: #{_encode.5} parent=31 // pred_fallthru
        _
    $region32: #{_encode.5} parent=5 // pred_fallthru
      _
    %p773 = scmp.le.s32.totalorder 2, %s11
    // Predicated region
    $region41: #{_encode.5} parent=5 // pred_check
      %p774 = pneg %p773
    $region42: #{_encode.5} parent=5 // pred_check_branch
      %776 = sbr.rel (%p774) target = $region44
    $region43: #{_encode.5} parent=5 // pred_region
      %s777 = ssub.s32 %s11, 2
      // Predicated region
      $region45: #{_encode.5} parent=43 // pred_check
        %p778 = pneg %p108
      $region46: #{_encode.5} parent=43 // pred_check_branch
        %780 = sbr.rel (%p778) target = $region48
      $region47: #{_encode.5} parent=43 // pred_region
        %p781 = scmp.lt.s32.totalorder %s17, 1
        %s782 = scalar_select %p781, %s17, 1
        %s783 = smul.addr %s782, 7
        %s784 = smul.addr %s783, 8
        %s785 = scalar_lea.vmem %s3, %s784
      $region48: #{_encode.5} parent=43 // pred_fallthru
        _
      // Predicated region
      $region49: #{_encode.5} parent=43 // pred_check
        %p786 = pneg %p134
      $region50: #{_encode.5} parent=43 // pred_check_branch
        %788 = sbr.rel (%p786) target = $region52
      $region51: #{_encode.5} parent=43 // pred_region
        %p789 = scmp.lt.s32.totalorder %s17, 1
        %s790 = scalar_select %p789, %s17, 1
        %s791 = smul.addr %s790, 7
        %s792 = smul.addr %s791, 8
        %s793 = scalar_lea.vmem %s4, %s792
      $region52: #{_encode.5} parent=43 // pred_fallthru
        _
    $region44: #{_encode.5} parent=5 // pred_fallthru
      _
  $region6: #{_encode.5} parent=0 // loop_footer
    %s15 = sadd.s32 1, %s11
  $region7: #{_encode.5} parent=0 // loop_footer_branch
    %10 = sbr.rel target = $region3
  $region8: #{_encode.5} parent=0 // loop_exit
    _

// kernel: _encode.4
$region0: #{_encode.4}
  #allocation0 [shape = 'u32[]', space=smem, size = 0x4, offset = 0x4, fixed_abs, tag = 'smem constant byte address 0x4 - core index']
  #allocation1 [shape = 'u32[72,128]{1,0:T(1,128)}', space=vmem, size = 0x9000, scoped, tag = 'internal scratch']
  %s0 = inlined_call_operand.vmem [shape: bf16[2,100,512], index: 0, kind: input, shape index: {}]
  %s1 = inlined_call_operand.vmem [shape: bf16[9,512,128], index: 1, kind: input, shape index: {}]
  %s2 = inlined_call_operand.vmem [shape: f32[1,128], index: 2, kind: input, shape index: {}]
  %s3 = inlined_call_operand.vmem [shape: bf16[2,78,128], index: 3, kind: output, shape index: {}]
  %s4 = sld [smem:[#allocation0]]
  $region45: #{_encode.4} parent=0
    _
  %s6 = ssub.s32 1, %s4
  %s7 = scalar_select 0, %s6, %s4
  loop: start=0, step=1, limit=4
  $region2: #{_encode.4} parent=0 // loop_pre_header
    _
  $region3: #{_encode.4} parent=0 // loop_header
    %s9 = sphi 0, %s13
    %p10 = scmp.ge.s32.totalorder %s9, 4
    %s19 = sphi 0, %s21
    %s22 = sphi 0, %s19
    %s23 = sphi 0, %s22
    %s39 = sphi 0, %s23
    %s43 = sphi 0, %s43
    %s45 = sphi 0, %s43
    %s46 = sphi 0, %s45
    %s60 = sphi 0, %s46
    %s64 = sphi 0, %s64
    %s66 = sphi 0, %s64
    %s67 = sphi 0, %s66
    %s81 = sphi 0, %s67
    %s87 = sphi 0, %s89
    %s90 = sphi 0, %s87
    %s91 = sphi 0, %s90
    %s107 = sphi 0, %s91
  $region4: #{_encode.4} parent=0 // loop_header_branch
    %12 = sbr.rel (%p10) target = $region8
  $region5: #{_encode.4} parent=0 // loop_body
    %s14 = ssub.s32 %s9, 1
    %s15 = ssub.s32 %s9, 2
    %s16 = sadd.s32 %s9, 1
    %s17 = ssub.s32 %s9, %s16
    %p18 = scmp.eq.s32.totalorder %s17, 0
    %s20 = sadd.s32 %s19, 1
    %s21 = scalar_select %p18, %s19, %s20
    %p24 = pneg %p18
    %p25 = scmp.eq.s32.totalorder %s9, 1
    %p26 = por %p24, %p25
    %p27 = scmp.ne.s32.totalorder %s19, %s22
    %p28 = scmp.eq.s32.totalorder %s9, 0
    %p29 = por %p27, %p28
    %p30 = scmp.ne.s32.totalorder %s19, %s22
    %p31 = scmp.eq.s32.totalorder %s14, 1
    %p32 = por %p30, %p31
    %p33 = scmp.ne.s32.totalorder %s22, %s23
    %p34 = scmp.eq.s32.totalorder %s14, 0
    %p35 = por %p33, %p34
    %p36 = scmp.ne.s32.totalorder %s22, %s23
    %p37 = scmp.eq.s32.totalorder %s15, 1
    %p38 = por %p36, %p37
    %p40 = scmp.ne.s32.totalorder %s23, %s39
    %p41 = scmp.eq.s32.totalorder %s15, 0
    %p42 = por %p40, %p41
    %s44 = sadd.s32 %s43, 1
    %p47 = scmp.eq.s32.totalorder %s9, 1
    %p48 = scmp.ne.s32.totalorder %s43, %s45
    %p49 = scmp.eq.s32.totalorder %s9, 0
    %p50 = por %p48, %p49
    %p51 = scmp.ne.s32.totalorder %s43, %s45
    %p52 = scmp.eq.s32.totalorder %s14, 1
    %p53 = por %p51, %p52
    %p54 = scmp.ne.s32.totalorder %s45, %s46
    %p55 = scmp.eq.s32.totalorder %s14, 0
    %p56 = por %p54, %p55
    %p57 = scmp.ne.s32.totalorder %s45, %s46
    %p58 = scmp.eq.s32.totalorder %s15, 1
    %p59 = por %p57, %p58
    %p61 = scmp.ne.s32.totalorder %s46, %s60
    %p62 = scmp.eq.s32.totalorder %s15, 0
    %p63 = por %p61, %p62
    %s65 = sadd.s32 %s64, 1
    %p68 = scmp.eq.s32.totalorder %s9, 1
    %p69 = scmp.ne.s32.totalorder %s64, %s66
    %p70 = scmp.eq.s32.totalorder %s9, 0
    %p71 = por %p69, %p70
    %p72 = scmp.ne.s32.totalorder %s64, %s66
    %p73 = scmp.eq.s32.totalorder %s14, 1
    %p74 = por %p72, %p73
    %p75 = scmp.ne.s32.totalorder %s66, %s67
    %p76 = scmp.eq.s32.totalorder %s14, 0
    %p77 = por %p75, %p76
    %p78 = scmp.ne.s32.totalorder %s66, %s67
    %p79 = scmp.eq.s32.totalorder %s15, 1
    %p80 = por %p78, %p79
    %p82 = scmp.ne.s32.totalorder %s67, %s81
    %p83 = scmp.eq.s32.totalorder %s15, 0
    %p84 = por %p82, %p83
    %s85 = ssub.s32 %s9, %s16
    %p86 = scmp.eq.s32.totalorder %s85, 0
    %s88 = sadd.s32 %s87, 1
    %s89 = scalar_select %p86, %s87, %s88
    %p92 = pneg %p86
    %p93 = scmp.eq.s32.totalorder %s9, 1
    %p94 = por %p92, %p93
    %p95 = scmp.ne.s32.totalorder %s87, %s90
    %p96 = scmp.eq.s32.totalorder %s9, 0
    %p97 = por %p95, %p96
    %p98 = scmp.ne.s32.totalorder %s87, %s90
    %p99 = scmp.eq.s32.totalorder %s14, 1
    %p100 = por %p98, %p99
    %p101 = scmp.ne.s32.totalorder %s90, %s91
    %p102 = scmp.eq.s32.totalorder %s14, 0
    %p103 = por %p101, %p102
    %p104 = scmp.ne.s32.totalorder %s90, %s91
    %p105 = scmp.eq.s32.totalorder %s15, 1
    %p106 = por %p104, %p105
    %p108 = scmp.ne.s32.totalorder %s91, %s107
    %p109 = scmp.eq.s32.totalorder %s15, 0
    %p110 = por %p108, %p109
    %p111 = scmp.le.s32.totalorder 1, %s9
    %p112 = scmp.lt.s32.totalorder %s9, 3
    %p113 = pnand %p111, %p112
    %p114 = pneg %p113
    // Predicated region
    $region9: #{_encode.4} parent=5 // pred_check
      _
    $region10: #{_encode.4} parent=5 // pred_check_branch
      %116 = sbr.rel (%p113) target = $region12
    $region11: #{_encode.4} parent=5 // pred_region
      %s117 = ssub.s32 %s9, 1
      // Predicated region
      $region13: #{_encode.4} parent=11 // pred_check
        %p118 = pneg %p56
      $region14: #{_encode.4} parent=11 // pred_check_branch
        %120 = sbr.rel (%p118) target = $region16
      $region15: #{_encode.4} parent=11 // pred_region
        _
      $region16: #{_encode.4} parent=11 // pred_fallthru
        _
      // Predicated region
      $region17: #{_encode.4} parent=11 // pred_check
        %p121 = pneg %p77
      $region18: #{_encode.4} parent=11 // pred_check_branch
        %123 = sbr.rel (%p121) target = $region20
      $region19: #{_encode.4} parent=11 // pred_region
        _
      $region20: #{_encode.4} parent=11 // pred_fallthru
        _
    $region12: #{_encode.4} parent=5 // pred_fallthru
      _
    %p124 = scmp.lt.s32.totalorder %s9, 2
    // Predicated region
    $region21: #{_encode.4} parent=5 // pred_check
      %p125 = pneg %p124
    $region22: #{_encode.4} parent=5 // pred_check_branch
      %127 = sbr.rel (%p125) target = $region24
    $region23: #{_encode.4} parent=5 // pred_region
      // Predicated region
      $region25: #{_encode.4} parent=23 // pred_check
        %p128 = pneg %p29
      $region26: #{_encode.4} parent=23 // pred_check_branch
        %130 = sbr.rel (%p128) target = $region28
      $region27: #{_encode.4} parent=23 // pred_region
        %p131 = scmp.lt.s32.totalorder %s9, 1
        %s132 = scalar_select %p131, %s9, 1
        %s133 = smul.addr %s132, 52
        %s134 = smul.addr %s133, 4
        %s135 = scalar_lea.vmem %s0, %s134
      $region28: #{_encode.4} parent=23 // pred_fallthru
        _
    $region24: #{_encode.4} parent=5 // pred_fallthru
      _
    %p136 = scmp.le.s32.totalorder 1, %s9
    %p137 = scmp.lt.s32.totalorder %s9, 3
    %p138 = pnand %p136, %p137
    %p139 = pneg %p138
    // Predicated region
    $region29: #{_encode.4} parent=5 // pred_check
      _
    $region30: #{_encode.4} parent=5 // pred_check_branch
      %141 = sbr.rel (%p138) target = $region32
    $region31: #{_encode.4} parent=5 // pred_region
      %s142 = ssub.s32 %s9, 1
      %p143 = scmp.lt.s32.totalorder %s14, 1
      %s144 = scalar_select %p143, %s14, 1
      %s145 = smul.addr %s144, 52
      %s146 = smul.addr %s145, 4
      %s147 = scalar_lea.vmem %s0, %s146
      %p148 = pneg %p35
      %p149 = pneg %p32
      %p150 = pneg %p56
      %p151 = pneg %p53
      %p152 = pneg %p77
      %p153 = pneg %p74
      %p154 = pneg %p103
      %p155 = pneg %p100
      %p156 = scmp.lt.s32.totalorder %s14, 1
      %s157 = scalar_select %p156, %s14, 1
      %s158 = smul.addr %s157, 10
      %s159 = smul.addr %s158, 4
      %s160 = scalar_lea.vmem %s3, %s159
      %p161 = scmp.lt.s32.totalorder %s14, 1
      %s162 = scalar_select %p161, %s14, 1
      %s163 = smul.addr %s162, 52
      %s164 = smul.addr %s163, 4
      %s165 = scalar_lea.vmem %s0, %s164
      %p166 = scmp.lt.s32.totalorder %s14, 1
      %s167 = scalar_select %p166, %s14, 1
      %s168 = smul.addr %s167, 10
      %s169 = smul.addr %s168, 4
      %s170 = scalar_lea.vmem %s3, %s169
      %v171 = vld [vmem:[%s165] sm:$0xff]
      %v172 = vld [vmem:[%s165 + $0x8] sm:$0xff]
      %v173 = vld [vmem:[%s165 + $0x10] sm:$0xff]
      %v174 = vld [vmem:[%s165 + $0x18] sm:$0xff]
      %v175 = vld [vmem:[%s165 + $0x20] sm:$0xff]
      %v176 = vld [vmem:[%s165 + $0x28] sm:$0xff]
      %v177 = vld [vmem:[%s165 + $0x30] sm:$0xff]
      %v178 = vld [vmem:[%s165 + $0x38] sm:$0xff]
      %v179 = vld [vmem:[%s165 + $0x40] sm:$0xff]
      %v180 = vld [vmem:[%s165 + $0x48] sm:$0xff]
      %v181 = vld [vmem:[%s165 + $0x50] sm:$0xff]
      %v182 = vld [vmem:[%s165 + $0x58] sm:$0xff]
      %v183 = vld [vmem:[%s165 + $0x60] sm:$0xff]
      %v184 = vld [vmem:[%s165 + $0x68] sm:$0xff]
      %v185 = vld [vmem:[%s165 + $0x70] sm:$0xff]
      %v186 = vld [vmem:[%s165 + $0x78] sm:$0xff]
      %v187 = vld [vmem:[%s165 + $0x80] sm:$0xff]
      %v188 = vld [vmem:[%s165 + $0x88] sm:$0xff]
      %v189 = vld [vmem:[%s165 + $0x90] sm:$0x77]
      %v190 = vld [vmem:[%s165 + $0x98] sm:$0x77]
      %v191 = vld [vmem:[%s1] sm:$0xf]
      %v192 = vld [vmem:[%s1 + $0x4] sm:$0xf]
      %v193 = vld [vmem:[%s1 + $0x8] sm:$0xf]
      %v194 = vld [vmem:[%s1 + $0xc] sm:$0xf]
      %v195 = vld [vmem:[%s1 + $0x10] sm:$0xf]
      %v196 = vld [vmem:[%s1 + $0x14] sm:$0xf]
      %v197 = vld [vmem:[%s1 + $0x18] sm:$0xf]
      %v198 = vld [vmem:[%s1 + $0x1c] sm:$0xf]
      %v199 = vld [vmem:[%s1 + $0x20] sm:$0xf]
      %v200 = vld [vmem:[%s1 + $0x24] sm:$0xf]
      %v201 = vld [vmem:[%s1 + $0x28] sm:$0xf]
      %v202 = vld [vmem:[%s1 + $0x2c] sm:$0xf]
      %v203 = vld [vmem:[%s1 + $0x30] sm:$0xf]
      %v204 = vld [vmem:[%s1 + $0x34] sm:$0xf]
      %v205 = vld [vmem:[%s1 + $0x38] sm:$0xf]
      %v206 = vld [vmem:[%s1 + $0x3c] sm:$0xf]
      %v207 = vld [vmem:[%s1 + $0x40] sm:$0xf]
      %v208 = vld [vmem:[%s1 + $0x44] sm:$0xf]
      %v209 = vld [vmem:[%s1 + $0x48] sm:$0xf]
      %v210 = vld [vmem:[%s1 + $0x4c] sm:$0xf]
      %v211 = vld [vmem:[%s1 + $0x50] sm:$0xf]
      %v212 = vld [vmem:[%s1 + $0x54] sm:$0xf]
      %v213 = vld [vmem:[%s1 + $0x58] sm:$0xf]
      %v214 = vld [vmem:[%s1 + $0x5c] sm:$0xf]
      %v215 = vld [vmem:[%s1 + $0x60] sm:$0xf]
      %v216 = vld [vmem:[%s1 + $0x64] sm:$0xf]
      %v217 = vld [vmem:[%s1 + $0x68] sm:$0xf]
      %v218 = vld [vmem:[%s1 + $0x6c] sm:$0xf]
      %v219 = vld [vmem:[%s1 + $0x70] sm:$0xf]
      %v220 = vld [vmem:[%s1 + $0x74] sm:$0xf]
      %v221 = vld [vmem:[%s1 + $0x78] sm:$0xf]
      %v222 = vld [vmem:[%s1 + $0x7c] sm:$0xf]
      %v223 = vld [vmem:[%s1 + $0x80] sm:$0xf]
      %v224 = vld [vmem:[%s1 + $0x84] sm:$0xf]
      %v225 = vld [vmem:[%s1 + $0x88] sm:$0xf]
      %v226 = vld [vmem:[%s1 + $0x8c] sm:$0xf]
      %v227 = vld [vmem:[%s1 + $0x90] sm:$0xf]
      %v228 = vld [vmem:[%s1 + $0x94] sm:$0xf]
      %v229 = vld [vmem:[%s1 + $0x98] sm:$0xf]
      %v230 = vld [vmem:[%s1 + $0x9c] sm:$0xf]
      %v231 = vld [vmem:[%s1 + $0xa0] sm:$0xf]
      %v232 = vld [vmem:[%s1 + $0xa4] sm:$0xf]
      %v233 = vld [vmem:[%s1 + $0xa8] sm:$0xf]
      %v234 = vld [vmem:[%s1 + $0xac] sm:$0xf]
      %v235 = vld [vmem:[%s1 + $0xb0] sm:$0xf]
      %v236 = vld [vmem:[%s1 + $0xb4] sm:$0xf]
      %v237 = vld [vmem:[%s1 + $0xb8] sm:$0xf]
      %v238 = vld [vmem:[%s1 + $0xbc] sm:$0xf]
      %v239 = vld [vmem:[%s1 + $0xc0] sm:$0xf]
      %v240 = vld [vmem:[%s1 + $0xc4] sm:$0xf]
      %v241 = vld [vmem:[%s1 + $0xc8] sm:$0xf]
      %v242 = vld [vmem:[%s1 + $0xcc] sm:$0xf]
      %v243 = vld [vmem:[%s1 + $0xd0] sm:$0xf]
      %v244 = vld [vmem:[%s1 + $0xd4] sm:$0xf]
      %v245 = vld [vmem:[%s1 + $0xd8] sm:$0xf]
      %v246 = vld [vmem:[%s1 + $0xdc] sm:$0xf]
      %v247 = vld [vmem:[%s1 + $0xe0] sm:$0xf]
      %v248 = vld [vmem:[%s1 + $0xe4] sm:$0xf]
      %v249 = vld [vmem:[%s1 + $0xe8] sm:$0xf]
      %v250 = vld [vmem:[%s1 + $0xec] sm:$0xf]
      %v251 = vld [vmem:[%s1 + $0xf0] sm:$0xf]
      %v252 = vld [vmem:[%s1 + $0xf4] sm:$0xf]
      %v253 = vld [vmem:[%s1 + $0xf8] sm:$0xf]
      %v254 = vld [vmem:[%s1 + $0xfc] sm:$0xf]
      %v255 = vld [vmem:[%s165 + $0x90] sm:$0xff]
      %v256 = vld [vmem:[%s165 + $0x98] sm:$0xff]
      %s257 = scalar_lea.vmem %s1, 256
      %v258 = vld [vmem:[%s257] sm:$0xf]
      %v259 = vld [vmem:[%s257 + $0x4] sm:$0xf]
      %v260 = vld [vmem:[%s257 + $0x8] sm:$0xf]
      %v261 = vld [vmem:[%s257 + $0xc] sm:$0xf]
      %v262 = vld [vmem:[%s257 + $0x10] sm:$0xf]
      %v263 = vld [vmem:[%s257 + $0x14] sm:$0xf]
      %v264 = vld [vmem:[%s257 + $0x18] sm:$0xf]
      %v265 = vld [vmem:[%s257 + $0x1c] sm:$0xf]
      %v266 = vld [vmem:[%s257 + $0x20] sm:$0xf]
      %v267 = vld [vmem:[%s257 + $0x24] sm:$0xf]
      %v268 = vld [vmem:[%s257 + $0x28] sm:$0xf]
      %v269 = vld [vmem:[%s257 + $0x2c] sm:$0xf]
      %v270 = vld [vmem:[%s257 + $0x30] sm:$0xf]
      %v271 = vld [vmem:[%s257 + $0x34] sm:$0xf]
      %v272 = vld [vmem:[%s257 + $0x38] sm:$0xf]
      %v273 = vld [vmem:[%s257 + $0x3c] sm:$0xf]
      %v274 = vld [vmem:[%s257 + $0x40] sm:$0xf]
      %v275 = vld [vmem:[%s257 + $0x44] sm:$0xf]
      %v276 = vld [vmem:[%s257 + $0x48] sm:$0xf]
      %v277 = vld [vmem:[%s257 + $0x4c] sm:$0xf]
      %v278 = vld [vmem:[%s257 + $0x50] sm:$0xf]
      %v279 = vld [vmem:[%s257 + $0x54] sm:$0xf]
      %v280 = vld [vmem:[%s257 + $0x58] sm:$0xf]
      %v281 = vld [vmem:[%s257 + $0x5c] sm:$0xf]
      %v282 = vld [vmem:[%s257 + $0x60] sm:$0xf]
      %v283 = vld [vmem:[%s257 + $0x64] sm:$0xf]
      %v284 = vld [vmem:[%s257 + $0x68] sm:$0xf]
      %v285 = vld [vmem:[%s257 + $0x6c] sm:$0xf]
      %v286 = vld [vmem:[%s257 + $0x70] sm:$0xf]
      %v287 = vld [vmem:[%s257 + $0x74] sm:$0xf]
      %v288 = vld [vmem:[%s257 + $0x78] sm:$0xf]
      %v289 = vld [vmem:[%s257 + $0x7c] sm:$0xf]
      %v290 = vld [vmem:[%s257 + $0x80] sm:$0xf]
      %v291 = vld [vmem:[%s257 + $0x84] sm:$0xf]
      %v292 = vld [vmem:[%s257 + $0x88] sm:$0xf]
      %v293 = vld [vmem:[%s257 + $0x8c] sm:$0xf]
      %v294 = vld [vmem:[%s257 + $0x90] sm:$0xf]
      %v295 = vld [vmem:[%s257 + $0x94] sm:$0xf]
      %v296 = vld [vmem:[%s257 + $0x98] sm:$0xf]
      %v297 = vld [vmem:[%s257 + $0x9c] sm:$0xf]
      %v298 = vld [vmem:[%s257 + $0xa0] sm:$0xf]
      %v299 = vld [vmem:[%s257 + $0xa4] sm:$0xf]
      %v300 = vld [vmem:[%s257 + $0xa8] sm:$0xf]
      %v301 = vld [vmem:[%s257 + $0xac] sm:$0xf]
      %v302 = vld [vmem:[%s257 + $0xb0] sm:$0xf]
      %v303 = vld [vmem:[%s257 + $0xb4] sm:$0xf]
      %v304 = vld [vmem:[%s257 + $0xb8] sm:$0xf]
      %v305 = vld [vmem:[%s257 + $0xbc] sm:$0xf]
      %v306 = vld [vmem:[%s257 + $0xc0] sm:$0xf]
      %v307 = vld [vmem:[%s257 + $0xc4] sm:$0xf]
      %v308 = vld [vmem:[%s257 + $0xc8] sm:$0xf]
      %v309 = vld [vmem:[%s257 + $0xcc] sm:$0xf]
      %v310 = vld [vmem:[%s257 + $0xd0] sm:$0xf]
      %v311 = vld [vmem:[%s257 + $0xd4] sm:$0xf]
      %v312 = vld [vmem:[%s257 + $0xd8] sm:$0xf]
      %v313 = vld [vmem:[%s257 + $0xdc] sm:$0xf]
      %v314 = vld [vmem:[%s257 + $0xe0] sm:$0xf]
      %v315 = vld [vmem:[%s257 + $0xe4] sm:$0xf]
      %v316 = vld [vmem:[%s257 + $0xe8] sm:$0xf]
      %v317 = vld [vmem:[%s257 + $0xec] sm:$0xf]
      %v318 = vld [vmem:[%s257 + $0xf0] sm:$0xf]
      %v319 = vld [vmem:[%s257 + $0xf4] sm:$0xf]
      %v320 = vld [vmem:[%s257 + $0xf8] sm:$0xf]
      %v321 = vld [vmem:[%s257 + $0xfc] sm:$0xf]
      %v342 = vunpack.c.l.b16 %v171
      %v343 = vunpack.c.h.b16 %v171
      %v344 = vunpack.c.l.b16 %v172
      %v345 = vunpack.c.h.b16 %v172
      %v346 = vunpack.c.l.b16 %v173
      %v347 = vunpack.c.h.b16 %v173
      %v348 = vunpack.c.l.b16 %v174
      %v349 = vunpack.c.h.b16 %v174
      %v350 = vunpack.c.l.b16 %v175
      %v351 = vunpack.c.h.b16 %v175
      %v352 = vunpack.c.l.b16 %v176
      %v353 = vunpack.c.h.b16 %v176
      %v354 = vunpack.c.l.b16 %v177
      %v355 = vunpack.c.h.b16 %v177
      %v356 = vunpack.c.l.b16 %v178
      %v357 = vunpack.c.h.b16 %v178
      %v358 = vunpack.c.l.b16 %v179
      %v359 = vunpack.c.h.b16 %v179
      %v360 = vunpack.c.l.b16 %v180
      %v361 = vunpack.c.h.b16 %v180
      %v362 = vunpack.c.l.b16 %v181
      %v363 = vunpack.c.h.b16 %v181
      %v364 = vunpack.c.l.b16 %v182
      %v365 = vunpack.c.h.b16 %v182
      %v366 = vunpack.c.l.b16 %v183
      %v367 = vunpack.c.h.b16 %v183
      %v368 = vunpack.c.l.b16 %v184
      %v369 = vunpack.c.h.b16 %v184
      %v370 = vunpack.c.l.b16 %v185
      %v371 = vunpack.c.h.b16 %v185
      %v372 = vunpack.c.l.b16 %v186
      %v373 = vunpack.c.h.b16 %v186
      %v374 = vunpack.c.l.b16 %v187
      %v375 = vunpack.c.h.b16 %v187
      %v376 = vunpack.c.l.b16 %v188
      %v377 = vunpack.c.h.b16 %v188
      %v378 = vunpack.c.l.b16 %v255
      %v379 = vunpack.c.h.b16 %v255
      %v380 = vunpack.c.l.b16 %v256
      %v381 = vunpack.c.h.b16 %v256
      %v382 = vpack.c.b16 %v346, %v342
      %v383 = vpack.c.b16 %v347, %v343
      %v384 = vpack.c.b16 %v348, %v344
      %v385 = vpack.c.b16 %v349, %v345
      %v386 = vpack.c.b16 %v354, %v350
      %v387 = vpack.c.b16 %v355, %v351
      %v388 = vpack.c.b16 %v356, %v352
      %v389 = vpack.c.b16 %v357, %v353
      %v390 = vpack.c.b16 %v362, %v358
      %v391 = vpack.c.b16 %v363, %v359
      %v392 = vpack.c.b16 %v364, %v360
      %v393 = vpack.c.b16 %v365, %v361
      %v394 = vpack.c.b16 %v370, %v366
      %v395 = vpack.c.b16 %v371, %v367
      %v396 = vpack.c.b16 %v372, %v368
      %v397 = vpack.c.b16 %v373, %v369
      %v398 = vpack.c.b16 %v378, %v374
      %v399 = vpack.c.b16 %v379, %v375
      %v400 = vpack.c.b16 %v380, %v376
      %v401 = vpack.c.b16 %v381, %v377
      %vm402 = vsmask.f32 7424
      %v404 = vshrl.u32 %v382, 16
      %v406 = vshll.u32 %v382, 16
      %v408 = vrot.slane %v406, 1
      %v409 = vor.u32 %v404, %v408
      %v411 = vshll.u32 %v386, 16
      %v413 = vrot.slane %v411, 1
      %v414 = vsel %vm402, %v409, %v413
      %v416 = vshrl.u32 %v383, 16
      %v418 = vshll.u32 %v383, 16
      %v420 = vrot.slane %v418, 1
      %v421 = vor.u32 %v416, %v420
      %v423 = vshll.u32 %v387, 16
      %v425 = vrot.slane %v423, 1
      %v426 = vsel %vm402, %v421, %v425
      %v428 = vshrl.u32 %v384, 16
      %v430 = vshll.u32 %v384, 16
      %v432 = vrot.slane %v430, 1
      %v433 = vor.u32 %v428, %v432
      %v435 = vshll.u32 %v388, 16
      %v437 = vrot.slane %v435, 1
      %v438 = vsel %vm402, %v433, %v437
      %v440 = vshrl.u32 %v385, 16
      %v442 = vshll.u32 %v385, 16
      %v444 = vrot.slane %v442, 1
      %v445 = vor.u32 %v440, %v444
      %v447 = vshll.u32 %v389, 16
      %v449 = vrot.slane %v447, 1
      %v450 = vsel %vm402, %v445, %v449
      %v451 = vshrl.u32 %v386, 16
      %v453 = vor.u32 %v451, %v413
      %v455 = vshll.u32 %v390, 16
      %v457 = vrot.slane %v455, 1
      %v458 = vsel %vm402, %v453, %v457
      %v459 = vshrl.u32 %v387, 16
      %v461 = vor.u32 %v459, %v425
      %v463 = vshll.u32 %v391, 16
      %v465 = vrot.slane %v463, 1
      %v466 = vsel %vm402, %v461, %v465
      %v467 = vshrl.u32 %v388, 16
      %v469 = vor.u32 %v467, %v437
      %v471 = vshll.u32 %v392, 16
      %v473 = vrot.slane %v471, 1
      %v474 = vsel %vm402, %v469, %v473
      %v475 = vshrl.u32 %v389, 16
      %v477 = vor.u32 %v475, %v449
      %v479 = vshll.u32 %v393, 16
      %v481 = vrot.slane %v479, 1
      %v482 = vsel %vm402, %v477, %v481
      %v483 = vshrl.u32 %v390, 16
      %v485 = vor.u32 %v483, %v457
      %v487 = vshll.u32 %v394, 16
      %v489 = vrot.slane %v487, 1
      %v490 = vsel %vm402, %v485, %v489
      %v491 = vshrl.u32 %v391, 16
      %v493 = vor.u32 %v491, %v465
      %v495 = vshll.u32 %v395, 16
      %v497 = vrot.slane %v495, 1
      %v498 = vsel %vm402, %v493, %v497
      %v499 = vshrl.u32 %v392, 16
      %v501 = vor.u32 %v499, %v473
      %v503 = vshll.u32 %v396, 16
      %v505 = vrot.slane %v503, 1
      %v506 = vsel %vm402, %v501, %v505
      %v507 = vshrl.u32 %v393, 16
      %v509 = vor.u32 %v507, %v481
      %v511 = vshll.u32 %v397, 16
      %v513 = vrot.slane %v511, 1
      %v514 = vsel %vm402, %v509, %v513
      %v515 = vshrl.u32 %v394, 16
      %v517 = vor.u32 %v515, %v489
      %v519 = vshll.u32 %v398, 16
      %v521 = vrot.slane %v519, 1
      %v522 = vsel %vm402, %v517, %v521
      %v523 = vshrl.u32 %v395, 16
      %v525 = vor.u32 %v523, %v497
      %v527 = vshll.u32 %v399, 16
      %v529 = vrot.slane %v527, 1
      %v530 = vsel %vm402, %v525, %v529
      %v531 = vshrl.u32 %v396, 16
      %v533 = vor.u32 %v531, %v505
      %v535 = vshll.u32 %v400, 16
      %v537 = vrot.slane %v535, 1
      %v538 = vsel %vm402, %v533, %v537
      %v539 = vshrl.u32 %v397, 16
      %v541 = vor.u32 %v539, %v513
      %v543 = vshll.u32 %v401, 16
      %v545 = vrot.slane %v543, 1
      %v546 = vsel %vm402, %v541, %v545
      %v547 = vshrl.u32 %v398, 16
      %v549 = vor.u32 %v547, %v521
      %v550 = vshrl.u32 %v399, 16
      %v552 = vor.u32 %v550, %v529
      %v553 = vshrl.u32 %v400, 16
      %v555 = vor.u32 %v553, %v537
      %v556 = vshrl.u32 %v401, 16
      %v558 = vor.u32 %v556, %v545
      %v643 = vunpack.c.l.b16 %v258
      %v644 = vunpack.c.l.b16 %v259
      %v645 = vunpack.c.l.b16 %v260
      %v646 = vunpack.c.l.b16 %v261
      %v647 = vunpack.c.l.b16 %v262
      %v648 = vunpack.c.l.b16 %v263
      %v649 = vunpack.c.l.b16 %v264
      %v650 = vunpack.c.l.b16 %v265
      %v651 = vunpack.c.l.b16 %v266
      %v652 = vunpack.c.l.b16 %v267
      %v653 = vunpack.c.l.b16 %v268
      %v654 = vunpack.c.l.b16 %v269
      %v655 = vunpack.c.l.b16 %v270
      %v656 = vunpack.c.l.b16 %v271
      %v657 = vunpack.c.l.b16 %v272
      %v658 = vunpack.c.l.b16 %v273
      %v659 = vunpack.c.l.b16 %v274
      %v660 = vunpack.c.l.b16 %v275
      %v661 = vunpack.c.l.b16 %v276
      %v662 = vunpack.c.l.b16 %v277
      %v663 = vunpack.c.l.b16 %v278
      %v664 = vunpack.c.l.b16 %v279
      %v665 = vunpack.c.l.b16 %v280
      %v666 = vunpack.c.l.b16 %v281
      %v667 = vunpack.c.l.b16 %v282
      %v668 = vunpack.c.l.b16 %v283
      %v669 = vunpack.c.l.b16 %v284
      %v670 = vunpack.c.l.b16 %v285
      %v671 = vunpack.c.l.b16 %v286
      %v672 = vunpack.c.l.b16 %v287
      %v673 = vunpack.c.l.b16 %v288
      %v674 = vunpack.c.l.b16 %v289
      %v675 = vunpack.c.l.b16 %v290
      %v676 = vunpack.c.l.b16 %v291
      %v677 = vunpack.c.l.b16 %v292
      %v678 = vunpack.c.l.b16 %v293
      %v679 = vunpack.c.l.b16 %v294
      %v680 = vunpack.c.l.b16 %v295
      %v681 = vunpack.c.l.b16 %v296
      %v682 = vunpack.c.l.b16 %v297
      %v683 = vunpack.c.l.b16 %v298
      %v684 = vunpack.c.l.b16 %v299
      %v685 = vunpack.c.l.b16 %v300
      %v686 = vunpack.c.l.b16 %v301
      %v687 = vunpack.c.l.b16 %v302
      %v688 = vunpack.c.l.b16 %v303
      %v689 = vunpack.c.l.b16 %v304
      %v690 = vunpack.c.l.b16 %v305
      %v691 = vunpack.c.l.b16 %v306
      %v692 = vunpack.c.l.b16 %v307
      %v693 = vunpack.c.l.b16 %v308
      %v694 = vunpack.c.l.b16 %v309
      %v695 = vunpack.c.l.b16 %v310
      %v696 = vunpack.c.l.b16 %v311
      %v697 = vunpack.c.l.b16 %v312
      %v698 = vunpack.c.l.b16 %v313
      %v699 = vunpack.c.l.b16 %v314
      %v700 = vunpack.c.l.b16 %v315
      %v701 = vunpack.c.l.b16 %v316
      %v702 = vunpack.c.l.b16 %v317
      %v703 = vunpack.c.l.b16 %v318
      %v704 = vunpack.c.l.b16 %v319
      %v705 = vunpack.c.l.b16 %v320
      %v706 = vunpack.c.l.b16 %v321
      %v707 = vpack.c.b16 %v644, %v643
      %v708 = vpack.c.b16 %v646, %v645
      %v709 = vpack.c.b16 %v648, %v647
      %v710 = vpack.c.b16 %v650, %v649
      %v711 = vpack.c.b16 %v652, %v651
      %v712 = vpack.c.b16 %v654, %v653
      %v713 = vpack.c.b16 %v656, %v655
      %v714 = vpack.c.b16 %v658, %v657
      %v715 = vpack.c.b16 %v660, %v659
      %v716 = vpack.c.b16 %v662, %v661
      %v717 = vpack.c.b16 %v664, %v663
      %v718 = vpack.c.b16 %v666, %v665
      %v719 = vpack.c.b16 %v668, %v667
      %v720 = vpack.c.b16 %v670, %v669
      %v721 = vpack.c.b16 %v672, %v671
      %v722 = vpack.c.b16 %v674, %v673
      %v723 = vpack.c.b16 %v676, %v675
      %v724 = vpack.c.b16 %v678, %v677
      %v725 = vpack.c.b16 %v680, %v679
      %v726 = vpack.c.b16 %v682, %v681
      %v727 = vpack.c.b16 %v684, %v683
      %v728 = vpack.c.b16 %v686, %v685
      %v729 = vpack.c.b16 %v688, %v687
      %v730 = vpack.c.b16 %v690, %v689
      %v731 = vpack.c.b16 %v692, %v691
      %v732 = vpack.c.b16 %v694, %v693
      %v733 = vpack.c.b16 %v696, %v695
      %v734 = vpack.c.b16 %v698, %v697
      %v735 = vpack.c.b16 %v700, %v699
      %v736 = vpack.c.b16 %v702, %v701
      %v737 = vpack.c.b16 %v704, %v703
      %v738 = vpack.c.b16 %v706, %v705
      %771 = vmatpush.bf16.msra.mxu0 %v714
      %772 = vmatpush.bf16.msra.mxu0 %v713
      %773 = vmatpush.bf16.msra.mxu0 %v712
      %774 = vmatpush.bf16.msra.mxu0 %v711
      %775 = vmatpush.bf16.msra.mxu0 %v710
      %776 = vmatpush.bf16.msra.mxu0 %v709
      %777 = vmatpush.bf16.msra.mxu0 %v708
      %778 = vmatpush.bf16.msra.mxu0 %v707
      %779 = vmatmul.bf16.gmra.mxu0 %v414
      %v780 = vpop.f32.mrf.mxu0
      %v781 = vadd.f32 0.0, %v780
      %v782 = vpop.f32.mrf.mxu0
      %v783 = vadd.f32 0.0, %v782
      %784 = vmatmul.bf16.gmra.mxu0 %v458
      %v785 = vpop.f32.mrf.mxu0
      %v786 = vadd.f32 0.0, %v785
      %v787 = vpop.f32.mrf.mxu0
      %v788 = vadd.f32 0.0, %v787
      %789 = vmatmul.bf16.gmra.mxu0 %v490
      %v790 = vpop.f32.mrf.mxu0
      %v791 = vadd.f32 0.0, %v790
      %v792 = vpop.f32.mrf.mxu0
      %v793 = vadd.f32 0.0, %v792
      %794 = vmatmul.bf16.gmra.mxu0 %v522
      %v795 = vpop.f32.mrf.mxu0
      %v796 = vadd.f32 0.0, %v795
      %v797 = vpop.f32.mrf.mxu0
      %v798 = vadd.f32 0.0, %v797
      %799 = vmatmul.bf16.gmra.mxu0 %v549
      %v800 = vpop.f32.mrf.mxu0
      %v801 = vadd.f32 0.0, %v800
      %v802 = vpop.f32.mrf.mxu0
      %v803 = vadd.f32 0.0, %v802
      %804 = vdwg.mxu0
      %805 = vmatpush.bf16.msra.mxu0 %v722
      %806 = vmatpush.bf16.msra.mxu0 %v721
      %807 = vmatpush.bf16.msra.mxu0 %v720
      %808 = vmatpush.bf16.msra.mxu0 %v719
      %809 = vmatpush.bf16.msra.mxu0 %v718
      %810 = vmatpush.bf16.msra.mxu0 %v717
      %811 = vmatpush.bf16.msra.mxu0 %v716
      %812 = vmatpush.bf16.msra.mxu0 %v715
      %813 = vmatmul.bf16.gmra.mxu0 %v426
      %v814 = vpop.f32.mrf.mxu0
      %v815 = vadd.f32 %v781, %v814
      %v816 = vpop.f32.mrf.mxu0
      %v817 = vadd.f32 %v783, %v816
      %818 = vmatmul.bf16.gmra.mxu0 %v466
      %v819 = vpop.f32.mrf.mxu0
      %v820 = vadd.f32 %v786, %v819
      %v821 = vpop.f32.mrf.mxu0
      %v822 = vadd.f32 %v788, %v821
      %823 = vmatmul.bf16.gmra.mxu0 %v498
      %v824 = vpop.f32.mrf.mxu0
      %v825 = vadd.f32 %v791, %v824
      %v826 = vpop.f32.mrf.mxu0
      %v827 = vadd.f32 %v793, %v826
      %828 = vmatmul.bf16.gmra.mxu0 %v530
      %v829 = vpop.f32.mrf.mxu0
      %v830 = vadd.f32 %v796, %v829
      %v831 = vpop.f32.mrf.mxu0
      %v832 = vadd.f32 %v798, %v831
      %833 = vmatmul.bf16.gmra.mxu0 %v552
      %v834 = vpop.f32.mrf.mxu0
      %v835 = vadd.f32 %v801, %v834
      %v836 = vpop.f32.mrf.mxu0
      %v837 = vadd.f32 %v803, %v836
      %838 = vdwg.mxu0
      %839 = vmatpush.bf16.msra.mxu0 %v730
      %840 = vmatpush.bf16.msra.mxu0 %v729
      %841 = vmatpush.bf16.msra.mxu0 %v728
      %842 = vmatpush.bf16.msra.mxu0 %v727
      %843 = vmatpush.bf16.msra.mxu0 %v726
      %844 = vmatpush.bf16.msra.mxu0 %v725
      %845 = vmatpush.bf16.msra.mxu0 %v724
      %846 = vmatpush.bf16.msra.mxu0 %v723
      %847 = vmatmul.bf16.gmra.mxu0 %v438
      %v848 = vpop.f32.mrf.mxu0
      %v849 = vadd.f32 %v815, %v848
      %v850 = vpop.f32.mrf.mxu0
      %v851 = vadd.f32 %v817, %v850
      %852 = vmatmul.bf16.gmra.mxu0 %v474
      %v853 = vpop.f32.mrf.mxu0
      %v854 = vadd.f32 %v820, %v853
      %v855 = vpop.f32.mrf.mxu0
      %v856 = vadd.f32 %v822, %v855
      %857 = vmatmul.bf16.gmra.mxu0 %v506
      %v858 = vpop.f32.mrf.mxu0
      %v859 = vadd.f32 %v825, %v858
      %v860 = vpop.f32.mrf.mxu0
      %v861 = vadd.f32 %v827, %v860
      %862 = vmatmul.bf16.gmra.mxu0 %v538
      %v863 = vpop.f32.mrf.mxu0
      %v864 = vadd.f32 %v830, %v863
      %v865 = vpop.f32.mrf.mxu0
      %v866 = vadd.f32 %v832, %v865
      %867 = vmatmul.bf16.gmra.mxu0 %v555
      %v868 = vpop.f32.mrf.mxu0
      %v869 = vadd.f32 %v835, %v868
      %v870 = vpop.f32.mrf.mxu0
      %v871 = vadd.f32 %v837, %v870
      %872 = vdwg.mxu0
      %873 = vmatpush.bf16.msra.mxu0 %v738
      %874 = vmatpush.bf16.msra.mxu0 %v737
      %875 = vmatpush.bf16.msra.mxu0 %v736
      %876 = vmatpush.bf16.msra.mxu0 %v735
      %877 = vmatpush.bf16.msra.mxu0 %v734
      %878 = vmatpush.bf16.msra.mxu0 %v733
      %879 = vmatpush.bf16.msra.mxu0 %v732
      %880 = vmatpush.bf16.msra.mxu0 %v731
      %881 = vmatmul.bf16.gmra.mxu0 %v450
      %v882 = vpop.f32.mrf.mxu0
      %v883 = vadd.f32 %v849, %v882
      %v884 = vpop.f32.mrf.mxu0
      %v885 = vadd.f32 %v851, %v884
      %886 = vmatmul.bf16.gmra.mxu0 %v482
      %v887 = vpop.f32.mrf.mxu0
      %v888 = vadd.f32 %v854, %v887
      %v889 = vpop.f32.mrf.mxu0
      %v890 = vadd.f32 %v856, %v889
      %891 = vmatmul.bf16.gmra.mxu0 %v514
      %v892 = vpop.f32.mrf.mxu0
      %v893 = vadd.f32 %v859, %v892
      %v894 = vpop.f32.mrf.mxu0
      %v895 = vadd.f32 %v861, %v894
      %896 = vmatmul.bf16.gmra.mxu0 %v546
      %v897 = vpop.f32.mrf.mxu0
      %v898 = vadd.f32 %v864, %v897
      %v899 = vpop.f32.mrf.mxu0
      %v900 = vadd.f32 %v866, %v899
      %901 = vmatmul.bf16.gmra.mxu0 %v558
      %v902 = vpop.f32.mrf.mxu0
      %v903 = vadd.f32 %v869, %v902
      %v904 = vpop.f32.mrf.mxu0
      %v905 = vadd.f32 %v871, %v904
      %906 = vdwg.mxu0
      %v909 = vunpack.c.l.b16 %v189
      %v910 = vunpack.c.h.b16 %v189
      %v911 = vunpack.c.l.b16 %v190
      %v912 = vunpack.c.h.b16 %v190
      %v913 = vpack.c.b16 %v909, %v374
      %v914 = vpack.c.b16 %v910, %v375
      %v915 = vpack.c.b16 %v911, %v376
      %v916 = vpack.c.b16 %v912, %v377
      %v1001 = vunpack.c.l.b16 %v191
      %v1002 = vunpack.c.l.b16 %v192
      %v1003 = vunpack.c.l.b16 %v193
      %v1004 = vunpack.c.l.b16 %v194
      %v1005 = vunpack.c.l.b16 %v195
      %v1006 = vunpack.c.l.b16 %v196
      %v1007 = vunpack.c.l.b16 %v197
      %v1008 = vunpack.c.l.b16 %v198
      %v1009 = vunpack.c.l.b16 %v199
      %v1010 = vunpack.c.l.b16 %v200
      %v1011 = vunpack.c.l.b16 %v201
      %v1012 = vunpack.c.l.b16 %v202
      %v1013 = vunpack.c.l.b16 %v203
      %v1014 = vunpack.c.l.b16 %v204
      %v1015 = vunpack.c.l.b16 %v205
      %v1016 = vunpack.c.l.b16 %v206
      %v1017 = vunpack.c.l.b16 %v207
      %v1018 = vunpack.c.l.b16 %v208
      %v1019 = vunpack.c.l.b16 %v209
      %v1020 = vunpack.c.l.b16 %v210
      %v1021 = vunpack.c.l.b16 %v211
      %v1022 = vunpack.c.l.b16 %v212
      %v1023 = vunpack.c.l.b16 %v213
      %v1024 = vunpack.c.l.b16 %v214
      %v1025 = vunpack.c.l.b16 %v215
      %v1026 = vunpack.c.l.b16 %v216
      %v1027 = vunpack.c.l.b16 %v217
      %v1028 = vunpack.c.l.b16 %v218
      %v1029 = vunpack.c.l.b16 %v219
      %v1030 = vunpack.c.l.b16 %v220
      %v1031 = vunpack.c.l.b16 %v221
      %v1032 = vunpack.c.l.b16 %v222
      %v1033 = vunpack.c.l.b16 %v223
      %v1034 = vunpack.c.l.b16 %v224
      %v1035 = vunpack.c.l.b16 %v225
      %v1036 = vunpack.c.l.b16 %v226
      %v1037 = vunpack.c.l.b16 %v227
      %v1038 = vunpack.c.l.b16 %v228
      %v1039 = vunpack.c.l.b16 %v229
      %v1040 = vunpack.c.l.b16 %v230
      %v1041 = vunpack.c.l.b16 %v231
      %v1042 = vunpack.c.l.b16 %v232
      %v1043 = vunpack.c.l.b16 %v233
      %v1044 = vunpack.c.l.b16 %v234
      %v1045 = vunpack.c.l.b16 %v235
      %v1046 = vunpack.c.l.b16 %v236
      %v1047 = vunpack.c.l.b16 %v237
      %v1048 = vunpack.c.l.b16 %v238
      %v1049 = vunpack.c.l.b16 %v239
      %v1050 = vunpack.c.l.b16 %v240
      %v1051 = vunpack.c.l.b16 %v241
      %v1052 = vunpack.c.l.b16 %v242
      %v1053 = vunpack.c.l.b16 %v243
      %v1054 = vunpack.c.l.b16 %v244
      %v1055 = vunpack.c.l.b16 %v245
      %v1056 = vunpack.c.l.b16 %v246
      %v1057 = vunpack.c.l.b16 %v247
      %v1058 = vunpack.c.l.b16 %v248
      %v1059 = vunpack.c.l.b16 %v249
      %v1060 = vunpack.c.l.b16 %v250
      %v1061 = vunpack.c.l.b16 %v251
      %v1062 = vunpack.c.l.b16 %v252
      %v1063 = vunpack.c.l.b16 %v253
      %v1064 = vunpack.c.l.b16 %v254
      %v1065 = vpack.c.b16 %v1002, %v1001
      %v1066 = vpack.c.b16 %v1004, %v1003
      %v1067 = vpack.c.b16 %v1006, %v1005
      %v1068 = vpack.c.b16 %v1008, %v1007
      %v1069 = vpack.c.b16 %v1010, %v1009
      %v1070 = vpack.c.b16 %v1012, %v1011
      %v1071 = vpack.c.b16 %v1014, %v1013
      %v1072 = vpack.c.b16 %v1016, %v1015
      %v1073 = vpack.c.b16 %v1018, %v1017
      %v1074 = vpack.c.b16 %v1020, %v1019
      %v1075 = vpack.c.b16 %v1022, %v1021
      %v1076 = vpack.c.b16 %v1024, %v1023
      %v1077 = vpack.c.b16 %v1026, %v1025
      %v1078 = vpack.c.b16 %v1028, %v1027
      %v1079 = vpack.c.b16 %v1030, %v1029
      %v1080 = vpack.c.b16 %v1032, %v1031
      %v1081 = vpack.c.b16 %v1034, %v1033
      %v1082 = vpack.c.b16 %v1036, %v1035
      %v1083 = vpack.c.b16 %v1038, %v1037
      %v1084 = vpack.c.b16 %v1040, %v1039
      %v1085 = vpack.c.b16 %v1042, %v1041
      %v1086 = vpack.c.b16 %v1044, %v1043
      %v1087 = vpack.c.b16 %v1046, %v1045
      %v1088 = vpack.c.b16 %v1048, %v1047
      %v1089 = vpack.c.b16 %v1050, %v1049
      %v1090 = vpack.c.b16 %v1052, %v1051
      %v1091 = vpack.c.b16 %v1054, %v1053
      %v1092 = vpack.c.b16 %v1056, %v1055
      %v1093 = vpack.c.b16 %v1058, %v1057
      %v1094 = vpack.c.b16 %v1060, %v1059
      %v1095 = vpack.c.b16 %v1062, %v1061
      %v1096 = vpack.c.b16 %v1064, %v1063
      %1129 = vmatpush.bf16.msra.mxu0 %v1072
      %1130 = vmatpush.bf16.msra.mxu0 %v1071
      %1131 = vmatpush.bf16.msra.mxu0 %v1070
      %1132 = vmatpush.bf16.msra.mxu0 %v1069
      %1133 = vmatpush.bf16.msra.mxu0 %v1068
      %1134 = vmatpush.bf16.msra.mxu0 %v1067
      %1135 = vmatpush.bf16.msra.mxu0 %v1066
      %1136 = vmatpush.bf16.msra.mxu0 %v1065
      %1137 = vmatmul.bf16.gmra.mxu0 %v382
      %v1138 = vpop.f32.mrf.mxu0
      %v1139 = vadd.f32 %v883, %v1138
      %v1140 = vpop.f32.mrf.mxu0
      %v1141 = vadd.f32 %v885, %v1140
      %1142 = vmatmul.bf16.gmra.mxu0 %v386
      %v1143 = vpop.f32.mrf.mxu0
      %v1144 = vadd.f32 %v888, %v1143
      %v1145 = vpop.f32.mrf.mxu0
      %v1146 = vadd.f32 %v890, %v1145
      %1147 = vmatmul.bf16.gmra.mxu0 %v390
      %v1148 = vpop.f32.mrf.mxu0
      %v1149 = vadd.f32 %v893, %v1148
      %v1150 = vpop.f32.mrf.mxu0
      %v1151 = vadd.f32 %v895, %v1150
      %1152 = vmatmul.bf16.gmra.mxu0 %v394
      %v1153 = vpop.f32.mrf.mxu0
      %v1154 = vadd.f32 %v898, %v1153
      %v1155 = vpop.f32.mrf.mxu0
      %v1156 = vadd.f32 %v900, %v1155
      %1157 = vmatmul.bf16.gmra.mxu0 %v913
      %v1158 = vpop.f32.mrf.mxu0
      %v1159 = vadd.f32 %v903, %v1158
      %v1160 = vpop.f32.mrf.mxu0
      %v1161 = vadd.f32 %v905, %v1160
      %1162 = vdwg.mxu0
      %1163 = vmatpush.bf16.msra.mxu0 %v1080
      %1164 = vmatpush.bf16.msra.mxu0 %v1079
      %1165 = vmatpush.bf16.msra.mxu0 %v1078
      %1166 = vmatpush.bf16.msra.mxu0 %v1077
      %1167 = vmatpush.bf16.msra.mxu0 %v1076
      %1168 = vmatpush.bf16.msra.mxu0 %v1075
      %1169 = vmatpush.bf16.msra.mxu0 %v1074
      %1170 = vmatpush.bf16.msra.mxu0 %v1073
      %1171 = vmatmul.bf16.gmra.mxu0 %v383
      %v1172 = vpop.f32.mrf.mxu0
      %v1173 = vadd.f32 %v1139, %v1172
      %v1174 = vpop.f32.mrf.mxu0
      %v1175 = vadd.f32 %v1141, %v1174
      %1176 = vmatmul.bf16.gmra.mxu0 %v387
      %v1177 = vpop.f32.mrf.mxu0
      %v1178 = vadd.f32 %v1144, %v1177
      %v1179 = vpop.f32.mrf.mxu0
      %v1180 = vadd.f32 %v1146, %v1179
      %1181 = vmatmul.bf16.gmra.mxu0 %v391
      %v1182 = vpop.f32.mrf.mxu0
      %v1183 = vadd.f32 %v1149, %v1182
      %v1184 = vpop.f32.mrf.mxu0
      %v1185 = vadd.f32 %v1151, %v1184
      %1186 = vmatmul.bf16.gmra.mxu0 %v395
      %v1187 = vpop.f32.mrf.mxu0
      %v1188 = vadd.f32 %v1154, %v1187
      %v1189 = vpop.f32.mrf.mxu0
      %v1190 = vadd.f32 %v1156, %v1189
      %1191 = vmatmul.bf16.gmra.mxu0 %v914
      %v1192 = vpop.f32.mrf.mxu0
      %v1193 = vadd.f32 %v1159, %v1192
      %v1194 = vpop.f32.mrf.mxu0
      %v1195 = vadd.f32 %v1161, %v1194
      %1196 = vdwg.mxu0
      %1197 = vmatpush.bf16.msra.mxu0 %v1088
      %1198 = vmatpush.bf16.msra.mxu0 %v1087
      %1199 = vmatpush.bf16.msra.mxu0 %v1086
      %1200 = vmatpush.bf16.msra.mxu0 %v1085
      %1201 = vmatpush.bf16.msra.mxu0 %v1084
      %1202 = vmatpush.bf16.msra.mxu0 %v1083
      %1203 = vmatpush.bf16.msra.mxu0 %v1082
      %1204 = vmatpush.bf16.msra.mxu0 %v1081
      %1205 = vmatmul.bf16.gmra.mxu0 %v384
      %v1206 = vpop.f32.mrf.mxu0
      %v1207 = vadd.f32 %v1173, %v1206
      %v1208 = vpop.f32.mrf.mxu0
      %v1209 = vadd.f32 %v1175, %v1208
      %1210 = vmatmul.bf16.gmra.mxu0 %v388
      %v1211 = vpop.f32.mrf.mxu0
      %v1212 = vadd.f32 %v1178, %v1211
      %v1213 = vpop.f32.mrf.mxu0
      %v1214 = vadd.f32 %v1180, %v1213
      %1215 = vmatmul.bf16.gmra.mxu0 %v392
      %v1216 = vpop.f32.mrf.mxu0
      %v1217 = vadd.f32 %v1183, %v1216
      %v1218 = vpop.f32.mrf.mxu0
      %v1219 = vadd.f32 %v1185, %v1218
      %1220 = vmatmul.bf16.gmra.mxu0 %v396
      %v1221 = vpop.f32.mrf.mxu0
      %v1222 = vadd.f32 %v1188, %v1221
      %v1223 = vpop.f32.mrf.mxu0
      %v1224 = vadd.f32 %v1190, %v1223
      %1225 = vmatmul.bf16.gmra.mxu0 %v915
      %v1226 = vpop.f32.mrf.mxu0
      %v1227 = vadd.f32 %v1193, %v1226
      %v1228 = vpop.f32.mrf.mxu0
      %v1229 = vadd.f32 %v1195, %v1228
      %1230 = vdwg.mxu0
      %1231 = vmatpush.bf16.msra.mxu0 %v1096
      %1232 = vmatpush.bf16.msra.mxu0 %v1095
      %1233 = vmatpush.bf16.msra.mxu0 %v1094
      %1234 = vmatpush.bf16.msra.mxu0 %v1093
      %1235 = vmatpush.bf16.msra.mxu0 %v1092
      %1236 = vmatpush.bf16.msra.mxu0 %v1091
      %1237 = vmatpush.bf16.msra.mxu0 %v1090
      %1238 = vmatpush.bf16.msra.mxu0 %v1089
      %1239 = vmatmul.bf16.gmra.mxu0 %v385
      %v1240 = vpop.f32.mrf.mxu0
      %v1241 = vadd.f32 %v1207, %v1240
      %v1242 = vpop.f32.mrf.mxu0
      %v1243 = vadd.f32 %v1209, %v1242
      %1244 = vmatmul.bf16.gmra.mxu0 %v389
      %v1245 = vpop.f32.mrf.mxu0
      %v1246 = vadd.f32 %v1212, %v1245
      %v1247 = vpop.f32.mrf.mxu0
      %v1248 = vadd.f32 %v1214, %v1247
      %1249 = vmatmul.bf16.gmra.mxu0 %v393
      %v1250 = vpop.f32.mrf.mxu0
      %v1251 = vadd.f32 %v1217, %v1250
      %v1252 = vpop.f32.mrf.mxu0
      %v1253 = vadd.f32 %v1219, %v1252
      %1254 = vmatmul.bf16.gmra.mxu0 %v397
      %v1255 = vpop.f32.mrf.mxu0
      %v1256 = vadd.f32 %v1222, %v1255
      %v1257 = vpop.f32.mrf.mxu0
      %v1258 = vadd.f32 %v1224, %v1257
      %1259 = vmatmul.bf16.gmra.mxu0 %v916
      %v1260 = vpop.f32.mrf.mxu0
      %v1261 = vadd.f32 %v1227, %v1260
      %v1262 = vpop.f32.mrf.mxu0
      %v1263 = vadd.f32 %v1229, %v1262
      %1264 = vdwg.mxu0
      %v1265 = vld [vmem:[%s165] sm:$0xee]
      %v1266 = vld [vmem:[%s165 + $0x8] sm:$0xee]
      %s1267 = scalar_lea.vmem %s1, 512
      %v1268 = vld [vmem:[%s1267] sm:$0xf]
      %v1269 = vld [vmem:[%s1267 + $0x4] sm:$0xf]
      %v1270 = vld [vmem:[%s1267 + $0x8] sm:$0xf]
      %v1271 = vld [vmem:[%s1267 + $0xc] sm:$0xf]
      %v1272 = vld [vmem:[%s1267 + $0x10] sm:$0xf]
      %v1273 = vld [vmem:[%s1267 + $0x14] sm:$0xf]
      %v1274 = vld [vmem:[%s1267 + $0x18] sm:$0xf]
      %v1275 = vld [vmem:[%s1267 + $0x1c] sm:$0xf]
      %v1276 = vld [vmem:[%s1267 + $0x20] sm:$0xf]
      %v1277 = vld [vmem:[%s1267 + $0x24] sm:$0xf]
      %v1278 = vld [vmem:[%s1267 + $0x28] sm:$0xf]
      %v1279 = vld [vmem:[%s1267 + $0x2c] sm:$0xf]
      %v1280 = vld [vmem:[%s1267 + $0x30] sm:$0xf]
      %v1281 = vld [vmem:[%s1267 + $0x34] sm:$0xf]
      %v1282 = vld [vmem:[%s1267 + $0x38] sm:$0xf]
      %v1283 = vld [vmem:[%s1267 + $0x3c] sm:$0xf]
      %v1284 = vld [vmem:[%s1267 + $0x40] sm:$0xf]
      %v1285 = vld [vmem:[%s1267 + $0x44] sm:$0xf]
      %v1286 = vld [vmem:[%s1267 + $0x48] sm:$0xf]
      %v1287 = vld [vmem:[%s1267 + $0x4c] sm:$0xf]
      %v1288 = vld [vmem:[%s1267 + $0x50] sm:$0xf]
      %v1289 = vld [vmem:[%s1267 + $0x54] sm:$0xf]
      %v1290 = vld [vmem:[%s1267 + $0x58] sm:$0xf]
      %v1291 = vld [vmem:[%s1267 + $0x5c] sm:$0xf]
      %v1292 = vld [vmem:[%s1267 + $0x60] sm:$0xf]
      %v1293 = vld [vmem:[%s1267 + $0x64] sm:$0xf]
      %v1294 = vld [vmem:[%s1267 + $0x68] sm:$0xf]
      %v1295 = vld [vmem:[%s1267 + $0x6c] sm:$0xf]
      %v1296 = vld [vmem:[%s1267 + $0x70] sm:$0xf]
      %v1297 = vld [vmem:[%s1267 + $0x74] sm:$0xf]
      %v1298 = vld [vmem:[%s1267 + $0x78] sm:$0xf]
      %v1299 = vld [vmem:[%s1267 + $0x7c] sm:$0xf]
      %v1300 = vld [vmem:[%s1267 + $0x80] sm:$0xf]
      %v1301 = vld [vmem:[%s1267 + $0x84] sm:$0xf]
      %v1302 = vld [vmem:[%s1267 + $0x88] sm:$0xf]
      %v1303 = vld [vmem:[%s1267 + $0x8c] sm:$0xf]
      %v1304 = vld [vmem:[%s1267 + $0x90] sm:$0xf]
      %v1305 = vld [vmem:[%s1267 + $0x94] sm:$0xf]
      %v1306 = vld [vmem:[%s1267 + $0x98] sm:$0xf]
      %v1307 = vld [vmem:[%s1267 + $0x9c] sm:$0xf]
      %v1308 = vld [vmem:[%s1267 + $0xa0] sm:$0xf]
      %v1309 = vld [vmem:[%s1267 + $0xa4] sm:$0xf]
      %v1310 = vld [vmem:[%s1267 + $0xa8] sm:$0xf]
      %v1311 = vld [vmem:[%s1267 + $0xac] sm:$0xf]
      %v1312 = vld [vmem:[%s1267 + $0xb0] sm:$0xf]
      %v1313 = vld [vmem:[%s1267 + $0xb4] sm:$0xf]
      %v1314 = vld [vmem:[%s1267 + $0xb8] sm:$0xf]
      %v1315 = vld [vmem:[%s1267 + $0xbc] sm:$0xf]
      %v1316 = vld [vmem:[%s1267 + $0xc0] sm:$0xf]
      %v1317 = vld [vmem:[%s1267 + $0xc4] sm:$0xf]
      %v1318 = vld [vmem:[%s1267 + $0xc8] sm:$0xf]
      %v1319 = vld [vmem:[%s1267 + $0xcc] sm:$0xf]
      %v1320 = vld [vmem:[%s1267 + $0xd0] sm:$0xf]
      %v1321 = vld [vmem:[%s1267 + $0xd4] sm:$0xf]
      %v1322 = vld [vmem:[%s1267 + $0xd8] sm:$0xf]
      %v1323 = vld [vmem:[%s1267 + $0xdc] sm:$0xf]
      %v1324 = vld [vmem:[%s1267 + $0xe0] sm:$0xf]
      %v1325 = vld [vmem:[%s1267 + $0xe4] sm:$0xf]
      %v1326 = vld [vmem:[%s1267 + $0xe8] sm:$0xf]
      %v1327 = vld [vmem:[%s1267 + $0xec] sm:$0xf]
      %v1328 = vld [vmem:[%s1267 + $0xf0] sm:$0xf]
      %v1329 = vld [vmem:[%s1267 + $0xf4] sm:$0xf]
      %v1330 = vld [vmem:[%s1267 + $0xf8] sm:$0xf]
      %v1331 = vld [vmem:[%s1267 + $0xfc] sm:$0xf]
      %v1334 = vunpack.c.l.b16 %v1265
      %v1335 = vunpack.c.h.b16 %v1265
      %v1336 = vunpack.c.l.b16 %v1266
      %v1337 = vunpack.c.h.b16 %v1266
      %v1338 = vpack.c.b16 %v346, %v1334
      %v1339 = vpack.c.b16 %v347, %v1335
      %v1340 = vpack.c.b16 %v348, %v1336
      %v1341 = vpack.c.b16 %v349, %v1337
      %vm1342 = vcmask 1046528
      %v1343 = vrot.slane %v1338, 1
      %v1344 = vrot.slane %v386, 1
      %v1345 = vsel %vm1342, %v1343, %v1344
      %v1346 = vrot.slane %v1339, 1
      %v1347 = vrot.slane %v387, 1
      %v1348 = vsel %vm1342, %v1346, %v1347
      %v1349 = vrot.slane %v1340, 1
      %v1350 = vrot.slane %v388, 1
      %v1351 = vsel %vm1342, %v1349, %v1350
      %v1352 = vrot.slane %v1341, 1
      %v1353 = vrot.slane %v389, 1
      %v1354 = vsel %vm1342, %v1352, %v1353
      %v1355 = vrot.slane %v390, 1
      %v1356 = vsel %vm1342, %v1344, %v1355
      %v1357 = vrot.slane %v391, 1
      %v1358 = vsel %vm1342, %v1347, %v1357
      %v1359 = vrot.slane %v392, 1
      %v1360 = vsel %vm1342, %v1350, %v1359
      %v1361 = vrot.slane %v393, 1
      %v1362 = vsel %vm1342, %v1353, %v1361
      %v1363 = vrot.slane %v394, 1
      %v1364 = vsel %vm1342, %v1355, %v1363
      %v1365 = vrot.slane %v395, 1
      %v1366 = vsel %vm1342, %v1357, %v1365
      %v1367 = vrot.slane %v396, 1
      %v1368 = vsel %vm1342, %v1359, %v1367
      %v1369 = vrot.slane %v397, 1
      %v1370 = vsel %vm1342, %v1361, %v1369
      %v1371 = vrot.slane %v398, 1
      %v1372 = vsel %vm1342, %v1363, %v1371
      %v1373 = vrot.slane %v399, 1
      %v1374 = vsel %vm1342, %v1365, %v1373
      %v1375 = vrot.slane %v400, 1
      %v1376 = vsel %vm1342, %v1367, %v1375
      %v1377 = vrot.slane %v401, 1
      %v1378 = vsel %vm1342, %v1369, %v1377
      %v1463 = vunpack.c.l.b16 %v1268
      %v1464 = vunpack.c.l.b16 %v1269
      %v1465 = vunpack.c.l.b16 %v1270
      %v1466 = vunpack.c.l.b16 %v1271
      %v1467 = vunpack.c.l.b16 %v1272
      %v1468 = vunpack.c.l.b16 %v1273
      %v1469 = vunpack.c.l.b16 %v1274
      %v1470 = vunpack.c.l.b16 %v1275
      %v1471 = vunpack.c.l.b16 %v1276
      %v1472 = vunpack.c.l.b16 %v1277
      %v1473 = vunpack.c.l.b16 %v1278
      %v1474 = vunpack.c.l.b16 %v1279
      %v1475 = vunpack.c.l.b16 %v1280
      %v1476 = vunpack.c.l.b16 %v1281
      %v1477 = vunpack.c.l.b16 %v1282
      %v1478 = vunpack.c.l.b16 %v1283
      %v1479 = vunpack.c.l.b16 %v1284
      %v1480 = vunpack.c.l.b16 %v1285
      %v1481 = vunpack.c.l.b16 %v1286
      %v1482 = vunpack.c.l.b16 %v1287
      %v1483 = vunpack.c.l.b16 %v1288
      %v1484 = vunpack.c.l.b16 %v1289
      %v1485 = vunpack.c.l.b16 %v1290
      %v1486 = vunpack.c.l.b16 %v1291
      %v1487 = vunpack.c.l.b16 %v1292
      %v1488 = vunpack.c.l.b16 %v1293
      %v1489 = vunpack.c.l.b16 %v1294
      %v1490 = vunpack.c.l.b16 %v1295
      %v1491 = vunpack.c.l.b16 %v1296
      %v1492 = vunpack.c.l.b16 %v1297
      %v1493 = vunpack.c.l.b16 %v1298
      %v1494 = vunpack.c.l.b16 %v1299
      %v1495 = vunpack.c.l.b16 %v1300
      %v1496 = vunpack.c.l.b16 %v1301
      %v1497 = vunpack.c.l.b16 %v1302
      %v1498 = vunpack.c.l.b16 %v1303
      %v1499 = vunpack.c.l.b16 %v1304
      %v1500 = vunpack.c.l.b16 %v1305
      %v1501 = vunpack.c.l.b16 %v1306
      %v1502 = vunpack.c.l.b16 %v1307
      %v1503 = vunpack.c.l.b16 %v1308
      %v1504 = vunpack.c.l.b16 %v1309
      %v1505 = vunpack.c.l.b16 %v1310
      %v1506 = vunpack.c.l.b16 %v1311
      %v1507 = vunpack.c.l.b16 %v1312
      %v1508 = vunpack.c.l.b16 %v1313
      %v1509 = vunpack.c.l.b16 %v1314
      %v1510 = vunpack.c.l.b16 %v1315
      %v1511 = vunpack.c.l.b16 %v1316
      %v1512 = vunpack.c.l.b16 %v1317
      %v1513 = vunpack.c.l.b16 %v1318
      %v1514 = vunpack.c.l.b16 %v1319
      %v1515 = vunpack.c.l.b16 %v1320
      %v1516 = vunpack.c.l.b16 %v1321
      %v1517 = vunpack.c.l.b16 %v1322
      %v1518 = vunpack.c.l.b16 %v1323
      %v1519 = vunpack.c.l.b16 %v1324
      %v1520 = vunpack.c.l.b16 %v1325
      %v1521 = vunpack.c.l.b16 %v1326
      %v1522 = vunpack.c.l.b16 %v1327
      %v1523 = vunpack.c.l.b16 %v1328
      %v1524 = vunpack.c.l.b16 %v1329
      %v1525 = vunpack.c.l.b16 %v1330
      %v1526 = vunpack.c.l.b16 %v1331
      %v1527 = vpack.c.b16 %v1464, %v1463
      %v1528 = vpack.c.b16 %v1466, %v1465
      %v1529 = vpack.c.b16 %v1468, %v1467
      %v1530 = vpack.c.b16 %v1470, %v1469
      %v1531 = vpack.c.b16 %v1472, %v1471
      %v1532 = vpack.c.b16 %v1474, %v1473
      %v1533 = vpack.c.b16 %v1476, %v1475
      %v1534 = vpack.c.b16 %v1478, %v1477
      %v1535 = vpack.c.b16 %v1480, %v1479
      %v1536 = vpack.c.b16 %v1482, %v1481
      %v1537 = vpack.c.b16 %v1484, %v1483
      %v1538 = vpack.c.b16 %v1486, %v1485
      %v1539 = vpack.c.b16 %v1488, %v1487
      %v1540 = vpack.c.b16 %v1490, %v1489
      %v1541 = vpack.c.b16 %v1492, %v1491
      %v1542 = vpack.c.b16 %v1494, %v1493
      %v1543 = vpack.c.b16 %v1496, %v1495
      %v1544 = vpack.c.b16 %v1498, %v1497
      %v1545 = vpack.c.b16 %v1500, %v1499
      %v1546 = vpack.c.b16 %v1502, %v1501
      %v1547 = vpack.c.b16 %v1504, %v1503
      %v1548 = vpack.c.b16 %v1506, %v1505
      %v1549 = vpack.c.b16 %v1508, %v1507
      %v1550 = vpack.c.b16 %v1510, %v1509
      %v1551 = vpack.c.b16 %v1512, %v1511
      %v1552 = vpack.c.b16 %v1514, %v1513
      %v1553 = vpack.c.b16 %v1516, %v1515
      %v1554 = vpack.c.b16 %v1518, %v1517
      %v1555 = vpack.c.b16 %v1520, %v1519
      %v1556 = vpack.c.b16 %v1522, %v1521
      %v1557 = vpack.c.b16 %v1524, %v1523
      %v1558 = vpack.c.b16 %v1526, %v1525
      %1591 = vmatpush.bf16.msra.mxu0 %v1534
      %1592 = vmatpush.bf16.msra.mxu0 %v1533
      %1593 = vmatpush.bf16.msra.mxu0 %v1532
      %1594 = vmatpush.bf16.msra.mxu0 %v1531
      %1595 = vmatpush.bf16.msra.mxu0 %v1530
      %1596 = vmatpush.bf16.msra.mxu0 %v1529
      %1597 = vmatpush.bf16.msra.mxu0 %v1528
      %1598 = vmatpush.bf16.msra.mxu0 %v1527
      %1599 = vmatmul.bf16.gmra.mxu0 %v1345
      %v1600 = vpop.f32.mrf.mxu0
      %v1601 = vadd.f32 0.0, %v1600
      %v1602 = vpop.f32.mrf.mxu0
      %v1603 = vadd.f32 0.0, %v1602
      %1604 = vmatmul.bf16.gmra.mxu0 %v1356
      %v1605 = vpop.f32.mrf.mxu0
      %v1606 = vadd.f32 0.0, %v1605
      %v1607 = vpop.f32.mrf.mxu0
      %v1608 = vadd.f32 0.0, %v1607
      %1609 = vmatmul.bf16.gmra.mxu0 %v1364
      %v1610 = vpop.f32.mrf.mxu0
      %v1611 = vadd.f32 0.0, %v1610
      %v1612 = vpop.f32.mrf.mxu0
      %v1613 = vadd.f32 0.0, %v1612
      %1614 = vmatmul.bf16.gmra.mxu0 %v1372
      %v1615 = vpop.f32.mrf.mxu0
      %v1616 = vadd.f32 0.0, %v1615
      %v1617 = vpop.f32.mrf.mxu0
      %v1618 = vadd.f32 0.0, %v1617
      %1619 = vmatmul.bf16.gmra.mxu0 %v1371
      %v1620 = vpop.f32.mrf.mxu0
      %v1621 = vadd.f32 0.0, %v1620
      %v1622 = vpop.f32.mrf.mxu0
      %v1623 = vadd.f32 0.0, %v1622
      %1624 = vdwg.mxu0
      %1625 = vmatpush.bf16.msra.mxu0 %v1542
      %1626 = vmatpush.bf16.msra.mxu0 %v1541
      %1627 = vmatpush.bf16.msra.mxu0 %v1540
      %1628 = vmatpush.bf16.msra.mxu0 %v1539
      %1629 = vmatpush.bf16.msra.mxu0 %v1538
      %1630 = vmatpush.bf16.msra.mxu0 %v1537
      %1631 = vmatpush.bf16.msra.mxu0 %v1536
      %1632 = vmatpush.bf16.msra.mxu0 %v1535
      %1633 = vmatmul.bf16.gmra.mxu0 %v1348
      %v1634 = vpop.f32.mrf.mxu0
      %v1635 = vadd.f32 %v1601, %v1634
      %v1636 = vpop.f32.mrf.mxu0
      %v1637 = vadd.f32 %v1603, %v1636
      %1638 = vmatmul.bf16.gmra.mxu0 %v1358
      %v1639 = vpop.f32.mrf.mxu0
      %v1640 = vadd.f32 %v1606, %v1639
      %v1641 = vpop.f32.mrf.mxu0
      %v1642 = vadd.f32 %v1608, %v1641
      %1643 = vmatmul.bf16.gmra.mxu0 %v1366
      %v1644 = vpop.f32.mrf.mxu0
      %v1645 = vadd.f32 %v1611, %v1644
      %v1646 = vpop.f32.mrf.mxu0
      %v1647 = vadd.f32 %v1613, %v1646
      %1648 = vmatmul.bf16.gmra.mxu0 %v1374
      %v1649 = vpop.f32.mrf.mxu0
      %v1650 = vadd.f32 %v1616, %v1649
      %v1651 = vpop.f32.mrf.mxu0
      %v1652 = vadd.f32 %v1618, %v1651
      %1653 = vmatmul.bf16.gmra.mxu0 %v1373
      %v1654 = vpop.f32.mrf.mxu0
      %v1655 = vadd.f32 %v1621, %v1654
      %v1656 = vpop.f32.mrf.mxu0
      %v1657 = vadd.f32 %v1623, %v1656
      %1658 = vdwg.mxu0
      %1659 = vmatpush.bf16.msra.mxu0 %v1550
      %1660 = vmatpush.bf16.msra.mxu0 %v1549
      %1661 = vmatpush.bf16.msra.mxu0 %v1548
      %1662 = vmatpush.bf16.msra.mxu0 %v1547
      %1663 = vmatpush.bf16.msra.mxu0 %v1546
      %1664 = vmatpush.bf16.msra.mxu0 %v1545
      %1665 = vmatpush.bf16.msra.mxu0 %v1544
      %1666 = vmatpush.bf16.msra.mxu0 %v1543
      %1667 = vmatmul.bf16.gmra.mxu0 %v1351
      %v1668 = vpop.f32.mrf.mxu0
      %v1669 = vadd.f32 %v1635, %v1668
      %v1670 = vpop.f32.mrf.mxu0
      %v1671 = vadd.f32 %v1637, %v1670
      %1672 = vmatmul.bf16.gmra.mxu0 %v1360
      %v1673 = vpop.f32.mrf.mxu0
      %v1674 = vadd.f32 %v1640, %v1673
      %v1675 = vpop.f32.mrf.mxu0
      %v1676 = vadd.f32 %v1642, %v1675
      %1677 = vmatmul.bf16.gmra.mxu0 %v1368
      %v1678 = vpop.f32.mrf.mxu0
      %v1679 = vadd.f32 %v1645, %v1678
      %v1680 = vpop.f32.mrf.mxu0
      %v1681 = vadd.f32 %v1647, %v1680
      %1682 = vmatmul.bf16.gmra.mxu0 %v1376
      %v1683 = vpop.f32.mrf.mxu0
      %v1684 = vadd.f32 %v1650, %v1683
      %v1685 = vpop.f32.mrf.mxu0
      %v1686 = vadd.f32 %v1652, %v1685
      %1687 = vmatmul.bf16.gmra.mxu0 %v1375
      %v1688 = vpop.f32.mrf.mxu0
      %v1689 = vadd.f32 %v1655, %v1688
      %v1690 = vpop.f32.mrf.mxu0
      %v1691 = vadd.f32 %v1657, %v1690
      %1692 = vdwg.mxu0
      %1693 = vmatpush.bf16.msra.mxu0 %v1558
      %1694 = vmatpush.bf16.msra.mxu0 %v1557
      %1695 = vmatpush.bf16.msra.mxu0 %v1556
      %1696 = vmatpush.bf16.msra.mxu0 %v1555
      %1697 = vmatpush.bf16.msra.mxu0 %v1554
      %1698 = vmatpush.bf16.msra.mxu0 %v1553
      %1699 = vmatpush.bf16.msra.mxu0 %v1552
      %1700 = vmatpush.bf16.msra.mxu0 %v1551
      %1701 = vmatmul.bf16.gmra.mxu0 %v1354
      %v1702 = vpop.f32.mrf.mxu0
      %v1703 = vadd.f32 %v1669, %v1702
      %v1704 = vpop.f32.mrf.mxu0
      %v1705 = vadd.f32 %v1671, %v1704
      %1706 = vmatmul.bf16.gmra.mxu0 %v1362
      %v1707 = vpop.f32.mrf.mxu0
      %v1708 = vadd.f32 %v1674, %v1707
      %v1709 = vpop.f32.mrf.mxu0
      %v1710 = vadd.f32 %v1676, %v1709
      %1711 = vmatmul.bf16.gmra.mxu0 %v1370
      %v1712 = vpop.f32.mrf.mxu0
      %v1713 = vadd.f32 %v1679, %v1712
      %v1714 = vpop.f32.mrf.mxu0
      %v1715 = vadd.f32 %v1681, %v1714
      %1716 = vmatmul.bf16.gmra.mxu0 %v1378
      %v1717 = vpop.f32.mrf.mxu0
      %v1718 = vadd.f32 %v1684, %v1717
      %v1719 = vpop.f32.mrf.mxu0
      %v1720 = vadd.f32 %v1686, %v1719
      %1721 = vmatmul.bf16.gmra.mxu0 %v1377
      %v1722 = vpop.f32.mrf.mxu0
      %v1723 = vadd.f32 %v1689, %v1722
      %v1724 = vpop.f32.mrf.mxu0
      %v1725 = vadd.f32 %v1691, %v1724
      %1726 = vdwg.mxu0
      %v1727 = vadd.f32 %v1241, %v1703
      %v1728 = vadd.f32 %v1243, %v1705
      %v1729 = vadd.f32 %v1246, %v1708
      %v1730 = vadd.f32 %v1248, %v1710
      %v1731 = vadd.f32 %v1251, %v1713
      %v1732 = vadd.f32 %v1253, %v1715
      %v1733 = vadd.f32 %v1256, %v1718
      %v1734 = vadd.f32 %v1258, %v1720
      %v1735 = vadd.f32 %v1261, %v1723
      %v1736 = vadd.f32 %v1263, %v1725
      %v1737 = vld [vmem:[%s165 + $0x10] sm:$0xee]
      %v1738 = vld [vmem:[%s165 + $0x18] sm:$0xee]
      %v1739 = vld [vmem:[%s165 + $0x20] sm:$0xff]
      %v1740 = vld [vmem:[%s165 + $0x28] sm:$0xff]
      %v1741 = vld [vmem:[%s165 + $0x30] sm:$0xff]
      %v1742 = vld [vmem:[%s165 + $0x38] sm:$0xff]
      %v1743 = vld [vmem:[%s165 + $0x40] sm:$0xff]
      %v1744 = vld [vmem:[%s165 + $0x48] sm:$0xff]
      %v1745 = vld [vmem:[%s165 + $0x50] sm:$0xff]
      %v1746 = vld [vmem:[%s165 + $0x58] sm:$0xff]
      %v1747 = vld [vmem:[%s165 + $0x60] sm:$0xff]
      %v1748 = vld [vmem:[%s165 + $0x68] sm:$0xff]
      %v1749 = vld [vmem:[%s165 + $0x70] sm:$0xff]
      %v1750 = vld [vmem:[%s165 + $0x78] sm:$0xff]
      %v1751 = vld [vmem:[%s165 + $0x80] sm:$0xff]
      %v1752 = vld [vmem:[%s165 + $0x88] sm:$0xff]
      %v1753 = vld [vmem:[%s165 + $0x90] sm:$0xff]
      %v1754 = vld [vmem:[%s165 + $0x98] sm:$0xff]
      %v1755 = vld [vmem:[%s165 + $0xa0] sm:$0xff]
      %v1756 = vld [vmem:[%s165 + $0xa8] sm:$0xff]
      %s1757 = scalar_lea.vmem %s1, 768
      %v1758 = vld [vmem:[%s1757] sm:$0xf]
      %v1759 = vld [vmem:[%s1757 + $0x4] sm:$0xf]
      %v1760 = vld [vmem:[%s1757 + $0x8] sm:$0xf]
      %v1761 = vld [vmem:[%s1757 + $0xc] sm:$0xf]
      %v1762 = vld [vmem:[%s1757 + $0x10] sm:$0xf]
      %v1763 = vld [vmem:[%s1757 + $0x14] sm:$0xf]
      %v1764 = vld [vmem:[%s1757 + $0x18] sm:$0xf]
      %v1765 = vld [vmem:[%s1757 + $0x1c] sm:$0xf]
      %v1766 = vld [vmem:[%s1757 + $0x20] sm:$0xf]
      %v1767 = vld [vmem:[%s1757 + $0x24] sm:$0xf]
      %v1768 = vld [vmem:[%s1757 + $0x28] sm:$0xf]
      %v1769 = vld [vmem:[%s1757 + $0x2c] sm:$0xf]
      %v1770 = vld [vmem:[%s1757 + $0x30] sm:$0xf]
      %v1771 = vld [vmem:[%s1757 + $0x34] sm:$0xf]
      %v1772 = vld [vmem:[%s1757 + $0x38] sm:$0xf]
      %v1773 = vld [vmem:[%s1757 + $0x3c] sm:$0xf]
      %v1774 = vld [vmem:[%s1757 + $0x40] sm:$0xf]
      %v1775 = vld [vmem:[%s1757 + $0x44] sm:$0xf]
      %v1776 = vld [vmem:[%s1757 + $0x48] sm:$0xf]
      %v1777 = vld [vmem:[%s1757 + $0x4c] sm:$0xf]
      %v1778 = vld [vmem:[%s1757 + $0x50] sm:$0xf]
      %v1779 = vld [vmem:[%s1757 + $0x54] sm:$0xf]
      %v1780 = vld [vmem:[%s1757 + $0x58] sm:$0xf]
      %v1781 = vld [vmem:[%s1757 + $0x5c] sm:$0xf]
      %v1782 = vld [vmem:[%s1757 + $0x60] sm:$0xf]
      %v1783 = vld [vmem:[%s1757 + $0x64] sm:$0xf]
      %v1784 = vld [vmem:[%s1757 + $0x68] sm:$0xf]
      %v1785 = vld [vmem:[%s1757 + $0x6c] sm:$0xf]
      %v1786 = vld [vmem:[%s1757 + $0x70] sm:$0xf]
      %v1787 = vld [vmem:[%s1757 + $0x74] sm:$0xf]
      %v1788 = vld [vmem:[%s1757 + $0x78] sm:$0xf]
      %v1789 = vld [vmem:[%s1757 + $0x7c] sm:$0xf]
      %v1790 = vld [vmem:[%s1757 + $0x80] sm:$0xf]
      %v1791 = vld [vmem:[%s1757 + $0x84] sm:$0xf]
      %v1792 = vld [vmem:[%s1757 + $0x88] sm:$0xf]
      %v1793 = vld [vmem:[%s1757 + $0x8c] sm:$0xf]
      %v1794 = vld [vmem:[%s1757 + $0x90] sm:$0xf]
      %v1795 = vld [vmem:[%s1757 + $0x94] sm:$0xf]
      %v1796 = vld [vmem:[%s1757 + $0x98] sm:$0xf]
      %v1797 = vld [vmem:[%s1757 + $0x9c] sm:$0xf]
      %v1798 = vld [vmem:[%s1757 + $0xa0] sm:$0xf]
      %v1799 = vld [vmem:[%s1757 + $0xa4] sm:$0xf]
      %v1800 = vld [vmem:[%s1757 + $0xa8] sm:$0xf]
      %v1801 = vld [vmem:[%s1757 + $0xac] sm:$0xf]
      %v1802 = vld [vmem:[%s1757 + $0xb0] sm:$0xf]
      %v1803 = vld [vmem:[%s1757 + $0xb4] sm:$0xf]
      %v1804 = vld [vmem:[%s1757 + $0xb8] sm:$0xf]
      %v1805 = vld [vmem:[%s1757 + $0xbc] sm:$0xf]
      %v1806 = vld [vmem:[%s1757 + $0xc0] sm:$0xf]
      %v1807 = vld [vmem:[%s1757 + $0xc4] sm:$0xf]
      %v1808 = vld [vmem:[%s1757 + $0xc8] sm:$0xf]
      %v1809 = vld [vmem:[%s1757 + $0xcc] sm:$0xf]
      %v1810 = vld [vmem:[%s1757 + $0xd0] sm:$0xf]
      %v1811 = vld [vmem:[%s1757 + $0xd4] sm:$0xf]
      %v1812 = vld [vmem:[%s1757 + $0xd8] sm:$0xf]
      %v1813 = vld [vmem:[%s1757 + $0xdc] sm:$0xf]
      %v1814 = vld [vmem:[%s1757 + $0xe0] sm:$0xf]
      %v1815 = vld [vmem:[%s1757 + $0xe4] sm:$0xf]
      %v1816 = vld [vmem:[%s1757 + $0xe8] sm:$0xf]
      %v1817 = vld [vmem:[%s1757 + $0xec] sm:$0xf]
      %v1818 = vld [vmem:[%s1757 + $0xf0] sm:$0xf]
      %v1819 = vld [vmem:[%s1757 + $0xf4] sm:$0xf]
      %v1820 = vld [vmem:[%s1757 + $0xf8] sm:$0xf]
      %v1821 = vld [vmem:[%s1757 + $0xfc] sm:$0xf]
      %v1842 = vunpack.c.l.b16 %v1737
      %v1843 = vunpack.c.h.b16 %v1737
      %v1844 = vunpack.c.l.b16 %v1738
      %v1845 = vunpack.c.h.b16 %v1738
      %v1846 = vunpack.c.l.b16 %v1739
      %v1847 = vunpack.c.h.b16 %v1739
      %v1848 = vunpack.c.l.b16 %v1740
      %v1849 = vunpack.c.h.b16 %v1740
      %v1850 = vunpack.c.l.b16 %v1741
      %v1851 = vunpack.c.h.b16 %v1741
      %v1852 = vunpack.c.l.b16 %v1742
      %v1853 = vunpack.c.h.b16 %v1742
      %v1854 = vunpack.c.l.b16 %v1743
      %v1855 = vunpack.c.h.b16 %v1743
      %v1856 = vunpack.c.l.b16 %v1744
      %v1857 = vunpack.c.h.b16 %v1744
      %v1858 = vunpack.c.l.b16 %v1745
      %v1859 = vunpack.c.h.b16 %v1745
      %v1860 = vunpack.c.l.b16 %v1746
      %v1861 = vunpack.c.h.b16 %v1746
      %v1862 = vunpack.c.l.b16 %v1747
      %v1863 = vunpack.c.h.b16 %v1747
      %v1864 = vunpack.c.l.b16 %v1748
      %v1865 = vunpack.c.h.b16 %v1748
      %v1866 = vunpack.c.l.b16 %v1749
      %v1867 = vunpack.c.h.b16 %v1749
      %v1868 = vunpack.c.l.b16 %v1750
      %v1869 = vunpack.c.h.b16 %v1750
      %v1870 = vunpack.c.l.b16 %v1751
      %v1871 = vunpack.c.h.b16 %v1751
      %v1872 = vunpack.c.l.b16 %v1752
      %v1873 = vunpack.c.h.b16 %v1752
      %v1874 = vunpack.c.l.b16 %v1753
      %v1875 = vunpack.c.h.b16 %v1753
      %v1876 = vunpack.c.l.b16 %v1754
      %v1877 = vunpack.c.h.b16 %v1754
      %v1878 = vunpack.c.l.b16 %v1755
      %v1879 = vunpack.c.h.b16 %v1755
      %v1880 = vunpack.c.l.b16 %v1756
      %v1881 = vunpack.c.h.b16 %v1756
      %v1882 = vpack.c.b16 %v1846, %v1842
      %v1883 = vpack.c.b16 %v1847, %v1843
      %v1884 = vpack.c.b16 %v1848, %v1844
      %v1885 = vpack.c.b16 %v1849, %v1845
      %v1886 = vpack.c.b16 %v1854, %v1850
      %v1887 = vpack.c.b16 %v1855, %v1851
      %v1888 = vpack.c.b16 %v1856, %v1852
      %v1889 = vpack.c.b16 %v1857, %v1853
      %v1890 = vpack.c.b16 %v1862, %v1858
      %v1891 = vpack.c.b16 %v1863, %v1859
      %v1892 = vpack.c.b16 %v1864, %v1860
      %v1893 = vpack.c.b16 %v1865, %v1861
      %v1894 = vpack.c.b16 %v1870, %v1866
      %v1895 = vpack.c.b16 %v1871, %v1867
      %v1896 = vpack.c.b16 %v1872, %v1868
      %v1897 = vpack.c.b16 %v1873, %v1869
      %v1898 = vpack.c.b16 %v1878, %v1874
      %v1899 = vpack.c.b16 %v1879, %v1875
      %v1900 = vpack.c.b16 %v1880, %v1876
      %v1901 = vpack.c.b16 %v1881, %v1877
      %v1902 = vrot.slane %v1882, 1
      %v1903 = vrot.slane %v1886, 1
      %v1904 = vsel %vm1342, %v1902, %v1903
      %v1905 = vrot.slane %v1883, 1
      %v1906 = vrot.slane %v1887, 1
      %v1907 = vsel %vm1342, %v1905, %v1906
      %v1908 = vrot.slane %v1884, 1
      %v1909 = vrot.slane %v1888, 1
      %v1910 = vsel %vm1342, %v1908, %v1909
      %v1911 = vrot.slane %v1885, 1
      %v1912 = vrot.slane %v1889, 1
      %v1913 = vsel %vm1342, %v1911, %v1912
      %v1914 = vrot.slane %v1890, 1
      %v1915 = vsel %vm1342, %v1903, %v1914
      %v1916 = vrot.slane %v1891, 1
      %v1917 = vsel %vm1342, %v1906, %v1916
      %v1918 = vrot.slane %v1892, 1
      %v1919 = vsel %vm1342, %v1909, %v1918
      %v1920 = vrot.slane %v1893, 1
      %v1921 = vsel %vm1342, %v1912, %v1920
      %v1922 = vrot.slane %v1894, 1
      %v1923 = vsel %vm1342, %v1914, %v1922
      %v1924 = vrot.slane %v1895, 1
      %v1925 = vsel %vm1342, %v1916, %v1924
      %v1926 = vrot.slane %v1896, 1
      %v1927 = vsel %vm1342, %v1918, %v1926
      %v1928 = vrot.slane %v1897, 1
      %v1929 = vsel %vm1342, %v1920, %v1928
      %v1930 = vrot.slane %v1898, 1
      %v1931 = vsel %vm1342, %v1922, %v1930
      %v1932 = vrot.slane %v1899, 1
      %v1933 = vsel %vm1342, %v1924, %v1932
      %v1934 = vrot.slane %v1900, 1
      %v1935 = vsel %vm1342, %v1926, %v1934
      %v1936 = vrot.slane %v1901, 1
      %v1937 = vsel %vm1342, %v1928, %v1936
      %v2022 = vunpack.c.l.b16 %v1758
      %v2023 = vunpack.c.l.b16 %v1759
      %v2024 = vunpack.c.l.b16 %v1760
      %v2025 = vunpack.c.l.b16 %v1761
      %v2026 = vunpack.c.l.b16 %v1762
      %v2027 = vunpack.c.l.b16 %v1763
      %v2028 = vunpack.c.l.b16 %v1764
      %v2029 = vunpack.c.l.b16 %v1765
      %v2030 = vunpack.c.l.b16 %v1766
      %v2031 = vunpack.c.l.b16 %v1767
      %v2032 = vunpack.c.l.b16 %v1768
      %v2033 = vunpack.c.l.b16 %v1769
      %v2034 = vunpack.c.l.b16 %v1770
      %v2035 = vunpack.c.l.b16 %v1771
      %v2036 = vunpack.c.l.b16 %v1772
      %v2037 = vunpack.c.l.b16 %v1773
      %v2038 = vunpack.c.l.b16 %v1774
      %v2039 = vunpack.c.l.b16 %v1775
      %v2040 = vunpack.c.l.b16 %v1776
      %v2041 = vunpack.c.l.b16 %v1777
      %v2042 = vunpack.c.l.b16 %v1778
      %v2043 = vunpack.c.l.b16 %v1779
      %v2044 = vunpack.c.l.b16 %v1780
      %v2045 = vunpack.c.l.b16 %v1781
      %v2046 = vunpack.c.l.b16 %v1782
      %v2047 = vunpack.c.l.b16 %v1783
      %v2048 = vunpack.c.l.b16 %v1784
      %v2049 = vunpack.c.l.b16 %v1785
      %v2050 = vunpack.c.l.b16 %v1786
      %v2051 = vunpack.c.l.b16 %v1787
      %v2052 = vunpack.c.l.b16 %v1788
      %v2053 = vunpack.c.l.b16 %v1789
      %v2054 = vunpack.c.l.b16 %v1790
      %v2055 = vunpack.c.l.b16 %v1791
      %v2056 = vunpack.c.l.b16 %v1792
      %v2057 = vunpack.c.l.b16 %v1793
      %v2058 = vunpack.c.l.b16 %v1794
      %v2059 = vunpack.c.l.b16 %v1795
      %v2060 = vunpack.c.l.b16 %v1796
      %v2061 = vunpack.c.l.b16 %v1797
      %v2062 = vunpack.c.l.b16 %v1798
      %v2063 = vunpack.c.l.b16 %v1799
      %v2064 = vunpack.c.l.b16 %v1800
      %v2065 = vunpack.c.l.b16 %v1801
      %v2066 = vunpack.c.l.b16 %v1802
      %v2067 = vunpack.c.l.b16 %v1803
      %v2068 = vunpack.c.l.b16 %v1804
      %v2069 = vunpack.c.l.b16 %v1805
      %v2070 = vunpack.c.l.b16 %v1806
      %v2071 = vunpack.c.l.b16 %v1807
      %v2072 = vunpack.c.l.b16 %v1808
      %v2073 = vunpack.c.l.b16 %v1809
      %v2074 = vunpack.c.l.b16 %v1810
      %v2075 = vunpack.c.l.b16 %v1811
      %v2076 = vunpack.c.l.b16 %v1812
      %v2077 = vunpack.c.l.b16 %v1813
      %v2078 = vunpack.c.l.b16 %v1814
      %v2079 = vunpack.c.l.b16 %v1815
      %v2080 = vunpack.c.l.b16 %v1816
      %v2081 = vunpack.c.l.b16 %v1817
      %v2082 = vunpack.c.l.b16 %v1818
      %v2083 = vunpack.c.l.b16 %v1819
      %v2084 = vunpack.c.l.b16 %v1820
      %v2085 = vunpack.c.l.b16 %v1821
      %v2086 = vpack.c.b16 %v2023, %v2022
      %v2087 = vpack.c.b16 %v2025, %v2024
      %v2088 = vpack.c.b16 %v2027, %v2026
      %v2089 = vpack.c.b16 %v2029, %v2028
      %v2090 = vpack.c.b16 %v2031, %v2030
      %v2091 = vpack.c.b16 %v2033, %v2032
      %v2092 = vpack.c.b16 %v2035, %v2034
      %v2093 = vpack.c.b16 %v2037, %v2036
      %v2094 = vpack.c.b16 %v2039, %v2038
      %v2095 = vpack.c.b16 %v2041, %v2040
      %v2096 = vpack.c.b16 %v2043, %v2042
      %v2097 = vpack.c.b16 %v2045, %v2044
      %v2098 = vpack.c.b16 %v2047, %v2046
      %v2099 = vpack.c.b16 %v2049, %v2048
      %v2100 = vpack.c.b16 %v2051, %v2050
      %v2101 = vpack.c.b16 %v2053, %v2052
      %v2102 = vpack.c.b16 %v2055, %v2054
      %v2103 = vpack.c.b16 %v2057, %v2056
      %v2104 = vpack.c.b16 %v2059, %v2058
      %v2105 = vpack.c.b16 %v2061, %v2060
      %v2106 = vpack.c.b16 %v2063, %v2062
      %v2107 = vpack.c.b16 %v2065, %v2064
      %v2108 = vpack.c.b16 %v2067, %v2066
      %v2109 = vpack.c.b16 %v2069, %v2068
      %v2110 = vpack.c.b16 %v2071, %v2070
      %v2111 = vpack.c.b16 %v2073, %v2072
      %v2112 = vpack.c.b16 %v2075, %v2074
      %v2113 = vpack.c.b16 %v2077, %v2076
      %v2114 = vpack.c.b16 %v2079, %v2078
      %v2115 = vpack.c.b16 %v2081, %v2080
      %v2116 = vpack.c.b16 %v2083, %v2082
      %v2117 = vpack.c.b16 %v2085, %v2084
      %2150 = vmatpush.bf16.msra.mxu0 %v2093
      %2151 = vmatpush.bf16.msra.mxu0 %v2092
      %2152 = vmatpush.bf16.msra.mxu0 %v2091
      %2153 = vmatpush.bf16.msra.mxu0 %v2090
      %2154 = vmatpush.bf16.msra.mxu0 %v2089
      %2155 = vmatpush.bf16.msra.mxu0 %v2088
      %2156 = vmatpush.bf16.msra.mxu0 %v2087
      %2157 = vmatpush.bf16.msra.mxu0 %v2086
      %2158 = vmatmul.bf16.gmra.mxu0 %v1904
      %v2159 = vpop.f32.mrf.mxu0
      %v2160 = vadd.f32 0.0, %v2159
      %v2161 = vpop.f32.mrf.mxu0
      %v2162 = vadd.f32 0.0, %v2161
      %2163 = vmatmul.bf16.gmra.mxu0 %v1915
      %v2164 = vpop.f32.mrf.mxu0
      %v2165 = vadd.f32 0.0, %v2164
      %v2166 = vpop.f32.mrf.mxu0
      %v2167 = vadd.f32 0.0, %v2166
      %2168 = vmatmul.bf16.gmra.mxu0 %v1923
      %v2169 = vpop.f32.mrf.mxu0
      %v2170 = vadd.f32 0.0, %v2169
      %v2171 = vpop.f32.mrf.mxu0
      %v2172 = vadd.f32 0.0, %v2171
      %2173 = vmatmul.bf16.gmra.mxu0 %v1931
      %v2174 = vpop.f32.mrf.mxu0
      %v2175 = vadd.f32 0.0, %v2174
      %v2176 = vpop.f32.mrf.mxu0
      %v2177 = vadd.f32 0.0, %v2176
      %2178 = vmatmul.bf16.gmra.mxu0 %v1930
      %v2179 = vpop.f32.mrf.mxu0
      %v2180 = vadd.f32 0.0, %v2179
      %v2181 = vpop.f32.mrf.mxu0
      %v2182 = vadd.f32 0.0, %v2181
      %2183 = vdwg.mxu0
      %2184 = vmatpush.bf16.msra.mxu0 %v2101
      %2185 = vmatpush.bf16.msra.mxu0 %v2100
      %2186 = vmatpush.bf16.msra.mxu0 %v2099
      %2187 = vmatpush.bf16.msra.mxu0 %v2098
      %2188 = vmatpush.bf16.msra.mxu0 %v2097
      %2189 = vmatpush.bf16.msra.mxu0 %v2096
      %2190 = vmatpush.bf16.msra.mxu0 %v2095
      %2191 = vmatpush.bf16.msra.mxu0 %v2094
      %2192 = vmatmul.bf16.gmra.mxu0 %v1907
      %v2193 = vpop.f32.mrf.mxu0
      %v2194 = vadd.f32 %v2160, %v2193
      %v2195 = vpop.f32.mrf.mxu0
      %v2196 = vadd.f32 %v2162, %v2195
      %2197 = vmatmul.bf16.gmra.mxu0 %v1917
      %v2198 = vpop.f32.mrf.mxu0
      %v2199 = vadd.f32 %v2165, %v2198
      %v2200 = vpop.f32.mrf.mxu0
      %v2201 = vadd.f32 %v2167, %v2200
      %2202 = vmatmul.bf16.gmra.mxu0 %v1925
      %v2203 = vpop.f32.mrf.mxu0
      %v2204 = vadd.f32 %v2170, %v2203
      %v2205 = vpop.f32.mrf.mxu0
      %v2206 = vadd.f32 %v2172, %v2205
      %2207 = vmatmul.bf16.gmra.mxu0 %v1933
      %v2208 = vpop.f32.mrf.mxu0
      %v2209 = vadd.f32 %v2175, %v2208
      %v2210 = vpop.f32.mrf.mxu0
      %v2211 = vadd.f32 %v2177, %v2210
      %2212 = vmatmul.bf16.gmra.mxu0 %v1932
      %v2213 = vpop.f32.mrf.mxu0
      %v2214 = vadd.f32 %v2180, %v2213
      %v2215 = vpop.f32.mrf.mxu0
      %v2216 = vadd.f32 %v2182, %v2215
      %2217 = vdwg.mxu0
      %2218 = vmatpush.bf16.msra.mxu0 %v2109
      %2219 = vmatpush.bf16.msra.mxu0 %v2108
      %2220 = vmatpush.bf16.msra.mxu0 %v2107
      %2221 = vmatpush.bf16.msra.mxu0 %v2106
      %2222 = vmatpush.bf16.msra.mxu0 %v2105
      %2223 = vmatpush.bf16.msra.mxu0 %v2104
      %2224 = vmatpush.bf16.msra.mxu0 %v2103
      %2225 = vmatpush.bf16.msra.mxu0 %v2102
      %2226 = vmatmul.bf16.gmra.mxu0 %v1910
      %v2227 = vpop.f32.mrf.mxu0
      %v2228 = vadd.f32 %v2194, %v2227
      %v2229 = vpop.f32.mrf.mxu0
      %v2230 = vadd.f32 %v2196, %v2229
      %2231 = vmatmul.bf16.gmra.mxu0 %v1919
      %v2232 = vpop.f32.mrf.mxu0
      %v2233 = vadd.f32 %v2199, %v2232
      %v2234 = vpop.f32.mrf.mxu0
      %v2235 = vadd.f32 %v2201, %v2234
      %2236 = vmatmul.bf16.gmra.mxu0 %v1927
      %v2237 = vpop.f32.mrf.mxu0
      %v2238 = vadd.f32 %v2204, %v2237
      %v2239 = vpop.f32.mrf.mxu0
      %v2240 = vadd.f32 %v2206, %v2239
      %2241 = vmatmul.bf16.gmra.mxu0 %v1935
      %v2242 = vpop.f32.mrf.mxu0
      %v2243 = vadd.f32 %v2209, %v2242
      %v2244 = vpop.f32.mrf.mxu0
      %v2245 = vadd.f32 %v2211, %v2244
      %2246 = vmatmul.bf16.gmra.mxu0 %v1934
      %v2247 = vpop.f32.mrf.mxu0
      %v2248 = vadd.f32 %v2214, %v2247
      %v2249 = vpop.f32.mrf.mxu0
      %v2250 = vadd.f32 %v2216, %v2249
      %2251 = vdwg.mxu0
      %2252 = vmatpush.bf16.msra.mxu0 %v2117
      %2253 = vmatpush.bf16.msra.mxu0 %v2116
      %2254 = vmatpush.bf16.msra.mxu0 %v2115
      %2255 = vmatpush.bf16.msra.mxu0 %v2114
      %2256 = vmatpush.bf16.msra.mxu0 %v2113
      %2257 = vmatpush.bf16.msra.mxu0 %v2112
      %2258 = vmatpush.bf16.msra.mxu0 %v2111
      %2259 = vmatpush.bf16.msra.mxu0 %v2110
      %2260 = vmatmul.bf16.gmra.mxu0 %v1913
      %v2261 = vpop.f32.mrf.mxu0
      %v2262 = vadd.f32 %v2228, %v2261
      %v2263 = vpop.f32.mrf.mxu0
      %v2264 = vadd.f32 %v2230, %v2263
      %2265 = vmatmul.bf16.gmra.mxu0 %v1921
      %v2266 = vpop.f32.mrf.mxu0
      %v2267 = vadd.f32 %v2233, %v2266
      %v2268 = vpop.f32.mrf.mxu0
      %v2269 = vadd.f32 %v2235, %v2268
      %2270 = vmatmul.bf16.gmra.mxu0 %v1929
      %v2271 = vpop.f32.mrf.mxu0
      %v2272 = vadd.f32 %v2238, %v2271
      %v2273 = vpop.f32.mrf.mxu0
      %v2274 = vadd.f32 %v2240, %v2273
      %2275 = vmatmul.bf16.gmra.mxu0 %v1937
      %v2276 = vpop.f32.mrf.mxu0
      %v2277 = vadd.f32 %v2243, %v2276
      %v2278 = vpop.f32.mrf.mxu0
      %v2279 = vadd.f32 %v2245, %v2278
      %2280 = vmatmul.bf16.gmra.mxu0 %v1936
      %v2281 = vpop.f32.mrf.mxu0
      %v2282 = vadd.f32 %v2248, %v2281
      %v2283 = vpop.f32.mrf.mxu0
      %v2284 = vadd.f32 %v2250, %v2283
      %2285 = vdwg.mxu0
      %v2286 = vadd.f32 %v1727, %v2262
      %v2287 = vadd.f32 %v1728, %v2264
      %v2288 = vadd.f32 %v1729, %v2267
      %v2289 = vadd.f32 %v1730, %v2269
      %v2290 = vadd.f32 %v1731, %v2272
      %v2291 = vadd.f32 %v1732, %v2274
      %v2292 = vadd.f32 %v1733, %v2277
      %v2293 = vadd.f32 %v1734, %v2279
      %v2294 = vadd.f32 %v1735, %v2282
      %v2295 = vadd.f32 %v1736, %v2284
      %v2296 = vld [vmem:[%s165 + $0x10] sm:$0xee]
      %v2297 = vld [vmem:[%s165 + $0x18] sm:$0xee]
      %v2298 = vld [vmem:[%s165 + $0x20] sm:$0xff]
      %v2299 = vld [vmem:[%s165 + $0x28] sm:$0xff]
      %v2300 = vld [vmem:[%s165 + $0x30] sm:$0xff]
      %v2301 = vld [vmem:[%s165 + $0x38] sm:$0xff]
      %v2302 = vld [vmem:[%s165 + $0x40] sm:$0xff]
      %v2303 = vld [vmem:[%s165 + $0x48] sm:$0xff]
      %v2304 = vld [vmem:[%s165 + $0x50] sm:$0xff]
      %v2305 = vld [vmem:[%s165 + $0x58] sm:$0xff]
      %v2306 = vld [vmem:[%s165 + $0x60] sm:$0xff]
      %v2307 = vld [vmem:[%s165 + $0x68] sm:$0xff]
      %v2308 = vld [vmem:[%s165 + $0x70] sm:$0xff]
      %v2309 = vld [vmem:[%s165 + $0x78] sm:$0xff]
      %v2310 = vld [vmem:[%s165 + $0x80] sm:$0xff]
      %v2311 = vld [vmem:[%s165 + $0x88] sm:$0xff]
      %v2312 = vld [vmem:[%s165 + $0x90] sm:$0xff]
      %v2313 = vld [vmem:[%s165 + $0x98] sm:$0xff]
      %v2314 = vld [vmem:[%s165 + $0xa0] sm:$0xff]
      %v2315 = vld [vmem:[%s165 + $0xa8] sm:$0xff]
      %v2316 = vld [vmem:[%s165 + $0xb0] sm:$0x11]
      %v2317 = vld [vmem:[%s165 + $0xb8] sm:$0x11]
      %s2318 = scalar_lea.vmem %s1, 1024
      %v2319 = vld [vmem:[%s2318] sm:$0xf]
      %v2320 = vld [vmem:[%s2318 + $0x4] sm:$0xf]
      %v2321 = vld [vmem:[%s2318 + $0x8] sm:$0xf]
      %v2322 = vld [vmem:[%s2318 + $0xc] sm:$0xf]
      %v2323 = vld [vmem:[%s2318 + $0x10] sm:$0xf]
      %v2324 = vld [vmem:[%s2318 + $0x14] sm:$0xf]
      %v2325 = vld [vmem:[%s2318 + $0x18] sm:$0xf]
      %v2326 = vld [vmem:[%s2318 + $0x1c] sm:$0xf]
      %v2327 = vld [vmem:[%s2318 + $0x20] sm:$0xf]
      %v2328 = vld [vmem:[%s2318 + $0x24] sm:$0xf]
      %v2329 = vld [vmem:[%s2318 + $0x28] sm:$0xf]
      %v2330 = vld [vmem:[%s2318 + $0x2c] sm:$0xf]
      %v2331 = vld [vmem:[%s2318 + $0x30] sm:$0xf]
      %v2332 = vld [vmem:[%s2318 + $0x34] sm:$0xf]
      %v2333 = vld [vmem:[%s2318 + $0x38] sm:$0xf]
      %v2334 = vld [vmem:[%s2318 + $0x3c] sm:$0xf]
      %v2335 = vld [vmem:[%s2318 + $0x40] sm:$0xf]
      %v2336 = vld [vmem:[%s2318 + $0x44] sm:$0xf]
      %v2337 = vld [vmem:[%s2318 + $0x48] sm:$0xf]
      %v2338 = vld [vmem:[%s2318 + $0x4c] sm:$0xf]
      %v2339 = vld [vmem:[%s2318 + $0x50] sm:$0xf]
      %v2340 = vld [vmem:[%s2318 + $0x54] sm:$0xf]
      %v2341 = vld [vmem:[%s2318 + $0x58] sm:$0xf]
      %v2342 = vld [vmem:[%s2318 + $0x5c] sm:$0xf]
      %v2343 = vld [vmem:[%s2318 + $0x60] sm:$0xf]
      %v2344 = vld [vmem:[%s2318 + $0x64] sm:$0xf]
      %v2345 = vld [vmem:[%s2318 + $0x68] sm:$0xf]
      %v2346 = vld [vmem:[%s2318 + $0x6c] sm:$0xf]
      %v2347 = vld [vmem:[%s2318 + $0x70] sm:$0xf]
      %v2348 = vld [vmem:[%s2318 + $0x74] sm:$0xf]
      %v2349 = vld [vmem:[%s2318 + $0x78] sm:$0xf]
      %v2350 = vld [vmem:[%s2318 + $0x7c] sm:$0xf]
      %v2351 = vld [vmem:[%s2318 + $0x80] sm:$0xf]
      %v2352 = vld [vmem:[%s2318 + $0x84] sm:$0xf]
      %v2353 = vld [vmem:[%s2318 + $0x88] sm:$0xf]
      %v2354 = vld [vmem:[%s2318 + $0x8c] sm:$0xf]
      %v2355 = vld [vmem:[%s2318 + $0x90] sm:$0xf]
      %v2356 = vld [vmem:[%s2318 + $0x94] sm:$0xf]
      %v2357 = vld [vmem:[%s2318 + $0x98] sm:$0xf]
      %v2358 = vld [vmem:[%s2318 + $0x9c] sm:$0xf]
      %v2359 = vld [vmem:[%s2318 + $0xa0] sm:$0xf]
      %v2360 = vld [vmem:[%s2318 + $0xa4] sm:$0xf]
      %v2361 = vld [vmem:[%s2318 + $0xa8] sm:$0xf]
      %v2362 = vld [vmem:[%s2318 + $0xac] sm:$0xf]
      %v2363 = vld [vmem:[%s2318 + $0xb0] sm:$0xf]
      %v2364 = vld [vmem:[%s2318 + $0xb4] sm:$0xf]
      %v2365 = vld [vmem:[%s2318 + $0xb8] sm:$0xf]
      %v2366 = vld [vmem:[%s2318 + $0xbc] sm:$0xf]
      %v2367 = vld [vmem:[%s2318 + $0xc0] sm:$0xf]
      %v2368 = vld [vmem:[%s2318 + $0xc4] sm:$0xf]
      %v2369 = vld [vmem:[%s2318 + $0xc8] sm:$0xf]
      %v2370 = vld [vmem:[%s2318 + $0xcc] sm:$0xf]
      %v2371 = vld [vmem:[%s2318 + $0xd0] sm:$0xf]
      %v2372 = vld [vmem:[%s2318 + $0xd4] sm:$0xf]
      %v2373 = vld [vmem:[%s2318 + $0xd8] sm:$0xf]
      %v2374 = vld [vmem:[%s2318 + $0xdc] sm:$0xf]
      %v2375 = vld [vmem:[%s2318 + $0xe0] sm:$0xf]
      %v2376 = vld [vmem:[%s2318 + $0xe4] sm:$0xf]
      %v2377 = vld [vmem:[%s2318 + $0xe8] sm:$0xf]
      %v2378 = vld [vmem:[%s2318 + $0xec] sm:$0xf]
      %v2379 = vld [vmem:[%s2318 + $0xf0] sm:$0xf]
      %v2380 = vld [vmem:[%s2318 + $0xf4] sm:$0xf]
      %v2381 = vld [vmem:[%s2318 + $0xf8] sm:$0xf]
      %v2382 = vld [vmem:[%s2318 + $0xfc] sm:$0xf]
      %v2405 = vunpack.c.l.b16 %v2296
      %v2406 = vunpack.c.h.b16 %v2296
      %v2407 = vunpack.c.l.b16 %v2297
      %v2408 = vunpack.c.h.b16 %v2297
      %v2409 = vunpack.c.l.b16 %v2298
      %v2410 = vunpack.c.h.b16 %v2298
      %v2411 = vunpack.c.l.b16 %v2299
      %v2412 = vunpack.c.h.b16 %v2299
      %v2413 = vunpack.c.l.b16 %v2300
      %v2414 = vunpack.c.h.b16 %v2300
      %v2415 = vunpack.c.l.b16 %v2301
      %v2416 = vunpack.c.h.b16 %v2301
      %v2417 = vunpack.c.l.b16 %v2302
      %v2418 = vunpack.c.h.b16 %v2302
      %v2419 = vunpack.c.l.b16 %v2303
      %v2420 = vunpack.c.h.b16 %v2303
      %v2421 = vunpack.c.l.b16 %v2304
      %v2422 = vunpack.c.h.b16 %v2304
      %v2423 = vunpack.c.l.b16 %v2305
      %v2424 = vunpack.c.h.b16 %v2305
      %v2425 = vunpack.c.l.b16 %v2306
      %v2426 = vunpack.c.h.b16 %v2306
      %v2427 = vunpack.c.l.b16 %v2307
      %v2428 = vunpack.c.h.b16 %v2307
      %v2429 = vunpack.c.l.b16 %v2308
      %v2430 = vunpack.c.h.b16 %v2308
      %v2431 = vunpack.c.l.b16 %v2309
      %v2432 = vunpack.c.h.b16 %v2309
      %v2433 = vunpack.c.l.b16 %v2310
      %v2434 = vunpack.c.h.b16 %v2310
      %v2435 = vunpack.c.l.b16 %v2311
      %v2436 = vunpack.c.h.b16 %v2311
      %v2437 = vunpack.c.l.b16 %v2312
      %v2438 = vunpack.c.h.b16 %v2312
      %v2439 = vunpack.c.l.b16 %v2313
      %v2440 = vunpack.c.h.b16 %v2313
      %v2441 = vunpack.c.l.b16 %v2314
      %v2442 = vunpack.c.h.b16 %v2314
      %v2443 = vunpack.c.l.b16 %v2315
      %v2444 = vunpack.c.h.b16 %v2315
      %v2445 = vunpack.c.l.b16 %v2316
      %v2446 = vunpack.c.h.b16 %v2316
      %v2447 = vunpack.c.l.b16 %v2317
      %v2448 = vunpack.c.h.b16 %v2317
      %v2449 = vpack.c.b16 %v2409, %v2405
      %v2450 = vpack.c.b16 %v2410, %v2406
      %v2451 = vpack.c.b16 %v2411, %v2407
      %v2452 = vpack.c.b16 %v2412, %v2408
      %v2453 = vpack.c.b16 %v2417, %v2413
      %v2454 = vpack.c.b16 %v2418, %v2414
      %v2455 = vpack.c.b16 %v2419, %v2415
      %v2456 = vpack.c.b16 %v2420, %v2416
      %v2457 = vpack.c.b16 %v2425, %v2421
      %v2458 = vpack.c.b16 %v2426, %v2422
      %v2459 = vpack.c.b16 %v2427, %v2423
      %v2460 = vpack.c.b16 %v2428, %v2424
      %v2461 = vpack.c.b16 %v2433, %v2429
      %v2462 = vpack.c.b16 %v2434, %v2430
      %v2463 = vpack.c.b16 %v2435, %v2431
      %v2464 = vpack.c.b16 %v2436, %v2432
      %v2465 = vpack.c.b16 %v2441, %v2437
      %v2466 = vpack.c.b16 %v2442, %v2438
      %v2467 = vpack.c.b16 %v2443, %v2439
      %v2468 = vpack.c.b16 %v2444, %v2440
      %v2469 = vpack.c.b16 %v2445, %v2445
      %v2470 = vpack.c.b16 %v2446, %v2446
      %v2471 = vpack.c.b16 %v2447, %v2447
      %v2472 = vpack.c.b16 %v2448, %v2448
      %vm2473 = vsmask.f32 6400
      %v2475 = vshrl.u32 %v2449, 16
      %v2477 = vrot.slane %v2475, 1
      %v2478 = vshll.u32 %v2449, 16
      %v2480 = vrot.slane %v2478, 2
      %v2481 = vor.u32 %v2477, %v2480
      %v2483 = vshrl.u32 %v2453, 16
      %v2485 = vrot.slane %v2483, 1
      %v2486 = vshll.u32 %v2453, 16
      %v2488 = vrot.slane %v2486, 2
      %v2489 = vor.u32 %v2485, %v2488
      %v2490 = vsel %vm2473, %v2481, %v2489
      %v2492 = vshrl.u32 %v2450, 16
      %v2494 = vrot.slane %v2492, 1
      %v2495 = vshll.u32 %v2450, 16
      %v2497 = vrot.slane %v2495, 2
      %v2498 = vor.u32 %v2494, %v2497
      %v2500 = vshrl.u32 %v2454, 16
      %v2502 = vrot.slane %v2500, 1
      %v2503 = vshll.u32 %v2454, 16
      %v2505 = vrot.slane %v2503, 2
      %v2506 = vor.u32 %v2502, %v2505
      %v2507 = vsel %vm2473, %v2498, %v2506
      %v2509 = vshrl.u32 %v2451, 16
      %v2511 = vrot.slane %v2509, 1
      %v2512 = vshll.u32 %v2451, 16
      %v2514 = vrot.slane %v2512, 2
      %v2515 = vor.u32 %v2511, %v2514
      %v2517 = vshrl.u32 %v2455, 16
      %v2519 = vrot.slane %v2517, 1
      %v2520 = vshll.u32 %v2455, 16
      %v2522 = vrot.slane %v2520, 2
      %v2523 = vor.u32 %v2519, %v2522
      %v2524 = vsel %vm2473, %v2515, %v2523
      %v2526 = vshrl.u32 %v2452, 16
      %v2528 = vrot.slane %v2526, 1
      %v2529 = vshll.u32 %v2452, 16
      %v2531 = vrot.slane %v2529, 2
      %v2532 = vor.u32 %v2528, %v2531
      %v2534 = vshrl.u32 %v2456, 16
      %v2536 = vrot.slane %v2534, 1
      %v2537 = vshll.u32 %v2456, 16
      %v2539 = vrot.slane %v2537, 2
      %v2540 = vor.u32 %v2536, %v2539
      %v2541 = vsel %vm2473, %v2532, %v2540
      %v2543 = vshrl.u32 %v2457, 16
      %v2545 = vrot.slane %v2543, 1
      %v2546 = vshll.u32 %v2457, 16
      %v2548 = vrot.slane %v2546, 2
      %v2549 = vor.u32 %v2545, %v2548
      %v2550 = vsel %vm2473, %v2489, %v2549
      %v2552 = vshrl.u32 %v2458, 16
      %v2554 = vrot.slane %v2552, 1
      %v2555 = vshll.u32 %v2458, 16
      %v2557 = vrot.slane %v2555, 2
      %v2558 = vor.u32 %v2554, %v2557
      %v2559 = vsel %vm2473, %v2506, %v2558
      %v2561 = vshrl.u32 %v2459, 16
      %v2563 = vrot.slane %v2561, 1
      %v2564 = vshll.u32 %v2459, 16
      %v2566 = vrot.slane %v2564, 2
      %v2567 = vor.u32 %v2563, %v2566
      %v2568 = vsel %vm2473, %v2523, %v2567
      %v2570 = vshrl.u32 %v2460, 16
      %v2572 = vrot.slane %v2570, 1
      %v2573 = vshll.u32 %v2460, 16
      %v2575 = vrot.slane %v2573, 2
      %v2576 = vor.u32 %v2572, %v2575
      %v2577 = vsel %vm2473, %v2540, %v2576
      %v2579 = vshrl.u32 %v2461, 16
      %v2581 = vrot.slane %v2579, 1
      %v2582 = vshll.u32 %v2461, 16
      %v2584 = vrot.slane %v2582, 2
      %v2585 = vor.u32 %v2581, %v2584
      %v2586 = vsel %vm2473, %v2549, %v2585
      %v2588 = vshrl.u32 %v2462, 16
      %v2590 = vrot.slane %v2588, 1
      %v2591 = vshll.u32 %v2462, 16
      %v2593 = vrot.slane %v2591, 2
      %v2594 = vor.u32 %v2590, %v2593
      %v2595 = vsel %vm2473, %v2558, %v2594
      %v2597 = vshrl.u32 %v2463, 16
      %v2599 = vrot.slane %v2597, 1
      %v2600 = vshll.u32 %v2463, 16
      %v2602 = vrot.slane %v2600, 2
      %v2603 = vor.u32 %v2599, %v2602
      %v2604 = vsel %vm2473, %v2567, %v2603
      %v2606 = vshrl.u32 %v2464, 16
      %v2608 = vrot.slane %v2606, 1
      %v2609 = vshll.u32 %v2464, 16
      %v2611 = vrot.slane %v2609, 2
      %v2612 = vor.u32 %v2608, %v2611
      %v2613 = vsel %vm2473, %v2576, %v2612
      %v2615 = vshrl.u32 %v2465, 16
      %v2617 = vrot.slane %v2615, 1
      %v2618 = vshll.u32 %v2465, 16
      %v2620 = vrot.slane %v2618, 2
      %v2621 = vor.u32 %v2617, %v2620
      %v2622 = vsel %vm2473, %v2585, %v2621
      %v2624 = vshrl.u32 %v2466, 16
      %v2626 = vrot.slane %v2624, 1
      %v2627 = vshll.u32 %v2466, 16
      %v2629 = vrot.slane %v2627, 2
      %v2630 = vor.u32 %v2626, %v2629
      %v2631 = vsel %vm2473, %v2594, %v2630
      %v2633 = vshrl.u32 %v2467, 16
      %v2635 = vrot.slane %v2633, 1
      %v2636 = vshll.u32 %v2467, 16
      %v2638 = vrot.slane %v2636, 2
      %v2639 = vor.u32 %v2635, %v2638
      %v2640 = vsel %vm2473, %v2603, %v2639
      %v2642 = vshrl.u32 %v2468, 16
      %v2644 = vrot.slane %v2642, 1
      %v2645 = vshll.u32 %v2468, 16
      %v2647 = vrot.slane %v2645, 2
      %v2648 = vor.u32 %v2644, %v2647
      %v2649 = vsel %vm2473, %v2612, %v2648
      %v2651 = vshll.u32 %v2469, 16
      %v2653 = vrot.slane %v2651, 2
      %v2654 = vsel %vm2473, %v2621, %v2653
      %v2656 = vshll.u32 %v2470, 16
      %v2658 = vrot.slane %v2656, 2
      %v2659 = vsel %vm2473, %v2630, %v2658
      %v2661 = vshll.u32 %v2471, 16
      %v2663 = vrot.slane %v2661, 2
      %v2664 = vsel %vm2473, %v2639, %v2663
      %v2666 = vshll.u32 %v2472, 16
      %v2668 = vrot.slane %v2666, 2
      %v2669 = vsel %vm2473, %v2648, %v2668
      %v2754 = vunpack.c.l.b16 %v2319
      %v2755 = vunpack.c.l.b16 %v2320
      %v2756 = vunpack.c.l.b16 %v2321
      %v2757 = vunpack.c.l.b16 %v2322
      %v2758 = vunpack.c.l.b16 %v2323
      %v2759 = vunpack.c.l.b16 %v2324
      %v2760 = vunpack.c.l.b16 %v2325
      %v2761 = vunpack.c.l.b16 %v2326
      %v2762 = vunpack.c.l.b16 %v2327
      %v2763 = vunpack.c.l.b16 %v2328
      %v2764 = vunpack.c.l.b16 %v2329
      %v2765 = vunpack.c.l.b16 %v2330
      %v2766 = vunpack.c.l.b16 %v2331
      %v2767 = vunpack.c.l.b16 %v2332
      %v2768 = vunpack.c.l.b16 %v2333
      %v2769 = vunpack.c.l.b16 %v2334
      %v2770 = vunpack.c.l.b16 %v2335
      %v2771 = vunpack.c.l.b16 %v2336
      %v2772 = vunpack.c.l.b16 %v2337
      %v2773 = vunpack.c.l.b16 %v2338
      %v2774 = vunpack.c.l.b16 %v2339
      %v2775 = vunpack.c.l.b16 %v2340
      %v2776 = vunpack.c.l.b16 %v2341
      %v2777 = vunpack.c.l.b16 %v2342
      %v2778 = vunpack.c.l.b16 %v2343
      %v2779 = vunpack.c.l.b16 %v2344
      %v2780 = vunpack.c.l.b16 %v2345
      %v2781 = vunpack.c.l.b16 %v2346
      %v2782 = vunpack.c.l.b16 %v2347
      %v2783 = vunpack.c.l.b16 %v2348
      %v2784 = vunpack.c.l.b16 %v2349
      %v2785 = vunpack.c.l.b16 %v2350
      %v2786 = vunpack.c.l.b16 %v2351
      %v2787 = vunpack.c.l.b16 %v2352
      %v2788 = vunpack.c.l.b16 %v2353
      %v2789 = vunpack.c.l.b16 %v2354
      %v2790 = vunpack.c.l.b16 %v2355
      %v2791 = vunpack.c.l.b16 %v2356
      %v2792 = vunpack.c.l.b16 %v2357
      %v2793 = vunpack.c.l.b16 %v2358
      %v2794 = vunpack.c.l.b16 %v2359
      %v2795 = vunpack.c.l.b16 %v2360
      %v2796 = vunpack.c.l.b16 %v2361
      %v2797 = vunpack.c.l.b16 %v2362
      %v2798 = vunpack.c.l.b16 %v2363
      %v2799 = vunpack.c.l.b16 %v2364
      %v2800 = vunpack.c.l.b16 %v2365
      %v2801 = vunpack.c.l.b16 %v2366
      %v2802 = vunpack.c.l.b16 %v2367
      %v2803 = vunpack.c.l.b16 %v2368
      %v2804 = vunpack.c.l.b16 %v2369
      %v2805 = vunpack.c.l.b16 %v2370
      %v2806 = vunpack.c.l.b16 %v2371
      %v2807 = vunpack.c.l.b16 %v2372
      %v2808 = vunpack.c.l.b16 %v2373
      %v2809 = vunpack.c.l.b16 %v2374
      %v2810 = vunpack.c.l.b16 %v2375
      %v2811 = vunpack.c.l.b16 %v2376
      %v2812 = vunpack.c.l.b16 %v2377
      %v2813 = vunpack.c.l.b16 %v2378
      %v2814 = vunpack.c.l.b16 %v2379
      %v2815 = vunpack.c.l.b16 %v2380
      %v2816 = vunpack.c.l.b16 %v2381
      %v2817 = vunpack.c.l.b16 %v2382
      %v2818 = vpack.c.b16 %v2755, %v2754
      %v2819 = vpack.c.b16 %v2757, %v2756
      %v2820 = vpack.c.b16 %v2759, %v2758
      %v2821 = vpack.c.b16 %v2761, %v2760
      %v2822 = vpack.c.b16 %v2763, %v2762
      %v2823 = vpack.c.b16 %v2765, %v2764
      %v2824 = vpack.c.b16 %v2767, %v2766
      %v2825 = vpack.c.b16 %v2769, %v2768
      %v2826 = vpack.c.b16 %v2771, %v2770
      %v2827 = vpack.c.b16 %v2773, %v2772
      %v2828 = vpack.c.b16 %v2775, %v2774
      %v2829 = vpack.c.b16 %v2777, %v2776
      %v2830 = vpack.c.b16 %v2779, %v2778
      %v2831 = vpack.c.b16 %v2781, %v2780
      %v2832 = vpack.c.b16 %v2783, %v2782
      %v2833 = vpack.c.b16 %v2785, %v2784
      %v2834 = vpack.c.b16 %v2787, %v2786
      %v2835 = vpack.c.b16 %v2789, %v2788
      %v2836 = vpack.c.b16 %v2791, %v2790
      %v2837 = vpack.c.b16 %v2793, %v2792
      %v2838 = vpack.c.b16 %v2795, %v2794
      %v2839 = vpack.c.b16 %v2797, %v2796
      %v2840 = vpack.c.b16 %v2799, %v2798
      %v2841 = vpack.c.b16 %v2801, %v2800
      %v2842 = vpack.c.b16 %v2803, %v2802
      %v2843 = vpack.c.b16 %v2805, %v2804
      %v2844 = vpack.c.b16 %v2807, %v2806
      %v2845 = vpack.c.b16 %v2809, %v2808
      %v2846 = vpack.c.b16 %v2811, %v2810
      %v2847 = vpack.c.b16 %v2813, %v2812
      %v2848 = vpack.c.b16 %v2815, %v2814
      %v2849 = vpack.c.b16 %v2817, %v2816
      %2882 = vmatpush.bf16.msra.mxu0 %v2825
      %2883 = vmatpush.bf16.msra.mxu0 %v2824
      %2884 = vmatpush.bf16.msra.mxu0 %v2823
      %2885 = vmatpush.bf16.msra.mxu0 %v2822
      %2886 = vmatpush.bf16.msra.mxu0 %v2821
      %2887 = vmatpush.bf16.msra.mxu0 %v2820
      %2888 = vmatpush.bf16.msra.mxu0 %v2819
      %2889 = vmatpush.bf16.msra.mxu0 %v2818
      %2890 = vmatmul.bf16.gmra.mxu0 %v2490
      %v2891 = vpop.f32.mrf.mxu0
      %v2892 = vadd.f32 0.0, %v2891
      %v2893 = vpop.f32.mrf.mxu0
      %v2894 = vadd.f32 0.0, %v2893
      %2895 = vmatmul.bf16.gmra.mxu0 %v2550
      %v2896 = vpop.f32.mrf.mxu0
      %v2897 = vadd.f32 0.0, %v2896
      %v2898 = vpop.f32.mrf.mxu0
      %v2899 = vadd.f32 0.0, %v2898
      %2900 = vmatmul.bf16.gmra.mxu0 %v2586
      %v2901 = vpop.f32.mrf.mxu0
      %v2902 = vadd.f32 0.0, %v2901
      %v2903 = vpop.f32.mrf.mxu0
      %v2904 = vadd.f32 0.0, %v2903
      %2905 = vmatmul.bf16.gmra.mxu0 %v2622
      %v2906 = vpop.f32.mrf.mxu0
      %v2907 = vadd.f32 0.0, %v2906
      %v2908 = vpop.f32.mrf.mxu0
      %v2909 = vadd.f32 0.0, %v2908
      %2910 = vmatmul.bf16.gmra.mxu0 %v2654
      %v2911 = vpop.f32.mrf.mxu0
      %v2912 = vadd.f32 0.0, %v2911
      %v2913 = vpop.f32.mrf.mxu0
      %v2914 = vadd.f32 0.0, %v2913
      %2915 = vdwg.mxu0
      %2916 = vmatpush.bf16.msra.mxu0 %v2833
      %2917 = vmatpush.bf16.msra.mxu0 %v2832
      %2918 = vmatpush.bf16.msra.mxu0 %v2831
      %2919 = vmatpush.bf16.msra.mxu0 %v2830
      %2920 = vmatpush.bf16.msra.mxu0 %v2829
      %2921 = vmatpush.bf16.msra.mxu0 %v2828
      %2922 = vmatpush.bf16.msra.mxu0 %v2827
      %2923 = vmatpush.bf16.msra.mxu0 %v2826
      %2924 = vmatmul.bf16.gmra.mxu0 %v2507
      %v2925 = vpop.f32.mrf.mxu0
      %v2926 = vadd.f32 %v2892, %v2925
      %v2927 = vpop.f32.mrf.mxu0
      %v2928 = vadd.f32 %v2894, %v2927
      %2929 = vmatmul.bf16.gmra.mxu0 %v2559
      %v2930 = vpop.f32.mrf.mxu0
      %v2931 = vadd.f32 %v2897, %v2930
      %v2932 = vpop.f32.mrf.mxu0
      %v2933 = vadd.f32 %v2899, %v2932
      %2934 = vmatmul.bf16.gmra.mxu0 %v2595
      %v2935 = vpop.f32.mrf.mxu0
      %v2936 = vadd.f32 %v2902, %v2935
      %v2937 = vpop.f32.mrf.mxu0
      %v2938 = vadd.f32 %v2904, %v2937
      %2939 = vmatmul.bf16.gmra.mxu0 %v2631
      %v2940 = vpop.f32.mrf.mxu0
      %v2941 = vadd.f32 %v2907, %v2940
      %v2942 = vpop.f32.mrf.mxu0
      %v2943 = vadd.f32 %v2909, %v2942
      %2944 = vmatmul.bf16.gmra.mxu0 %v2659
      %v2945 = vpop.f32.mrf.mxu0
      %v2946 = vadd.f32 %v2912, %v2945
      %v2947 = vpop.f32.mrf.mxu0
      %v2948 = vadd.f32 %v2914, %v2947
      %2949 = vdwg.mxu0
      %2950 = vmatpush.bf16.msra.mxu0 %v2841
      %2951 = vmatpush.bf16.msra.mxu0 %v2840
      %2952 = vmatpush.bf16.msra.mxu0 %v2839
      %2953 = vmatpush.bf16.msra.mxu0 %v2838
      %2954 = vmatpush.bf16.msra.mxu0 %v2837
      %2955 = vmatpush.bf16.msra.mxu0 %v2836
      %2956 = vmatpush.bf16.msra.mxu0 %v2835
      %2957 = vmatpush.bf16.msra.mxu0 %v2834
      %2958 = vmatmul.bf16.gmra.mxu0 %v2524
      %v2959 = vpop.f32.mrf.mxu0
      %v2960 = vadd.f32 %v2926, %v2959
      %v2961 = vpop.f32.mrf.mxu0
      %v2962 = vadd.f32 %v2928, %v2961
      %2963 = vmatmul.bf16.gmra.mxu0 %v2568
      %v2964 = vpop.f32.mrf.mxu0
      %v2965 = vadd.f32 %v2931, %v2964
      %v2966 = vpop.f32.mrf.mxu0
      %v2967 = vadd.f32 %v2933, %v2966
      %2968 = vmatmul.bf16.gmra.mxu0 %v2604
      %v2969 = vpop.f32.mrf.mxu0
      %v2970 = vadd.f32 %v2936, %v2969
      %v2971 = vpop.f32.mrf.mxu0
      %v2972 = vadd.f32 %v2938, %v2971
      %2973 = vmatmul.bf16.gmra.mxu0 %v2640
      %v2974 = vpop.f32.mrf.mxu0
      %v2975 = vadd.f32 %v2941, %v2974
      %v2976 = vpop.f32.mrf.mxu0
      %v2977 = vadd.f32 %v2943, %v2976
      %2978 = vmatmul.bf16.gmra.mxu0 %v2664
      %v2979 = vpop.f32.mrf.mxu0
      %v2980 = vadd.f32 %v2946, %v2979
      %v2981 = vpop.f32.mrf.mxu0
      %v2982 = vadd.f32 %v2948, %v2981
      %2983 = vdwg.mxu0
      %2984 = vmatpush.bf16.msra.mxu0 %v2849
      %2985 = vmatpush.bf16.msra.mxu0 %v2848
      %2986 = vmatpush.bf16.msra.mxu0 %v2847
      %2987 = vmatpush.bf16.msra.mxu0 %v2846
      %2988 = vmatpush.bf16.msra.mxu0 %v2845
      %2989 = vmatpush.bf16.msra.mxu0 %v2844
      %2990 = vmatpush.bf16.msra.mxu0 %v2843
      %2991 = vmatpush.bf16.msra.mxu0 %v2842
      %2992 = vmatmul.bf16.gmra.mxu0 %v2541
      %v2993 = vpop.f32.mrf.mxu0
      %v2994 = vadd.f32 %v2960, %v2993
      %v2995 = vpop.f32.mrf.mxu0
      %v2996 = vadd.f32 %v2962, %v2995
      %2997 = vmatmul.bf16.gmra.mxu0 %v2577
      %v2998 = vpop.f32.mrf.mxu0
      %v2999 = vadd.f32 %v2965, %v2998
      %v3000 = vpop.f32.mrf.mxu0
      %v3001 = vadd.f32 %v2967, %v3000
      %3002 = vmatmul.bf16.gmra.mxu0 %v2613
      %v3003 = vpop.f32.mrf.mxu0
      %v3004 = vadd.f32 %v2970, %v3003
      %v3005 = vpop.f32.mrf.mxu0
      %v3006 = vadd.f32 %v2972, %v3005
      %3007 = vmatmul.bf16.gmra.mxu0 %v2649
      %v3008 = vpop.f32.mrf.mxu0
      %v3009 = vadd.f32 %v2975, %v3008
      %v3010 = vpop.f32.mrf.mxu0
      %v3011 = vadd.f32 %v2977, %v3010
      %3012 = vmatmul.bf16.gmra.mxu0 %v2669
      %v3013 = vpop.f32.mrf.mxu0
      %v3014 = vadd.f32 %v2980, %v3013
      %v3015 = vpop.f32.mrf.mxu0
      %v3016 = vadd.f32 %v2982, %v3015
      %3017 = vdwg.mxu0
      %v3018 = vadd.f32 %v2286, %v2994
      %v3019 = vadd.f32 %v2287, %v2996
      %v3020 = vadd.f32 %v2288, %v2999
      %v3021 = vadd.f32 %v2289, %v3001
      %v3022 = vadd.f32 %v2290, %v3004
      %v3023 = vadd.f32 %v2291, %v3006
      %v3024 = vadd.f32 %v2292, %v3009
      %v3025 = vadd.f32 %v2293, %v3011
      %v3026 = vadd.f32 %v2294, %v3014
      %v3027 = vadd.f32 %v2295, %v3016
      %v3028 = vld [vmem:[%s165 + $0x10] sm:$0xcc]
      %v3029 = vld [vmem:[%s165 + $0x18] sm:$0xcc]
      %s3030 = scalar_lea.vmem %s1, 1280
      %v3031 = vld [vmem:[%s3030] sm:$0xf]
      %v3032 = vld [vmem:[%s3030 + $0x4] sm:$0xf]
      %v3033 = vld [vmem:[%s3030 + $0x8] sm:$0xf]
      %v3034 = vld [vmem:[%s3030 + $0xc] sm:$0xf]
      %v3035 = vld [vmem:[%s3030 + $0x10] sm:$0xf]
      %v3036 = vld [vmem:[%s3030 + $0x14] sm:$0xf]
      %v3037 = vld [vmem:[%s3030 + $0x18] sm:$0xf]
      %v3038 = vld [vmem:[%s3030 + $0x1c] sm:$0xf]
      %v3039 = vld [vmem:[%s3030 + $0x20] sm:$0xf]
      %v3040 = vld [vmem:[%s3030 + $0x24] sm:$0xf]
      %v3041 = vld [vmem:[%s3030 + $0x28] sm:$0xf]
      %v3042 = vld [vmem:[%s3030 + $0x2c] sm:$0xf]
      %v3043 = vld [vmem:[%s3030 + $0x30] sm:$0xf]
      %v3044 = vld [vmem:[%s3030 + $0x34] sm:$0xf]
      %v3045 = vld [vmem:[%s3030 + $0x38] sm:$0xf]
      %v3046 = vld [vmem:[%s3030 + $0x3c] sm:$0xf]
      %v3047 = vld [vmem:[%s3030 + $0x40] sm:$0xf]
      %v3048 = vld [vmem:[%s3030 + $0x44] sm:$0xf]
      %v3049 = vld [vmem:[%s3030 + $0x48] sm:$0xf]
      %v3050 = vld [vmem:[%s3030 + $0x4c] sm:$0xf]
      %v3051 = vld [vmem:[%s3030 + $0x50] sm:$0xf]
      %v3052 = vld [vmem:[%s3030 + $0x54] sm:$0xf]
      %v3053 = vld [vmem:[%s3030 + $0x58] sm:$0xf]
      %v3054 = vld [vmem:[%s3030 + $0x5c] sm:$0xf]
      %v3055 = vld [vmem:[%s3030 + $0x60] sm:$0xf]
      %v3056 = vld [vmem:[%s3030 + $0x64] sm:$0xf]
      %v3057 = vld [vmem:[%s3030 + $0x68] sm:$0xf]
      %v3058 = vld [vmem:[%s3030 + $0x6c] sm:$0xf]
      %v3059 = vld [vmem:[%s3030 + $0x70] sm:$0xf]
      %v3060 = vld [vmem:[%s3030 + $0x74] sm:$0xf]
      %v3061 = vld [vmem:[%s3030 + $0x78] sm:$0xf]
      %v3062 = vld [vmem:[%s3030 + $0x7c] sm:$0xf]
      %v3063 = vld [vmem:[%s3030 + $0x80] sm:$0xf]
      %v3064 = vld [vmem:[%s3030 + $0x84] sm:$0xf]
      %v3065 = vld [vmem:[%s3030 + $0x88] sm:$0xf]
      %v3066 = vld [vmem:[%s3030 + $0x8c] sm:$0xf]
      %v3067 = vld [vmem:[%s3030 + $0x90] sm:$0xf]
      %v3068 = vld [vmem:[%s3030 + $0x94] sm:$0xf]
      %v3069 = vld [vmem:[%s3030 + $0x98] sm:$0xf]
      %v3070 = vld [vmem:[%s3030 + $0x9c] sm:$0xf]
      %v3071 = vld [vmem:[%s3030 + $0xa0] sm:$0xf]
      %v3072 = vld [vmem:[%s3030 + $0xa4] sm:$0xf]
      %v3073 = vld [vmem:[%s3030 + $0xa8] sm:$0xf]
      %v3074 = vld [vmem:[%s3030 + $0xac] sm:$0xf]
      %v3075 = vld [vmem:[%s3030 + $0xb0] sm:$0xf]
      %v3076 = vld [vmem:[%s3030 + $0xb4] sm:$0xf]
      %v3077 = vld [vmem:[%s3030 + $0xb8] sm:$0xf]
      %v3078 = vld [vmem:[%s3030 + $0xbc] sm:$0xf]
      %v3079 = vld [vmem:[%s3030 + $0xc0] sm:$0xf]
      %v3080 = vld [vmem:[%s3030 + $0xc4] sm:$0xf]
      %v3081 = vld [vmem:[%s3030 + $0xc8] sm:$0xf]
      %v3082 = vld [vmem:[%s3030 + $0xcc] sm:$0xf]
      %v3083 = vld [vmem:[%s3030 + $0xd0] sm:$0xf]
      %v3084 = vld [vmem:[%s3030 + $0xd4] sm:$0xf]
      %v3085 = vld [vmem:[%s3030 + $0xd8] sm:$0xf]
      %v3086 = vld [vmem:[%s3030 + $0xdc] sm:$0xf]
      %v3087 = vld [vmem:[%s3030 + $0xe0] sm:$0xf]
      %v3088 = vld [vmem:[%s3030 + $0xe4] sm:$0xf]
      %v3089 = vld [vmem:[%s3030 + $0xe8] sm:$0xf]
      %v3090 = vld [vmem:[%s3030 + $0xec] sm:$0xf]
      %v3091 = vld [vmem:[%s3030 + $0xf0] sm:$0xf]
      %v3092 = vld [vmem:[%s3030 + $0xf4] sm:$0xf]
      %v3093 = vld [vmem:[%s3030 + $0xf8] sm:$0xf]
      %v3094 = vld [vmem:[%s3030 + $0xfc] sm:$0xf]
      %v3097 = vunpack.c.l.b16 %v3028
      %v3098 = vunpack.c.h.b16 %v3028
      %v3099 = vunpack.c.l.b16 %v3029
      %v3100 = vunpack.c.h.b16 %v3029
      %v3101 = vpack.c.b16 %v2409, %v3097
      %v3102 = vpack.c.b16 %v2410, %v3098
      %v3103 = vpack.c.b16 %v2411, %v3099
      %v3104 = vpack.c.b16 %v2412, %v3100
      %vm3105 = vcmask 1045504
      %v3106 = vrot.slane %v3101, 2
      %v3107 = vrot.slane %v2453, 2
      %v3108 = vsel %vm3105, %v3106, %v3107
      %v3109 = vrot.slane %v3102, 2
      %v3110 = vrot.slane %v2454, 2
      %v3111 = vsel %vm3105, %v3109, %v3110
      %v3112 = vrot.slane %v3103, 2
      %v3113 = vrot.slane %v2455, 2
      %v3114 = vsel %vm3105, %v3112, %v3113
      %v3115 = vrot.slane %v3104, 2
      %v3116 = vrot.slane %v2456, 2
      %v3117 = vsel %vm3105, %v3115, %v3116
      %v3118 = vrot.slane %v2457, 2
      %v3119 = vsel %vm3105, %v3107, %v3118
      %v3120 = vrot.slane %v2458, 2
      %v3121 = vsel %vm3105, %v3110, %v3120
      %v3122 = vrot.slane %v2459, 2
      %v3123 = vsel %vm3105, %v3113, %v3122
      %v3124 = vrot.slane %v2460, 2
      %v3125 = vsel %vm3105, %v3116, %v3124
      %v3126 = vrot.slane %v2461, 2
      %v3127 = vsel %vm3105, %v3118, %v3126
      %v3128 = vrot.slane %v2462, 2
      %v3129 = vsel %vm3105, %v3120, %v3128
      %v3130 = vrot.slane %v2463, 2
      %v3131 = vsel %vm3105, %v3122, %v3130
      %v3132 = vrot.slane %v2464, 2
      %v3133 = vsel %vm3105, %v3124, %v3132
      %v3134 = vrot.slane %v2465, 2
      %v3135 = vsel %vm3105, %v3126, %v3134
      %v3136 = vrot.slane %v2466, 2
      %v3137 = vsel %vm3105, %v3128, %v3136
      %v3138 = vrot.slane %v2467, 2
      %v3139 = vsel %vm3105, %v3130, %v3138
      %v3140 = vrot.slane %v2468, 2
      %v3141 = vsel %vm3105, %v3132, %v3140
      %v3142 = vrot.slane %v2469, 2
      %v3143 = vsel %vm3105, %v3134, %v3142
      %v3144 = vrot.slane %v2470, 2
      %v3145 = vsel %vm3105, %v3136, %v3144
      %v3146 = vrot.slane %v2471, 2
      %v3147 = vsel %vm3105, %v3138, %v3146
      %v3148 = vrot.slane %v2472, 2
      %v3149 = vsel %vm3105, %v3140, %v3148
      %v3234 = vunpack.c.l.b16 %v3031
      %v3235 = vunpack.c.l.b16 %v3032
      %v3236 = vunpack.c.l.b16 %v3033
      %v3237 = vunpack.c.l.b16 %v3034
      %v3238 = vunpack.c.l.b16 %v3035
      %v3239 = vunpack.c.l.b16 %v3036
      %v3240 = vunpack.c.l.b16 %v3037
      %v3241 = vunpack.c.l.b16 %v3038
      %v3242 = vunpack.c.l.b16 %v3039
      %v3243 = vunpack.c.l.b16 %v3040
      %v3244 = vunpack.c.l.b16 %v3041
      %v3245 = vunpack.c.l.b16 %v3042
      %v3246 = vunpack.c.l.b16 %v3043
      %v3247 = vunpack.c.l.b16 %v3044
      %v3248 = vunpack.c.l.b16 %v3045
      %v3249 = vunpack.c.l.b16 %v3046
      %v3250 = vunpack.c.l.b16 %v3047
      %v3251 = vunpack.c.l.b16 %v3048
      %v3252 = vunpack.c.l.b16 %v3049
      %v3253 = vunpack.c.l.b16 %v3050
      %v3254 = vunpack.c.l.b16 %v3051
      %v3255 = vunpack.c.l.b16 %v3052
      %v3256 = vunpack.c.l.b16 %v3053
      %v3257 = vunpack.c.l.b16 %v3054
      %v3258 = vunpack.c.l.b16 %v3055
      %v3259 = vunpack.c.l.b16 %v3056
      %v3260 = vunpack.c.l.b16 %v3057
      %v3261 = vunpack.c.l.b16 %v3058
      %v3262 = vunpack.c.l.b16 %v3059
      %v3263 = vunpack.c.l.b16 %v3060
      %v3264 = vunpack.c.l.b16 %v3061
      %v3265 = vunpack.c.l.b16 %v3062
      %v3266 = vunpack.c.l.b16 %v3063
      %v3267 = vunpack.c.l.b16 %v3064
      %v3268 = vunpack.c.l.b16 %v3065
      %v3269 = vunpack.c.l.b16 %v3066
      %v3270 = vunpack.c.l.b16 %v3067
      %v3271 = vunpack.c.l.b16 %v3068
      %v3272 = vunpack.c.l.b16 %v3069
      %v3273 = vunpack.c.l.b16 %v3070
      %v3274 = vunpack.c.l.b16 %v3071
      %v3275 = vunpack.c.l.b16 %v3072
      %v3276 = vunpack.c.l.b16 %v3073
      %v3277 = vunpack.c.l.b16 %v3074
      %v3278 = vunpack.c.l.b16 %v3075
      %v3279 = vunpack.c.l.b16 %v3076
      %v3280 = vunpack.c.l.b16 %v3077
      %v3281 = vunpack.c.l.b16 %v3078
      %v3282 = vunpack.c.l.b16 %v3079
      %v3283 = vunpack.c.l.b16 %v3080
      %v3284 = vunpack.c.l.b16 %v3081
      %v3285 = vunpack.c.l.b16 %v3082
      %v3286 = vunpack.c.l.b16 %v3083
      %v3287 = vunpack.c.l.b16 %v3084
      %v3288 = vunpack.c.l.b16 %v3085
      %v3289 = vunpack.c.l.b16 %v3086
      %v3290 = vunpack.c.l.b16 %v3087
      %v3291 = vunpack.c.l.b16 %v3088
      %v3292 = vunpack.c.l.b16 %v3089
      %v3293 = vunpack.c.l.b16 %v3090
      %v3294 = vunpack.c.l.b16 %v3091
      %v3295 = vunpack.c.l.b16 %v3092
      %v3296 = vunpack.c.l.b16 %v3093
      %v3297 = vunpack.c.l.b16 %v3094
      %v3298 = vpack.c.b16 %v3235, %v3234
      %v3299 = vpack.c.b16 %v3237, %v3236
      %v3300 = vpack.c.b16 %v3239, %v3238
      %v3301 = vpack.c.b16 %v3241, %v3240
      %v3302 = vpack.c.b16 %v3243, %v3242
      %v3303 = vpack.c.b16 %v3245, %v3244
      %v3304 = vpack.c.b16 %v3247, %v3246
      %v3305 = vpack.c.b16 %v3249, %v3248
      %v3306 = vpack.c.b16 %v3251, %v3250
      %v3307 = vpack.c.b16 %v3253, %v3252
      %v3308 = vpack.c.b16 %v3255, %v3254
      %v3309 = vpack.c.b16 %v3257, %v3256
      %v3310 = vpack.c.b16 %v3259, %v3258
      %v3311 = vpack.c.b16 %v3261, %v3260
      %v3312 = vpack.c.b16 %v3263, %v3262
      %v3313 = vpack.c.b16 %v3265, %v3264
      %v3314 = vpack.c.b16 %v3267, %v3266
      %v3315 = vpack.c.b16 %v3269, %v3268
      %v3316 = vpack.c.b16 %v3271, %v3270
      %v3317 = vpack.c.b16 %v3273, %v3272
      %v3318 = vpack.c.b16 %v3275, %v3274
      %v3319 = vpack.c.b16 %v3277, %v3276
      %v3320 = vpack.c.b16 %v3279, %v3278
      %v3321 = vpack.c.b16 %v3281, %v3280
      %v3322 = vpack.c.b16 %v3283, %v3282
      %v3323 = vpack.c.b16 %v3285, %v3284
      %v3324 = vpack.c.b16 %v3287, %v3286
      %v3325 = vpack.c.b16 %v3289, %v3288
      %v3326 = vpack.c.b16 %v3291, %v3290
      %v3327 = vpack.c.b16 %v3293, %v3292
      %v3328 = vpack.c.b16 %v3295, %v3294
      %v3329 = vpack.c.b16 %v3297, %v3296
      %3362 = vmatpush.bf16.msra.mxu0 %v3305
      %3363 = vmatpush.bf16.msra.mxu0 %v3304
      %3364 = vmatpush.bf16.msra.mxu0 %v3303
      %3365 = vmatpush.bf16.msra.mxu0 %v3302
      %3366 = vmatpush.bf16.msra.mxu0 %v3301
      %3367 = vmatpush.bf16.msra.mxu0 %v3300
      %3368 = vmatpush.bf16.msra.mxu0 %v3299
      %3369 = vmatpush.bf16.msra.mxu0 %v3298
      %3370 = vmatmul.bf16.gmra.mxu0 %v3108
      %v3371 = vpop.f32.mrf.mxu0
      %v3372 = vadd.f32 0.0, %v3371
      %v3373 = vpop.f32.mrf.mxu0
      %v3374 = vadd.f32 0.0, %v3373
      %3375 = vmatmul.bf16.gmra.mxu0 %v3119
      %v3376 = vpop.f32.mrf.mxu0
      %v3377 = vadd.f32 0.0, %v3376
      %v3378 = vpop.f32.mrf.mxu0
      %v3379 = vadd.f32 0.0, %v3378
      %3380 = vmatmul.bf16.gmra.mxu0 %v3127
      %v3381 = vpop.f32.mrf.mxu0
      %v3382 = vadd.f32 0.0, %v3381
      %v3383 = vpop.f32.mrf.mxu0
      %v3384 = vadd.f32 0.0, %v3383
      %3385 = vmatmul.bf16.gmra.mxu0 %v3135
      %v3386 = vpop.f32.mrf.mxu0
      %v3387 = vadd.f32 0.0, %v3386
      %v3388 = vpop.f32.mrf.mxu0
      %v3389 = vadd.f32 0.0, %v3388
      %3390 = vmatmul.bf16.gmra.mxu0 %v3143
      %v3391 = vpop.f32.mrf.mxu0
      %v3392 = vadd.f32 0.0, %v3391
      %v3393 = vpop.f32.mrf.mxu0
      %v3394 = vadd.f32 0.0, %v3393
      %3395 = vdwg.mxu0
      %3396 = vmatpush.bf16.msra.mxu0 %v3313
      %3397 = vmatpush.bf16.msra.mxu0 %v3312
      %3398 = vmatpush.bf16.msra.mxu0 %v3311
      %3399 = vmatpush.bf16.msra.mxu0 %v3310
      %3400 = vmatpush.bf16.msra.mxu0 %v3309
      %3401 = vmatpush.bf16.msra.mxu0 %v3308
      %3402 = vmatpush.bf16.msra.mxu0 %v3307
      %3403 = vmatpush.bf16.msra.mxu0 %v3306
      %3404 = vmatmul.bf16.gmra.mxu0 %v3111
      %v3405 = vpop.f32.mrf.mxu0
      %v3406 = vadd.f32 %v3372, %v3405
      %v3407 = vpop.f32.mrf.mxu0
      %v3408 = vadd.f32 %v3374, %v3407
      %3409 = vmatmul.bf16.gmra.mxu0 %v3121
      %v3410 = vpop.f32.mrf.mxu0
      %v3411 = vadd.f32 %v3377, %v3410
      %v3412 = vpop.f32.mrf.mxu0
      %v3413 = vadd.f32 %v3379, %v3412
      %3414 = vmatmul.bf16.gmra.mxu0 %v3129
      %v3415 = vpop.f32.mrf.mxu0
      %v3416 = vadd.f32 %v3382, %v3415
      %v3417 = vpop.f32.mrf.mxu0
      %v3418 = vadd.f32 %v3384, %v3417
      %3419 = vmatmul.bf16.gmra.mxu0 %v3137
      %v3420 = vpop.f32.mrf.mxu0
      %v3421 = vadd.f32 %v3387, %v3420
      %v3422 = vpop.f32.mrf.mxu0
      %v3423 = vadd.f32 %v3389, %v3422
      %3424 = vmatmul.bf16.gmra.mxu0 %v3145
      %v3425 = vpop.f32.mrf.mxu0
      %v3426 = vadd.f32 %v3392, %v3425
      %v3427 = vpop.f32.mrf.mxu0
      %v3428 = vadd.f32 %v3394, %v3427
      %3429 = vdwg.mxu0
      %3430 = vmatpush.bf16.msra.mxu0 %v3321
      %3431 = vmatpush.bf16.msra.mxu0 %v3320
      %3432 = vmatpush.bf16.msra.mxu0 %v3319
      %3433 = vmatpush.bf16.msra.mxu0 %v3318
      %3434 = vmatpush.bf16.msra.mxu0 %v3317
      %3435 = vmatpush.bf16.msra.mxu0 %v3316
      %3436 = vmatpush.bf16.msra.mxu0 %v3315
      %3437 = vmatpush.bf16.msra.mxu0 %v3314
      %3438 = vmatmul.bf16.gmra.mxu0 %v3114
      %v3439 = vpop.f32.mrf.mxu0
      %v3440 = vadd.f32 %v3406, %v3439
      %v3441 = vpop.f32.mrf.mxu0
      %v3442 = vadd.f32 %v3408, %v3441
      %3443 = vmatmul.bf16.gmra.mxu0 %v3123
      %v3444 = vpop.f32.mrf.mxu0
      %v3445 = vadd.f32 %v3411, %v3444
      %v3446 = vpop.f32.mrf.mxu0
      %v3447 = vadd.f32 %v3413, %v3446
      %3448 = vmatmul.bf16.gmra.mxu0 %v3131
      %v3449 = vpop.f32.mrf.mxu0
      %v3450 = vadd.f32 %v3416, %v3449
      %v3451 = vpop.f32.mrf.mxu0
      %v3452 = vadd.f32 %v3418, %v3451
      %3453 = vmatmul.bf16.gmra.mxu0 %v3139
      %v3454 = vpop.f32.mrf.mxu0
      %v3455 = vadd.f32 %v3421, %v3454
      %v3456 = vpop.f32.mrf.mxu0
      %v3457 = vadd.f32 %v3423, %v3456
      %3458 = vmatmul.bf16.gmra.mxu0 %v3147
      %v3459 = vpop.f32.mrf.mxu0
      %v3460 = vadd.f32 %v3426, %v3459
      %v3461 = vpop.f32.mrf.mxu0
      %v3462 = vadd.f32 %v3428, %v3461
      %3463 = vdwg.mxu0
      %3464 = vmatpush.bf16.msra.mxu0 %v3329
      %3465 = vmatpush.bf16.msra.mxu0 %v3328
      %3466 = vmatpush.bf16.msra.mxu0 %v3327
      %3467 = vmatpush.bf16.msra.mxu0 %v3326
      %3468 = vmatpush.bf16.msra.mxu0 %v3325
      %3469 = vmatpush.bf16.msra.mxu0 %v3324
      %3470 = vmatpush.bf16.msra.mxu0 %v3323
      %3471 = vmatpush.bf16.msra.mxu0 %v3322
      %3472 = vmatmul.bf16.gmra.mxu0 %v3117
      %v3473 = vpop.f32.mrf.mxu0
      %v3474 = vadd.f32 %v3440, %v3473
      %v3475 = vpop.f32.mrf.mxu0
      %v3476 = vadd.f32 %v3442, %v3475
      %3477 = vmatmul.bf16.gmra.mxu0 %v3125
      %v3478 = vpop.f32.mrf.mxu0
      %v3479 = vadd.f32 %v3445, %v3478
      %v3480 = vpop.f32.mrf.mxu0
      %v3481 = vadd.f32 %v3447, %v3480
      %3482 = vmatmul.bf16.gmra.mxu0 %v3133
      %v3483 = vpop.f32.mrf.mxu0
      %v3484 = vadd.f32 %v3450, %v3483
      %v3485 = vpop.f32.mrf.mxu0
      %v3486 = vadd.f32 %v3452, %v3485
      %3487 = vmatmul.bf16.gmra.mxu0 %v3141
      %v3488 = vpop.f32.mrf.mxu0
      %v3489 = vadd.f32 %v3455, %v3488
      %v3490 = vpop.f32.mrf.mxu0
      %v3491 = vadd.f32 %v3457, %v3490
      %3492 = vmatmul.bf16.gmra.mxu0 %v3149
      %v3493 = vpop.f32.mrf.mxu0
      %v3494 = vadd.f32 %v3460, %v3493
      %v3495 = vpop.f32.mrf.mxu0
      %v3496 = vadd.f32 %v3462, %v3495
      %3497 = vdwg.mxu0
      %v3498 = vadd.f32 %v3018, %v3474
      %v3499 = vadd.f32 %v3019, %v3476
      %v3500 = vadd.f32 %v3020, %v3479
      %v3501 = vadd.f32 %v3021, %v3481
      %v3502 = vadd.f32 %v3022, %v3484
      %v3503 = vadd.f32 %v3023, %v3486
      %v3504 = vadd.f32 %v3024, %v3489
      %v3505 = vadd.f32 %v3025, %v3491
      %v3506 = vadd.f32 %v3026, %v3494
      %v3507 = vadd.f32 %v3027, %v3496
      %v3508 = vld [vmem:[%s165 + $0x20] sm:$0xcc]
      %v3509 = vld [vmem:[%s165 + $0x28] sm:$0xcc]
      %v3510 = vld [vmem:[%s165 + $0x30] sm:$0xff]
      %v3511 = vld [vmem:[%s165 + $0x38] sm:$0xff]
      %v3512 = vld [vmem:[%s165 + $0x40] sm:$0xff]
      %v3513 = vld [vmem:[%s165 + $0x48] sm:$0xff]
      %v3514 = vld [vmem:[%s165 + $0x50] sm:$0xff]
      %v3515 = vld [vmem:[%s165 + $0x58] sm:$0xff]
      %v3516 = vld [vmem:[%s165 + $0x60] sm:$0xff]
      %v3517 = vld [vmem:[%s165 + $0x68] sm:$0xff]
      %v3518 = vld [vmem:[%s165 + $0x70] sm:$0xff]
      %v3519 = vld [vmem:[%s165 + $0x78] sm:$0xff]
      %v3520 = vld [vmem:[%s165 + $0x80] sm:$0xff]
      %v3521 = vld [vmem:[%s165 + $0x88] sm:$0xff]
      %v3522 = vld [vmem:[%s165 + $0x90] sm:$0xff]
      %v3523 = vld [vmem:[%s165 + $0x98] sm:$0xff]
      %v3524 = vld [vmem:[%s165 + $0xa0] sm:$0xff]
      %v3525 = vld [vmem:[%s165 + $0xa8] sm:$0xff]
      %v3526 = vld [vmem:[%s165 + $0xb0] sm:$0xff]
      %v3527 = vld [vmem:[%s165 + $0xb8] sm:$0xff]
      %v3528 = vld [vmem:[%s165 + $0xc0] sm:$0x11]
      %v3529 = vld [vmem:[%s165 + $0xc8] sm:$0x11]
      %s3530 = scalar_lea.vmem %s1, 1536
      %v3531 = vld [vmem:[%s3530] sm:$0xf]
      %v3532 = vld [vmem:[%s3530 + $0x4] sm:$0xf]
      %v3533 = vld [vmem:[%s3530 + $0x8] sm:$0xf]
      %v3534 = vld [vmem:[%s3530 + $0xc] sm:$0xf]
      %v3535 = vld [vmem:[%s3530 + $0x10] sm:$0xf]
      %v3536 = vld [vmem:[%s3530 + $0x14] sm:$0xf]
      %v3537 = vld [vmem:[%s3530 + $0x18] sm:$0xf]
      %v3538 = vld [vmem:[%s3530 + $0x1c] sm:$0xf]
      %v3539 = vld [vmem:[%s3530 + $0x20] sm:$0xf]
      %v3540 = vld [vmem:[%s3530 + $0x24] sm:$0xf]
      %v3541 = vld [vmem:[%s3530 + $0x28] sm:$0xf]
      %v3542 = vld [vmem:[%s3530 + $0x2c] sm:$0xf]
      %v3543 = vld [vmem:[%s3530 + $0x30] sm:$0xf]
      %v3544 = vld [vmem:[%s3530 + $0x34] sm:$0xf]
      %v3545 = vld [vmem:[%s3530 + $0x38] sm:$0xf]
      %v3546 = vld [vmem:[%s3530 + $0x3c] sm:$0xf]
      %v3547 = vld [vmem:[%s3530 + $0x40] sm:$0xf]
      %v3548 = vld [vmem:[%s3530 + $0x44] sm:$0xf]
      %v3549 = vld [vmem:[%s3530 + $0x48] sm:$0xf]
      %v3550 = vld [vmem:[%s3530 + $0x4c] sm:$0xf]
      %v3551 = vld [vmem:[%s3530 + $0x50] sm:$0xf]
      %v3552 = vld [vmem:[%s3530 + $0x54] sm:$0xf]
      %v3553 = vld [vmem:[%s3530 + $0x58] sm:$0xf]
      %v3554 = vld [vmem:[%s3530 + $0x5c] sm:$0xf]
      %v3555 = vld [vmem:[%s3530 + $0x60] sm:$0xf]
      %v3556 = vld [vmem:[%s3530 + $0x64] sm:$0xf]
      %v3557 = vld [vmem:[%s3530 + $0x68] sm:$0xf]
      %v3558 = vld [vmem:[%s3530 + $0x6c] sm:$0xf]
      %v3559 = vld [vmem:[%s3530 + $0x70] sm:$0xf]
      %v3560 = vld [vmem:[%s3530 + $0x74] sm:$0xf]
      %v3561 = vld [vmem:[%s3530 + $0x78] sm:$0xf]
      %v3562 = vld [vmem:[%s3530 + $0x7c] sm:$0xf]
      %v3563 = vld [vmem:[%s3530 + $0x80] sm:$0xf]
      %v3564 = vld [vmem:[%s3530 + $0x84] sm:$0xf]
      %v3565 = vld [vmem:[%s3530 + $0x88] sm:$0xf]
      %v3566 = vld [vmem:[%s3530 + $0x8c] sm:$0xf]
      %v3567 = vld [vmem:[%s3530 + $0x90] sm:$0xf]
      %v3568 = vld [vmem:[%s3530 + $0x94] sm:$0xf]
      %v3569 = vld [vmem:[%s3530 + $0x98] sm:$0xf]
      %v3570 = vld [vmem:[%s3530 + $0x9c] sm:$0xf]
      %v3571 = vld [vmem:[%s3530 + $0xa0] sm:$0xf]
      %v3572 = vld [vmem:[%s3530 + $0xa4] sm:$0xf]
      %v3573 = vld [vmem:[%s3530 + $0xa8] sm:$0xf]
      %v3574 = vld [vmem:[%s3530 + $0xac] sm:$0xf]
      %v3575 = vld [vmem:[%s3530 + $0xb0] sm:$0xf]
      %v3576 = vld [vmem:[%s3530 + $0xb4] sm:$0xf]
      %v3577 = vld [vmem:[%s3530 + $0xb8] sm:$0xf]
      %v3578 = vld [vmem:[%s3530 + $0xbc] sm:$0xf]
      %v3579 = vld [vmem:[%s3530 + $0xc0] sm:$0xf]
      %v3580 = vld [vmem:[%s3530 + $0xc4] sm:$0xf]
      %v3581 = vld [vmem:[%s3530 + $0xc8] sm:$0xf]
      %v3582 = vld [vmem:[%s3530 + $0xcc] sm:$0xf]
      %v3583 = vld [vmem:[%s3530 + $0xd0] sm:$0xf]
      %v3584 = vld [vmem:[%s3530 + $0xd4] sm:$0xf]
      %v3585 = vld [vmem:[%s3530 + $0xd8] sm:$0xf]
      %v3586 = vld [vmem:[%s3530 + $0xdc] sm:$0xf]
      %v3587 = vld [vmem:[%s3530 + $0xe0] sm:$0xf]
      %v3588 = vld [vmem:[%s3530 + $0xe4] sm:$0xf]
      %v3589 = vld [vmem:[%s3530 + $0xe8] sm:$0xf]
      %v3590 = vld [vmem:[%s3530 + $0xec] sm:$0xf]
      %v3591 = vld [vmem:[%s3530 + $0xf0] sm:$0xf]
      %v3592 = vld [vmem:[%s3530 + $0xf4] sm:$0xf]
      %v3593 = vld [vmem:[%s3530 + $0xf8] sm:$0xf]
      %v3594 = vld [vmem:[%s3530 + $0xfc] sm:$0xf]
      %v3617 = vunpack.c.l.b16 %v3508
      %v3618 = vunpack.c.h.b16 %v3508
      %v3619 = vunpack.c.l.b16 %v3509
      %v3620 = vunpack.c.h.b16 %v3509
      %v3621 = vunpack.c.l.b16 %v3510
      %v3622 = vunpack.c.h.b16 %v3510
      %v3623 = vunpack.c.l.b16 %v3511
      %v3624 = vunpack.c.h.b16 %v3511
      %v3625 = vunpack.c.l.b16 %v3512
      %v3626 = vunpack.c.h.b16 %v3512
      %v3627 = vunpack.c.l.b16 %v3513
      %v3628 = vunpack.c.h.b16 %v3513
      %v3629 = vunpack.c.l.b16 %v3514
      %v3630 = vunpack.c.h.b16 %v3514
      %v3631 = vunpack.c.l.b16 %v3515
      %v3632 = vunpack.c.h.b16 %v3515
      %v3633 = vunpack.c.l.b16 %v3516
      %v3634 = vunpack.c.h.b16 %v3516
      %v3635 = vunpack.c.l.b16 %v3517
      %v3636 = vunpack.c.h.b16 %v3517
      %v3637 = vunpack.c.l.b16 %v3518
      %v3638 = vunpack.c.h.b16 %v3518
      %v3639 = vunpack.c.l.b16 %v3519
      %v3640 = vunpack.c.h.b16 %v3519
      %v3641 = vunpack.c.l.b16 %v3520
      %v3642 = vunpack.c.h.b16 %v3520
      %v3643 = vunpack.c.l.b16 %v3521
      %v3644 = vunpack.c.h.b16 %v3521
      %v3645 = vunpack.c.l.b16 %v3522
      %v3646 = vunpack.c.h.b16 %v3522
      %v3647 = vunpack.c.l.b16 %v3523
      %v3648 = vunpack.c.h.b16 %v3523
      %v3649 = vunpack.c.l.b16 %v3524
      %v3650 = vunpack.c.h.b16 %v3524
      %v3651 = vunpack.c.l.b16 %v3525
      %v3652 = vunpack.c.h.b16 %v3525
      %v3653 = vunpack.c.l.b16 %v3526
      %v3654 = vunpack.c.h.b16 %v3526
      %v3655 = vunpack.c.l.b16 %v3527
      %v3656 = vunpack.c.h.b16 %v3527
      %v3657 = vunpack.c.l.b16 %v3528
      %v3658 = vunpack.c.h.b16 %v3528
      %v3659 = vunpack.c.l.b16 %v3529
      %v3660 = vunpack.c.h.b16 %v3529
      %v3661 = vpack.c.b16 %v3621, %v3617
      %v3662 = vpack.c.b16 %v3622, %v3618
      %v3663 = vpack.c.b16 %v3623, %v3619
      %v3664 = vpack.c.b16 %v3624, %v3620
      %v3665 = vpack.c.b16 %v3629, %v3625
      %v3666 = vpack.c.b16 %v3630, %v3626
      %v3667 = vpack.c.b16 %v3631, %v3627
      %v3668 = vpack.c.b16 %v3632, %v3628
      %v3669 = vpack.c.b16 %v3637, %v3633
      %v3670 = vpack.c.b16 %v3638, %v3634
      %v3671 = vpack.c.b16 %v3639, %v3635
      %v3672 = vpack.c.b16 %v3640, %v3636
      %v3673 = vpack.c.b16 %v3645, %v3641
      %v3674 = vpack.c.b16 %v3646, %v3642
      %v3675 = vpack.c.b16 %v3647, %v3643
      %v3676 = vpack.c.b16 %v3648, %v3644
      %v3677 = vpack.c.b16 %v3653, %v3649
      %v3678 = vpack.c.b16 %v3654, %v3650
      %v3679 = vpack.c.b16 %v3655, %v3651
      %v3680 = vpack.c.b16 %v3656, %v3652
      %v3681 = vpack.c.b16 %v3657, %v3657
      %v3682 = vpack.c.b16 %v3658, %v3658
      %v3683 = vpack.c.b16 %v3659, %v3659
      %v3684 = vpack.c.b16 %v3660, %v3660
      %v3685 = vrot.slane %v3661, 2
      %v3686 = vrot.slane %v3665, 2
      %v3687 = vsel %vm3105, %v3685, %v3686
      %v3688 = vrot.slane %v3662, 2
      %v3689 = vrot.slane %v3666, 2
      %v3690 = vsel %vm3105, %v3688, %v3689
      %v3691 = vrot.slane %v3663, 2
      %v3692 = vrot.slane %v3667, 2
      %v3693 = vsel %vm3105, %v3691, %v3692
      %v3694 = vrot.slane %v3664, 2
      %v3695 = vrot.slane %v3668, 2
      %v3696 = vsel %vm3105, %v3694, %v3695
      %v3697 = vrot.slane %v3669, 2
      %v3698 = vsel %vm3105, %v3686, %v3697
      %v3699 = vrot.slane %v3670, 2
      %v3700 = vsel %vm3105, %v3689, %v3699
      %v3701 = vrot.slane %v3671, 2
      %v3702 = vsel %vm3105, %v3692, %v3701
      %v3703 = vrot.slane %v3672, 2
      %v3704 = vsel %vm3105, %v3695, %v3703
      %v3705 = vrot.slane %v3673, 2
      %v3706 = vsel %vm3105, %v3697, %v3705
      %v3707 = vrot.slane %v3674, 2
      %v3708 = vsel %vm3105, %v3699, %v3707
      %v3709 = vrot.slane %v3675, 2
      %v3710 = vsel %vm3105, %v3701, %v3709
      %v3711 = vrot.slane %v3676, 2
      %v3712 = vsel %vm3105, %v3703, %v3711
      %v3713 = vrot.slane %v3677, 2
      %v3714 = vsel %vm3105, %v3705, %v3713
      %v3715 = vrot.slane %v3678, 2
      %v3716 = vsel %vm3105, %v3707, %v3715
      %v3717 = vrot.slane %v3679, 2
      %v3718 = vsel %vm3105, %v3709, %v3717
      %v3719 = vrot.slane %v3680, 2
      %v3720 = vsel %vm3105, %v3711, %v3719
      %v3721 = vrot.slane %v3681, 2
      %v3722 = vsel %vm3105, %v3713, %v3721
      %v3723 = vrot.slane %v3682, 2
      %v3724 = vsel %vm3105, %v3715, %v3723
      %v3725 = vrot.slane %v3683, 2
      %v3726 = vsel %vm3105, %v3717, %v3725
      %v3727 = vrot.slane %v3684, 2
      %v3728 = vsel %vm3105, %v3719, %v3727
      %v3813 = vunpack.c.l.b16 %v3531
      %v3814 = vunpack.c.l.b16 %v3532
      %v3815 = vunpack.c.l.b16 %v3533
      %v3816 = vunpack.c.l.b16 %v3534
      %v3817 = vunpack.c.l.b16 %v3535
      %v3818 = vunpack.c.l.b16 %v3536
      %v3819 = vunpack.c.l.b16 %v3537
      %v3820 = vunpack.c.l.b16 %v3538
      %v3821 = vunpack.c.l.b16 %v3539
      %v3822 = vunpack.c.l.b16 %v3540
      %v3823 = vunpack.c.l.b16 %v3541
      %v3824 = vunpack.c.l.b16 %v3542
      %v3825 = vunpack.c.l.b16 %v3543
      %v3826 = vunpack.c.l.b16 %v3544
      %v3827 = vunpack.c.l.b16 %v3545
      %v3828 = vunpack.c.l.b16 %v3546
      %v3829 = vunpack.c.l.b16 %v3547
      %v3830 = vunpack.c.l.b16 %v3548
      %v3831 = vunpack.c.l.b16 %v3549
      %v3832 = vunpack.c.l.b16 %v3550
      %v3833 = vunpack.c.l.b16 %v3551
      %v3834 = vunpack.c.l.b16 %v3552
      %v3835 = vunpack.c.l.b16 %v3553
      %v3836 = vunpack.c.l.b16 %v3554
      %v3837 = vunpack.c.l.b16 %v3555
      %v3838 = vunpack.c.l.b16 %v3556
      %v3839 = vunpack.c.l.b16 %v3557
      %v3840 = vunpack.c.l.b16 %v3558
      %v3841 = vunpack.c.l.b16 %v3559
      %v3842 = vunpack.c.l.b16 %v3560
      %v3843 = vunpack.c.l.b16 %v3561
      %v3844 = vunpack.c.l.b16 %v3562
      %v3845 = vunpack.c.l.b16 %v3563
      %v3846 = vunpack.c.l.b16 %v3564
      %v3847 = vunpack.c.l.b16 %v3565
      %v3848 = vunpack.c.l.b16 %v3566
      %v3849 = vunpack.c.l.b16 %v3567
      %v3850 = vunpack.c.l.b16 %v3568
      %v3851 = vunpack.c.l.b16 %v3569
      %v3852 = vunpack.c.l.b16 %v3570
      %v3853 = vunpack.c.l.b16 %v3571
      %v3854 = vunpack.c.l.b16 %v3572
      %v3855 = vunpack.c.l.b16 %v3573
      %v3856 = vunpack.c.l.b16 %v3574
      %v3857 = vunpack.c.l.b16 %v3575
      %v3858 = vunpack.c.l.b16 %v3576
      %v3859 = vunpack.c.l.b16 %v3577
      %v3860 = vunpack.c.l.b16 %v3578
      %v3861 = vunpack.c.l.b16 %v3579
      %v3862 = vunpack.c.l.b16 %v3580
      %v3863 = vunpack.c.l.b16 %v3581
      %v3864 = vunpack.c.l.b16 %v3582
      %v3865 = vunpack.c.l.b16 %v3583
      %v3866 = vunpack.c.l.b16 %v3584
      %v3867 = vunpack.c.l.b16 %v3585
      %v3868 = vunpack.c.l.b16 %v3586
      %v3869 = vunpack.c.l.b16 %v3587
      %v3870 = vunpack.c.l.b16 %v3588
      %v3871 = vunpack.c.l.b16 %v3589
      %v3872 = vunpack.c.l.b16 %v3590
      %v3873 = vunpack.c.l.b16 %v3591
      %v3874 = vunpack.c.l.b16 %v3592
      %v3875 = vunpack.c.l.b16 %v3593
      %v3876 = vunpack.c.l.b16 %v3594
      %v3877 = vpack.c.b16 %v3814, %v3813
      %v3878 = vpack.c.b16 %v3816, %v3815
      %v3879 = vpack.c.b16 %v3818, %v3817
      %v3880 = vpack.c.b16 %v3820, %v3819
      %v3881 = vpack.c.b16 %v3822, %v3821
      %v3882 = vpack.c.b16 %v3824, %v3823
      %v3883 = vpack.c.b16 %v3826, %v3825
      %v3884 = vpack.c.b16 %v3828, %v3827
      %v3885 = vpack.c.b16 %v3830, %v3829
      %v3886 = vpack.c.b16 %v3832, %v3831
      %v3887 = vpack.c.b16 %v3834, %v3833
      %v3888 = vpack.c.b16 %v3836, %v3835
      %v3889 = vpack.c.b16 %v3838, %v3837
      %v3890 = vpack.c.b16 %v3840, %v3839
      %v3891 = vpack.c.b16 %v3842, %v3841
      %v3892 = vpack.c.b16 %v3844, %v3843
      %v3893 = vpack.c.b16 %v3846, %v3845
      %v3894 = vpack.c.b16 %v3848, %v3847
      %v3895 = vpack.c.b16 %v3850, %v3849
      %v3896 = vpack.c.b16 %v3852, %v3851
      %v3897 = vpack.c.b16 %v3854, %v3853
      %v3898 = vpack.c.b16 %v3856, %v3855
      %v3899 = vpack.c.b16 %v3858, %v3857
      %v3900 = vpack.c.b16 %v3860, %v3859
      %v3901 = vpack.c.b16 %v3862, %v3861
      %v3902 = vpack.c.b16 %v3864, %v3863
      %v3903 = vpack.c.b16 %v3866, %v3865
      %v3904 = vpack.c.b16 %v3868, %v3867
      %v3905 = vpack.c.b16 %v3870, %v3869
      %v3906 = vpack.c.b16 %v3872, %v3871
      %v3907 = vpack.c.b16 %v3874, %v3873
      %v3908 = vpack.c.b16 %v3876, %v3875
      %3941 = vmatpush.bf16.msra.mxu0 %v3884
      %3942 = vmatpush.bf16.msra.mxu0 %v3883
      %3943 = vmatpush.bf16.msra.mxu0 %v3882
      %3944 = vmatpush.bf16.msra.mxu0 %v3881
      %3945 = vmatpush.bf16.msra.mxu0 %v3880
      %3946 = vmatpush.bf16.msra.mxu0 %v3879
      %3947 = vmatpush.bf16.msra.mxu0 %v3878
      %3948 = vmatpush.bf16.msra.mxu0 %v3877
      %3949 = vmatmul.bf16.gmra.mxu0 %v3687
      %v3950 = vpop.f32.mrf.mxu0
      %v3951 = vadd.f32 0.0, %v3950
      %v3952 = vpop.f32.mrf.mxu0
      %v3953 = vadd.f32 0.0, %v3952
      %3954 = vmatmul.bf16.gmra.mxu0 %v3698
      %v3955 = vpop.f32.mrf.mxu0
      %v3956 = vadd.f32 0.0, %v3955
      %v3957 = vpop.f32.mrf.mxu0
      %v3958 = vadd.f32 0.0, %v3957
      %3959 = vmatmul.bf16.gmra.mxu0 %v3706
      %v3960 = vpop.f32.mrf.mxu0
      %v3961 = vadd.f32 0.0, %v3960
      %v3962 = vpop.f32.mrf.mxu0
      %v3963 = vadd.f32 0.0, %v3962
      %3964 = vmatmul.bf16.gmra.mxu0 %v3714
      %v3965 = vpop.f32.mrf.mxu0
      %v3966 = vadd.f32 0.0, %v3965
      %v3967 = vpop.f32.mrf.mxu0
      %v3968 = vadd.f32 0.0, %v3967
      %3969 = vmatmul.bf16.gmra.mxu0 %v3722
      %v3970 = vpop.f32.mrf.mxu0
      %v3971 = vadd.f32 0.0, %v3970
      %v3972 = vpop.f32.mrf.mxu0
      %v3973 = vadd.f32 0.0, %v3972
      %3974 = vdwg.mxu0
      %3975 = vmatpush.bf16.msra.mxu0 %v3892
      %3976 = vmatpush.bf16.msra.mxu0 %v3891
      %3977 = vmatpush.bf16.msra.mxu0 %v3890
      %3978 = vmatpush.bf16.msra.mxu0 %v3889
      %3979 = vmatpush.bf16.msra.mxu0 %v3888
      %3980 = vmatpush.bf16.msra.mxu0 %v3887
      %3981 = vmatpush.bf16.msra.mxu0 %v3886
      %3982 = vmatpush.bf16.msra.mxu0 %v3885
      %3983 = vmatmul.bf16.gmra.mxu0 %v3690
      %v3984 = vpop.f32.mrf.mxu0
      %v3985 = vadd.f32 %v3951, %v3984
      %v3986 = vpop.f32.mrf.mxu0
      %v3987 = vadd.f32 %v3953, %v3986
      %3988 = vmatmul.bf16.gmra.mxu0 %v3700
      %v3989 = vpop.f32.mrf.mxu0
      %v3990 = vadd.f32 %v3956, %v3989
      %v3991 = vpop.f32.mrf.mxu0
      %v3992 = vadd.f32 %v3958, %v3991
      %3993 = vmatmul.bf16.gmra.mxu0 %v3708
      %v3994 = vpop.f32.mrf.mxu0
      %v3995 = vadd.f32 %v3961, %v3994
      %v3996 = vpop.f32.mrf.mxu0
      %v3997 = vadd.f32 %v3963, %v3996
      %3998 = vmatmul.bf16.gmra.mxu0 %v3716
      %v3999 = vpop.f32.mrf.mxu0
      %v4000 = vadd.f32 %v3966, %v3999
      %v4001 = vpop.f32.mrf.mxu0
      %v4002 = vadd.f32 %v3968, %v4001
      %4003 = vmatmul.bf16.gmra.mxu0 %v3724
      %v4004 = vpop.f32.mrf.mxu0
      %v4005 = vadd.f32 %v3971, %v4004
      %v4006 = vpop.f32.mrf.mxu0
      %v4007 = vadd.f32 %v3973, %v4006
      %4008 = vdwg.mxu0
      %4009 = vmatpush.bf16.msra.mxu0 %v3900
      %4010 = vmatpush.bf16.msra.mxu0 %v3899
      %4011 = vmatpush.bf16.msra.mxu0 %v3898
      %4012 = vmatpush.bf16.msra.mxu0 %v3897
      %4013 = vmatpush.bf16.msra.mxu0 %v3896
      %4014 = vmatpush.bf16.msra.mxu0 %v3895
      %4015 = vmatpush.bf16.msra.mxu0 %v3894
      %4016 = vmatpush.bf16.msra.mxu0 %v3893
      %4017 = vmatmul.bf16.gmra.mxu0 %v3693
      %v4018 = vpop.f32.mrf.mxu0
      %v4019 = vadd.f32 %v3985, %v4018
      %v4020 = vpop.f32.mrf.mxu0
      %v4021 = vadd.f32 %v3987, %v4020
      %4022 = vmatmul.bf16.gmra.mxu0 %v3702
      %v4023 = vpop.f32.mrf.mxu0
      %v4024 = vadd.f32 %v3990, %v4023
      %v4025 = vpop.f32.mrf.mxu0
      %v4026 = vadd.f32 %v3992, %v4025
      %4027 = vmatmul.bf16.gmra.mxu0 %v3710
      %v4028 = vpop.f32.mrf.mxu0
      %v4029 = vadd.f32 %v3995, %v4028
      %v4030 = vpop.f32.mrf.mxu0
      %v4031 = vadd.f32 %v3997, %v4030
      %4032 = vmatmul.bf16.gmra.mxu0 %v3718
      %v4033 = vpop.f32.mrf.mxu0
      %v4034 = vadd.f32 %v4000, %v4033
      %v4035 = vpop.f32.mrf.mxu0
      %v4036 = vadd.f32 %v4002, %v4035
      %4037 = vmatmul.bf16.gmra.mxu0 %v3726
      %v4038 = vpop.f32.mrf.mxu0
      %v4039 = vadd.f32 %v4005, %v4038
      %v4040 = vpop.f32.mrf.mxu0
      %v4041 = vadd.f32 %v4007, %v4040
      %4042 = vdwg.mxu0
      %4043 = vmatpush.bf16.msra.mxu0 %v3908
      %4044 = vmatpush.bf16.msra.mxu0 %v3907
      %4045 = vmatpush.bf16.msra.mxu0 %v3906
      %4046 = vmatpush.bf16.msra.mxu0 %v3905
      %4047 = vmatpush.bf16.msra.mxu0 %v3904
      %4048 = vmatpush.bf16.msra.mxu0 %v3903
      %4049 = vmatpush.bf16.msra.mxu0 %v3902
      %4050 = vmatpush.bf16.msra.mxu0 %v3901
      %4051 = vmatmul.bf16.gmra.mxu0 %v3696
      %v4052 = vpop.f32.mrf.mxu0
      %v4053 = vadd.f32 %v4019, %v4052
      %v4054 = vpop.f32.mrf.mxu0
      %v4055 = vadd.f32 %v4021, %v4054
      %4056 = vmatmul.bf16.gmra.mxu0 %v3704
      %v4057 = vpop.f32.mrf.mxu0
      %v4058 = vadd.f32 %v4024, %v4057
      %v4059 = vpop.f32.mrf.mxu0
      %v4060 = vadd.f32 %v4026, %v4059
      %4061 = vmatmul.bf16.gmra.mxu0 %v3712
      %v4062 = vpop.f32.mrf.mxu0
      %v4063 = vadd.f32 %v4029, %v4062
      %v4064 = vpop.f32.mrf.mxu0
      %v4065 = vadd.f32 %v4031, %v4064
      %4066 = vmatmul.bf16.gmra.mxu0 %v3720
      %v4067 = vpop.f32.mrf.mxu0
      %v4068 = vadd.f32 %v4034, %v4067
      %v4069 = vpop.f32.mrf.mxu0
      %v4070 = vadd.f32 %v4036, %v4069
      %4071 = vmatmul.bf16.gmra.mxu0 %v3728
      %v4072 = vpop.f32.mrf.mxu0
      %v4073 = vadd.f32 %v4039, %v4072
      %v4074 = vpop.f32.mrf.mxu0
      %v4075 = vadd.f32 %v4041, %v4074
      %4076 = vdwg.mxu0
      %v4077 = vadd.f32 %v3498, %v4053
      %v4078 = vadd.f32 %v3499, %v4055
      %v4079 = vadd.f32 %v3500, %v4058
      %v4080 = vadd.f32 %v3501, %v4060
      %v4081 = vadd.f32 %v3502, %v4063
      %v4082 = vadd.f32 %v3503, %v4065
      %v4083 = vadd.f32 %v3504, %v4068
      %v4084 = vadd.f32 %v3505, %v4070
      %v4085 = vadd.f32 %v3506, %v4073
      %v4086 = vadd.f32 %v3507, %v4075
      %v4087 = vld [vmem:[%s165 + $0xc0] sm:$0x33]
      %v4088 = vld [vmem:[%s165 + $0xc8] sm:$0x33]
      %s4089 = scalar_lea.vmem %s1, 1792
      %v4090 = vld [vmem:[%s4089] sm:$0xf]
      %v4091 = vld [vmem:[%s4089 + $0x4] sm:$0xf]
      %v4092 = vld [vmem:[%s4089 + $0x8] sm:$0xf]
      %v4093 = vld [vmem:[%s4089 + $0xc] sm:$0xf]
      %v4094 = vld [vmem:[%s4089 + $0x10] sm:$0xf]
      %v4095 = vld [vmem:[%s4089 + $0x14] sm:$0xf]
      %v4096 = vld [vmem:[%s4089 + $0x18] sm:$0xf]
      %v4097 = vld [vmem:[%s4089 + $0x1c] sm:$0xf]
      %v4098 = vld [vmem:[%s4089 + $0x20] sm:$0xf]
      %v4099 = vld [vmem:[%s4089 + $0x24] sm:$0xf]
      %v4100 = vld [vmem:[%s4089 + $0x28] sm:$0xf]
      %v4101 = vld [vmem:[%s4089 + $0x2c] sm:$0xf]
      %v4102 = vld [vmem:[%s4089 + $0x30] sm:$0xf]
      %v4103 = vld [vmem:[%s4089 + $0x34] sm:$0xf]
      %v4104 = vld [vmem:[%s4089 + $0x38] sm:$0xf]
      %v4105 = vld [vmem:[%s4089 + $0x3c] sm:$0xf]
      %v4106 = vld [vmem:[%s4089 + $0x40] sm:$0xf]
      %v4107 = vld [vmem:[%s4089 + $0x44] sm:$0xf]
      %v4108 = vld [vmem:[%s4089 + $0x48] sm:$0xf]
      %v4109 = vld [vmem:[%s4089 + $0x4c] sm:$0xf]
      %v4110 = vld [vmem:[%s4089 + $0x50] sm:$0xf]
      %v4111 = vld [vmem:[%s4089 + $0x54] sm:$0xf]
      %v4112 = vld [vmem:[%s4089 + $0x58] sm:$0xf]
      %v4113 = vld [vmem:[%s4089 + $0x5c] sm:$0xf]
      %v4114 = vld [vmem:[%s4089 + $0x60] sm:$0xf]
      %v4115 = vld [vmem:[%s4089 + $0x64] sm:$0xf]
      %v4116 = vld [vmem:[%s4089 + $0x68] sm:$0xf]
      %v4117 = vld [vmem:[%s4089 + $0x6c] sm:$0xf]
      %v4118 = vld [vmem:[%s4089 + $0x70] sm:$0xf]
      %v4119 = vld [vmem:[%s4089 + $0x74] sm:$0xf]
      %v4120 = vld [vmem:[%s4089 + $0x78] sm:$0xf]
      %v4121 = vld [vmem:[%s4089 + $0x7c] sm:$0xf]
      %v4122 = vld [vmem:[%s4089 + $0x80] sm:$0xf]
      %v4123 = vld [vmem:[%s4089 + $0x84] sm:$0xf]
      %v4124 = vld [vmem:[%s4089 + $0x88] sm:$0xf]
      %v4125 = vld [vmem:[%s4089 + $0x8c] sm:$0xf]
      %v4126 = vld [vmem:[%s4089 + $0x90] sm:$0xf]
      %v4127 = vld [vmem:[%s4089 + $0x94] sm:$0xf]
      %v4128 = vld [vmem:[%s4089 + $0x98] sm:$0xf]
      %v4129 = vld [vmem:[%s4089 + $0x9c] sm:$0xf]
      %v4130 = vld [vmem:[%s4089 + $0xa0] sm:$0xf]
      %v4131 = vld [vmem:[%s4089 + $0xa4] sm:$0xf]
      %v4132 = vld [vmem:[%s4089 + $0xa8] sm:$0xf]
      %v4133 = vld [vmem:[%s4089 + $0xac] sm:$0xf]
      %v4134 = vld [vmem:[%s4089 + $0xb0] sm:$0xf]
      %v4135 = vld [vmem:[%s4089 + $0xb4] sm:$0xf]
      %v4136 = vld [vmem:[%s4089 + $0xb8] sm:$0xf]
      %v4137 = vld [vmem:[%s4089 + $0xbc] sm:$0xf]
      %v4138 = vld [vmem:[%s4089 + $0xc0] sm:$0xf]
      %v4139 = vld [vmem:[%s4089 + $0xc4] sm:$0xf]
      %v4140 = vld [vmem:[%s4089 + $0xc8] sm:$0xf]
      %v4141 = vld [vmem:[%s4089 + $0xcc] sm:$0xf]
      %v4142 = vld [vmem:[%s4089 + $0xd0] sm:$0xf]
      %v4143 = vld [vmem:[%s4089 + $0xd4] sm:$0xf]
      %v4144 = vld [vmem:[%s4089 + $0xd8] sm:$0xf]
      %v4145 = vld [vmem:[%s4089 + $0xdc] sm:$0xf]
      %v4146 = vld [vmem:[%s4089 + $0xe0] sm:$0xf]
      %v4147 = vld [vmem:[%s4089 + $0xe4] sm:$0xf]
      %v4148 = vld [vmem:[%s4089 + $0xe8] sm:$0xf]
      %v4149 = vld [vmem:[%s4089 + $0xec] sm:$0xf]
      %v4150 = vld [vmem:[%s4089 + $0xf0] sm:$0xf]
      %v4151 = vld [vmem:[%s4089 + $0xf4] sm:$0xf]
      %v4152 = vld [vmem:[%s4089 + $0xf8] sm:$0xf]
      %v4153 = vld [vmem:[%s4089 + $0xfc] sm:$0xf]
      %v4156 = vunpack.c.l.b16 %v4087
      %v4157 = vunpack.c.h.b16 %v4087
      %v4158 = vunpack.c.l.b16 %v4088
      %v4159 = vunpack.c.h.b16 %v4088
      %v4160 = vpack.c.b16 %v4156, %v4156
      %v4161 = vpack.c.b16 %v4157, %v4157
      %v4162 = vpack.c.b16 %v4158, %v4158
      %v4163 = vpack.c.b16 %v4159, %v4159
      %vm4164 = vsmask.f32 5376
      %v4166 = vshrl.u32 %v3661, 16
      %v4168 = vrot.slane %v4166, 2
      %v4169 = vshll.u32 %v3661, 16
      %v4171 = vrot.slane %v4169, 3
      %v4172 = vor.u32 %v4168, %v4171
      %v4174 = vshrl.u32 %v3665, 16
      %v4176 = vrot.slane %v4174, 2
      %v4177 = vshll.u32 %v3665, 16
      %v4179 = vrot.slane %v4177, 3
      %v4180 = vor.u32 %v4176, %v4179
      %v4181 = vsel %vm4164, %v4172, %v4180
      %v4183 = vshrl.u32 %v3662, 16
      %v4185 = vrot.slane %v4183, 2
      %v4186 = vshll.u32 %v3662, 16
      %v4188 = vrot.slane %v4186, 3
      %v4189 = vor.u32 %v4185, %v4188
      %v4191 = vshrl.u32 %v3666, 16
      %v4193 = vrot.slane %v4191, 2
      %v4194 = vshll.u32 %v3666, 16
      %v4196 = vrot.slane %v4194, 3
      %v4197 = vor.u32 %v4193, %v4196
      %v4198 = vsel %vm4164, %v4189, %v4197
      %v4200 = vshrl.u32 %v3663, 16
      %v4202 = vrot.slane %v4200, 2
      %v4203 = vshll.u32 %v3663, 16
      %v4205 = vrot.slane %v4203, 3
      %v4206 = vor.u32 %v4202, %v4205
      %v4208 = vshrl.u32 %v3667, 16
      %v4210 = vrot.slane %v4208, 2
      %v4211 = vshll.u32 %v3667, 16
      %v4213 = vrot.slane %v4211, 3
      %v4214 = vor.u32 %v4210, %v4213
      %v4215 = vsel %vm4164, %v4206, %v4214
      %v4217 = vshrl.u32 %v3664, 16
      %v4219 = vrot.slane %v4217, 2
      %v4220 = vshll.u32 %v3664, 16
      %v4222 = vrot.slane %v4220, 3
      %v4223 = vor.u32 %v4219, %v4222
      %v4225 = vshrl.u32 %v3668, 16
      %v4227 = vrot.slane %v4225, 2
      %v4228 = vshll.u32 %v3668, 16
      %v4230 = vrot.slane %v4228, 3
      %v4231 = vor.u32 %v4227, %v4230
      %v4232 = vsel %vm4164, %v4223, %v4231
      %v4234 = vshrl.u32 %v3669, 16
      %v4236 = vrot.slane %v4234, 2
      %v4237 = vshll.u32 %v3669, 16
      %v4239 = vrot.slane %v4237, 3
      %v4240 = vor.u32 %v4236, %v4239
      %v4241 = vsel %vm4164, %v4180, %v4240
      %v4243 = vshrl.u32 %v3670, 16
      %v4245 = vrot.slane %v4243, 2
      %v4246 = vshll.u32 %v3670, 16
      %v4248 = vrot.slane %v4246, 3
      %v4249 = vor.u32 %v4245, %v4248
      %v4250 = vsel %vm4164, %v4197, %v4249
      %v4252 = vshrl.u32 %v3671, 16
      %v4254 = vrot.slane %v4252, 2
      %v4255 = vshll.u32 %v3671, 16
      %v4257 = vrot.slane %v4255, 3
      %v4258 = vor.u32 %v4254, %v4257
      %v4259 = vsel %vm4164, %v4214, %v4258
      %v4261 = vshrl.u32 %v3672, 16
      %v4263 = vrot.slane %v4261, 2
      %v4264 = vshll.u32 %v3672, 16
      %v4266 = vrot.slane %v4264, 3
      %v4267 = vor.u32 %v4263, %v4266
      %v4268 = vsel %vm4164, %v4231, %v4267
      %v4270 = vshrl.u32 %v3673, 16
      %v4272 = vrot.slane %v4270, 2
      %v4273 = vshll.u32 %v3673, 16
      %v4275 = vrot.slane %v4273, 3
      %v4276 = vor.u32 %v4272, %v4275
      %v4277 = vsel %vm4164, %v4240, %v4276
      %v4279 = vshrl.u32 %v3674, 16
      %v4281 = vrot.slane %v4279, 2
      %v4282 = vshll.u32 %v3674, 16
      %v4284 = vrot.slane %v4282, 3
      %v4285 = vor.u32 %v4281, %v4284
      %v4286 = vsel %vm4164, %v4249, %v4285
      %v4288 = vshrl.u32 %v3675, 16
      %v4290 = vrot.slane %v4288, 2
      %v4291 = vshll.u32 %v3675, 16
      %v4293 = vrot.slane %v4291, 3
      %v4294 = vor.u32 %v4290, %v4293
      %v4295 = vsel %vm4164, %v4258, %v4294
      %v4297 = vshrl.u32 %v3676, 16
      %v4299 = vrot.slane %v4297, 2
      %v4300 = vshll.u32 %v3676, 16
      %v4302 = vrot.slane %v4300, 3
      %v4303 = vor.u32 %v4299, %v4302
      %v4304 = vsel %vm4164, %v4267, %v4303
      %v4306 = vshrl.u32 %v3677, 16
      %v4308 = vrot.slane %v4306, 2
      %v4309 = vshll.u32 %v3677, 16
      %v4311 = vrot.slane %v4309, 3
      %v4312 = vor.u32 %v4308, %v4311
      %v4313 = vsel %vm4164, %v4276, %v4312
      %v4315 = vshrl.u32 %v3678, 16
      %v4317 = vrot.slane %v4315, 2
      %v4318 = vshll.u32 %v3678, 16
      %v4320 = vrot.slane %v4318, 3
      %v4321 = vor.u32 %v4317, %v4320
      %v4322 = vsel %vm4164, %v4285, %v4321
      %v4324 = vshrl.u32 %v3679, 16
      %v4326 = vrot.slane %v4324, 2
      %v4327 = vshll.u32 %v3679, 16
      %v4329 = vrot.slane %v4327, 3
      %v4330 = vor.u32 %v4326, %v4329
      %v4331 = vsel %vm4164, %v4294, %v4330
      %v4333 = vshrl.u32 %v3680, 16
      %v4335 = vrot.slane %v4333, 2
      %v4336 = vshll.u32 %v3680, 16
      %v4338 = vrot.slane %v4336, 3
      %v4339 = vor.u32 %v4335, %v4338
      %v4340 = vsel %vm4164, %v4303, %v4339
      %v4342 = vshrl.u32 %v4160, 16
      %v4344 = vrot.slane %v4342, 2
      %v4345 = vshll.u32 %v4160, 16
      %v4347 = vrot.slane %v4345, 3
      %v4348 = vor.u32 %v4344, %v4347
      %v4349 = vsel %vm4164, %v4312, %v4348
      %v4351 = vshrl.u32 %v4161, 16
      %v4353 = vrot.slane %v4351, 2
      %v4354 = vshll.u32 %v4161, 16
      %v4356 = vrot.slane %v4354, 3
      %v4357 = vor.u32 %v4353, %v4356
      %v4358 = vsel %vm4164, %v4321, %v4357
      %v4360 = vshrl.u32 %v4162, 16
      %v4362 = vrot.slane %v4360, 2
      %v4363 = vshll.u32 %v4162, 16
      %v4365 = vrot.slane %v4363, 3
      %v4366 = vor.u32 %v4362, %v4365
      %v4367 = vsel %vm4164, %v4330, %v4366
      %v4369 = vshrl.u32 %v4163, 16
      %v4371 = vrot.slane %v4369, 2
      %v4372 = vshll.u32 %v4163, 16
      %v4374 = vrot.slane %v4372, 3
      %v4375 = vor.u32 %v4371, %v4374
      %v4376 = vsel %vm4164, %v4339, %v4375
      %v4461 = vunpack.c.l.b16 %v4090
      %v4462 = vunpack.c.l.b16 %v4091
      %v4463 = vunpack.c.l.b16 %v4092
      %v4464 = vunpack.c.l.b16 %v4093
      %v4465 = vunpack.c.l.b16 %v4094
      %v4466 = vunpack.c.l.b16 %v4095
      %v4467 = vunpack.c.l.b16 %v4096
      %v4468 = vunpack.c.l.b16 %v4097
      %v4469 = vunpack.c.l.b16 %v4098
      %v4470 = vunpack.c.l.b16 %v4099
      %v4471 = vunpack.c.l.b16 %v4100
      %v4472 = vunpack.c.l.b16 %v4101
      %v4473 = vunpack.c.l.b16 %v4102
      %v4474 = vunpack.c.l.b16 %v4103
      %v4475 = vunpack.c.l.b16 %v4104
      %v4476 = vunpack.c.l.b16 %v4105
      %v4477 = vunpack.c.l.b16 %v4106
      %v4478 = vunpack.c.l.b16 %v4107
      %v4479 = vunpack.c.l.b16 %v4108
      %v4480 = vunpack.c.l.b16 %v4109
      %v4481 = vunpack.c.l.b16 %v4110
      %v4482 = vunpack.c.l.b16 %v4111
      %v4483 = vunpack.c.l.b16 %v4112
      %v4484 = vunpack.c.l.b16 %v4113
      %v4485 = vunpack.c.l.b16 %v4114
      %v4486 = vunpack.c.l.b16 %v4115
      %v4487 = vunpack.c.l.b16 %v4116
      %v4488 = vunpack.c.l.b16 %v4117
      %v4489 = vunpack.c.l.b16 %v4118
      %v4490 = vunpack.c.l.b16 %v4119
      %v4491 = vunpack.c.l.b16 %v4120
      %v4492 = vunpack.c.l.b16 %v4121
      %v4493 = vunpack.c.l.b16 %v4122
      %v4494 = vunpack.c.l.b16 %v4123
      %v4495 = vunpack.c.l.b16 %v4124
      %v4496 = vunpack.c.l.b16 %v4125
      %v4497 = vunpack.c.l.b16 %v4126
      %v4498 = vunpack.c.l.b16 %v4127
      %v4499 = vunpack.c.l.b16 %v4128
      %v4500 = vunpack.c.l.b16 %v4129
      %v4501 = vunpack.c.l.b16 %v4130
      %v4502 = vunpack.c.l.b16 %v4131
      %v4503 = vunpack.c.l.b16 %v4132
      %v4504 = vunpack.c.l.b16 %v4133
      %v4505 = vunpack.c.l.b16 %v4134
      %v4506 = vunpack.c.l.b16 %v4135
      %v4507 = vunpack.c.l.b16 %v4136
      %v4508 = vunpack.c.l.b16 %v4137
      %v4509 = vunpack.c.l.b16 %v4138
      %v4510 = vunpack.c.l.b16 %v4139
      %v4511 = vunpack.c.l.b16 %v4140
      %v4512 = vunpack.c.l.b16 %v4141
      %v4513 = vunpack.c.l.b16 %v4142
      %v4514 = vunpack.c.l.b16 %v4143
      %v4515 = vunpack.c.l.b16 %v4144
      %v4516 = vunpack.c.l.b16 %v4145
      %v4517 = vunpack.c.l.b16 %v4146
      %v4518 = vunpack.c.l.b16 %v4147
      %v4519 = vunpack.c.l.b16 %v4148
      %v4520 = vunpack.c.l.b16 %v4149
      %v4521 = vunpack.c.l.b16 %v4150
      %v4522 = vunpack.c.l.b16 %v4151
      %v4523 = vunpack.c.l.b16 %v4152
      %v4524 = vunpack.c.l.b16 %v4153
      %v4525 = vpack.c.b16 %v4462, %v4461
      %v4526 = vpack.c.b16 %v4464, %v4463
      %v4527 = vpack.c.b16 %v4466, %v4465
      %v4528 = vpack.c.b16 %v4468, %v4467
      %v4529 = vpack.c.b16 %v4470, %v4469
      %v4530 = vpack.c.b16 %v4472, %v4471
      %v4531 = vpack.c.b16 %v4474, %v4473
      %v4532 = vpack.c.b16 %v4476, %v4475
      %v4533 = vpack.c.b16 %v4478, %v4477
      %v4534 = vpack.c.b16 %v4480, %v4479
      %v4535 = vpack.c.b16 %v4482, %v4481
      %v4536 = vpack.c.b16 %v4484, %v4483
      %v4537 = vpack.c.b16 %v4486, %v4485
      %v4538 = vpack.c.b16 %v4488, %v4487
      %v4539 = vpack.c.b16 %v4490, %v4489
      %v4540 = vpack.c.b16 %v4492, %v4491
      %v4541 = vpack.c.b16 %v4494, %v4493
      %v4542 = vpack.c.b16 %v4496, %v4495
      %v4543 = vpack.c.b16 %v4498, %v4497
      %v4544 = vpack.c.b16 %v4500, %v4499
      %v4545 = vpack.c.b16 %v4502, %v4501
      %v4546 = vpack.c.b16 %v4504, %v4503
      %v4547 = vpack.c.b16 %v4506, %v4505
      %v4548 = vpack.c.b16 %v4508, %v4507
      %v4549 = vpack.c.b16 %v4510, %v4509
      %v4550 = vpack.c.b16 %v4512, %v4511
      %v4551 = vpack.c.b16 %v4514, %v4513
      %v4552 = vpack.c.b16 %v4516, %v4515
      %v4553 = vpack.c.b16 %v4518, %v4517
      %v4554 = vpack.c.b16 %v4520, %v4519
      %v4555 = vpack.c.b16 %v4522, %v4521
      %v4556 = vpack.c.b16 %v4524, %v4523
      %4589 = vmatpush.bf16.msra.mxu0 %v4532
      %4590 = vmatpush.bf16.msra.mxu0 %v4531
      %4591 = vmatpush.bf16.msra.mxu0 %v4530
      %4592 = vmatpush.bf16.msra.mxu0 %v4529
      %4593 = vmatpush.bf16.msra.mxu0 %v4528
      %4594 = vmatpush.bf16.msra.mxu0 %v4527
      %4595 = vmatpush.bf16.msra.mxu0 %v4526
      %4596 = vmatpush.bf16.msra.mxu0 %v4525
      %4597 = vmatmul.bf16.gmra.mxu0 %v4181
      %v4598 = vpop.f32.mrf.mxu0
      %v4599 = vadd.f32 0.0, %v4598
      %v4600 = vpop.f32.mrf.mxu0
      %v4601 = vadd.f32 0.0, %v4600
      %4602 = vmatmul.bf16.gmra.mxu0 %v4241
      %v4603 = vpop.f32.mrf.mxu0
      %v4604 = vadd.f32 0.0, %v4603
      %v4605 = vpop.f32.mrf.mxu0
      %v4606 = vadd.f32 0.0, %v4605
      %4607 = vmatmul.bf16.gmra.mxu0 %v4277
      %v4608 = vpop.f32.mrf.mxu0
      %v4609 = vadd.f32 0.0, %v4608
      %v4610 = vpop.f32.mrf.mxu0
      %v4611 = vadd.f32 0.0, %v4610
      %4612 = vmatmul.bf16.gmra.mxu0 %v4313
      %v4613 = vpop.f32.mrf.mxu0
      %v4614 = vadd.f32 0.0, %v4613
      %v4615 = vpop.f32.mrf.mxu0
      %v4616 = vadd.f32 0.0, %v4615
      %4617 = vmatmul.bf16.gmra.mxu0 %v4349
      %v4618 = vpop.f32.mrf.mxu0
      %v4619 = vadd.f32 0.0, %v4618
      %v4620 = vpop.f32.mrf.mxu0
      %v4621 = vadd.f32 0.0, %v4620
      %4622 = vdwg.mxu0
      %4623 = vmatpush.bf16.msra.mxu0 %v4540
      %4624 = vmatpush.bf16.msra.mxu0 %v4539
      %4625 = vmatpush.bf16.msra.mxu0 %v4538
      %4626 = vmatpush.bf16.msra.mxu0 %v4537
      %4627 = vmatpush.bf16.msra.mxu0 %v4536
      %4628 = vmatpush.bf16.msra.mxu0 %v4535
      %4629 = vmatpush.bf16.msra.mxu0 %v4534
      %4630 = vmatpush.bf16.msra.mxu0 %v4533
      %4631 = vmatmul.bf16.gmra.mxu0 %v4198
      %v4632 = vpop.f32.mrf.mxu0
      %v4633 = vadd.f32 %v4599, %v4632
      %v4634 = vpop.f32.mrf.mxu0
      %v4635 = vadd.f32 %v4601, %v4634
      %4636 = vmatmul.bf16.gmra.mxu0 %v4250
      %v4637 = vpop.f32.mrf.mxu0
      %v4638 = vadd.f32 %v4604, %v4637
      %v4639 = vpop.f32.mrf.mxu0
      %v4640 = vadd.f32 %v4606, %v4639
      %4641 = vmatmul.bf16.gmra.mxu0 %v4286
      %v4642 = vpop.f32.mrf.mxu0
      %v4643 = vadd.f32 %v4609, %v4642
      %v4644 = vpop.f32.mrf.mxu0
      %v4645 = vadd.f32 %v4611, %v4644
      %4646 = vmatmul.bf16.gmra.mxu0 %v4322
      %v4647 = vpop.f32.mrf.mxu0
      %v4648 = vadd.f32 %v4614, %v4647
      %v4649 = vpop.f32.mrf.mxu0
      %v4650 = vadd.f32 %v4616, %v4649
      %4651 = vmatmul.bf16.gmra.mxu0 %v4358
      %v4652 = vpop.f32.mrf.mxu0
      %v4653 = vadd.f32 %v4619, %v4652
      %v4654 = vpop.f32.mrf.mxu0
      %v4655 = vadd.f32 %v4621, %v4654
      %4656 = vdwg.mxu0
      %4657 = vmatpush.bf16.msra.mxu0 %v4548
      %4658 = vmatpush.bf16.msra.mxu0 %v4547
      %4659 = vmatpush.bf16.msra.mxu0 %v4546
      %4660 = vmatpush.bf16.msra.mxu0 %v4545
      %4661 = vmatpush.bf16.msra.mxu0 %v4544
      %4662 = vmatpush.bf16.msra.mxu0 %v4543
      %4663 = vmatpush.bf16.msra.mxu0 %v4542
      %4664 = vmatpush.bf16.msra.mxu0 %v4541
      %4665 = vmatmul.bf16.gmra.mxu0 %v4215
      %v4666 = vpop.f32.mrf.mxu0
      %v4667 = vadd.f32 %v4633, %v4666
      %v4668 = vpop.f32.mrf.mxu0
      %v4669 = vadd.f32 %v4635, %v4668
      %4670 = vmatmul.bf16.gmra.mxu0 %v4259
      %v4671 = vpop.f32.mrf.mxu0
      %v4672 = vadd.f32 %v4638, %v4671
      %v4673 = vpop.f32.mrf.mxu0
      %v4674 = vadd.f32 %v4640, %v4673
      %4675 = vmatmul.bf16.gmra.mxu0 %v4295
      %v4676 = vpop.f32.mrf.mxu0
      %v4677 = vadd.f32 %v4643, %v4676
      %v4678 = vpop.f32.mrf.mxu0
      %v4679 = vadd.f32 %v4645, %v4678
      %4680 = vmatmul.bf16.gmra.mxu0 %v4331
      %v4681 = vpop.f32.mrf.mxu0
      %v4682 = vadd.f32 %v4648, %v4681
      %v4683 = vpop.f32.mrf.mxu0
      %v4684 = vadd.f32 %v4650, %v4683
      %4685 = vmatmul.bf16.gmra.mxu0 %v4367
      %v4686 = vpop.f32.mrf.mxu0
      %v4687 = vadd.f32 %v4653, %v4686
      %v4688 = vpop.f32.mrf.mxu0
      %v4689 = vadd.f32 %v4655, %v4688
      %4690 = vdwg.mxu0
      %4691 = vmatpush.bf16.msra.mxu0 %v4556
      %4692 = vmatpush.bf16.msra.mxu0 %v4555
      %4693 = vmatpush.bf16.msra.mxu0 %v4554
      %4694 = vmatpush.bf16.msra.mxu0 %v4553
      %4695 = vmatpush.bf16.msra.mxu0 %v4552
      %4696 = vmatpush.bf16.msra.mxu0 %v4551
      %4697 = vmatpush.bf16.msra.mxu0 %v4550
      %4698 = vmatpush.bf16.msra.mxu0 %v4549
      %4699 = vmatmul.bf16.gmra.mxu0 %v4232
      %v4700 = vpop.f32.mrf.mxu0
      %v4701 = vadd.f32 %v4667, %v4700
      %v4702 = vpop.f32.mrf.mxu0
      %v4703 = vadd.f32 %v4669, %v4702
      %4704 = vmatmul.bf16.gmra.mxu0 %v4268
      %v4705 = vpop.f32.mrf.mxu0
      %v4706 = vadd.f32 %v4672, %v4705
      %v4707 = vpop.f32.mrf.mxu0
      %v4708 = vadd.f32 %v4674, %v4707
      %4709 = vmatmul.bf16.gmra.mxu0 %v4304
      %v4710 = vpop.f32.mrf.mxu0
      %v4711 = vadd.f32 %v4677, %v4710
      %v4712 = vpop.f32.mrf.mxu0
      %v4713 = vadd.f32 %v4679, %v4712
      %4714 = vmatmul.bf16.gmra.mxu0 %v4340
      %v4715 = vpop.f32.mrf.mxu0
      %v4716 = vadd.f32 %v4682, %v4715
      %v4717 = vpop.f32.mrf.mxu0
      %v4718 = vadd.f32 %v4684, %v4717
      %4719 = vmatmul.bf16.gmra.mxu0 %v4376
      %v4720 = vpop.f32.mrf.mxu0
      %v4721 = vadd.f32 %v4687, %v4720
      %v4722 = vpop.f32.mrf.mxu0
      %v4723 = vadd.f32 %v4689, %v4722
      %4724 = vdwg.mxu0
      %v4725 = vadd.f32 %v4077, %v4701
      %v4726 = vadd.f32 %v4078, %v4703
      %v4727 = vadd.f32 %v4079, %v4706
      %v4728 = vadd.f32 %v4080, %v4708
      %v4729 = vadd.f32 %v4081, %v4711
      %v4730 = vadd.f32 %v4082, %v4713
      %v4731 = vadd.f32 %v4083, %v4716
      %v4732 = vadd.f32 %v4084, %v4718
      %v4733 = vadd.f32 %v4085, %v4721
      %v4734 = vadd.f32 %v4086, %v4723
      %v4735 = vld [vmem:[%s165 + $0x20] sm:$0x88]
      %v4736 = vld [vmem:[%s165 + $0x28] sm:$0x88]
      %s4737 = scalar_lea.vmem %s1, 2048
      %v4738 = vld [vmem:[%s4737] sm:$0xf]
      %v4739 = vld [vmem:[%s4737 + $0x4] sm:$0xf]
      %v4740 = vld [vmem:[%s4737 + $0x8] sm:$0xf]
      %v4741 = vld [vmem:[%s4737 + $0xc] sm:$0xf]
      %v4742 = vld [vmem:[%s4737 + $0x10] sm:$0xf]
      %v4743 = vld [vmem:[%s4737 + $0x14] sm:$0xf]
      %v4744 = vld [vmem:[%s4737 + $0x18] sm:$0xf]
      %v4745 = vld [vmem:[%s4737 + $0x1c] sm:$0xf]
      %v4746 = vld [vmem:[%s4737 + $0x20] sm:$0xf]
      %v4747 = vld [vmem:[%s4737 + $0x24] sm:$0xf]
      %v4748 = vld [vmem:[%s4737 + $0x28] sm:$0xf]
      %v4749 = vld [vmem:[%s4737 + $0x2c] sm:$0xf]
      %v4750 = vld [vmem:[%s4737 + $0x30] sm:$0xf]
      %v4751 = vld [vmem:[%s4737 + $0x34] sm:$0xf]
      %v4752 = vld [vmem:[%s4737 + $0x38] sm:$0xf]
      %v4753 = vld [vmem:[%s4737 + $0x3c] sm:$0xf]
      %v4754 = vld [vmem:[%s4737 + $0x40] sm:$0xf]
      %v4755 = vld [vmem:[%s4737 + $0x44] sm:$0xf]
      %v4756 = vld [vmem:[%s4737 + $0x48] sm:$0xf]
      %v4757 = vld [vmem:[%s4737 + $0x4c] sm:$0xf]
      %v4758 = vld [vmem:[%s4737 + $0x50] sm:$0xf]
      %v4759 = vld [vmem:[%s4737 + $0x54] sm:$0xf]
      %v4760 = vld [vmem:[%s4737 + $0x58] sm:$0xf]
      %v4761 = vld [vmem:[%s4737 + $0x5c] sm:$0xf]
      %v4762 = vld [vmem:[%s4737 + $0x60] sm:$0xf]
      %v4763 = vld [vmem:[%s4737 + $0x64] sm:$0xf]
      %v4764 = vld [vmem:[%s4737 + $0x68] sm:$0xf]
      %v4765 = vld [vmem:[%s4737 + $0x6c] sm:$0xf]
      %v4766 = vld [vmem:[%s4737 + $0x70] sm:$0xf]
      %v4767 = vld [vmem:[%s4737 + $0x74] sm:$0xf]
      %v4768 = vld [vmem:[%s4737 + $0x78] sm:$0xf]
      %v4769 = vld [vmem:[%s4737 + $0x7c] sm:$0xf]
      %v4770 = vld [vmem:[%s4737 + $0x80] sm:$0xf]
      %v4771 = vld [vmem:[%s4737 + $0x84] sm:$0xf]
      %v4772 = vld [vmem:[%s4737 + $0x88] sm:$0xf]
      %v4773 = vld [vmem:[%s4737 + $0x8c] sm:$0xf]
      %v4774 = vld [vmem:[%s4737 + $0x90] sm:$0xf]
      %v4775 = vld [vmem:[%s4737 + $0x94] sm:$0xf]
      %v4776 = vld [vmem:[%s4737 + $0x98] sm:$0xf]
      %v4777 = vld [vmem:[%s4737 + $0x9c] sm:$0xf]
      %v4778 = vld [vmem:[%s4737 + $0xa0] sm:$0xf]
      %v4779 = vld [vmem:[%s4737 + $0xa4] sm:$0xf]
      %v4780 = vld [vmem:[%s4737 + $0xa8] sm:$0xf]
      %v4781 = vld [vmem:[%s4737 + $0xac] sm:$0xf]
      %v4782 = vld [vmem:[%s4737 + $0xb0] sm:$0xf]
      %v4783 = vld [vmem:[%s4737 + $0xb4] sm:$0xf]
      %v4784 = vld [vmem:[%s4737 + $0xb8] sm:$0xf]
      %v4785 = vld [vmem:[%s4737 + $0xbc] sm:$0xf]
      %v4786 = vld [vmem:[%s4737 + $0xc0] sm:$0xf]
      %v4787 = vld [vmem:[%s4737 + $0xc4] sm:$0xf]
      %v4788 = vld [vmem:[%s4737 + $0xc8] sm:$0xf]
      %v4789 = vld [vmem:[%s4737 + $0xcc] sm:$0xf]
      %v4790 = vld [vmem:[%s4737 + $0xd0] sm:$0xf]
      %v4791 = vld [vmem:[%s4737 + $0xd4] sm:$0xf]
      %v4792 = vld [vmem:[%s4737 + $0xd8] sm:$0xf]
      %v4793 = vld [vmem:[%s4737 + $0xdc] sm:$0xf]
      %v4794 = vld [vmem:[%s4737 + $0xe0] sm:$0xf]
      %v4795 = vld [vmem:[%s4737 + $0xe4] sm:$0xf]
      %v4796 = vld [vmem:[%s4737 + $0xe8] sm:$0xf]
      %v4797 = vld [vmem:[%s4737 + $0xec] sm:$0xf]
      %v4798 = vld [vmem:[%s4737 + $0xf0] sm:$0xf]
      %v4799 = vld [vmem:[%s4737 + $0xf4] sm:$0xf]
      %v4800 = vld [vmem:[%s4737 + $0xf8] sm:$0xf]
      %v4801 = vld [vmem:[%s4737 + $0xfc] sm:$0xf]
      %v4804 = vunpack.c.l.b16 %v4735
      %v4805 = vunpack.c.h.b16 %v4735
      %v4806 = vunpack.c.l.b16 %v4736
      %v4807 = vunpack.c.h.b16 %v4736
      %v4808 = vpack.c.b16 %v3621, %v4804
      %v4809 = vpack.c.b16 %v3622, %v4805
      %v4810 = vpack.c.b16 %v3623, %v4806
      %v4811 = vpack.c.b16 %v3624, %v4807
      %vm4812 = vcmask 1044480
      %v4813 = vrot.slane %v4808, 3
      %v4814 = vrot.slane %v3665, 3
      %v4815 = vsel %vm4812, %v4813, %v4814
      %v4816 = vrot.slane %v4809, 3
      %v4817 = vrot.slane %v3666, 3
      %v4818 = vsel %vm4812, %v4816, %v4817
      %v4819 = vrot.slane %v4810, 3
      %v4820 = vrot.slane %v3667, 3
      %v4821 = vsel %vm4812, %v4819, %v4820
      %v4822 = vrot.slane %v4811, 3
      %v4823 = vrot.slane %v3668, 3
      %v4824 = vsel %vm4812, %v4822, %v4823
      %v4825 = vrot.slane %v3669, 3
      %v4826 = vsel %vm4812, %v4814, %v4825
      %v4827 = vrot.slane %v3670, 3
      %v4828 = vsel %vm4812, %v4817, %v4827
      %v4829 = vrot.slane %v3671, 3
      %v4830 = vsel %vm4812, %v4820, %v4829
      %v4831 = vrot.slane %v3672, 3
      %v4832 = vsel %vm4812, %v4823, %v4831
      %v4833 = vrot.slane %v3673, 3
      %v4834 = vsel %vm4812, %v4825, %v4833
      %v4835 = vrot.slane %v3674, 3
      %v4836 = vsel %vm4812, %v4827, %v4835
      %v4837 = vrot.slane %v3675, 3
      %v4838 = vsel %vm4812, %v4829, %v4837
      %v4839 = vrot.slane %v3676, 3
      %v4840 = vsel %vm4812, %v4831, %v4839
      %v4841 = vrot.slane %v3677, 3
      %v4842 = vsel %vm4812, %v4833, %v4841
      %v4843 = vrot.slane %v3678, 3
      %v4844 = vsel %vm4812, %v4835, %v4843
      %v4845 = vrot.slane %v3679, 3
      %v4846 = vsel %vm4812, %v4837, %v4845
      %v4847 = vrot.slane %v3680, 3
      %v4848 = vsel %vm4812, %v4839, %v4847
      %v4849 = vrot.slane %v4160, 3
      %v4850 = vsel %vm4812, %v4841, %v4849
      %v4851 = vrot.slane %v4161, 3
      %v4852 = vsel %vm4812, %v4843, %v4851
      %v4853 = vrot.slane %v4162, 3
      %v4854 = vsel %vm4812, %v4845, %v4853
      %v4855 = vrot.slane %v4163, 3
      %v4856 = vsel %vm4812, %v4847, %v4855
      %v4941 = vunpack.c.l.b16 %v4738
      %v4942 = vunpack.c.l.b16 %v4739
      %v4943 = vunpack.c.l.b16 %v4740
      %v4944 = vunpack.c.l.b16 %v4741
      %v4945 = vunpack.c.l.b16 %v4742
      %v4946 = vunpack.c.l.b16 %v4743
      %v4947 = vunpack.c.l.b16 %v4744
      %v4948 = vunpack.c.l.b16 %v4745
      %v4949 = vunpack.c.l.b16 %v4746
      %v4950 = vunpack.c.l.b16 %v4747
      %v4951 = vunpack.c.l.b16 %v4748
      %v4952 = vunpack.c.l.b16 %v4749
      %v4953 = vunpack.c.l.b16 %v4750
      %v4954 = vunpack.c.l.b16 %v4751
      %v4955 = vunpack.c.l.b16 %v4752
      %v4956 = vunpack.c.l.b16 %v4753
      %v4957 = vunpack.c.l.b16 %v4754
      %v4958 = vunpack.c.l.b16 %v4755
      %v4959 = vunpack.c.l.b16 %v4756
      %v4960 = vunpack.c.l.b16 %v4757
      %v4961 = vunpack.c.l.b16 %v4758
      %v4962 = vunpack.c.l.b16 %v4759
      %v4963 = vunpack.c.l.b16 %v4760
      %v4964 = vunpack.c.l.b16 %v4761
      %v4965 = vunpack.c.l.b16 %v4762
      %v4966 = vunpack.c.l.b16 %v4763
      %v4967 = vunpack.c.l.b16 %v4764
      %v4968 = vunpack.c.l.b16 %v4765
      %v4969 = vunpack.c.l.b16 %v4766
      %v4970 = vunpack.c.l.b16 %v4767
      %v4971 = vunpack.c.l.b16 %v4768
      %v4972 = vunpack.c.l.b16 %v4769
      %v4973 = vunpack.c.l.b16 %v4770
      %v4974 = vunpack.c.l.b16 %v4771
      %v4975 = vunpack.c.l.b16 %v4772
      %v4976 = vunpack.c.l.b16 %v4773
      %v4977 = vunpack.c.l.b16 %v4774
      %v4978 = vunpack.c.l.b16 %v4775
      %v4979 = vunpack.c.l.b16 %v4776
      %v4980 = vunpack.c.l.b16 %v4777
      %v4981 = vunpack.c.l.b16 %v4778
      %v4982 = vunpack.c.l.b16 %v4779
      %v4983 = vunpack.c.l.b16 %v4780
      %v4984 = vunpack.c.l.b16 %v4781
      %v4985 = vunpack.c.l.b16 %v4782
      %v4986 = vunpack.c.l.b16 %v4783
      %v4987 = vunpack.c.l.b16 %v4784
      %v4988 = vunpack.c.l.b16 %v4785
      %v4989 = vunpack.c.l.b16 %v4786
      %v4990 = vunpack.c.l.b16 %v4787
      %v4991 = vunpack.c.l.b16 %v4788
      %v4992 = vunpack.c.l.b16 %v4789
      %v4993 = vunpack.c.l.b16 %v4790
      %v4994 = vunpack.c.l.b16 %v4791
      %v4995 = vunpack.c.l.b16 %v4792
      %v4996 = vunpack.c.l.b16 %v4793
      %v4997 = vunpack.c.l.b16 %v4794
      %v4998 = vunpack.c.l.b16 %v4795
      %v4999 = vunpack.c.l.b16 %v4796
      %v5000 = vunpack.c.l.b16 %v4797
      %v5001 = vunpack.c.l.b16 %v4798
      %v5002 = vunpack.c.l.b16 %v4799
      %v5003 = vunpack.c.l.b16 %v4800
      %v5004 = vunpack.c.l.b16 %v4801
      %v5005 = vpack.c.b16 %v4942, %v4941
      %v5006 = vpack.c.b16 %v4944, %v4943
      %v5007 = vpack.c.b16 %v4946, %v4945
      %v5008 = vpack.c.b16 %v4948, %v4947
      %v5009 = vpack.c.b16 %v4950, %v4949
      %v5010 = vpack.c.b16 %v4952, %v4951
      %v5011 = vpack.c.b16 %v4954, %v4953
      %v5012 = vpack.c.b16 %v4956, %v4955
      %v5013 = vpack.c.b16 %v4958, %v4957
      %v5014 = vpack.c.b16 %v4960, %v4959
      %v5015 = vpack.c.b16 %v4962, %v4961
      %v5016 = vpack.c.b16 %v4964, %v4963
      %v5017 = vpack.c.b16 %v4966, %v4965
      %v5018 = vpack.c.b16 %v4968, %v4967
      %v5019 = vpack.c.b16 %v4970, %v4969
      %v5020 = vpack.c.b16 %v4972, %v4971
      %v5021 = vpack.c.b16 %v4974, %v4973
      %v5022 = vpack.c.b16 %v4976, %v4975
      %v5023 = vpack.c.b16 %v4978, %v4977
      %v5024 = vpack.c.b16 %v4980, %v4979
      %v5025 = vpack.c.b16 %v4982, %v4981
      %v5026 = vpack.c.b16 %v4984, %v4983
      %v5027 = vpack.c.b16 %v4986, %v4985
      %v5028 = vpack.c.b16 %v4988, %v4987
      %v5029 = vpack.c.b16 %v4990, %v4989
      %v5030 = vpack.c.b16 %v4992, %v4991
      %v5031 = vpack.c.b16 %v4994, %v4993
      %v5032 = vpack.c.b16 %v4996, %v4995
      %v5033 = vpack.c.b16 %v4998, %v4997
      %v5034 = vpack.c.b16 %v5000, %v4999
      %v5035 = vpack.c.b16 %v5002, %v5001
      %v5036 = vpack.c.b16 %v5004, %v5003
      %5069 = vmatpush.bf16.msra.mxu0 %v5012
      %5070 = vmatpush.bf16.msra.mxu0 %v5011
      %5071 = vmatpush.bf16.msra.mxu0 %v5010
      %5072 = vmatpush.bf16.msra.mxu0 %v5009
      %5073 = vmatpush.bf16.msra.mxu0 %v5008
      %5074 = vmatpush.bf16.msra.mxu0 %v5007
      %5075 = vmatpush.bf16.msra.mxu0 %v5006
      %5076 = vmatpush.bf16.msra.mxu0 %v5005
      %5077 = vmatmul.bf16.gmra.mxu0 %v4815
      %v5078 = vpop.f32.mrf.mxu0
      %v5079 = vadd.f32 0.0, %v5078
      %v5080 = vpop.f32.mrf.mxu0
      %v5081 = vadd.f32 0.0, %v5080
      %5082 = vmatmul.bf16.gmra.mxu0 %v4826
      %v5083 = vpop.f32.mrf.mxu0
      %v5084 = vadd.f32 0.0, %v5083
      %v5085 = vpop.f32.mrf.mxu0
      %v5086 = vadd.f32 0.0, %v5085
      %5087 = vmatmul.bf16.gmra.mxu0 %v4834
      %v5088 = vpop.f32.mrf.mxu0
      %v5089 = vadd.f32 0.0, %v5088
      %v5090 = vpop.f32.mrf.mxu0
      %v5091 = vadd.f32 0.0, %v5090
      %5092 = vmatmul.bf16.gmra.mxu0 %v4842
      %v5093 = vpop.f32.mrf.mxu0
      %v5094 = vadd.f32 0.0, %v5093
      %v5095 = vpop.f32.mrf.mxu0
      %v5096 = vadd.f32 0.0, %v5095
      %5097 = vmatmul.bf16.gmra.mxu0 %v4850
      %v5098 = vpop.f32.mrf.mxu0
      %v5099 = vadd.f32 0.0, %v5098
      %v5100 = vpop.f32.mrf.mxu0
      %v5101 = vadd.f32 0.0, %v5100
      %5102 = vdwg.mxu0
      %5103 = vmatpush.bf16.msra.mxu0 %v5020
      %5104 = vmatpush.bf16.msra.mxu0 %v5019
      %5105 = vmatpush.bf16.msra.mxu0 %v5018
      %5106 = vmatpush.bf16.msra.mxu0 %v5017
      %5107 = vmatpush.bf16.msra.mxu0 %v5016
      %5108 = vmatpush.bf16.msra.mxu0 %v5015
      %5109 = vmatpush.bf16.msra.mxu0 %v5014
      %5110 = vmatpush.bf16.msra.mxu0 %v5013
      %5111 = vmatmul.bf16.gmra.mxu0 %v4818
      %v5112 = vpop.f32.mrf.mxu0
      %v5113 = vadd.f32 %v5079, %v5112
      %v5114 = vpop.f32.mrf.mxu0
      %v5115 = vadd.f32 %v5081, %v5114
      %5116 = vmatmul.bf16.gmra.mxu0 %v4828
      %v5117 = vpop.f32.mrf.mxu0
      %v5118 = vadd.f32 %v5084, %v5117
      %v5119 = vpop.f32.mrf.mxu0
      %v5120 = vadd.f32 %v5086, %v5119
      %5121 = vmatmul.bf16.gmra.mxu0 %v4836
      %v5122 = vpop.f32.mrf.mxu0
      %v5123 = vadd.f32 %v5089, %v5122
      %v5124 = vpop.f32.mrf.mxu0
      %v5125 = vadd.f32 %v5091, %v5124
      %5126 = vmatmul.bf16.gmra.mxu0 %v4844
      %v5127 = vpop.f32.mrf.mxu0
      %v5128 = vadd.f32 %v5094, %v5127
      %v5129 = vpop.f32.mrf.mxu0
      %v5130 = vadd.f32 %v5096, %v5129
      %5131 = vmatmul.bf16.gmra.mxu0 %v4852
      %v5132 = vpop.f32.mrf.mxu0
      %v5133 = vadd.f32 %v5099, %v5132
      %v5134 = vpop.f32.mrf.mxu0
      %v5135 = vadd.f32 %v5101, %v5134
      %5136 = vdwg.mxu0
      %5137 = vmatpush.bf16.msra.mxu0 %v5028
      %5138 = vmatpush.bf16.msra.mxu0 %v5027
      %5139 = vmatpush.bf16.msra.mxu0 %v5026
      %5140 = vmatpush.bf16.msra.mxu0 %v5025
      %5141 = vmatpush.bf16.msra.mxu0 %v5024
      %5142 = vmatpush.bf16.msra.mxu0 %v5023
      %5143 = vmatpush.bf16.msra.mxu0 %v5022
      %5144 = vmatpush.bf16.msra.mxu0 %v5021
      %5145 = vmatmul.bf16.gmra.mxu0 %v4821
      %v5146 = vpop.f32.mrf.mxu0
      %v5147 = vadd.f32 %v5113, %v5146
      %v5148 = vpop.f32.mrf.mxu0
      %v5149 = vadd.f32 %v5115, %v5148
      %5150 = vmatmul.bf16.gmra.mxu0 %v4830
      %v5151 = vpop.f32.mrf.mxu0
      %v5152 = vadd.f32 %v5118, %v5151
      %v5153 = vpop.f32.mrf.mxu0
      %v5154 = vadd.f32 %v5120, %v5153
      %5155 = vmatmul.bf16.gmra.mxu0 %v4838
      %v5156 = vpop.f32.mrf.mxu0
      %v5157 = vadd.f32 %v5123, %v5156
      %v5158 = vpop.f32.mrf.mxu0
      %v5159 = vadd.f32 %v5125, %v5158
      %5160 = vmatmul.bf16.gmra.mxu0 %v4846
      %v5161 = vpop.f32.mrf.mxu0
      %v5162 = vadd.f32 %v5128, %v5161
      %v5163 = vpop.f32.mrf.mxu0
      %v5164 = vadd.f32 %v5130, %v5163
      %5165 = vmatmul.bf16.gmra.mxu0 %v4854
      %v5166 = vpop.f32.mrf.mxu0
      %v5167 = vadd.f32 %v5133, %v5166
      %v5168 = vpop.f32.mrf.mxu0
      %v5169 = vadd.f32 %v5135, %v5168
      %5170 = vdwg.mxu0
      %5171 = vmatpush.bf16.msra.mxu0 %v5036
      %5172 = vmatpush.bf16.msra.mxu0 %v5035
      %5173 = vmatpush.bf16.msra.mxu0 %v5034
      %5174 = vmatpush.bf16.msra.mxu0 %v5033
      %5175 = vmatpush.bf16.msra.mxu0 %v5032
      %5176 = vmatpush.bf16.msra.mxu0 %v5031
      %5177 = vmatpush.bf16.msra.mxu0 %v5030
      %5178 = vmatpush.bf16.msra.mxu0 %v5029
      %5179 = vmatmul.bf16.gmra.mxu0 %v4824
      %v5180 = vpop.f32.mrf.mxu0
      %v5181 = vadd.f32 %v5147, %v5180
      %v5182 = vpop.f32.mrf.mxu0
      %v5183 = vadd.f32 %v5149, %v5182
      %5184 = vmatmul.bf16.gmra.mxu0 %v4832
      %v5185 = vpop.f32.mrf.mxu0
      %v5186 = vadd.f32 %v5152, %v5185
      %v5187 = vpop.f32.mrf.mxu0
      %v5188 = vadd.f32 %v5154, %v5187
      %5189 = vmatmul.bf16.gmra.mxu0 %v4840
      %v5190 = vpop.f32.mrf.mxu0
      %v5191 = vadd.f32 %v5157, %v5190
      %v5192 = vpop.f32.mrf.mxu0
      %v5193 = vadd.f32 %v5159, %v5192
      %5194 = vmatmul.bf16.gmra.mxu0 %v4848
      %v5195 = vpop.f32.mrf.mxu0
      %v5196 = vadd.f32 %v5162, %v5195
      %v5197 = vpop.f32.mrf.mxu0
      %v5198 = vadd.f32 %v5164, %v5197
      %5199 = vmatmul.bf16.gmra.mxu0 %v4856
      %v5200 = vpop.f32.mrf.mxu0
      %v5201 = vadd.f32 %v5167, %v5200
      %v5202 = vpop.f32.mrf.mxu0
      %v5203 = vadd.f32 %v5169, %v5202
      %5204 = vdwg.mxu0
      %v5205 = vadd.f32 %v4725, %v5181
      %v5206 = vadd.f32 %v4726, %v5183
      %v5207 = vadd.f32 %v4727, %v5186
      %v5208 = vadd.f32 %v4728, %v5188
      %v5209 = vadd.f32 %v4729, %v5191
      %v5210 = vadd.f32 %v4730, %v5193
      %v5211 = vadd.f32 %v4731, %v5196
      %v5212 = vadd.f32 %v4732, %v5198
      %v5213 = vadd.f32 %v4733, %v5201
      %v5214 = vadd.f32 %v4734, %v5203
      %v5215 = vld [vmem:[%s2] sm:$0x1]
      %v5217 = vperm.slane %v5215, 0
      %v5219 = vadd.f32 %v5205, %v5217
      %v5220 = vadd.f32 %v5206, %v5217
      %v5221 = vadd.f32 %v5207, %v5217
      %v5222 = vadd.f32 %v5208, %v5217
      %v5223 = vadd.f32 %v5209, %v5217
      %v5224 = vadd.f32 %v5210, %v5217
      %v5225 = vadd.f32 %v5211, %v5217
      %v5226 = vadd.f32 %v5212, %v5217
      %v5227 = vadd.f32 %v5213, %v5217
      %v5228 = vadd.f32 %v5214, %v5217
      %v5229 = vmax.f32 %v5219, 0.0
      %v5230 = vmax.f32 %v5220, 0.0
      %v5231 = vmax.f32 %v5221, 0.0
      %v5232 = vmax.f32 %v5222, 0.0
      %v5233 = vmax.f32 %v5223, 0.0
      %v5234 = vmax.f32 %v5224, 0.0
      %v5235 = vmax.f32 %v5225, 0.0
      %v5236 = vmax.f32 %v5226, 0.0
      %v5237 = vmax.f32 %v5227, 0.0
      %v5238 = vmax.f32 %v5228, 0.0
      %v5239 = vpack.c.bf16 %v5229, %v5229
      %v5240 = vpack.c.bf16 %v5230, %v5230
      %v5241 = vpack.c.bf16 %v5231, %v5231
      %v5242 = vpack.c.bf16 %v5232, %v5232
      %v5243 = vpack.c.bf16 %v5233, %v5233
      %v5244 = vpack.c.bf16 %v5234, %v5234
      %v5245 = vpack.c.bf16 %v5235, %v5235
      %v5246 = vpack.c.bf16 %v5236, %v5236
      %v5247 = vpack.c.bf16 %v5237, %v5237
      %v5248 = vpack.c.bf16 %v5238, %v5238
      %5249 = vst [vmem:[%s170] sm:$0xf] %v5239
      %5250 = vst [vmem:[%s170 + $0x4] sm:$0xf] %v5240
      %5251 = vst [vmem:[%s170 + $0x8] sm:$0xf] %v5241
      %5252 = vst [vmem:[%s170 + $0xc] sm:$0xf] %v5242
      %5253 = vst [vmem:[%s170 + $0x10] sm:$0xf] %v5243
      %5254 = vst [vmem:[%s170 + $0x14] sm:$0xf] %v5244
      %5255 = vst [vmem:[%s170 + $0x18] sm:$0xf] %v5245
      %5256 = vst [vmem:[%s170 + $0x1c] sm:$0xf] %v5246
      %5257 = vst [vmem:[%s170 + $0x20] sm:$0xf] %v5247
      %5258 = vst [vmem:[%s170 + $0x24] sm:$0x7] %v5248
      %p5259 = scmp.lt.s32.totalorder %s14, 1
      %s5260 = scalar_select %p5259, %s14, 1
      %s5261 = smul.addr %s5260, 10
      %s5262 = smul.addr %s5261, 4
      %s5263 = scalar_lea.vmem %s3, %s5262
      // Predicated region
      $region33: #{_encode.4} parent=31 // pred_check
        %p5264 = pneg %p100
      $region34: #{_encode.4} parent=31 // pred_check_branch
        %5266 = sbr.rel (%p5264) target = $region36
      $region35: #{_encode.4} parent=31 // pred_region
        _
      $region36: #{_encode.4} parent=31 // pred_fallthru
        _
    $region32: #{_encode.4} parent=5 // pred_fallthru
      _
    %p5267 = scmp.le.s32.totalorder 2, %s9
    // Predicated region
    $region37: #{_encode.4} parent=5 // pred_check
      %p5268 = pneg %p5267
    $region38: #{_encode.4} parent=5 // pred_check_branch
      %5270 = sbr.rel (%p5268) target = $region40
    $region39: #{_encode.4} parent=5 // pred_region
      %s5271 = ssub.s32 %s9, 2
      // Predicated region
      $region41: #{_encode.4} parent=39 // pred_check
        %p5272 = pneg %p106
      $region42: #{_encode.4} parent=39 // pred_check_branch
        %5274 = sbr.rel (%p5272) target = $region44
      $region43: #{_encode.4} parent=39 // pred_region
        %p5275 = scmp.lt.s32.totalorder %s15, 1
        %s5276 = scalar_select %p5275, %s15, 1
        %s5277 = smul.addr %s5276, 10
        %s5278 = smul.addr %s5277, 4
        %s5279 = scalar_lea.vmem %s3, %s5278
      $region44: #{_encode.4} parent=39 // pred_fallthru
        _
    $region40: #{_encode.4} parent=5 // pred_fallthru
      _
  $region6: #{_encode.4} parent=0 // loop_footer
    %s13 = sadd.s32 1, %s9
  $region7: #{_encode.4} parent=0 // loop_footer_branch
    %8 = sbr.rel target = $region3
  $region8: #{_encode.4} parent=0 // loop_exit
    _

</llo_original>
